<compile_context>
chip_gen: v6e
topology: v6e:2x2x1
jax: 0.10.0
libtpu: 0.0.40
codegen_flags: <defaults>
</compile_context>

<pallas_src>
import functools
import math

import jax
import jax.numpy as jnp
import numpy as np
from jax.experimental import pallas as pl
from jax.experimental.pallas import tpu as pltpu

BN_EPS = 1e-5
CPAD = 128  # every channel / lane dim is padded to 128 lanes


# ---------------------------------------------------------------------------
# Zero-padded raster geometry (rows = n*rimg + (y+1)*pitch + (x+2))
# ---------------------------------------------------------------------------
def _raster_dims(nb, h, w):
    """Raster geometry for a conv layer whose input is (h, w) spatial.

    Pitch is w + 4 (1-pixel halo plus one extra zero column per side) so every
    store into the bf16-packed raster lands on an even sublane offset with an
    even length (no packed-pair read-modify-write).
    """
    pitch = w + 4
    rimg = (h + 2) * pitch          # rows per image incl. top/bottom halo stripes
    rbody = nb * rimg               # rows carrying image data
    rin = rbody + 2 * pitch + 2     # + tail so all 9 shifted tap reads stay in bounds
    return pitch, rimg, rbody, rin


# ---------------------------------------------------------------------------
# Fused whole-network kernel (built per static shape, one batch block / step)
# ---------------------------------------------------------------------------
def _make_kernel(nb, height, width):
    hf, wf = height >> 4, width >> 4
    hfwf = hf * wf

    def kernel(x_ref, wc1, bc1, wc2, bc2, wc3, bc3, wc4, bc4,
               wf1, bf1, wf2, bf2, o_ref,
               a1, p2, a2, p3, a3, p4, a4, m4):

        def pool_chunk(a_ref, base, pitch_a, wn):
            # 2x2/2 max-pool for one pooled output row (wn pixels, 128 lanes).
            def ld(off):
                if wn == 1:
                    return a_ref[pl.ds(base + off, 1), :]
                return a_ref[pl.ds(base + off, wn, stride=2), :]
            return jnp.maximum(jnp.maximum(ld(0), ld(1)),
                               jnp.maximum(ld(pitch_a), ld(pitch_a + 1)))

        def pool_into_raster(a_ref, pn_ref, pitch_a, img_a, off_a, hn, wn):
            # Max-pool a_ref and scatter into the next layer's zero-padded bf16
            # raster.  Only halo / tail rows are zeroed explicitly; interior
            # rows are fully covered by the pooled-row stores.  All stores use
            # even offsets / even lengths (bf16 sublane packing is 2 rows).
            pitch_n, rimg_n, _, rin_n = _raster_dims(nb, hn, wn)
            z_stripe = jnp.zeros((pitch_n, CPAD), pn_ref.dtype)
            z_edge = jnp.zeros((2, CPAD), pn_ref.dtype)
            for n in range(nb):
                img = n * rimg_n
                pn_ref[pl.ds(img, pitch_n), :] = z_stripe                        # y = -1 halo
                pn_ref[pl.ds(img + (hn + 1) * pitch_n, pitch_n), :] = z_stripe   # y = hn halo
                for yo in range(hn):
                    row = img + (yo + 1) * pitch_n
                    base = n * img_a + 2 * yo * pitch_a + off_a
                    chunk = pool_chunk(a_ref, base, pitch_a, wn)
                    pn_ref[pl.ds(row, 2), :] = z_edge                  # x = -1 halo columns
                    pn_ref[pl.ds(row + 2, wn), :] = chunk.astype(pn_ref.dtype)
                    pn_ref[pl.ds(row + 2 + wn, 2), :] = z_edge         # x = wn halo columns
            tail = rin_n - nb * rimg_n
            pn_ref[pl.ds(nb * rimg_n, tail), :] = jnp.zeros((tail, CPAD),
                                                            pn_ref.dtype)

        def pool_into_compact(a_ref, m_ref, pitch_a, img_a, off_a, hn, wn):
            # Last layer: pooled output goes straight to a compact block
            # (row = n*hf*wf + y*wf + x) feeding fc1 — no padded raster needed.
            for n in range(nb):
                for yo in range(hn):
                    base = n * img_a + 2 * yo * pitch_a + off_a
                    m_ref[pl.ds((n * hn + yo) * wn, wn), :] = pool_chunk(
                        a_ref, base, pitch_a, wn)

        # ---- layer 1: conv3x3 (BN folded) + ReLU as ONE im2col matmul -------
        acc = jnp.dot(x_ref[0], wc1[...], preferred_element_type=jnp.float32)
        a1[...] = jnp.maximum(acc + bc1[...], 0.0)   # fused bias + ReLU, single store
        pool_into_raster(a1, p2, width, height * width, 0,
                         height >> 1, width >> 1)

        # ---- layers 2-4: conv3x3 = 9 shifted-window matmuls over the raster -
        # (Conv output rows past the valid region hold garbage; they are never
        #  read by the pooling / scatter paths below.)
        layers = ((p2, a2, wc2, bc2, p3, height >> 1, width >> 1),
                  (p3, a3, wc3, bc3, p4, height >> 2, width >> 2),
                  (p4, a4, wc4, bc4, None, height >> 3, width >> 3))
        for p_ref, a_ref, w_ref, b_ref, p_next, hl, wl in layers:
            pitch, rimg, rbody, _ = _raster_dims(nb, hl, wl)
            acc = None
            for t in range(9):
                dy, dx = divmod(t, 3)
                y = jnp.dot(p_ref[pl.ds(dy * pitch + dx, rbody), :], w_ref[t],
                            preferred_element_type=jnp.float32)
                acc = y if acc is None else acc + y
            # Folded-BN bias + ReLU fused into the single accumulator store.
            a_ref[...] = jnp.maximum(acc + b_ref[...], 0.0)
            if p_next is not None:
                pool_into_raster(a_ref, p_next, pitch, rimg, 1,
                                 hl >> 1, wl >> 1)
            else:
                pool_into_compact(a_ref, m4, pitch, rimg, 1, hl >> 1, wl >> 1)

        # ---- head: fc1 (+BN1d folded) + ReLU + Dropout(eval) + fc2 ----------
        h = None
        for pos in range(hfwf):
            lhs = m4[...] if hfwf == 1 else m4[pl.ds(pos, nb, stride=hfwf), :]
            y = jnp.dot(lhs.astype(jnp.bfloat16), wf1[pos],
                        preferred_element_type=jnp.float32)
            h = y if h is None else h + y
        h = jnp.maximum(h + bf1[...], 0.0)
        # Dropout(p=0.2): identity in eval mode.
        o_ref[0] = jnp.dot(h.astype(jnp.bfloat16), wf2[...],
                           preferred_element_type=jnp.float32) + bf2[...]

    return kernel


# ---------------------------------------------------------------------------
# Parameter construction (synthetic, deterministic) with BN folding + packing
# ---------------------------------------------------------------------------
def _fold_bn(prev_bias, gamma, beta, mean, var, eps=BN_EPS):
    scale = gamma / jnp.sqrt(var + eps)
    return scale, (prev_bias - mean) * scale + beta


def init_net_params(key, num_images, img_width, img_height, num_actions):
    assert img_width % 16 == 0 and img_height % 16 == 0, \
        "H and W must be divisible by 16 (four 2x2 max-pools)"
    assert 9 * num_images <= CPAD, "im2col K (9*num_images) must fit in 128 lanes"
    assert num_actions <= CPAD, "num_actions must be <= 128"
    keys = jax.random.split(key, 8)
    conv_channels = [num_images, 32, 64, 64, 128]

    conv_w, conv_b, ref_w, ref_b = [], [], [], []
    for i in range(4):
        cin, cout = conv_channels[i], conv_channels[i + 1]
        k = jax.random.split(keys[i], 6)
        w = jax.random.normal(k[0], (3, 3, cin, cout), jnp.float32) * 0.05
        b = jax.random.normal(k[1], (cout,), jnp.float32) * 0.05
        gamma = jax.random.uniform(k[2], (cout,), jnp.float32, 0.8, 1.2)
        beta = jax.random.normal(k[3], (cout,), jnp.float32) * 0.05
        mean = jax.random.normal(k[4], (cout,), jnp.float32) * 0.05
        var = jax.random.uniform(k[5], (cout,), jnp.float32, 0.5, 1.5)
        scale, bias = _fold_bn(b, gamma, beta, mean, var)
        w_fold = (w * scale).astype(jnp.bfloat16)     # BN scale folded, bf16 weights
        ref_w.append(w_fold.astype(jnp.float32))
        ref_b.append(bias)
        if i == 0:
            # conv1 runs as a single im2col matmul: K rows ordered tap-major
            # (dy, dx) then input channel, padded to 128.
            wp = jnp.zeros((CPAD, CPAD), jnp.bfloat16)
            wp = wp.at[:9 * cin, :cout].set(w_fold.reshape(9 * cin, cout))
        else:
            wp = jnp.zeros((9, CPAD, CPAD), jnp.bfloat16)
            wp = wp.at[:, :cin, :cout].set(w_fold.reshape(9, cin, cout))
        conv_w.append(wp)
        conv_b.append(jnp.zeros((1, CPAD), jnp.float32).at[0, :cout].set(bias))

    hf, wf = img_height // 16, img_width // 16
    c4 = conv_channels[-1]                       # 128
    cnn_out = c4 * hf * wf

    k = jax.random.split(keys[4], 2)
    # Rows of w1 are in PyTorch NCHW-flatten order: index = c*hf*wf + y*wf + x.
    w1 = jax.random.normal(k[0], (cnn_out, 512), jnp.float32) * 0.05
    b1 = jax.random.normal(k[1], (512,), jnp.float32) * 0.05
    k = jax.random.split(keys[5], 4)
    gamma1 = jax.random.uniform(k[0], (512,), jnp.float32, 0.8, 1.2)
    beta1 = jax.random.normal(k[1], (512,), jnp.float32) * 0.05
    mean1 = jax.random.normal(k[2], (512,), jnp.float32) * 0.05
    var1 = jax.random.uniform(k[3], (512,), jnp.float32, 0.5, 1.5)
    s1, bias1 = _fold_bn(b1, gamma1, beta1, mean1, var1)
    w1_fold = (w1 * s1[None, :]).astype(jnp.bfloat16)   # fold BN1d scale into fc1
    # One-time permutation: NCHW flatten order -> per-(y, x) channel blocks so
    # the kernel never flattens / transposes activations at runtime.
    w1_blk = (w1_fold.reshape(c4, hf, wf, 512).transpose(1, 2, 0, 3)
              .reshape(hf * wf, c4, 512))
    if c4 < CPAD:
        w1_blk = jnp.pad(w1_blk, ((0, 0), (0, CPAD - c4), (0, 0)))

    k = jax.random.split(keys[6], 2)
    w2 = (jax.random.normal(k[0], (512, num_actions), jnp.float32) * 0.05
          ).astype(jnp.bfloat16)
    b2 = jax.random.normal(k[1], (num_actions,), jnp.float32) * 0.05
    w2_pad = jnp.zeros((512, CPAD), jnp.bfloat16).at[:, :num_actions].set(w2)
    b2_pad = jnp.zeros((1, CPAD), jnp.float32).at[0, :num_actions].set(b2)

    params = {"conv_w": conv_w, "conv_b": conv_b,
              "fc1_w": w1_blk, "fc1_b": bias1.reshape(1, 512),
              "fc2_w": w2_pad, "fc2_b": b2_pad}
    # Reference params: identical (BN-folded, bf16-rounded) values in plain
    # layouts, used by the pure-JAX numerics check in __main__.
    ref_params = {"conv_w": ref_w, "conv_b": ref_b,
                  "fc1_w": w1_fold.astype(jnp.float32), "fc1_b": bias1,
                  "fc2_w": w2.astype(jnp.float32), "fc2_b": b2}
    return params, ref_params


# ---------------------------------------------------------------------------
# Wrapper: im2col glue + one fused pallas_call over a batch grid
# ---------------------------------------------------------------------------
def _build_im2col(x_nchw, num_blocks, nb):
    n, cin, h, w = x_nchw.shape
    x = jnp.transpose(x_nchw, (0, 2, 3, 1)).astype(jnp.float32)    # NHWC
    xp = jnp.pad(x, ((0, 0), (1, 1), (1, 1), (0, 0)))
    taps = [xp[:, dy:dy + h, dx:dx + w, :]
            for dy in range(3) for dx in range(3)]
    col = jnp.concatenate(taps, axis=-1)                           # (N, H, W, 9*Cin)
    col = jnp.pad(col, ((0, 0), (0, 0), (0, 0), (0, CPAD - 9 * cin)))
    return col.astype(jnp.bfloat16).reshape(num_blocks, nb * h * w, CPAD)


def _nbytes(shape, dtype):
    return math.prod(shape) * np.dtype(dtype).itemsize


@functools.partial(jax.jit, static_argnames=("num_actions", "images_per_block"))
def net_forward(x_nchw, params, *, num_actions, images_per_block=1):
    n, cin, h, w = x_nchw.shape
    if h % 16 or w % 16:
        raise ValueError("H and W must be divisible by 16 (four 2x2 max-pools)")
    if 9 * cin > CPAD:
        raise ValueError("9 * num_images must be <= 128 for the im2col packing")
    if num_actions > CPAD:
        raise ValueError("num_actions must be <= 128")
    nb = images_per_block
    if n % nb:
        raise ValueError("batch must be divisible by images_per_block")
    num_blocks = n // nb
    hf, wf = h >> 4, w >> 4

    x_col = _build_im2col(x_nchw, num_blocks, nb)

    args = (x_col,
            params["conv_w"][0], params["conv_b"][0],
            params["conv_w"][1], params["conv_b"][1],
            params["conv_w"][2], params["conv_b"][2],
            params["conv_w"][3], params["conv_b"][3],
            params["fc1_w"], params["fc1_b"],
            params["fc2_w"], params["fc2_b"])

    def _const_spec(a):
        # Whole array resident in VMEM; block index never changes across steps.
        return pl.BlockSpec(a.shape, lambda b, _nd=a.ndim: (0,) * _nd)

    in_specs = ([pl.BlockSpec((1, nb * h * w, CPAD), lambda b: (b, 0, 0))] +
                [_const_spec(a) for a in args[1:]])
    out_specs = pl.BlockSpec((1, nb, CPAD), lambda b: (b, 0, 0))

    # Scratch: per layer one f32 conv accumulator (written once, bias+ReLU
    # fused) and one bf16 zero-padded raster for the next layer's input; plus
    # a small compact block feeding the fully-connected head.
    scratch, scratch_bytes = [], 0

    def _add(shape, dtype):
        nonlocal scratch_bytes
        scratch.append(pltpu.VMEM(shape, dtype))
        scratch_bytes += _nbytes(shape, dtype)

    _add((nb * h * w, CPAD), jnp.float32)                      # a1
    for l in (1, 2, 3):
        _, _, rbody, rin = _raster_dims(nb, h >> l, w >> l)
        _add((rin, CPAD), jnp.bfloat16)                        # p_{l+1}
        _add((rbody, CPAD), jnp.float32)                       # a_{l+1}
    _add((nb * hf * wf, CPAD), jnp.float32)                    # m4 (head input)

    # Explicit scoped-VMEM budget: double-buffered blocks + scratch + headroom.
    block_bytes = (_nbytes((1, nb * h * w, CPAD), jnp.bfloat16) +
                   sum(_nbytes(a.shape, a.dtype) for a in args[1:]) +
                   _nbytes((1, nb, CPAD), jnp.float32))
    vmem_limit = int(min(2 * block_bytes + scratch_bytes + (8 << 20), 96 << 20))

    out = pl.pallas_call(
        _make_kernel(nb, h, w),
        out_shape=jax.ShapeDtypeStruct((num_blocks, nb, CPAD), jnp.float32),
        grid=(num_blocks,),
        in_specs=in_specs,
        out_specs=out_specs,
        scratch_shapes=scratch,
        compiler_params=pltpu.CompilerParams(
            dimension_semantics=("parallel",),
            vmem_limit_bytes=vmem_limit),
    )(*args)

    return out.reshape(n, CPAD)[:, :num_actions]   # drop head lane padding


# ---------------------------------------------------------------------------
# Pure-JAX reference with numerics matched to the kernel (bf16 weights,
# activations rounded to bf16 wherever the kernel stores bf16)
# ---------------------------------------------------------------------------
def reference_forward(x_nchw, ref_params):
    rb = lambda a: a.astype(jnp.bfloat16).astype(jnp.float32)
    x = rb(jnp.transpose(x_nchw, (0, 2, 3, 1)).astype(jnp.float32))   # NHWC
    for w, b in zip(ref_params["conv_w"], ref_params["conv_b"]):
        y = jax.lax.conv_general_dilated(
            x, w, window_strides=(1, 1), padding="SAME",
            dimension_numbers=("NHWC", "HWIO", "NHWC"),
            precision=jax.lax.Precision.HIGHEST)
        y = jnp.maximum(y + b, 0.0)
        y = jax.lax.reduce_window(y, -jnp.inf, jax.lax.max,
                                  (1, 2, 2, 1), (1, 2, 2, 1), "VALID")
        x = rb(y)
    feat = jnp.transpose(x, (0, 3, 1, 2)).reshape(x.shape[0], -1)     # NCHW flatten
    h = jnp.maximum(
        jnp.dot(feat, ref_params["fc1_w"],
                precision=jax.lax.Precision.HIGHEST) + ref_params["fc1_b"], 0.0)
    h = rb(h)    # Dropout(p=0.2): identity in eval mode.
    return jnp.dot(h, ref_params["fc2_w"],
                   precision=jax.lax.Precision.HIGHEST) + ref_params["fc2_b"]


if __name__ == "__main__":
    num_images, img_h, img_w, num_actions = 4, 16, 16, 4
    batch = 2

    params, ref_params = init_net_params(
        jax.random.PRNGKey(0), num_images, img_w, img_h, num_actions)
    x = jax.random.normal(jax.random.PRNGKey(0),
                          (batch, num_images, img_h, img_w), jnp.float32)

    out = net_forward(x, params, num_actions=num_actions, images_per_block=1)
    out = jax.block_until_ready(out)
    assert out.shape == (batch, num_actions), out.shape

    ref = jax.block_until_ready(reference_forward(x, ref_params))
    np.testing.assert_allclose(np.asarray(out), np.asarray(ref),
                               rtol=1e-2, atol=1e-2)
    print("KERNEL_OK")
</pallas_src>

<mosaic_0001>
module attributes {stable_mosaic.version = 11 : i64} {
  func.func @kernel(%arg0: i32, %arg1: memref<1x256x128xbf16, #tpu.memory_space<vmem>>, %arg2: memref<128x128xbf16, #tpu.memory_space<vmem>>, %arg3: memref<1x128xf32, #tpu.memory_space<vmem>>, %arg4: memref<9x128x128xbf16, #tpu.memory_space<vmem>>, %arg5: memref<1x128xf32, #tpu.memory_space<vmem>>, %arg6: memref<9x128x128xbf16, #tpu.memory_space<vmem>>, %arg7: memref<1x128xf32, #tpu.memory_space<vmem>>, %arg8: memref<9x128x128xbf16, #tpu.memory_space<vmem>>, %arg9: memref<1x128xf32, #tpu.memory_space<vmem>>, %arg10: memref<1x128x512xbf16, #tpu.memory_space<vmem>>, %arg11: memref<1x512xf32, #tpu.memory_space<vmem>>, %arg12: memref<512x128xbf16, #tpu.memory_space<vmem>>, %arg13: memref<1x128xf32, #tpu.memory_space<vmem>>, %arg14: memref<1x1x128xf32, #tpu.memory_space<vmem>>, %arg15: memref<256x128xf32, #tpu.memory_space<vmem>>, %arg16: memref<146x128xbf16, #tpu.memory_space<vmem>>, %arg17: memref<120x128xf32, #tpu.memory_space<vmem>>, %arg18: memref<66x128xbf16, #tpu.memory_space<vmem>>, %arg19: memref<48x128xf32, #tpu.memory_space<vmem>>, %arg20: memref<38x128xbf16, #tpu.memory_space<vmem>>, %arg21: memref<24x128xf32, #tpu.memory_space<vmem>>, %arg22: memref<1x128xf32, #tpu.memory_space<vmem>>) attributes {dimension_semantics = [#tpu.dimension_semantics<parallel>], iteration_bounds = array<i64: 2>, scalar_prefetch = 0 : i64, scratch_operands = 8 : i64, tpu.core_type = #tpu.core_type<tc>, window_params = [{transform_indices = @transform_0, window_bounds = array<i64: 1, 256, 128>}, {pipeline_mode = #tpu.pipeline_mode<synchronous>, transform_indices = @transform_1, window_bounds = array<i64: 128, 128>}, {pipeline_mode = #tpu.pipeline_mode<synchronous>, transform_indices = @transform_2, window_bounds = array<i64: 1, 128>}, {pipeline_mode = #tpu.pipeline_mode<synchronous>, transform_indices = @transform_3, window_bounds = array<i64: 9, 128, 128>}, {pipeline_mode = #tpu.pipeline_mode<synchronous>, transform_indices = @transform_4, window_bounds = array<i64: 1, 128>}, {pipeline_mode = #tpu.pipeline_mode<synchronous>, transform_indices = @transform_5, window_bounds = array<i64: 9, 128, 128>}, {pipeline_mode = #tpu.pipeline_mode<synchronous>, transform_indices = @transform_6, window_bounds = array<i64: 1, 128>}, {pipeline_mode = #tpu.pipeline_mode<synchronous>, transform_indices = @transform_7, window_bounds = array<i64: 9, 128, 128>}, {pipeline_mode = #tpu.pipeline_mode<synchronous>, transform_indices = @transform_8, window_bounds = array<i64: 1, 128>}, {pipeline_mode = #tpu.pipeline_mode<synchronous>, transform_indices = @transform_9, window_bounds = array<i64: 1, 128, 512>}, {pipeline_mode = #tpu.pipeline_mode<synchronous>, transform_indices = @transform_10, window_bounds = array<i64: 1, 512>}, {pipeline_mode = #tpu.pipeline_mode<synchronous>, transform_indices = @transform_11, window_bounds = array<i64: 512, 128>}, {pipeline_mode = #tpu.pipeline_mode<synchronous>, transform_indices = @transform_12, window_bounds = array<i64: 1, 128>}, {transform_indices = @transform_13, window_bounds = array<i64: 1, 1, 128>}]} {
    %c0 = arith.constant 0 : index
    %c0_0 = arith.constant 0 : index
    %c0_1 = arith.constant 0 : index
    %0 = vector.load %arg1[%c0, %c0_0, %c0_1] : memref<1x256x128xbf16, #tpu.memory_space<vmem>>, vector<1x256x128xbf16>
    %1 = vector.shape_cast %0 : vector<1x256x128xbf16> to vector<256x128xbf16>
    %c0_2 = arith.constant 0 : index
    %c0_3 = arith.constant 0 : index
    %2 = vector.load %arg2[%c0_2, %c0_3] : memref<128x128xbf16, #tpu.memory_space<vmem>>, vector<128x128xbf16>
    %cst = arith.constant dense<0.000000e+00> : vector<256x128xf32>
    %3 = tpu.matmul %1, %2, %cst {dimension_numbers = #tpu.dot_dimension_numbers<[1], [0], [0], [1], [0, 0, 1, 1], [], []>} : vector<256x128xbf16>, vector<128x128xbf16>, vector<256x128xf32> -> vector<256x128xf32>
    %c0_4 = arith.constant 0 : index
    %c0_5 = arith.constant 0 : index
    %4 = vector.load %arg3[%c0_4, %c0_5] : memref<1x128xf32, #tpu.memory_space<vmem>>, vector<1x128xf32>
    %5 = vector.broadcast %4 : vector<1x128xf32> to vector<256x128xf32>
    %6 = arith.addf %3, %5 : vector<256x128xf32>
    %cst_6 = arith.constant 0.000000e+00 : f32
    %7 = vector.broadcast %cst_6 : f32 to vector<256x128xf32>
    %8 = arith.maximumf %6, %7 : vector<256x128xf32>
    %c0_7 = arith.constant 0 : index
    %c0_8 = arith.constant 0 : index
    %9 = vector.load %arg15[%c0_7, %c0_8] : memref<256x128xf32, #tpu.memory_space<vmem>>, vector<256x128xf32>
    tpu.vector_store %arg15[%c0_7, %c0_8], %8 {strides = array<i32>} : memref<256x128xf32, #tpu.memory_space<vmem>>, vector<256x128xf32>,
    %cst_9 = arith.constant 0.000000e+00 : bf16
    %10 = vector.broadcast %cst_9 : bf16 to vector<12x128xbf16>
    %cst_10 = arith.constant 0.000000e+00 : bf16
    %11 = vector.broadcast %cst_10 : bf16 to vector<2x128xbf16>
    %c0_11 = arith.constant 0 : index
    %c0_12 = arith.constant 0 : index
    %12 = vector.load %arg16[%c0_11, %c0_12] : memref<146x128xbf16, #tpu.memory_space<vmem>>, vector<12x128xbf16>
    tpu.vector_store %arg16[%c0_11, %c0_12], %10 {strides = array<i32>} : memref<146x128xbf16, #tpu.memory_space<vmem>>, vector<12x128xbf16>,
    %c108 = arith.constant 108 : index
    %c0_13 = arith.constant 0 : index
    %13 = vector.load %arg16[%c108, %c0_13] : memref<146x128xbf16, #tpu.memory_space<vmem>>, vector<12x128xbf16>
    tpu.vector_store %arg16[%c108, %c0_13], %10 {strides = array<i32>} : memref<146x128xbf16, #tpu.memory_space<vmem>>, vector<12x128xbf16>,
    %c0_14 = arith.constant 0 : index
    %c0_15 = arith.constant 0 : index
    %14 = tpu.strided_load %arg15[%c0_14, %c0_15] {strides = array<i32: 2, 1>} : memref<256x128xf32, #tpu.memory_space<vmem>>, vector<8x128xf32>
    %c1 = arith.constant 1 : index
    %c0_16 = arith.constant 0 : index
    %15 = tpu.strided_load %arg15[%c1, %c0_16] {strides = array<i32: 2, 1>} : memref<256x128xf32, #tpu.memory_space<vmem>>, vector<8x128xf32>
    %16 = arith.maximumf %14, %15 : vector<8x128xf32>
    %c16 = arith.constant 16 : index
    %c0_17 = arith.constant 0 : index
    %17 = tpu.strided_load %arg15[%c16, %c0_17] {strides = array<i32: 2, 1>} : memref<256x128xf32, #tpu.memory_space<vmem>>, vector<8x128xf32>
    %c17 = arith.constant 17 : index
    %c0_18 = arith.constant 0 : index
    %18 = tpu.strided_load %arg15[%c17, %c0_18] {strides = array<i32: 2, 1>} : memref<256x128xf32, #tpu.memory_space<vmem>>, vector<8x128xf32>
    %19 = arith.maximumf %17, %18 : vector<8x128xf32>
    %20 = arith.maximumf %16, %19 : vector<8x128xf32>
    %c12 = arith.constant 12 : index
    %c0_19 = arith.constant 0 : index
    %21 = vector.load %arg16[%c12, %c0_19] : memref<146x128xbf16, #tpu.memory_space<vmem>>, vector<2x128xbf16>
    tpu.vector_store %arg16[%c12, %c0_19], %11 {strides = array<i32>} : memref<146x128xbf16, #tpu.memory_space<vmem>>, vector<2x128xbf16>,
    %22 = arith.truncf %20 : vector<8x128xf32> to vector<8x128xbf16>
    %c14 = arith.constant 14 : index
    %c0_20 = arith.constant 0 : index
    %23 = vector.load %arg16[%c14, %c0_20] : memref<146x128xbf16, #tpu.memory_space<vmem>>, vector<8x128xbf16>
    tpu.vector_store %arg16[%c14, %c0_20], %22 {strides = array<i32>} : memref<146x128xbf16, #tpu.memory_space<vmem>>, vector<8x128xbf16>,
    %c22 = arith.constant 22 : index
    %c0_21 = arith.constant 0 : index
    %24 = vector.load %arg16[%c22, %c0_21] : memref<146x128xbf16, #tpu.memory_space<vmem>>, vector<2x128xbf16>
    tpu.vector_store %arg16[%c22, %c0_21], %11 {strides = array<i32>} : memref<146x128xbf16, #tpu.memory_space<vmem>>, vector<2x128xbf16>,
    %c32 = arith.constant 32 : index
    %c0_22 = arith.constant 0 : index
    %25 = tpu.strided_load %arg15[%c32, %c0_22] {strides = array<i32: 2, 1>} : memref<256x128xf32, #tpu.memory_space<vmem>>, vector<8x128xf32>
    %c33 = arith.constant 33 : index
    %c0_23 = arith.constant 0 : index
    %26 = tpu.strided_load %arg15[%c33, %c0_23] {strides = array<i32: 2, 1>} : memref<256x128xf32, #tpu.memory_space<vmem>>, vector<8x128xf32>
    %27 = arith.maximumf %25, %26 : vector<8x128xf32>
    %c48 = arith.constant 48 : index
    %c0_24 = arith.constant 0 : index
    %28 = tpu.strided_load %arg15[%c48, %c0_24] {strides = array<i32: 2, 1>} : memref<256x128xf32, #tpu.memory_space<vmem>>, vector<8x128xf32>
    %c49 = arith.constant 49 : index
    %c0_25 = arith.constant 0 : index
    %29 = tpu.strided_load %arg15[%c49, %c0_25] {strides = array<i32: 2, 1>} : memref<256x128xf32, #tpu.memory_space<vmem>>, vector<8x128xf32>
    %30 = arith.maximumf %28, %29 : vector<8x128xf32>
    %31 = arith.maximumf %27, %30 : vector<8x128xf32>
    %c24 = arith.constant 24 : index
    %c0_26 = arith.constant 0 : index
    %32 = vector.load %arg16[%c24, %c0_26] : memref<146x128xbf16, #tpu.memory_space<vmem>>, vector<2x128xbf16>
    tpu.vector_store %arg16[%c24, %c0_26], %11 {strides = array<i32>} : memref<146x128xbf16, #tpu.memory_space<vmem>>, vector<2x128xbf16>,
    %33 = arith.truncf %31 : vector<8x128xf32> to vector<8x128xbf16>
    %c26 = arith.constant 26 : index
    %c0_27 = arith.constant 0 : index
    %34 = vector.load %arg16[%c26, %c0_27] : memref<146x128xbf16, #tpu.memory_space<vmem>>, vector<8x128xbf16>
    tpu.vector_store %arg16[%c26, %c0_27], %33 {strides = array<i32>} : memref<146x128xbf16, #tpu.memory_space<vmem>>, vector<8x128xbf16>,
    %c34 = arith.constant 34 : index
    %c0_28 = arith.constant 0 : index
    %35 = vector.load %arg16[%c34, %c0_28] : memref<146x128xbf16, #tpu.memory_space<vmem>>, vector<2x128xbf16>
    tpu.vector_store %arg16[%c34, %c0_28], %11 {strides = array<i32>} : memref<146x128xbf16, #tpu.memory_space<vmem>>, vector<2x128xbf16>,
    %c64 = arith.constant 64 : index
    %c0_29 = arith.constant 0 : index
    %36 = tpu.strided_load %arg15[%c64, %c0_29] {strides = array<i32: 2, 1>} : memref<256x128xf32, #tpu.memory_space<vmem>>, vector<8x128xf32>
    %c65 = arith.constant 65 : index
    %c0_30 = arith.constant 0 : index
    %37 = tpu.strided_load %arg15[%c65, %c0_30] {strides = array<i32: 2, 1>} : memref<256x128xf32, #tpu.memory_space<vmem>>, vector<8x128xf32>
    %38 = arith.maximumf %36, %37 : vector<8x128xf32>
    %c80 = arith.constant 80 : index
    %c0_31 = arith.constant 0 : index
    %39 = tpu.strided_load %arg15[%c80, %c0_31] {strides = array<i32: 2, 1>} : memref<256x128xf32, #tpu.memory_space<vmem>>, vector<8x128xf32>
    %c81 = arith.constant 81 : index
    %c0_32 = arith.constant 0 : index
    %40 = tpu.strided_load %arg15[%c81, %c0_32] {strides = array<i32: 2, 1>} : memref<256x128xf32, #tpu.memory_space<vmem>>, vector<8x128xf32>
    %41 = arith.maximumf %39, %40 : vector<8x128xf32>
    %42 = arith.maximumf %38, %41 : vector<8x128xf32>
    %c36 = arith.constant 36 : index
    %c0_33 = arith.constant 0 : index
    %43 = vector.load %arg16[%c36, %c0_33] : memref<146x128xbf16, #tpu.memory_space<vmem>>, vector<2x128xbf16>
    tpu.vector_store %arg16[%c36, %c0_33], %11 {strides = array<i32>} : memref<146x128xbf16, #tpu.memory_space<vmem>>, vector<2x128xbf16>,
    %44 = arith.truncf %42 : vector<8x128xf32> to vector<8x128xbf16>
    %c38 = arith.constant 38 : index
    %c0_34 = arith.constant 0 : index
    %45 = vector.load %arg16[%c38, %c0_34] : memref<146x128xbf16, #tpu.memory_space<vmem>>, vector<8x128xbf16>
    tpu.vector_store %arg16[%c38, %c0_34], %44 {strides = array<i32>} : memref<146x128xbf16, #tpu.memory_space<vmem>>, vector<8x128xbf16>,
    %c46 = arith.constant 46 : index
    %c0_35 = arith.constant 0 : index
    %46 = vector.load %arg16[%c46, %c0_35] : memref<146x128xbf16, #tpu.memory_space<vmem>>, vector<2x128xbf16>
    tpu.vector_store %arg16[%c46, %c0_35], %11 {strides = array<i32>} : memref<146x128xbf16, #tpu.memory_space<vmem>>, vector<2x128xbf16>,
    %c96 = arith.constant 96 : index
    %c0_36 = arith.constant 0 : index
    %47 = tpu.strided_load %arg15[%c96, %c0_36] {strides = array<i32: 2, 1>} : memref<256x128xf32, #tpu.memory_space<vmem>>, vector<8x128xf32>
    %c97 = arith.constant 97 : index
    %c0_37 = arith.constant 0 : index
    %48 = tpu.strided_load %arg15[%c97, %c0_37] {strides = array<i32: 2, 1>} : memref<256x128xf32, #tpu.memory_space<vmem>>, vector<8x128xf32>
    %49 = arith.maximumf %47, %48 : vector<8x128xf32>
    %c112 = arith.constant 112 : index
    %c0_38 = arith.constant 0 : index
    %50 = tpu.strided_load %arg15[%c112, %c0_38] {strides = array<i32: 2, 1>} : memref<256x128xf32, #tpu.memory_space<vmem>>, vector<8x128xf32>
    %c113 = arith.constant 113 : index
    %c0_39 = arith.constant 0 : index
    %51 = tpu.strided_load %arg15[%c113, %c0_39] {strides = array<i32: 2, 1>} : memref<256x128xf32, #tpu.memory_space<vmem>>, vector<8x128xf32>
    %52 = arith.maximumf %50, %51 : vector<8x128xf32>
    %53 = arith.maximumf %49, %52 : vector<8x128xf32>
    %c48_40 = arith.constant 48 : index
    %c0_41 = arith.constant 0 : index
    %54 = vector.load %arg16[%c48_40, %c0_41] : memref<146x128xbf16, #tpu.memory_space<vmem>>, vector<2x128xbf16>
    tpu.vector_store %arg16[%c48_40, %c0_41], %11 {strides = array<i32>} : memref<146x128xbf16, #tpu.memory_space<vmem>>, vector<2x128xbf16>,
    %55 = arith.truncf %53 : vector<8x128xf32> to vector<8x128xbf16>
    %c50 = arith.constant 50 : index
    %c0_42 = arith.constant 0 : index
    %56 = vector.load %arg16[%c50, %c0_42] : memref<146x128xbf16, #tpu.memory_space<vmem>>, vector<8x128xbf16>
    tpu.vector_store %arg16[%c50, %c0_42], %55 {strides = array<i32>} : memref<146x128xbf16, #tpu.memory_space<vmem>>, vector<8x128xbf16>,
    %c58 = arith.constant 58 : index
    %c0_43 = arith.constant 0 : index
    %57 = vector.load %arg16[%c58, %c0_43] : memref<146x128xbf16, #tpu.memory_space<vmem>>, vector<2x128xbf16>
    tpu.vector_store %arg16[%c58, %c0_43], %11 {strides = array<i32>} : memref<146x128xbf16, #tpu.memory_space<vmem>>, vector<2x128xbf16>,
    %c128 = arith.constant 128 : index
    %c0_44 = arith.constant 0 : index
    %58 = tpu.strided_load %arg15[%c128, %c0_44] {strides = array<i32: 2, 1>} : memref<256x128xf32, #tpu.memory_space<vmem>>, vector<8x128xf32>
    %c129 = arith.constant 129 : index
    %c0_45 = arith.constant 0 : index
    %59 = tpu.strided_load %arg15[%c129, %c0_45] {strides = array<i32: 2, 1>} : memref<256x128xf32, #tpu.memory_space<vmem>>, vector<8x128xf32>
    %60 = arith.maximumf %58, %59 : vector<8x128xf32>
    %c144 = arith.constant 144 : index
    %c0_46 = arith.constant 0 : index
    %61 = tpu.strided_load %arg15[%c144, %c0_46] {strides = array<i32: 2, 1>} : memref<256x128xf32, #tpu.memory_space<vmem>>, vector<8x128xf32>
    %c145 = arith.constant 145 : index
    %c0_47 = arith.constant 0 : index
    %62 = tpu.strided_load %arg15[%c145, %c0_47] {strides = array<i32: 2, 1>} : memref<256x128xf32, #tpu.memory_space<vmem>>, vector<8x128xf32>
    %63 = arith.maximumf %61, %62 : vector<8x128xf32>
    %64 = arith.maximumf %60, %63 : vector<8x128xf32>
    %c60 = arith.constant 60 : index
    %c0_48 = arith.constant 0 : index
    %65 = vector.load %arg16[%c60, %c0_48] : memref<146x128xbf16, #tpu.memory_space<vmem>>, vector<2x128xbf16>
    tpu.vector_store %arg16[%c60, %c0_48], %11 {strides = array<i32>} : memref<146x128xbf16, #tpu.memory_space<vmem>>, vector<2x128xbf16>,
    %66 = arith.truncf %64 : vector<8x128xf32> to vector<8x128xbf16>
    %c62 = arith.constant 62 : index
    %c0_49 = arith.constant 0 : index
    %67 = vector.load %arg16[%c62, %c0_49] : memref<146x128xbf16, #tpu.memory_space<vmem>>, vector<8x128xbf16>
    tpu.vector_store %arg16[%c62, %c0_49], %66 {strides = array<i32>} : memref<146x128xbf16, #tpu.memory_space<vmem>>, vector<8x128xbf16>,
    %c70 = arith.constant 70 : index
    %c0_50 = arith.constant 0 : index
    %68 = vector.load %arg16[%c70, %c0_50] : memref<146x128xbf16, #tpu.memory_space<vmem>>, vector<2x128xbf16>
    tpu.vector_store %arg16[%c70, %c0_50], %11 {strides = array<i32>} : memref<146x128xbf16, #tpu.memory_space<vmem>>, vector<2x128xbf16>,
    %c160 = arith.constant 160 : index
    %c0_51 = arith.constant 0 : index
    %69 = tpu.strided_load %arg15[%c160, %c0_51] {strides = array<i32: 2, 1>} : memref<256x128xf32, #tpu.memory_space<vmem>>, vector<8x128xf32>
    %c161 = arith.constant 161 : index
    %c0_52 = arith.constant 0 : index
    %70 = tpu.strided_load %arg15[%c161, %c0_52] {strides = array<i32: 2, 1>} : memref<256x128xf32, #tpu.memory_space<vmem>>, vector<8x128xf32>
    %71 = arith.maximumf %69, %70 : vector<8x128xf32>
    %c176 = arith.constant 176 : index
    %c0_53 = arith.constant 0 : index
    %72 = tpu.strided_load %arg15[%c176, %c0_53] {strides = array<i32: 2, 1>} : memref<256x128xf32, #tpu.memory_space<vmem>>, vector<8x128xf32>
    %c177 = arith.constant 177 : index
    %c0_54 = arith.constant 0 : index
    %73 = tpu.strided_load %arg15[%c177, %c0_54] {strides = array<i32: 2, 1>} : memref<256x128xf32, #tpu.memory_space<vmem>>, vector<8x128xf32>
    %74 = arith.maximumf %72, %73 : vector<8x128xf32>
    %75 = arith.maximumf %71, %74 : vector<8x128xf32>
    %c72 = arith.constant 72 : index
    %c0_55 = arith.constant 0 : index
    %76 = vector.load %arg16[%c72, %c0_55] : memref<146x128xbf16, #tpu.memory_space<vmem>>, vector<2x128xbf16>
    tpu.vector_store %arg16[%c72, %c0_55], %11 {strides = array<i32>} : memref<146x128xbf16, #tpu.memory_space<vmem>>, vector<2x128xbf16>,
    %77 = arith.truncf %75 : vector<8x128xf32> to vector<8x128xbf16>
    %c74 = arith.constant 74 : index
    %c0_56 = arith.constant 0 : index
    %78 = vector.load %arg16[%c74, %c0_56] : memref<146x128xbf16, #tpu.memory_space<vmem>>, vector<8x128xbf16>
    tpu.vector_store %arg16[%c74, %c0_56], %77 {strides = array<i32>} : memref<146x128xbf16, #tpu.memory_space<vmem>>, vector<8x128xbf16>,
    %c82 = arith.constant 82 : index
    %c0_57 = arith.constant 0 : index
    %79 = vector.load %arg16[%c82, %c0_57] : memref<146x128xbf16, #tpu.memory_space<vmem>>, vector<2x128xbf16>
    tpu.vector_store %arg16[%c82, %c0_57], %11 {strides = array<i32>} : memref<146x128xbf16, #tpu.memory_space<vmem>>, vector<2x128xbf16>,
    %c192 = arith.constant 192 : index
    %c0_58 = arith.constant 0 : index
    %80 = tpu.strided_load %arg15[%c192, %c0_58] {strides = array<i32: 2, 1>} : memref<256x128xf32, #tpu.memory_space<vmem>>, vector<8x128xf32>
    %c193 = arith.constant 193 : index
    %c0_59 = arith.constant 0 : index
    %81 = tpu.strided_load %arg15[%c193, %c0_59] {strides = array<i32: 2, 1>} : memref<256x128xf32, #tpu.memory_space<vmem>>, vector<8x128xf32>
    %82 = arith.maximumf %80, %81 : vector<8x128xf32>
    %c208 = arith.constant 208 : index
    %c0_60 = arith.constant 0 : index
    %83 = tpu.strided_load %arg15[%c208, %c0_60] {strides = array<i32: 2, 1>} : memref<256x128xf32, #tpu.memory_space<vmem>>, vector<8x128xf32>
    %c209 = arith.constant 209 : index
    %c0_61 = arith.constant 0 : index
    %84 = tpu.strided_load %arg15[%c209, %c0_61] {strides = array<i32: 2, 1>} : memref<256x128xf32, #tpu.memory_space<vmem>>, vector<8x128xf32>
    %85 = arith.maximumf %83, %84 : vector<8x128xf32>
    %86 = arith.maximumf %82, %85 : vector<8x128xf32>
    %c84 = arith.constant 84 : index
    %c0_62 = arith.constant 0 : index
    %87 = vector.load %arg16[%c84, %c0_62] : memref<146x128xbf16, #tpu.memory_space<vmem>>, vector<2x128xbf16>
    tpu.vector_store %arg16[%c84, %c0_62], %11 {strides = array<i32>} : memref<146x128xbf16, #tpu.memory_space<vmem>>, vector<2x128xbf16>,
    %88 = arith.truncf %86 : vector<8x128xf32> to vector<8x128xbf16>
    %c86 = arith.constant 86 : index
    %c0_63 = arith.constant 0 : index
    %89 = vector.load %arg16[%c86, %c0_63] : memref<146x128xbf16, #tpu.memory_space<vmem>>, vector<8x128xbf16>
    tpu.vector_store %arg16[%c86, %c0_63], %88 {strides = array<i32>} : memref<146x128xbf16, #tpu.memory_space<vmem>>, vector<8x128xbf16>,
    %c94 = arith.constant 94 : index
    %c0_64 = arith.constant 0 : index
    %90 = vector.load %arg16[%c94, %c0_64] : memref<146x128xbf16, #tpu.memory_space<vmem>>, vector<2x128xbf16>
    tpu.vector_store %arg16[%c94, %c0_64], %11 {strides = array<i32>} : memref<146x128xbf16, #tpu.memory_space<vmem>>, vector<2x128xbf16>,
    %c224 = arith.constant 224 : index
    %c0_65 = arith.constant 0 : index
    %91 = tpu.strided_load %arg15[%c224, %c0_65] {strides = array<i32: 2, 1>} : memref<256x128xf32, #tpu.memory_space<vmem>>, vector<8x128xf32>
    %c225 = arith.constant 225 : index
    %c0_66 = arith.constant 0 : index
    %92 = tpu.strided_load %arg15[%c225, %c0_66] {strides = array<i32: 2, 1>} : memref<256x128xf32, #tpu.memory_space<vmem>>, vector<8x128xf32>
    %93 = arith.maximumf %91, %92 : vector<8x128xf32>
    %c240 = arith.constant 240 : index
    %c0_67 = arith.constant 0 : index
    %94 = tpu.strided_load %arg15[%c240, %c0_67] {strides = array<i32: 2, 1>} : memref<256x128xf32, #tpu.memory_space<vmem>>, vector<8x128xf32>
    %c241 = arith.constant 241 : index
    %c0_68 = arith.constant 0 : index
    %95 = tpu.strided_load %arg15[%c241, %c0_68] {strides = array<i32: 2, 1>} : memref<256x128xf32, #tpu.memory_space<vmem>>, vector<8x128xf32>
    %96 = arith.maximumf %94, %95 : vector<8x128xf32>
    %97 = arith.maximumf %93, %96 : vector<8x128xf32>
    %c96_69 = arith.constant 96 : index
    %c0_70 = arith.constant 0 : index
    %98 = vector.load %arg16[%c96_69, %c0_70] : memref<146x128xbf16, #tpu.memory_space<vmem>>, vector<2x128xbf16>
    tpu.vector_store %arg16[%c96_69, %c0_70], %11 {strides = array<i32>} : memref<146x128xbf16, #tpu.memory_space<vmem>>, vector<2x128xbf16>,
    %99 = arith.truncf %97 : vector<8x128xf32> to vector<8x128xbf16>
    %c98 = arith.constant 98 : index
    %c0_71 = arith.constant 0 : index
    %100 = vector.load %arg16[%c98, %c0_71] : memref<146x128xbf16, #tpu.memory_space<vmem>>, vector<8x128xbf16>
    tpu.vector_store %arg16[%c98, %c0_71], %99 {strides = array<i32>} : memref<146x128xbf16, #tpu.memory_space<vmem>>, vector<8x128xbf16>,
    %c106 = arith.constant 106 : index
    %c0_72 = arith.constant 0 : index
    %101 = vector.load %arg16[%c106, %c0_72] : memref<146x128xbf16, #tpu.memory_space<vmem>>, vector<2x128xbf16>
    tpu.vector_store %arg16[%c106, %c0_72], %11 {strides = array<i32>} : memref<146x128xbf16, #tpu.memory_space<vmem>>, vector<2x128xbf16>,
    %cst_73 = arith.constant 0.000000e+00 : bf16
    %102 = vector.broadcast %cst_73 : bf16 to vector<26x128xbf16>
    %c120 = arith.constant 120 : index
    %c0_74 = arith.constant 0 : index
    %103 = vector.load %arg16[%c120, %c0_74] : memref<146x128xbf16, #tpu.memory_space<vmem>>, vector<26x128xbf16>
    tpu.vector_store %arg16[%c120, %c0_74], %102 {strides = array<i32>} : memref<146x128xbf16, #tpu.memory_space<vmem>>, vector<26x128xbf16>,
    %c0_75 = arith.constant 0 : index
    %c0_76 = arith.constant 0 : index
    %104 = vector.load %arg16[%c0_75, %c0_76] : memref<146x128xbf16, #tpu.memory_space<vmem>>, vector<120x128xbf16>
    %c0_77 = arith.constant 0 : index
    %c0_78 = arith.constant 0 : index
    %c0_79 = arith.constant 0 : index
    %105 = vector.load %arg4[%c0_77, %c0_78, %c0_79] : memref<9x128x128xbf16, #tpu.memory_space<vmem>>, vector<1x128x128xbf16>
    %106 = vector.shape_cast %105 : vector<1x128x128xbf16> to vector<128x128xbf16>
    %cst_80 = arith.constant dense<0.000000e+00> : vector<120x128xf32>
    %107 = tpu.matmul %104, %106, %cst_80 {dimension_numbers = #tpu.dot_dimension_numbers<[1], [0], [0], [1], [0, 0, 1, 1], [], []>} : vector<120x128xbf16>, vector<128x128xbf16>, vector<120x128xf32> -> vector<120x128xf32>
    %c1_81 = arith.constant 1 : index
    %c0_82 = arith.constant 0 : index
    %108 = vector.load %arg16[%c1_81, %c0_82] : memref<146x128xbf16, #tpu.memory_space<vmem>>, vector<120x128xbf16>
    %c1_83 = arith.constant 1 : index
    %c0_84 = arith.constant 0 : index
    %c0_85 = arith.constant 0 : index
    %109 = vector.load %arg4[%c1_83, %c0_84, %c0_85] : memref<9x128x128xbf16, #tpu.memory_space<vmem>>, vector<1x128x128xbf16>
    %110 = vector.shape_cast %109 : vector<1x128x128xbf16> to vector<128x128xbf16>
    %cst_86 = arith.constant dense<0.000000e+00> : vector<120x128xf32>
    %111 = tpu.matmul %108, %110, %cst_86 {dimension_numbers = #tpu.dot_dimension_numbers<[1], [0], [0], [1], [0, 0, 1, 1], [], []>} : vector<120x128xbf16>, vector<128x128xbf16>, vector<120x128xf32> -> vector<120x128xf32>
    %112 = arith.addf %107, %111 : vector<120x128xf32>
    %c2 = arith.constant 2 : index
    %c0_87 = arith.constant 0 : index
    %113 = vector.load %arg16[%c2, %c0_87] : memref<146x128xbf16, #tpu.memory_space<vmem>>, vector<120x128xbf16>
    %c2_88 = arith.constant 2 : index
    %c0_89 = arith.constant 0 : index
    %c0_90 = arith.constant 0 : index
    %114 = vector.load %arg4[%c2_88, %c0_89, %c0_90] : memref<9x128x128xbf16, #tpu.memory_space<vmem>>, vector<1x128x128xbf16>
    %115 = vector.shape_cast %114 : vector<1x128x128xbf16> to vector<128x128xbf16>
    %cst_91 = arith.constant dense<0.000000e+00> : vector<120x128xf32>
    %116 = tpu.matmul %113, %115, %cst_91 {dimension_numbers = #tpu.dot_dimension_numbers<[1], [0], [0], [1], [0, 0, 1, 1], [], []>} : vector<120x128xbf16>, vector<128x128xbf16>, vector<120x128xf32> -> vector<120x128xf32>
    %117 = arith.addf %112, %116 : vector<120x128xf32>
    %c12_92 = arith.constant 12 : index
    %c0_93 = arith.constant 0 : index
    %118 = vector.load %arg16[%c12_92, %c0_93] : memref<146x128xbf16, #tpu.memory_space<vmem>>, vector<120x128xbf16>
    %c3 = arith.constant 3 : index
    %c0_94 = arith.constant 0 : index
    %c0_95 = arith.constant 0 : index
    %119 = vector.load %arg4[%c3, %c0_94, %c0_95] : memref<9x128x128xbf16, #tpu.memory_space<vmem>>, vector<1x128x128xbf16>
    %120 = vector.shape_cast %119 : vector<1x128x128xbf16> to vector<128x128xbf16>
    %cst_96 = arith.constant dense<0.000000e+00> : vector<120x128xf32>
    %121 = tpu.matmul %118, %120, %cst_96 {dimension_numbers = #tpu.dot_dimension_numbers<[1], [0], [0], [1], [0, 0, 1, 1], [], []>} : vector<120x128xbf16>, vector<128x128xbf16>, vector<120x128xf32> -> vector<120x128xf32>
    %122 = arith.addf %117, %121 : vector<120x128xf32>
    %c13 = arith.constant 13 : index
    %c0_97 = arith.constant 0 : index
    %123 = vector.load %arg16[%c13, %c0_97] : memref<146x128xbf16, #tpu.memory_space<vmem>>, vector<120x128xbf16>
    %c4 = arith.constant 4 : index
    %c0_98 = arith.constant 0 : index
    %c0_99 = arith.constant 0 : index
    %124 = vector.load %arg4[%c4, %c0_98, %c0_99] : memref<9x128x128xbf16, #tpu.memory_space<vmem>>, vector<1x128x128xbf16>
    %125 = vector.shape_cast %124 : vector<1x128x128xbf16> to vector<128x128xbf16>
    %cst_100 = arith.constant dense<0.000000e+00> : vector<120x128xf32>
    %126 = tpu.matmul %123, %125, %cst_100 {dimension_numbers = #tpu.dot_dimension_numbers<[1], [0], [0], [1], [0, 0, 1, 1], [], []>} : vector<120x128xbf16>, vector<128x128xbf16>, vector<120x128xf32> -> vector<120x128xf32>
    %127 = arith.addf %122, %126 : vector<120x128xf32>
    %c14_101 = arith.constant 14 : index
    %c0_102 = arith.constant 0 : index
    %128 = vector.load %arg16[%c14_101, %c0_102] : memref<146x128xbf16, #tpu.memory_space<vmem>>, vector<120x128xbf16>
    %c5 = arith.constant 5 : index
    %c0_103 = arith.constant 0 : index
    %c0_104 = arith.constant 0 : index
    %129 = vector.load %arg4[%c5, %c0_103, %c0_104] : memref<9x128x128xbf16, #tpu.memory_space<vmem>>, vector<1x128x128xbf16>
    %130 = vector.shape_cast %129 : vector<1x128x128xbf16> to vector<128x128xbf16>
    %cst_105 = arith.constant dense<0.000000e+00> : vector<120x128xf32>
    %131 = tpu.matmul %128, %130, %cst_105 {dimension_numbers = #tpu.dot_dimension_numbers<[1], [0], [0], [1], [0, 0, 1, 1], [], []>} : vector<120x128xbf16>, vector<128x128xbf16>, vector<120x128xf32> -> vector<120x128xf32>
    %132 = arith.addf %127, %131 : vector<120x128xf32>
    %c24_106 = arith.constant 24 : index
    %c0_107 = arith.constant 0 : index
    %133 = vector.load %arg16[%c24_106, %c0_107] : memref<146x128xbf16, #tpu.memory_space<vmem>>, vector<120x128xbf16>
    %c6 = arith.constant 6 : index
    %c0_108 = arith.constant 0 : index
    %c0_109 = arith.constant 0 : index
    %134 = vector.load %arg4[%c6, %c0_108, %c0_109] : memref<9x128x128xbf16, #tpu.memory_space<vmem>>, vector<1x128x128xbf16>
    %135 = vector.shape_cast %134 : vector<1x128x128xbf16> to vector<128x128xbf16>
    %cst_110 = arith.constant dense<0.000000e+00> : vector<120x128xf32>
    %136 = tpu.matmul %133, %135, %cst_110 {dimension_numbers = #tpu.dot_dimension_numbers<[1], [0], [0], [1], [0, 0, 1, 1], [], []>} : vector<120x128xbf16>, vector<128x128xbf16>, vector<120x128xf32> -> vector<120x128xf32>
    %137 = arith.addf %132, %136 : vector<120x128xf32>
    %c25 = arith.constant 25 : index
    %c0_111 = arith.constant 0 : index
    %138 = vector.load %arg16[%c25, %c0_111] : memref<146x128xbf16, #tpu.memory_space<vmem>>, vector<120x128xbf16>
    %c7 = arith.constant 7 : index
    %c0_112 = arith.constant 0 : index
    %c0_113 = arith.constant 0 : index
    %139 = vector.load %arg4[%c7, %c0_112, %c0_113] : memref<9x128x128xbf16, #tpu.memory_space<vmem>>, vector<1x128x128xbf16>
    %140 = vector.shape_cast %139 : vector<1x128x128xbf16> to vector<128x128xbf16>
    %cst_114 = arith.constant dense<0.000000e+00> : vector<120x128xf32>
    %141 = tpu.matmul %138, %140, %cst_114 {dimension_numbers = #tpu.dot_dimension_numbers<[1], [0], [0], [1], [0, 0, 1, 1], [], []>} : vector<120x128xbf16>, vector<128x128xbf16>, vector<120x128xf32> -> vector<120x128xf32>
    %142 = arith.addf %137, %141 : vector<120x128xf32>
    %c26_115 = arith.constant 26 : index
    %c0_116 = arith.constant 0 : index
    %143 = vector.load %arg16[%c26_115, %c0_116] : memref<146x128xbf16, #tpu.memory_space<vmem>>, vector<120x128xbf16>
    %c8 = arith.constant 8 : index
    %c0_117 = arith.constant 0 : index
    %c0_118 = arith.constant 0 : index
    %144 = vector.load %arg4[%c8, %c0_117, %c0_118] : memref<9x128x128xbf16, #tpu.memory_space<vmem>>, vector<1x128x128xbf16>
    %145 = vector.shape_cast %144 : vector<1x128x128xbf16> to vector<128x128xbf16>
    %cst_119 = arith.constant dense<0.000000e+00> : vector<120x128xf32>
    %146 = tpu.matmul %143, %145, %cst_119 {dimension_numbers = #tpu.dot_dimension_numbers<[1], [0], [0], [1], [0, 0, 1, 1], [], []>} : vector<120x128xbf16>, vector<128x128xbf16>, vector<120x128xf32> -> vector<120x128xf32>
    %147 = arith.addf %142, %146 : vector<120x128xf32>
    %c0_120 = arith.constant 0 : index
    %c0_121 = arith.constant 0 : index
    %148 = vector.load %arg5[%c0_120, %c0_121] : memref<1x128xf32, #tpu.memory_space<vmem>>, vector<1x128xf32>
    %149 = vector.broadcast %148 : vector<1x128xf32> to vector<120x128xf32>
    %150 = arith.addf %147, %149 : vector<120x128xf32>
    %cst_122 = arith.constant 0.000000e+00 : f32
    %151 = vector.broadcast %cst_122 : f32 to vector<120x128xf32>
    %152 = arith.maximumf %150, %151 : vector<120x128xf32>
    %c0_123 = arith.constant 0 : index
    %c0_124 = arith.constant 0 : index
    %153 = vector.load %arg17[%c0_123, %c0_124] : memref<120x128xf32, #tpu.memory_space<vmem>>, vector<120x128xf32>
    tpu.vector_store %arg17[%c0_123, %c0_124], %152 {strides = array<i32>} : memref<120x128xf32, #tpu.memory_space<vmem>>, vector<120x128xf32>,
    %cst_125 = arith.constant 0.000000e+00 : bf16
    %154 = vector.broadcast %cst_125 : bf16 to vector<8x128xbf16>
    %cst_126 = arith.constant 0.000000e+00 : bf16
    %155 = vector.broadcast %cst_126 : bf16 to vector<2x128xbf16>
    %c0_127 = arith.constant 0 : index
    %c0_128 = arith.constant 0 : index
    %156 = vector.load %arg18[%c0_127, %c0_128] : memref<66x128xbf16, #tpu.memory_space<vmem>>, vector<8x128xbf16>
    tpu.vector_store %arg18[%c0_127, %c0_128], %154 {strides = array<i32>} : memref<66x128xbf16, #tpu.memory_space<vmem>>, vector<8x128xbf16>,
    %c40 = arith.constant 40 : index
    %c0_129 = arith.constant 0 : index
    %157 = vector.load %arg18[%c40, %c0_129] : memref<66x128xbf16, #tpu.memory_space<vmem>>, vector<8x128xbf16>
    tpu.vector_store %arg18[%c40, %c0_129], %154 {strides = array<i32>} : memref<66x128xbf16, #tpu.memory_space<vmem>>, vector<8x128xbf16>,
    %c1_130 = arith.constant 1 : index
    %c0_131 = arith.constant 0 : index
    %158 = tpu.strided_load %arg17[%c1_130, %c0_131] {strides = array<i32: 2, 1>} : memref<120x128xf32, #tpu.memory_space<vmem>>, vector<4x128xf32>
    %c2_132 = arith.constant 2 : index
    %c0_133 = arith.constant 0 : index
    %159 = tpu.strided_load %arg17[%c2_132, %c0_133] {strides = array<i32: 2, 1>} : memref<120x128xf32, #tpu.memory_space<vmem>>, vector<4x128xf32>
    %160 = arith.maximumf %158, %159 : vector<4x128xf32>
    %c13_134 = arith.constant 13 : index
    %c0_135 = arith.constant 0 : index
    %161 = tpu.strided_load %arg17[%c13_134, %c0_135] {strides = array<i32: 2, 1>} : memref<120x128xf32, #tpu.memory_space<vmem>>, vector<4x128xf32>
    %c14_136 = arith.constant 14 : index
    %c0_137 = arith.constant 0 : index
    %162 = tpu.strided_load %arg17[%c14_136, %c0_137] {strides = array<i32: 2, 1>} : memref<120x128xf32, #tpu.memory_space<vmem>>, vector<4x128xf32>
    %163 = arith.maximumf %161, %162 : vector<4x128xf32>
    %164 = arith.maximumf %160, %163 : vector<4x128xf32>
    %c8_138 = arith.constant 8 : index
    %c0_139 = arith.constant 0 : index
    %165 = vector.load %arg18[%c8_138, %c0_139] : memref<66x128xbf16, #tpu.memory_space<vmem>>, vector<2x128xbf16>
    tpu.vector_store %arg18[%c8_138, %c0_139], %155 {strides = array<i32>} : memref<66x128xbf16, #tpu.memory_space<vmem>>, vector<2x128xbf16>,
    %166 = arith.truncf %164 : vector<4x128xf32> to vector<4x128xbf16>
    %c10 = arith.constant 10 : index
    %c0_140 = arith.constant 0 : index
    %167 = vector.load %arg18[%c10, %c0_140] : memref<66x128xbf16, #tpu.memory_space<vmem>>, vector<4x128xbf16>
    tpu.vector_store %arg18[%c10, %c0_140], %166 {strides = array<i32>} : memref<66x128xbf16, #tpu.memory_space<vmem>>, vector<4x128xbf16>,
    %c14_141 = arith.constant 14 : index
    %c0_142 = arith.constant 0 : index
    %168 = vector.load %arg18[%c14_141, %c0_142] : memref<66x128xbf16, #tpu.memory_space<vmem>>, vector<2x128xbf16>
    tpu.vector_store %arg18[%c14_141, %c0_142], %155 {strides = array<i32>} : memref<66x128xbf16, #tpu.memory_space<vmem>>, vector<2x128xbf16>,
    %c25_143 = arith.constant 25 : index
    %c0_144 = arith.constant 0 : index
    %169 = tpu.strided_load %arg17[%c25_143, %c0_144] {strides = array<i32: 2, 1>} : memref<120x128xf32, #tpu.memory_space<vmem>>, vector<4x128xf32>
    %c26_145 = arith.constant 26 : index
    %c0_146 = arith.constant 0 : index
    %170 = tpu.strided_load %arg17[%c26_145, %c0_146] {strides = array<i32: 2, 1>} : memref<120x128xf32, #tpu.memory_space<vmem>>, vector<4x128xf32>
    %171 = arith.maximumf %169, %170 : vector<4x128xf32>
    %c37 = arith.constant 37 : index
    %c0_147 = arith.constant 0 : index
    %172 = tpu.strided_load %arg17[%c37, %c0_147] {strides = array<i32: 2, 1>} : memref<120x128xf32, #tpu.memory_space<vmem>>, vector<4x128xf32>
    %c38_148 = arith.constant 38 : index
    %c0_149 = arith.constant 0 : index
    %173 = tpu.strided_load %arg17[%c38_148, %c0_149] {strides = array<i32: 2, 1>} : memref<120x128xf32, #tpu.memory_space<vmem>>, vector<4x128xf32>
    %174 = arith.maximumf %172, %173 : vector<4x128xf32>
    %175 = arith.maximumf %171, %174 : vector<4x128xf32>
    %c16_150 = arith.constant 16 : index
    %c0_151 = arith.constant 0 : index
    %176 = vector.load %arg18[%c16_150, %c0_151] : memref<66x128xbf16, #tpu.memory_space<vmem>>, vector<2x128xbf16>
    tpu.vector_store %arg18[%c16_150, %c0_151], %155 {strides = array<i32>} : memref<66x128xbf16, #tpu.memory_space<vmem>>, vector<2x128xbf16>,
    %177 = arith.truncf %175 : vector<4x128xf32> to vector<4x128xbf16>
    %c18 = arith.constant 18 : index
    %c0_152 = arith.constant 0 : index
    %178 = vector.load %arg18[%c18, %c0_152] : memref<66x128xbf16, #tpu.memory_space<vmem>>, vector<4x128xbf16>
    tpu.vector_store %arg18[%c18, %c0_152], %177 {strides = array<i32>} : memref<66x128xbf16, #tpu.memory_space<vmem>>, vector<4x128xbf16>,
    %c22_153 = arith.constant 22 : index
    %c0_154 = arith.constant 0 : index
    %179 = vector.load %arg18[%c22_153, %c0_154] : memref<66x128xbf16, #tpu.memory_space<vmem>>, vector<2x128xbf16>
    tpu.vector_store %arg18[%c22_153, %c0_154], %155 {strides = array<i32>} : memref<66x128xbf16, #tpu.memory_space<vmem>>, vector<2x128xbf16>,
    %c49_155 = arith.constant 49 : index
    %c0_156 = arith.constant 0 : index
    %180 = tpu.strided_load %arg17[%c49_155, %c0_156] {strides = array<i32: 2, 1>} : memref<120x128xf32, #tpu.memory_space<vmem>>, vector<4x128xf32>
    %c50_157 = arith.constant 50 : index
    %c0_158 = arith.constant 0 : index
    %181 = tpu.strided_load %arg17[%c50_157, %c0_158] {strides = array<i32: 2, 1>} : memref<120x128xf32, #tpu.memory_space<vmem>>, vector<4x128xf32>
    %182 = arith.maximumf %180, %181 : vector<4x128xf32>
    %c61 = arith.constant 61 : index
    %c0_159 = arith.constant 0 : index
    %183 = tpu.strided_load %arg17[%c61, %c0_159] {strides = array<i32: 2, 1>} : memref<120x128xf32, #tpu.memory_space<vmem>>, vector<4x128xf32>
    %c62_160 = arith.constant 62 : index
    %c0_161 = arith.constant 0 : index
    %184 = tpu.strided_load %arg17[%c62_160, %c0_161] {strides = array<i32: 2, 1>} : memref<120x128xf32, #tpu.memory_space<vmem>>, vector<4x128xf32>
    %185 = arith.maximumf %183, %184 : vector<4x128xf32>
    %186 = arith.maximumf %182, %185 : vector<4x128xf32>
    %c24_162 = arith.constant 24 : index
    %c0_163 = arith.constant 0 : index
    %187 = vector.load %arg18[%c24_162, %c0_163] : memref<66x128xbf16, #tpu.memory_space<vmem>>, vector<2x128xbf16>
    tpu.vector_store %arg18[%c24_162, %c0_163], %155 {strides = array<i32>} : memref<66x128xbf16, #tpu.memory_space<vmem>>, vector<2x128xbf16>,
    %188 = arith.truncf %186 : vector<4x128xf32> to vector<4x128xbf16>
    %c26_164 = arith.constant 26 : index
    %c0_165 = arith.constant 0 : index
    %189 = vector.load %arg18[%c26_164, %c0_165] : memref<66x128xbf16, #tpu.memory_space<vmem>>, vector<4x128xbf16>
    tpu.vector_store %arg18[%c26_164, %c0_165], %188 {strides = array<i32>} : memref<66x128xbf16, #tpu.memory_space<vmem>>, vector<4x128xbf16>,
    %c30 = arith.constant 30 : index
    %c0_166 = arith.constant 0 : index
    %190 = vector.load %arg18[%c30, %c0_166] : memref<66x128xbf16, #tpu.memory_space<vmem>>, vector<2x128xbf16>
    tpu.vector_store %arg18[%c30, %c0_166], %155 {strides = array<i32>} : memref<66x128xbf16, #tpu.memory_space<vmem>>, vector<2x128xbf16>,
    %c73 = arith.constant 73 : index
    %c0_167 = arith.constant 0 : index
    %191 = tpu.strided_load %arg17[%c73, %c0_167] {strides = array<i32: 2, 1>} : memref<120x128xf32, #tpu.memory_space<vmem>>, vector<4x128xf32>
    %c74_168 = arith.constant 74 : index
    %c0_169 = arith.constant 0 : index
    %192 = tpu.strided_load %arg17[%c74_168, %c0_169] {strides = array<i32: 2, 1>} : memref<120x128xf32, #tpu.memory_space<vmem>>, vector<4x128xf32>
    %193 = arith.maximumf %191, %192 : vector<4x128xf32>
    %c85 = arith.constant 85 : index
    %c0_170 = arith.constant 0 : index
    %194 = tpu.strided_load %arg17[%c85, %c0_170] {strides = array<i32: 2, 1>} : memref<120x128xf32, #tpu.memory_space<vmem>>, vector<4x128xf32>
    %c86_171 = arith.constant 86 : index
    %c0_172 = arith.constant 0 : index
    %195 = tpu.strided_load %arg17[%c86_171, %c0_172] {strides = array<i32: 2, 1>} : memref<120x128xf32, #tpu.memory_space<vmem>>, vector<4x128xf32>
    %196 = arith.maximumf %194, %195 : vector<4x128xf32>
    %197 = arith.maximumf %193, %196 : vector<4x128xf32>
    %c32_173 = arith.constant 32 : index
    %c0_174 = arith.constant 0 : index
    %198 = vector.load %arg18[%c32_173, %c0_174] : memref<66x128xbf16, #tpu.memory_space<vmem>>, vector<2x128xbf16>
    tpu.vector_store %arg18[%c32_173, %c0_174], %155 {strides = array<i32>} : memref<66x128xbf16, #tpu.memory_space<vmem>>, vector<2x128xbf16>,
    %199 = arith.truncf %197 : vector<4x128xf32> to vector<4x128xbf16>
    %c34_175 = arith.constant 34 : index
    %c0_176 = arith.constant 0 : index
    %200 = vector.load %arg18[%c34_175, %c0_176] : memref<66x128xbf16, #tpu.memory_space<vmem>>, vector<4x128xbf16>
    tpu.vector_store %arg18[%c34_175, %c0_176], %199 {strides = array<i32>} : memref<66x128xbf16, #tpu.memory_space<vmem>>, vector<4x128xbf16>,
    %c38_177 = arith.constant 38 : index
    %c0_178 = arith.constant 0 : index
    %201 = vector.load %arg18[%c38_177, %c0_178] : memref<66x128xbf16, #tpu.memory_space<vmem>>, vector<2x128xbf16>
    tpu.vector_store %arg18[%c38_177, %c0_178], %155 {strides = array<i32>} : memref<66x128xbf16, #tpu.memory_space<vmem>>, vector<2x128xbf16>,
    %cst_179 = arith.constant 0.000000e+00 : bf16
    %202 = vector.broadcast %cst_179 : bf16 to vector<18x128xbf16>
    %c48_180 = arith.constant 48 : index
    %c0_181 = arith.constant 0 : index
    %203 = vector.load %arg18[%c48_180, %c0_181] : memref<66x128xbf16, #tpu.memory_space<vmem>>, vector<18x128xbf16>
    tpu.vector_store %arg18[%c48_180, %c0_181], %202 {strides = array<i32>} : memref<66x128xbf16, #tpu.memory_space<vmem>>, vector<18x128xbf16>,
    %c0_182 = arith.constant 0 : index
    %c0_183 = arith.constant 0 : index
    %204 = vector.load %arg18[%c0_182, %c0_183] : memref<66x128xbf16, #tpu.memory_space<vmem>>, vector<48x128xbf16>
    %c0_184 = arith.constant 0 : index
    %c0_185 = arith.constant 0 : index
    %c0_186 = arith.constant 0 : index
    %205 = vector.load %arg6[%c0_184, %c0_185, %c0_186] : memref<9x128x128xbf16, #tpu.memory_space<vmem>>, vector<1x128x128xbf16>
    %206 = vector.shape_cast %205 : vector<1x128x128xbf16> to vector<128x128xbf16>
    %cst_187 = arith.constant dense<0.000000e+00> : vector<48x128xf32>
    %207 = tpu.matmul %204, %206, %cst_187 {dimension_numbers = #tpu.dot_dimension_numbers<[1], [0], [0], [1], [0, 0, 1, 1], [], []>} : vector<48x128xbf16>, vector<128x128xbf16>, vector<48x128xf32> -> vector<48x128xf32>
    %c1_188 = arith.constant 1 : index
    %c0_189 = arith.constant 0 : index
    %208 = vector.load %arg18[%c1_188, %c0_189] : memref<66x128xbf16, #tpu.memory_space<vmem>>, vector<48x128xbf16>
    %c1_190 = arith.constant 1 : index
    %c0_191 = arith.constant 0 : index
    %c0_192 = arith.constant 0 : index
    %209 = vector.load %arg6[%c1_190, %c0_191, %c0_192] : memref<9x128x128xbf16, #tpu.memory_space<vmem>>, vector<1x128x128xbf16>
    %210 = vector.shape_cast %209 : vector<1x128x128xbf16> to vector<128x128xbf16>
    %cst_193 = arith.constant dense<0.000000e+00> : vector<48x128xf32>
    %211 = tpu.matmul %208, %210, %cst_193 {dimension_numbers = #tpu.dot_dimension_numbers<[1], [0], [0], [1], [0, 0, 1, 1], [], []>} : vector<48x128xbf16>, vector<128x128xbf16>, vector<48x128xf32> -> vector<48x128xf32>
    %212 = arith.addf %207, %211 : vector<48x128xf32>
    %c2_194 = arith.constant 2 : index
    %c0_195 = arith.constant 0 : index
    %213 = vector.load %arg18[%c2_194, %c0_195] : memref<66x128xbf16, #tpu.memory_space<vmem>>, vector<48x128xbf16>
    %c2_196 = arith.constant 2 : index
    %c0_197 = arith.constant 0 : index
    %c0_198 = arith.constant 0 : index
    %214 = vector.load %arg6[%c2_196, %c0_197, %c0_198] : memref<9x128x128xbf16, #tpu.memory_space<vmem>>, vector<1x128x128xbf16>
    %215 = vector.shape_cast %214 : vector<1x128x128xbf16> to vector<128x128xbf16>
    %cst_199 = arith.constant dense<0.000000e+00> : vector<48x128xf32>
    %216 = tpu.matmul %213, %215, %cst_199 {dimension_numbers = #tpu.dot_dimension_numbers<[1], [0], [0], [1], [0, 0, 1, 1], [], []>} : vector<48x128xbf16>, vector<128x128xbf16>, vector<48x128xf32> -> vector<48x128xf32>
    %217 = arith.addf %212, %216 : vector<48x128xf32>
    %c8_200 = arith.constant 8 : index
    %c0_201 = arith.constant 0 : index
    %218 = vector.load %arg18[%c8_200, %c0_201] : memref<66x128xbf16, #tpu.memory_space<vmem>>, vector<48x128xbf16>
    %c3_202 = arith.constant 3 : index
    %c0_203 = arith.constant 0 : index
    %c0_204 = arith.constant 0 : index
    %219 = vector.load %arg6[%c3_202, %c0_203, %c0_204] : memref<9x128x128xbf16, #tpu.memory_space<vmem>>, vector<1x128x128xbf16>
    %220 = vector.shape_cast %219 : vector<1x128x128xbf16> to vector<128x128xbf16>
    %cst_205 = arith.constant dense<0.000000e+00> : vector<48x128xf32>
    %221 = tpu.matmul %218, %220, %cst_205 {dimension_numbers = #tpu.dot_dimension_numbers<[1], [0], [0], [1], [0, 0, 1, 1], [], []>} : vector<48x128xbf16>, vector<128x128xbf16>, vector<48x128xf32> -> vector<48x128xf32>
    %222 = arith.addf %217, %221 : vector<48x128xf32>
    %c9 = arith.constant 9 : index
    %c0_206 = arith.constant 0 : index
    %223 = vector.load %arg18[%c9, %c0_206] : memref<66x128xbf16, #tpu.memory_space<vmem>>, vector<48x128xbf16>
    %c4_207 = arith.constant 4 : index
    %c0_208 = arith.constant 0 : index
    %c0_209 = arith.constant 0 : index
    %224 = vector.load %arg6[%c4_207, %c0_208, %c0_209] : memref<9x128x128xbf16, #tpu.memory_space<vmem>>, vector<1x128x128xbf16>
    %225 = vector.shape_cast %224 : vector<1x128x128xbf16> to vector<128x128xbf16>
    %cst_210 = arith.constant dense<0.000000e+00> : vector<48x128xf32>
    %226 = tpu.matmul %223, %225, %cst_210 {dimension_numbers = #tpu.dot_dimension_numbers<[1], [0], [0], [1], [0, 0, 1, 1], [], []>} : vector<48x128xbf16>, vector<128x128xbf16>, vector<48x128xf32> -> vector<48x128xf32>
    %227 = arith.addf %222, %226 : vector<48x128xf32>
    %c10_211 = arith.constant 10 : index
    %c0_212 = arith.constant 0 : index
    %228 = vector.load %arg18[%c10_211, %c0_212] : memref<66x128xbf16, #tpu.memory_space<vmem>>, vector<48x128xbf16>
    %c5_213 = arith.constant 5 : index
    %c0_214 = arith.constant 0 : index
    %c0_215 = arith.constant 0 : index
    %229 = vector.load %arg6[%c5_213, %c0_214, %c0_215] : memref<9x128x128xbf16, #tpu.memory_space<vmem>>, vector<1x128x128xbf16>
    %230 = vector.shape_cast %229 : vector<1x128x128xbf16> to vector<128x128xbf16>
    %cst_216 = arith.constant dense<0.000000e+00> : vector<48x128xf32>
    %231 = tpu.matmul %228, %230, %cst_216 {dimension_numbers = #tpu.dot_dimension_numbers<[1], [0], [0], [1], [0, 0, 1, 1], [], []>} : vector<48x128xbf16>, vector<128x128xbf16>, vector<48x128xf32> -> vector<48x128xf32>
    %232 = arith.addf %227, %231 : vector<48x128xf32>
    %c16_217 = arith.constant 16 : index
    %c0_218 = arith.constant 0 : index
    %233 = vector.load %arg18[%c16_217, %c0_218] : memref<66x128xbf16, #tpu.memory_space<vmem>>, vector<48x128xbf16>
    %c6_219 = arith.constant 6 : index
    %c0_220 = arith.constant 0 : index
    %c0_221 = arith.constant 0 : index
    %234 = vector.load %arg6[%c6_219, %c0_220, %c0_221] : memref<9x128x128xbf16, #tpu.memory_space<vmem>>, vector<1x128x128xbf16>
    %235 = vector.shape_cast %234 : vector<1x128x128xbf16> to vector<128x128xbf16>
    %cst_222 = arith.constant dense<0.000000e+00> : vector<48x128xf32>
    %236 = tpu.matmul %233, %235, %cst_222 {dimension_numbers = #tpu.dot_dimension_numbers<[1], [0], [0], [1], [0, 0, 1, 1], [], []>} : vector<48x128xbf16>, vector<128x128xbf16>, vector<48x128xf32> -> vector<48x128xf32>
    %237 = arith.addf %232, %236 : vector<48x128xf32>
    %c17_223 = arith.constant 17 : index
    %c0_224 = arith.constant 0 : index
    %238 = vector.load %arg18[%c17_223, %c0_224] : memref<66x128xbf16, #tpu.memory_space<vmem>>, vector<48x128xbf16>
    %c7_225 = arith.constant 7 : index
    %c0_226 = arith.constant 0 : index
    %c0_227 = arith.constant 0 : index
    %239 = vector.load %arg6[%c7_225, %c0_226, %c0_227] : memref<9x128x128xbf16, #tpu.memory_space<vmem>>, vector<1x128x128xbf16>
    %240 = vector.shape_cast %239 : vector<1x128x128xbf16> to vector<128x128xbf16>
    %cst_228 = arith.constant dense<0.000000e+00> : vector<48x128xf32>
    %241 = tpu.matmul %238, %240, %cst_228 {dimension_numbers = #tpu.dot_dimension_numbers<[1], [0], [0], [1], [0, 0, 1, 1], [], []>} : vector<48x128xbf16>, vector<128x128xbf16>, vector<48x128xf32> -> vector<48x128xf32>
    %242 = arith.addf %237, %241 : vector<48x128xf32>
    %c18_229 = arith.constant 18 : index
    %c0_230 = arith.constant 0 : index
    %243 = vector.load %arg18[%c18_229, %c0_230] : memref<66x128xbf16, #tpu.memory_space<vmem>>, vector<48x128xbf16>
    %c8_231 = arith.constant 8 : index
    %c0_232 = arith.constant 0 : index
    %c0_233 = arith.constant 0 : index
    %244 = vector.load %arg6[%c8_231, %c0_232, %c0_233] : memref<9x128x128xbf16, #tpu.memory_space<vmem>>, vector<1x128x128xbf16>
    %245 = vector.shape_cast %244 : vector<1x128x128xbf16> to vector<128x128xbf16>
    %cst_234 = arith.constant dense<0.000000e+00> : vector<48x128xf32>
    %246 = tpu.matmul %243, %245, %cst_234 {dimension_numbers = #tpu.dot_dimension_numbers<[1], [0], [0], [1], [0, 0, 1, 1], [], []>} : vector<48x128xbf16>, vector<128x128xbf16>, vector<48x128xf32> -> vector<48x128xf32>
    %247 = arith.addf %242, %246 : vector<48x128xf32>
    %c0_235 = arith.constant 0 : index
    %c0_236 = arith.constant 0 : index
    %248 = vector.load %arg7[%c0_235, %c0_236] : memref<1x128xf32, #tpu.memory_space<vmem>>, vector<1x128xf32>
    %249 = vector.broadcast %248 : vector<1x128xf32> to vector<48x128xf32>
    %250 = arith.addf %247, %249 : vector<48x128xf32>
    %cst_237 = arith.constant 0.000000e+00 : f32
    %251 = vector.broadcast %cst_237 : f32 to vector<48x128xf32>
    %252 = arith.maximumf %250, %251 : vector<48x128xf32>
    %c0_238 = arith.constant 0 : index
    %c0_239 = arith.constant 0 : index
    %253 = vector.load %arg19[%c0_238, %c0_239] : memref<48x128xf32, #tpu.memory_space<vmem>>, vector<48x128xf32>
    tpu.vector_store %arg19[%c0_238, %c0_239], %252 {strides = array<i32>} : memref<48x128xf32, #tpu.memory_space<vmem>>, vector<48x128xf32>,
    %cst_240 = arith.constant 0.000000e+00 : bf16
    %254 = vector.broadcast %cst_240 : bf16 to vector<6x128xbf16>
    %cst_241 = arith.constant 0.000000e+00 : bf16
    %255 = vector.broadcast %cst_241 : bf16 to vector<2x128xbf16>
    %c0_242 = arith.constant 0 : index
    %c0_243 = arith.constant 0 : index
    %256 = vector.load %arg20[%c0_242, %c0_243] : memref<38x128xbf16, #tpu.memory_space<vmem>>, vector<6x128xbf16>
    tpu.vector_store %arg20[%c0_242, %c0_243], %254 {strides = array<i32>} : memref<38x128xbf16, #tpu.memory_space<vmem>>, vector<6x128xbf16>,
    %c18_244 = arith.constant 18 : index
    %c0_245 = arith.constant 0 : index
    %257 = vector.load %arg20[%c18_244, %c0_245] : memref<38x128xbf16, #tpu.memory_space<vmem>>, vector<6x128xbf16>
    tpu.vector_store %arg20[%c18_244, %c0_245], %254 {strides = array<i32>} : memref<38x128xbf16, #tpu.memory_space<vmem>>, vector<6x128xbf16>,
    %c1_246 = arith.constant 1 : index
    %c0_247 = arith.constant 0 : index
    %258 = tpu.strided_load %arg19[%c1_246, %c0_247] {strides = array<i32: 2, 1>} : memref<48x128xf32, #tpu.memory_space<vmem>>, vector<2x128xf32>
    %c2_248 = arith.constant 2 : index
    %c0_249 = arith.constant 0 : index
    %259 = tpu.strided_load %arg19[%c2_248, %c0_249] {strides = array<i32: 2, 1>} : memref<48x128xf32, #tpu.memory_space<vmem>>, vector<2x128xf32>
    %260 = arith.maximumf %258, %259 : vector<2x128xf32>
    %c9_250 = arith.constant 9 : index
    %c0_251 = arith.constant 0 : index
    %261 = tpu.strided_load %arg19[%c9_250, %c0_251] {strides = array<i32: 2, 1>} : memref<48x128xf32, #tpu.memory_space<vmem>>, vector<2x128xf32>
    %c10_252 = arith.constant 10 : index
    %c0_253 = arith.constant 0 : index
    %262 = tpu.strided_load %arg19[%c10_252, %c0_253] {strides = array<i32: 2, 1>} : memref<48x128xf32, #tpu.memory_space<vmem>>, vector<2x128xf32>
    %263 = arith.maximumf %261, %262 : vector<2x128xf32>
    %264 = arith.maximumf %260, %263 : vector<2x128xf32>
    %c6_254 = arith.constant 6 : index
    %c0_255 = arith.constant 0 : index
    %265 = vector.load %arg20[%c6_254, %c0_255] : memref<38x128xbf16, #tpu.memory_space<vmem>>, vector<2x128xbf16>
    tpu.vector_store %arg20[%c6_254, %c0_255], %255 {strides = array<i32>} : memref<38x128xbf16, #tpu.memory_space<vmem>>, vector<2x128xbf16>,
    %266 = arith.truncf %264 : vector<2x128xf32> to vector<2x128xbf16>
    %c8_256 = arith.constant 8 : index
    %c0_257 = arith.constant 0 : index
    %267 = vector.load %arg20[%c8_256, %c0_257] : memref<38x128xbf16, #tpu.memory_space<vmem>>, vector<2x128xbf16>
    tpu.vector_store %arg20[%c8_256, %c0_257], %266 {strides = array<i32>} : memref<38x128xbf16, #tpu.memory_space<vmem>>, vector<2x128xbf16>,
    %c10_258 = arith.constant 10 : index
    %c0_259 = arith.constant 0 : index
    %268 = vector.load %arg20[%c10_258, %c0_259] : memref<38x128xbf16, #tpu.memory_space<vmem>>, vector<2x128xbf16>
    tpu.vector_store %arg20[%c10_258, %c0_259], %255 {strides = array<i32>} : memref<38x128xbf16, #tpu.memory_space<vmem>>, vector<2x128xbf16>,
    %c17_260 = arith.constant 17 : index
    %c0_261 = arith.constant 0 : index
    %269 = tpu.strided_load %arg19[%c17_260, %c0_261] {strides = array<i32: 2, 1>} : memref<48x128xf32, #tpu.memory_space<vmem>>, vector<2x128xf32>
    %c18_262 = arith.constant 18 : index
    %c0_263 = arith.constant 0 : index
    %270 = tpu.strided_load %arg19[%c18_262, %c0_263] {strides = array<i32: 2, 1>} : memref<48x128xf32, #tpu.memory_space<vmem>>, vector<2x128xf32>
    %271 = arith.maximumf %269, %270 : vector<2x128xf32>
    %c25_264 = arith.constant 25 : index
    %c0_265 = arith.constant 0 : index
    %272 = tpu.strided_load %arg19[%c25_264, %c0_265] {strides = array<i32: 2, 1>} : memref<48x128xf32, #tpu.memory_space<vmem>>, vector<2x128xf32>
    %c26_266 = arith.constant 26 : index
    %c0_267 = arith.constant 0 : index
    %273 = tpu.strided_load %arg19[%c26_266, %c0_267] {strides = array<i32: 2, 1>} : memref<48x128xf32, #tpu.memory_space<vmem>>, vector<2x128xf32>
    %274 = arith.maximumf %272, %273 : vector<2x128xf32>
    %275 = arith.maximumf %271, %274 : vector<2x128xf32>
    %c12_268 = arith.constant 12 : index
    %c0_269 = arith.constant 0 : index
    %276 = vector.load %arg20[%c12_268, %c0_269] : memref<38x128xbf16, #tpu.memory_space<vmem>>, vector<2x128xbf16>
    tpu.vector_store %arg20[%c12_268, %c0_269], %255 {strides = array<i32>} : memref<38x128xbf16, #tpu.memory_space<vmem>>, vector<2x128xbf16>,
    %277 = arith.truncf %275 : vector<2x128xf32> to vector<2x128xbf16>
    %c14_270 = arith.constant 14 : index
    %c0_271 = arith.constant 0 : index
    %278 = vector.load %arg20[%c14_270, %c0_271] : memref<38x128xbf16, #tpu.memory_space<vmem>>, vector<2x128xbf16>
    tpu.vector_store %arg20[%c14_270, %c0_271], %277 {strides = array<i32>} : memref<38x128xbf16, #tpu.memory_space<vmem>>, vector<2x128xbf16>,
    %c16_272 = arith.constant 16 : index
    %c0_273 = arith.constant 0 : index
    %279 = vector.load %arg20[%c16_272, %c0_273] : memref<38x128xbf16, #tpu.memory_space<vmem>>, vector<2x128xbf16>
    tpu.vector_store %arg20[%c16_272, %c0_273], %255 {strides = array<i32>} : memref<38x128xbf16, #tpu.memory_space<vmem>>, vector<2x128xbf16>,
    %cst_274 = arith.constant 0.000000e+00 : bf16
    %280 = vector.broadcast %cst_274 : bf16 to vector<14x128xbf16>
    %c24_275 = arith.constant 24 : index
    %c0_276 = arith.constant 0 : index
    %281 = vector.load %arg20[%c24_275, %c0_276] : memref<38x128xbf16, #tpu.memory_space<vmem>>, vector<14x128xbf16>
    tpu.vector_store %arg20[%c24_275, %c0_276], %280 {strides = array<i32>} : memref<38x128xbf16, #tpu.memory_space<vmem>>, vector<14x128xbf16>,
    %c0_277 = arith.constant 0 : index
    %c0_278 = arith.constant 0 : index
    %282 = vector.load %arg20[%c0_277, %c0_278] : memref<38x128xbf16, #tpu.memory_space<vmem>>, vector<24x128xbf16>
    %c0_279 = arith.constant 0 : index
    %c0_280 = arith.constant 0 : index
    %c0_281 = arith.constant 0 : index
    %283 = vector.load %arg8[%c0_279, %c0_280, %c0_281] : memref<9x128x128xbf16, #tpu.memory_space<vmem>>, vector<1x128x128xbf16>
    %284 = vector.shape_cast %283 : vector<1x128x128xbf16> to vector<128x128xbf16>
    %cst_282 = arith.constant dense<0.000000e+00> : vector<24x128xf32>
    %285 = tpu.matmul %282, %284, %cst_282 {dimension_numbers = #tpu.dot_dimension_numbers<[1], [0], [0], [1], [0, 0, 1, 1], [], []>} : vector<24x128xbf16>, vector<128x128xbf16>, vector<24x128xf32> -> vector<24x128xf32>
    %c1_283 = arith.constant 1 : index
    %c0_284 = arith.constant 0 : index
    %286 = vector.load %arg20[%c1_283, %c0_284] : memref<38x128xbf16, #tpu.memory_space<vmem>>, vector<24x128xbf16>
    %c1_285 = arith.constant 1 : index
    %c0_286 = arith.constant 0 : index
    %c0_287 = arith.constant 0 : index
    %287 = vector.load %arg8[%c1_285, %c0_286, %c0_287] : memref<9x128x128xbf16, #tpu.memory_space<vmem>>, vector<1x128x128xbf16>
    %288 = vector.shape_cast %287 : vector<1x128x128xbf16> to vector<128x128xbf16>
    %cst_288 = arith.constant dense<0.000000e+00> : vector<24x128xf32>
    %289 = tpu.matmul %286, %288, %cst_288 {dimension_numbers = #tpu.dot_dimension_numbers<[1], [0], [0], [1], [0, 0, 1, 1], [], []>} : vector<24x128xbf16>, vector<128x128xbf16>, vector<24x128xf32> -> vector<24x128xf32>
    %290 = arith.addf %285, %289 : vector<24x128xf32>
    %c2_289 = arith.constant 2 : index
    %c0_290 = arith.constant 0 : index
    %291 = vector.load %arg20[%c2_289, %c0_290] : memref<38x128xbf16, #tpu.memory_space<vmem>>, vector<24x128xbf16>
    %c2_291 = arith.constant 2 : index
    %c0_292 = arith.constant 0 : index
    %c0_293 = arith.constant 0 : index
    %292 = vector.load %arg8[%c2_291, %c0_292, %c0_293] : memref<9x128x128xbf16, #tpu.memory_space<vmem>>, vector<1x128x128xbf16>
    %293 = vector.shape_cast %292 : vector<1x128x128xbf16> to vector<128x128xbf16>
    %cst_294 = arith.constant dense<0.000000e+00> : vector<24x128xf32>
    %294 = tpu.matmul %291, %293, %cst_294 {dimension_numbers = #tpu.dot_dimension_numbers<[1], [0], [0], [1], [0, 0, 1, 1], [], []>} : vector<24x128xbf16>, vector<128x128xbf16>, vector<24x128xf32> -> vector<24x128xf32>
    %295 = arith.addf %290, %294 : vector<24x128xf32>
    %c6_295 = arith.constant 6 : index
    %c0_296 = arith.constant 0 : index
    %296 = vector.load %arg20[%c6_295, %c0_296] : memref<38x128xbf16, #tpu.memory_space<vmem>>, vector<24x128xbf16>
    %c3_297 = arith.constant 3 : index
    %c0_298 = arith.constant 0 : index
    %c0_299 = arith.constant 0 : index
    %297 = vector.load %arg8[%c3_297, %c0_298, %c0_299] : memref<9x128x128xbf16, #tpu.memory_space<vmem>>, vector<1x128x128xbf16>
    %298 = vector.shape_cast %297 : vector<1x128x128xbf16> to vector<128x128xbf16>
    %cst_300 = arith.constant dense<0.000000e+00> : vector<24x128xf32>
    %299 = tpu.matmul %296, %298, %cst_300 {dimension_numbers = #tpu.dot_dimension_numbers<[1], [0], [0], [1], [0, 0, 1, 1], [], []>} : vector<24x128xbf16>, vector<128x128xbf16>, vector<24x128xf32> -> vector<24x128xf32>
    %300 = arith.addf %295, %299 : vector<24x128xf32>
    %c7_301 = arith.constant 7 : index
    %c0_302 = arith.constant 0 : index
    %301 = vector.load %arg20[%c7_301, %c0_302] : memref<38x128xbf16, #tpu.memory_space<vmem>>, vector<24x128xbf16>
    %c4_303 = arith.constant 4 : index
    %c0_304 = arith.constant 0 : index
    %c0_305 = arith.constant 0 : index
    %302 = vector.load %arg8[%c4_303, %c0_304, %c0_305] : memref<9x128x128xbf16, #tpu.memory_space<vmem>>, vector<1x128x128xbf16>
    %303 = vector.shape_cast %302 : vector<1x128x128xbf16> to vector<128x128xbf16>
    %cst_306 = arith.constant dense<0.000000e+00> : vector<24x128xf32>
    %304 = tpu.matmul %301, %303, %cst_306 {dimension_numbers = #tpu.dot_dimension_numbers<[1], [0], [0], [1], [0, 0, 1, 1], [], []>} : vector<24x128xbf16>, vector<128x128xbf16>, vector<24x128xf32> -> vector<24x128xf32>
    %305 = arith.addf %300, %304 : vector<24x128xf32>
    %c8_307 = arith.constant 8 : index
    %c0_308 = arith.constant 0 : index
    %306 = vector.load %arg20[%c8_307, %c0_308] : memref<38x128xbf16, #tpu.memory_space<vmem>>, vector<24x128xbf16>
    %c5_309 = arith.constant 5 : index
    %c0_310 = arith.constant 0 : index
    %c0_311 = arith.constant 0 : index
    %307 = vector.load %arg8[%c5_309, %c0_310, %c0_311] : memref<9x128x128xbf16, #tpu.memory_space<vmem>>, vector<1x128x128xbf16>
    %308 = vector.shape_cast %307 : vector<1x128x128xbf16> to vector<128x128xbf16>
    %cst_312 = arith.constant dense<0.000000e+00> : vector<24x128xf32>
    %309 = tpu.matmul %306, %308, %cst_312 {dimension_numbers = #tpu.dot_dimension_numbers<[1], [0], [0], [1], [0, 0, 1, 1], [], []>} : vector<24x128xbf16>, vector<128x128xbf16>, vector<24x128xf32> -> vector<24x128xf32>
    %310 = arith.addf %305, %309 : vector<24x128xf32>
    %c12_313 = arith.constant 12 : index
    %c0_314 = arith.constant 0 : index
    %311 = vector.load %arg20[%c12_313, %c0_314] : memref<38x128xbf16, #tpu.memory_space<vmem>>, vector<24x128xbf16>
    %c6_315 = arith.constant 6 : index
    %c0_316 = arith.constant 0 : index
    %c0_317 = arith.constant 0 : index
    %312 = vector.load %arg8[%c6_315, %c0_316, %c0_317] : memref<9x128x128xbf16, #tpu.memory_space<vmem>>, vector<1x128x128xbf16>
    %313 = vector.shape_cast %312 : vector<1x128x128xbf16> to vector<128x128xbf16>
    %cst_318 = arith.constant dense<0.000000e+00> : vector<24x128xf32>
    %314 = tpu.matmul %311, %313, %cst_318 {dimension_numbers = #tpu.dot_dimension_numbers<[1], [0], [0], [1], [0, 0, 1, 1], [], []>} : vector<24x128xbf16>, vector<128x128xbf16>, vector<24x128xf32> -> vector<24x128xf32>
    %315 = arith.addf %310, %314 : vector<24x128xf32>
    %c13_319 = arith.constant 13 : index
    %c0_320 = arith.constant 0 : index
    %316 = vector.load %arg20[%c13_319, %c0_320] : memref<38x128xbf16, #tpu.memory_space<vmem>>, vector<24x128xbf16>
    %c7_321 = arith.constant 7 : index
    %c0_322 = arith.constant 0 : index
    %c0_323 = arith.constant 0 : index
    %317 = vector.load %arg8[%c7_321, %c0_322, %c0_323] : memref<9x128x128xbf16, #tpu.memory_space<vmem>>, vector<1x128x128xbf16>
    %318 = vector.shape_cast %317 : vector<1x128x128xbf16> to vector<128x128xbf16>
    %cst_324 = arith.constant dense<0.000000e+00> : vector<24x128xf32>
    %319 = tpu.matmul %316, %318, %cst_324 {dimension_numbers = #tpu.dot_dimension_numbers<[1], [0], [0], [1], [0, 0, 1, 1], [], []>} : vector<24x128xbf16>, vector<128x128xbf16>, vector<24x128xf32> -> vector<24x128xf32>
    %320 = arith.addf %315, %319 : vector<24x128xf32>
    %c14_325 = arith.constant 14 : index
    %c0_326 = arith.constant 0 : index
    %321 = vector.load %arg20[%c14_325, %c0_326] : memref<38x128xbf16, #tpu.memory_space<vmem>>, vector<24x128xbf16>
    %c8_327 = arith.constant 8 : index
    %c0_328 = arith.constant 0 : index
    %c0_329 = arith.constant 0 : index
    %322 = vector.load %arg8[%c8_327, %c0_328, %c0_329] : memref<9x128x128xbf16, #tpu.memory_space<vmem>>, vector<1x128x128xbf16>
    %323 = vector.shape_cast %322 : vector<1x128x128xbf16> to vector<128x128xbf16>
    %cst_330 = arith.constant dense<0.000000e+00> : vector<24x128xf32>
    %324 = tpu.matmul %321, %323, %cst_330 {dimension_numbers = #tpu.dot_dimension_numbers<[1], [0], [0], [1], [0, 0, 1, 1], [], []>} : vector<24x128xbf16>, vector<128x128xbf16>, vector<24x128xf32> -> vector<24x128xf32>
    %325 = arith.addf %320, %324 : vector<24x128xf32>
    %c0_331 = arith.constant 0 : index
    %c0_332 = arith.constant 0 : index
    %326 = vector.load %arg9[%c0_331, %c0_332] : memref<1x128xf32, #tpu.memory_space<vmem>>, vector<1x128xf32>
    %327 = vector.broadcast %326 : vector<1x128xf32> to vector<24x128xf32>
    %328 = arith.addf %325, %327 : vector<24x128xf32>
    %cst_333 = arith.constant 0.000000e+00 : f32
    %329 = vector.broadcast %cst_333 : f32 to vector<24x128xf32>
    %330 = arith.maximumf %328, %329 : vector<24x128xf32>
    %c0_334 = arith.constant 0 : index
    %c0_335 = arith.constant 0 : index
    %331 = vector.load %arg21[%c0_334, %c0_335] : memref<24x128xf32, #tpu.memory_space<vmem>>, vector<24x128xf32>
    tpu.vector_store %arg21[%c0_334, %c0_335], %330 {strides = array<i32>} : memref<24x128xf32, #tpu.memory_space<vmem>>, vector<24x128xf32>,
    %c1_336 = arith.constant 1 : index
    %c0_337 = arith.constant 0 : index
    %332 = vector.load %arg21[%c1_336, %c0_337] : memref<24x128xf32, #tpu.memory_space<vmem>>, vector<1x128xf32>
    %c2_338 = arith.constant 2 : index
    %c0_339 = arith.constant 0 : index
    %333 = vector.load %arg21[%c2_338, %c0_339] : memref<24x128xf32, #tpu.memory_space<vmem>>, vector<1x128xf32>
    %334 = arith.maximumf %332, %333 : vector<1x128xf32>
    %c7_340 = arith.constant 7 : index
    %c0_341 = arith.constant 0 : index
    %335 = vector.load %arg21[%c7_340, %c0_341] : memref<24x128xf32, #tpu.memory_space<vmem>>, vector<1x128xf32>
    %c8_342 = arith.constant 8 : index
    %c0_343 = arith.constant 0 : index
    %336 = vector.load %arg21[%c8_342, %c0_343] : memref<24x128xf32, #tpu.memory_space<vmem>>, vector<1x128xf32>
    %337 = arith.maximumf %335, %336 : vector<1x128xf32>
    %338 = arith.maximumf %334, %337 : vector<1x128xf32>
    %c0_344 = arith.constant 0 : index
    %c0_345 = arith.constant 0 : index
    %339 = vector.load %arg22[%c0_344, %c0_345] : memref<1x128xf32, #tpu.memory_space<vmem>>, vector<1x128xf32>
    tpu.vector_store %arg22[%c0_344, %c0_345], %338 {strides = array<i32>} : memref<1x128xf32, #tpu.memory_space<vmem>>, vector<1x128xf32>,
    %c0_346 = arith.constant 0 : index
    %c0_347 = arith.constant 0 : index
    %340 = vector.load %arg22[%c0_346, %c0_347] : memref<1x128xf32, #tpu.memory_space<vmem>>, vector<1x128xf32>
    %341 = arith.truncf %340 : vector<1x128xf32> to vector<1x128xbf16>
    %c0_348 = arith.constant 0 : index
    %c0_349 = arith.constant 0 : index
    %c0_350 = arith.constant 0 : index
    %342 = vector.load %arg10[%c0_348, %c0_349, %c0_350] : memref<1x128x512xbf16, #tpu.memory_space<vmem>>, vector<1x128x512xbf16>
    %343 = vector.shape_cast %342 : vector<1x128x512xbf16> to vector<128x512xbf16>
    %cst_351 = arith.constant dense<0.000000e+00> : vector<1x512xf32>
    %344 = tpu.matmul %341, %343, %cst_351 {dimension_numbers = #tpu.dot_dimension_numbers<[1], [0], [0], [1], [0, 0, 1, 1], [], []>} : vector<1x128xbf16>, vector<128x512xbf16>, vector<1x512xf32> -> vector<1x512xf32>
    %c0_352 = arith.constant 0 : index
    %c0_353 = arith.constant 0 : index
    %345 = vector.load %arg11[%c0_352, %c0_353] : memref<1x512xf32, #tpu.memory_space<vmem>>, vector<1x512xf32>
    %346 = arith.addf %344, %345 : vector<1x512xf32>
    %cst_354 = arith.constant 0.000000e+00 : f32
    %347 = vector.broadcast %cst_354 : f32 to vector<1x512xf32>
    %348 = arith.maximumf %346, %347 : vector<1x512xf32>
    %349 = arith.truncf %348 : vector<1x512xf32> to vector<1x512xbf16>
    %c0_355 = arith.constant 0 : index
    %c0_356 = arith.constant 0 : index
    %350 = vector.load %arg12[%c0_355, %c0_356] : memref<512x128xbf16, #tpu.memory_space<vmem>>, vector<512x128xbf16>
    %cst_357 = arith.constant dense<0.000000e+00> : vector<1x128xf32>
    %351 = tpu.matmul %349, %350, %cst_357 {dimension_numbers = #tpu.dot_dimension_numbers<[1], [0], [0], [1], [0, 0, 1, 1], [], []>} : vector<1x512xbf16>, vector<512x128xbf16>, vector<1x128xf32> -> vector<1x128xf32>
    %c0_358 = arith.constant 0 : index
    %c0_359 = arith.constant 0 : index
    %352 = vector.load %arg13[%c0_358, %c0_359] : memref<1x128xf32, #tpu.memory_space<vmem>>, vector<1x128xf32>
    %353 = arith.addf %351, %352 : vector<1x128xf32>
    %c0_360 = arith.constant 0 : index
    %c0_361 = arith.constant 0 : index
    %c0_362 = arith.constant 0 : index
    %354 = vector.load %arg14[%c0_360, %c0_361, %c0_362] : memref<1x1x128xf32, #tpu.memory_space<vmem>>, vector<1x1x128xf32>
    %355 = vector.shape_cast %354 : vector<1x1x128xf32> to vector<1x128xf32>
    %356 = vector.shape_cast %353 : vector<1x128xf32> to vector<1x1x128xf32>
    tpu.vector_store %arg14[%c0_360, %c0_361, %c0_362], %356 {strides = array<i32>} : memref<1x1x128xf32, #tpu.memory_space<vmem>>, vector<1x1x128xf32>,
    return
  }
  func.func @transform_0(%arg0: i32) -> (i32, i32, i32) {
    %c0_i32 = arith.constant 0 : i32
    %c0_i32_0 = arith.constant 0 : i32
    %c0_i32_1 = arith.constant 0 : i32
    return %arg0, %c0_i32, %c0_i32_0 : i32, i32, i32
  }
  func.func @transform_1(%arg0: i32) -> (i32, i32) {
    %c0_i32 = arith.constant 0 : i32
    %c0_i32_0 = arith.constant 0 : i32
    %c0_i32_1 = arith.constant 0 : i32
    return %c0_i32, %c0_i32_0 : i32, i32
  }
  func.func @transform_2(%arg0: i32) -> (i32, i32) {
    %c0_i32 = arith.constant 0 : i32
    %c0_i32_0 = arith.constant 0 : i32
    %c0_i32_1 = arith.constant 0 : i32
    return %c0_i32, %c0_i32_0 : i32, i32
  }
  func.func @transform_3(%arg0: i32) -> (i32, i32, i32) {
    %c0_i32 = arith.constant 0 : i32
    %c0_i32_0 = arith.constant 0 : i32
    %c0_i32_1 = arith.constant 0 : i32
    %c0_i32_2 = arith.constant 0 : i32
    return %c0_i32, %c0_i32_0, %c0_i32_1 : i32, i32, i32
  }
  func.func @transform_4(%arg0: i32) -> (i32, i32) {
    %c0_i32 = arith.constant 0 : i32
    %c0_i32_0 = arith.constant 0 : i32
    %c0_i32_1 = arith.constant 0 : i32
    return %c0_i32, %c0_i32_0 : i32, i32
  }
  func.func @transform_5(%arg0: i32) -> (i32, i32, i32) {
    %c0_i32 = arith.constant 0 : i32
    %c0_i32_0 = arith.constant 0 : i32
    %c0_i32_1 = arith.constant 0 : i32
    %c0_i32_2 = arith.constant 0 : i32
    return %c0_i32, %c0_i32_0, %c0_i32_1 : i32, i32, i32
  }
  func.func @transform_6(%arg0: i32) -> (i32, i32) {
    %c0_i32 = arith.constant 0 : i32
    %c0_i32_0 = arith.constant 0 : i32
    %c0_i32_1 = arith.constant 0 : i32
    return %c0_i32, %c0_i32_0 : i32, i32
  }
  func.func @transform_7(%arg0: i32) -> (i32, i32, i32) {
    %c0_i32 = arith.constant 0 : i32
    %c0_i32_0 = arith.constant 0 : i32
    %c0_i32_1 = arith.constant 0 : i32
    %c0_i32_2 = arith.constant 0 : i32
    return %c0_i32, %c0_i32_0, %c0_i32_1 : i32, i32, i32
  }
  func.func @transform_8(%arg0: i32) -> (i32, i32) {
    %c0_i32 = arith.constant 0 : i32
    %c0_i32_0 = arith.constant 0 : i32
    %c0_i32_1 = arith.constant 0 : i32
    return %c0_i32, %c0_i32_0 : i32, i32
  }
  func.func @transform_9(%arg0: i32) -> (i32, i32, i32) {
    %c0_i32 = arith.constant 0 : i32
    %c0_i32_0 = arith.constant 0 : i32
    %c0_i32_1 = arith.constant 0 : i32
    %c0_i32_2 = arith.constant 0 : i32
    return %c0_i32, %c0_i32_0, %c0_i32_1 : i32, i32, i32
  }
  func.func @transform_10(%arg0: i32) -> (i32, i32) {
    %c0_i32 = arith.constant 0 : i32
    %c0_i32_0 = arith.constant 0 : i32
    %c0_i32_1 = arith.constant 0 : i32
    return %c0_i32, %c0_i32_0 : i32, i32
  }
  func.func @transform_11(%arg0: i32) -> (i32, i32) {
    %c0_i32 = arith.constant 0 : i32
    %c0_i32_0 = arith.constant 0 : i32
    %c0_i32_1 = arith.constant 0 : i32
    return %c0_i32, %c0_i32_0 : i32, i32
  }
  func.func @transform_12(%arg0: i32) -> (i32, i32) {
    %c0_i32 = arith.constant 0 : i32
    %c0_i32_0 = arith.constant 0 : i32
    %c0_i32_1 = arith.constant 0 : i32
    return %c0_i32, %c0_i32_0 : i32, i32
  }
  func.func @transform_13(%arg0: i32) -> (i32, i32, i32) {
    %c0_i32 = arith.constant 0 : i32
    %c0_i32_0 = arith.constant 0 : i32
    %c0_i32_1 = arith.constant 0 : i32
    return %arg0, %c0_i32, %c0_i32_0 : i32, i32, i32
  }
}

</mosaic_0001>

<llo_original>
// kernel: net_forward.1
$region0: #{net_forward.1}
  #allocation0 [shape = 'u32[]', space=smem, size = 0x4, offset = 0x4, fixed_abs, tag = 'smem constant byte address 0x4 - core index']
  #allocation1 [shape = 'u32[144,128]{1,0:T(1,128)}', space=vmem, size = 0x12000, scoped, tag = 'internal scratch']
  #allocation2 [shape = 'f32[256,128]{1,0:T(8,128)}', space=vmem, size = 0x20000, scoped, tag = 'scratch operand']
  #allocation3 [shape = 'bf16[146,128]{1,0:T(8,128)(2,1)}', space=vmem, size = 0x9800, scoped, tag = 'scratch operand']
  #allocation4 [shape = 'f32[120,128]{1,0:T(8,128)}', space=vmem, size = 0xf000, scoped, tag = 'scratch operand']
  #allocation5 [shape = 'bf16[66,128]{1,0:T(8,128)(2,1)}', space=vmem, size = 0x4800, scoped, tag = 'scratch operand']
  #allocation6 [shape = 'f32[48,128]{1,0:T(8,128)}', space=vmem, size = 0x6000, scoped, tag = 'scratch operand']
  #allocation7 [shape = 'bf16[38,128]{1,0:T(8,128)(2,1)}', space=vmem, size = 0x2800, scoped, tag = 'scratch operand']
  #allocation8 [shape = 'f32[24,128]{1,0:T(8,128)}', space=vmem, size = 0x3000, scoped, tag = 'scratch operand']
  #allocation9 [shape = 'f32[1,128]{1,0:T(1,128)}', space=vmem, size = 0x200, scoped, tag = 'scratch operand']
  %s0 = inlined_call_operand.vmem [shape: bf16[2,256,128], index: 0, kind: input, shape index: {}]
  %s1 = inlined_call_operand.vmem [shape: bf16[128,128], index: 1, kind: input, shape index: {}]
  %s2 = inlined_call_operand.vmem [shape: f32[1,128], index: 2, kind: input, shape index: {}]
  %s3 = inlined_call_operand.vmem [shape: bf16[9,128,128], index: 3, kind: input, shape index: {}]
  %s4 = inlined_call_operand.vmem [shape: f32[1,128], index: 4, kind: input, shape index: {}]
  %s5 = inlined_call_operand.vmem [shape: bf16[9,128,128], index: 5, kind: input, shape index: {}]
  %s6 = inlined_call_operand.vmem [shape: f32[1,128], index: 6, kind: input, shape index: {}]
  %s7 = inlined_call_operand.vmem [shape: bf16[9,128,128], index: 7, kind: input, shape index: {}]
  %s8 = inlined_call_operand.vmem [shape: f32[1,128], index: 8, kind: input, shape index: {}]
  %s9 = inlined_call_operand.vmem [shape: bf16[1,128,512], index: 9, kind: input, shape index: {}]
  %s10 = inlined_call_operand.vmem [shape: f32[1,512], index: 10, kind: input, shape index: {}]
  %s11 = inlined_call_operand.vmem [shape: bf16[512,128], index: 11, kind: input, shape index: {}]
  %s12 = inlined_call_operand.vmem [shape: f32[1,128], index: 12, kind: input, shape index: {}]
  %s13 = inlined_call_operand.hbm [shape: f32[2,1,128], index: 13, kind: output, shape index: {}]
  %s14 = sld [smem:[#allocation0]]
  $region85: #{net_forward.1} parent=0
    _
  %s16 = ssub.s32 1, %s14
  %s17 = scalar_select 0, %s16, %s14
  $region1: #{net_forward.1} parent=0
    #allocation10 [shape = 'u8[1024]{0}', space=vmem, size = 0x400, scoped, tag = 'output window, operand 0']
    #allocation11 [shape = 's32[2]{0}', space=sflag, size = 0x8, scoped, tag = 'scoped memory for net_forward.1']
    %18 = vsyncpa [#allocation11], 0
    %s19 = scalar_lea.sflag [#allocation11], 1
    %20 = vsyncpa %s19, 0
    loop: start=0, step=1, limit=4
    $region2: #{net_forward.1} parent=1 // loop_pre_header
      _
    $region3: #{net_forward.1} parent=1 // loop_header
      %s22 = sphi 0, %s26
      %p23 = scmp.ge.s32.totalorder %s22, 4
      %s32 = sphi 0, %s34
      %s35 = sphi 0, %s32
      %s36 = sphi 0, %s35
      %s52 = sphi 0, %s36
      %s56 = sphi 0, %s56
      %s58 = sphi 0, %s56
      %s59 = sphi 0, %s58
      %s73 = sphi 0, %s59
      %s77 = sphi 0, %s77
      %s79 = sphi 0, %s77
      %s80 = sphi 0, %s79
      %s94 = sphi 0, %s80
      %s98 = sphi 0, %s98
      %s100 = sphi 0, %s98
      %s101 = sphi 0, %s100
      %s115 = sphi 0, %s101
      %s119 = sphi 0, %s119
      %s121 = sphi 0, %s119
      %s122 = sphi 0, %s121
      %s136 = sphi 0, %s122
      %s140 = sphi 0, %s140
      %s142 = sphi 0, %s140
      %s143 = sphi 0, %s142
      %s157 = sphi 0, %s143
      %s161 = sphi 0, %s161
      %s163 = sphi 0, %s161
      %s164 = sphi 0, %s163
      %s178 = sphi 0, %s164
      %s182 = sphi 0, %s182
      %s184 = sphi 0, %s182
      %s185 = sphi 0, %s184
      %s199 = sphi 0, %s185
      %s203 = sphi 0, %s203
      %s205 = sphi 0, %s203
      %s206 = sphi 0, %s205
      %s220 = sphi 0, %s206
      %s224 = sphi 0, %s224
      %s226 = sphi 0, %s224
      %s227 = sphi 0, %s226
      %s241 = sphi 0, %s227
      %s245 = sphi 0, %s245
      %s247 = sphi 0, %s245
      %s248 = sphi 0, %s247
      %s262 = sphi 0, %s248
      %s266 = sphi 0, %s266
      %s268 = sphi 0, %s266
      %s269 = sphi 0, %s268
      %s283 = sphi 0, %s269
      %s287 = sphi 0, %s287
      %s289 = sphi 0, %s287
      %s290 = sphi 0, %s289
      %s304 = sphi 0, %s290
      %s310 = sphi 0, %s312
      %s313 = sphi 0, %s310
      %s314 = sphi 0, %s313
      %s330 = sphi 0, %s314
    $region4: #{net_forward.1} parent=1 // loop_header_branch
      %25 = sbr.rel (%p23) target = $region8
    $region5: #{net_forward.1} parent=1 // loop_body
      %s27 = ssub.s32 %s22, 1
      %s28 = ssub.s32 %s22, 2
      %s29 = sadd.s32 %s22, 1
      %s30 = ssub.s32 %s22, %s29
      %p31 = scmp.eq.s32.totalorder %s30, 0
      %s33 = sadd.s32 %s32, 1
      %s34 = scalar_select %p31, %s32, %s33
      %p37 = pneg %p31
      %p38 = scmp.eq.s32.totalorder %s22, 1
      %p39 = por %p37, %p38
      %p40 = scmp.ne.s32.totalorder %s32, %s35
      %p41 = scmp.eq.s32.totalorder %s22, 0
      %p42 = por %p40, %p41
      %p43 = scmp.ne.s32.totalorder %s32, %s35
      %p44 = scmp.eq.s32.totalorder %s27, 1
      %p45 = por %p43, %p44
      %p46 = scmp.ne.s32.totalorder %s35, %s36
      %p47 = scmp.eq.s32.totalorder %s27, 0
      %p48 = por %p46, %p47
      %p49 = scmp.ne.s32.totalorder %s35, %s36
      %p50 = scmp.eq.s32.totalorder %s28, 1
      %p51 = por %p49, %p50
      %p53 = scmp.ne.s32.totalorder %s36, %s52
      %p54 = scmp.eq.s32.totalorder %s28, 0
      %p55 = por %p53, %p54
      %s57 = sadd.s32 %s56, 1
      %p60 = scmp.eq.s32.totalorder %s22, 1
      %p61 = scmp.ne.s32.totalorder %s56, %s58
      %p62 = scmp.eq.s32.totalorder %s22, 0
      %p63 = por %p61, %p62
      %p64 = scmp.ne.s32.totalorder %s56, %s58
      %p65 = scmp.eq.s32.totalorder %s27, 1
      %p66 = por %p64, %p65
      %p67 = scmp.ne.s32.totalorder %s58, %s59
      %p68 = scmp.eq.s32.totalorder %s27, 0
      %p69 = por %p67, %p68
      %p70 = scmp.ne.s32.totalorder %s58, %s59
      %p71 = scmp.eq.s32.totalorder %s28, 1
      %p72 = por %p70, %p71
      %p74 = scmp.ne.s32.totalorder %s59, %s73
      %p75 = scmp.eq.s32.totalorder %s28, 0
      %p76 = por %p74, %p75
      %s78 = sadd.s32 %s77, 1
      %p81 = scmp.eq.s32.totalorder %s22, 1
      %p82 = scmp.ne.s32.totalorder %s77, %s79
      %p83 = scmp.eq.s32.totalorder %s22, 0
      %p84 = por %p82, %p83
      %p85 = scmp.ne.s32.totalorder %s77, %s79
      %p86 = scmp.eq.s32.totalorder %s27, 1
      %p87 = por %p85, %p86
      %p88 = scmp.ne.s32.totalorder %s79, %s80
      %p89 = scmp.eq.s32.totalorder %s27, 0
      %p90 = por %p88, %p89
      %p91 = scmp.ne.s32.totalorder %s79, %s80
      %p92 = scmp.eq.s32.totalorder %s28, 1
      %p93 = por %p91, %p92
      %p95 = scmp.ne.s32.totalorder %s80, %s94
      %p96 = scmp.eq.s32.totalorder %s28, 0
      %p97 = por %p95, %p96
      %s99 = sadd.s32 %s98, 1
      %p102 = scmp.eq.s32.totalorder %s22, 1
      %p103 = scmp.ne.s32.totalorder %s98, %s100
      %p104 = scmp.eq.s32.totalorder %s22, 0
      %p105 = por %p103, %p104
      %p106 = scmp.ne.s32.totalorder %s98, %s100
      %p107 = scmp.eq.s32.totalorder %s27, 1
      %p108 = por %p106, %p107
      %p109 = scmp.ne.s32.totalorder %s100, %s101
      %p110 = scmp.eq.s32.totalorder %s27, 0
      %p111 = por %p109, %p110
      %p112 = scmp.ne.s32.totalorder %s100, %s101
      %p113 = scmp.eq.s32.totalorder %s28, 1
      %p114 = por %p112, %p113
      %p116 = scmp.ne.s32.totalorder %s101, %s115
      %p117 = scmp.eq.s32.totalorder %s28, 0
      %p118 = por %p116, %p117
      %s120 = sadd.s32 %s119, 1
      %p123 = scmp.eq.s32.totalorder %s22, 1
      %p124 = scmp.ne.s32.totalorder %s119, %s121
      %p125 = scmp.eq.s32.totalorder %s22, 0
      %p126 = por %p124, %p125
      %p127 = scmp.ne.s32.totalorder %s119, %s121
      %p128 = scmp.eq.s32.totalorder %s27, 1
      %p129 = por %p127, %p128
      %p130 = scmp.ne.s32.totalorder %s121, %s122
      %p131 = scmp.eq.s32.totalorder %s27, 0
      %p132 = por %p130, %p131
      %p133 = scmp.ne.s32.totalorder %s121, %s122
      %p134 = scmp.eq.s32.totalorder %s28, 1
      %p135 = por %p133, %p134
      %p137 = scmp.ne.s32.totalorder %s122, %s136
      %p138 = scmp.eq.s32.totalorder %s28, 0
      %p139 = por %p137, %p138
      %s141 = sadd.s32 %s140, 1
      %p144 = scmp.eq.s32.totalorder %s22, 1
      %p145 = scmp.ne.s32.totalorder %s140, %s142
      %p146 = scmp.eq.s32.totalorder %s22, 0
      %p147 = por %p145, %p146
      %p148 = scmp.ne.s32.totalorder %s140, %s142
      %p149 = scmp.eq.s32.totalorder %s27, 1
      %p150 = por %p148, %p149
      %p151 = scmp.ne.s32.totalorder %s142, %s143
      %p152 = scmp.eq.s32.totalorder %s27, 0
      %p153 = por %p151, %p152
      %p154 = scmp.ne.s32.totalorder %s142, %s143
      %p155 = scmp.eq.s32.totalorder %s28, 1
      %p156 = por %p154, %p155
      %p158 = scmp.ne.s32.totalorder %s143, %s157
      %p159 = scmp.eq.s32.totalorder %s28, 0
      %p160 = por %p158, %p159
      %s162 = sadd.s32 %s161, 1
      %p165 = scmp.eq.s32.totalorder %s22, 1
      %p166 = scmp.ne.s32.totalorder %s161, %s163
      %p167 = scmp.eq.s32.totalorder %s22, 0
      %p168 = por %p166, %p167
      %p169 = scmp.ne.s32.totalorder %s161, %s163
      %p170 = scmp.eq.s32.totalorder %s27, 1
      %p171 = por %p169, %p170
      %p172 = scmp.ne.s32.totalorder %s163, %s164
      %p173 = scmp.eq.s32.totalorder %s27, 0
      %p174 = por %p172, %p173
      %p175 = scmp.ne.s32.totalorder %s163, %s164
      %p176 = scmp.eq.s32.totalorder %s28, 1
      %p177 = por %p175, %p176
      %p179 = scmp.ne.s32.totalorder %s164, %s178
      %p180 = scmp.eq.s32.totalorder %s28, 0
      %p181 = por %p179, %p180
      %s183 = sadd.s32 %s182, 1
      %p186 = scmp.eq.s32.totalorder %s22, 1
      %p187 = scmp.ne.s32.totalorder %s182, %s184
      %p188 = scmp.eq.s32.totalorder %s22, 0
      %p189 = por %p187, %p188
      %p190 = scmp.ne.s32.totalorder %s182, %s184
      %p191 = scmp.eq.s32.totalorder %s27, 1
      %p192 = por %p190, %p191
      %p193 = scmp.ne.s32.totalorder %s184, %s185
      %p194 = scmp.eq.s32.totalorder %s27, 0
      %p195 = por %p193, %p194
      %p196 = scmp.ne.s32.totalorder %s184, %s185
      %p197 = scmp.eq.s32.totalorder %s28, 1
      %p198 = por %p196, %p197
      %p200 = scmp.ne.s32.totalorder %s185, %s199
      %p201 = scmp.eq.s32.totalorder %s28, 0
      %p202 = por %p200, %p201
      %s204 = sadd.s32 %s203, 1
      %p207 = scmp.eq.s32.totalorder %s22, 1
      %p208 = scmp.ne.s32.totalorder %s203, %s205
      %p209 = scmp.eq.s32.totalorder %s22, 0
      %p210 = por %p208, %p209
      %p211 = scmp.ne.s32.totalorder %s203, %s205
      %p212 = scmp.eq.s32.totalorder %s27, 1
      %p213 = por %p211, %p212
      %p214 = scmp.ne.s32.totalorder %s205, %s206
      %p215 = scmp.eq.s32.totalorder %s27, 0
      %p216 = por %p214, %p215
      %p217 = scmp.ne.s32.totalorder %s205, %s206
      %p218 = scmp.eq.s32.totalorder %s28, 1
      %p219 = por %p217, %p218
      %p221 = scmp.ne.s32.totalorder %s206, %s220
      %p222 = scmp.eq.s32.totalorder %s28, 0
      %p223 = por %p221, %p222
      %s225 = sadd.s32 %s224, 1
      %p228 = scmp.eq.s32.totalorder %s22, 1
      %p229 = scmp.ne.s32.totalorder %s224, %s226
      %p230 = scmp.eq.s32.totalorder %s22, 0
      %p231 = por %p229, %p230
      %p232 = scmp.ne.s32.totalorder %s224, %s226
      %p233 = scmp.eq.s32.totalorder %s27, 1
      %p234 = por %p232, %p233
      %p235 = scmp.ne.s32.totalorder %s226, %s227
      %p236 = scmp.eq.s32.totalorder %s27, 0
      %p237 = por %p235, %p236
      %p238 = scmp.ne.s32.totalorder %s226, %s227
      %p239 = scmp.eq.s32.totalorder %s28, 1
      %p240 = por %p238, %p239
      %p242 = scmp.ne.s32.totalorder %s227, %s241
      %p243 = scmp.eq.s32.totalorder %s28, 0
      %p244 = por %p242, %p243
      %s246 = sadd.s32 %s245, 1
      %p249 = scmp.eq.s32.totalorder %s22, 1
      %p250 = scmp.ne.s32.totalorder %s245, %s247
      %p251 = scmp.eq.s32.totalorder %s22, 0
      %p252 = por %p250, %p251
      %p253 = scmp.ne.s32.totalorder %s245, %s247
      %p254 = scmp.eq.s32.totalorder %s27, 1
      %p255 = por %p253, %p254
      %p256 = scmp.ne.s32.totalorder %s247, %s248
      %p257 = scmp.eq.s32.totalorder %s27, 0
      %p258 = por %p256, %p257
      %p259 = scmp.ne.s32.totalorder %s247, %s248
      %p260 = scmp.eq.s32.totalorder %s28, 1
      %p261 = por %p259, %p260
      %p263 = scmp.ne.s32.totalorder %s248, %s262
      %p264 = scmp.eq.s32.totalorder %s28, 0
      %p265 = por %p263, %p264
      %s267 = sadd.s32 %s266, 1
      %p270 = scmp.eq.s32.totalorder %s22, 1
      %p271 = scmp.ne.s32.totalorder %s266, %s268
      %p272 = scmp.eq.s32.totalorder %s22, 0
      %p273 = por %p271, %p272
      %p274 = scmp.ne.s32.totalorder %s266, %s268
      %p275 = scmp.eq.s32.totalorder %s27, 1
      %p276 = por %p274, %p275
      %p277 = scmp.ne.s32.totalorder %s268, %s269
      %p278 = scmp.eq.s32.totalorder %s27, 0
      %p279 = por %p277, %p278
      %p280 = scmp.ne.s32.totalorder %s268, %s269
      %p281 = scmp.eq.s32.totalorder %s28, 1
      %p282 = por %p280, %p281
      %p284 = scmp.ne.s32.totalorder %s269, %s283
      %p285 = scmp.eq.s32.totalorder %s28, 0
      %p286 = por %p284, %p285
      %s288 = sadd.s32 %s287, 1
      %p291 = scmp.eq.s32.totalorder %s22, 1
      %p292 = scmp.ne.s32.totalorder %s287, %s289
      %p293 = scmp.eq.s32.totalorder %s22, 0
      %p294 = por %p292, %p293
      %p295 = scmp.ne.s32.totalorder %s287, %s289
      %p296 = scmp.eq.s32.totalorder %s27, 1
      %p297 = por %p295, %p296
      %p298 = scmp.ne.s32.totalorder %s289, %s290
      %p299 = scmp.eq.s32.totalorder %s27, 0
      %p300 = por %p298, %p299
      %p301 = scmp.ne.s32.totalorder %s289, %s290
      %p302 = scmp.eq.s32.totalorder %s28, 1
      %p303 = por %p301, %p302
      %p305 = scmp.ne.s32.totalorder %s290, %s304
      %p306 = scmp.eq.s32.totalorder %s28, 0
      %p307 = por %p305, %p306
      %s308 = ssub.s32 %s22, %s29
      %p309 = scmp.eq.s32.totalorder %s308, 0
      %s311 = sadd.s32 %s310, 1
      %s312 = scalar_select %p309, %s310, %s311
      %p315 = pneg %p309
      %p316 = scmp.eq.s32.totalorder %s22, 1
      %p317 = por %p315, %p316
      %p318 = scmp.ne.s32.totalorder %s310, %s313
      %p319 = scmp.eq.s32.totalorder %s22, 0
      %p320 = por %p318, %p319
      %p321 = scmp.ne.s32.totalorder %s310, %s313
      %p322 = scmp.eq.s32.totalorder %s27, 1
      %p323 = por %p321, %p322
      %p324 = scmp.ne.s32.totalorder %s313, %s314
      %p325 = scmp.eq.s32.totalorder %s27, 0
      %p326 = por %p324, %p325
      %p327 = scmp.ne.s32.totalorder %s313, %s314
      %p328 = scmp.eq.s32.totalorder %s28, 1
      %p329 = por %p327, %p328
      %p331 = scmp.ne.s32.totalorder %s314, %s330
      %p332 = scmp.eq.s32.totalorder %s28, 0
      %p333 = por %p331, %p332
      %p334 = scmp.le.s32.totalorder 1, %s22
      %p335 = scmp.lt.s32.totalorder %s22, 3
      %p336 = pnand %p334, %p335
      %p337 = pneg %p336
      // Predicated region
      $region9: #{net_forward.1} parent=5 // pred_check
        _
      $region10: #{net_forward.1} parent=5 // pred_check_branch
        %339 = sbr.rel (%p336) target = $region12
      $region11: #{net_forward.1} parent=5 // pred_region
        %s340 = ssub.s32 %s22, 1
        // Predicated region
        $region13: #{net_forward.1} parent=11 // pred_check
          %p341 = pneg %p69
        $region14: #{net_forward.1} parent=11 // pred_check_branch
          %343 = sbr.rel (%p341) target = $region16
        $region15: #{net_forward.1} parent=11 // pred_region
          _
        $region16: #{net_forward.1} parent=11 // pred_fallthru
          _
        // Predicated region
        $region17: #{net_forward.1} parent=11 // pred_check
          %p344 = pneg %p90
        $region18: #{net_forward.1} parent=11 // pred_check_branch
          %346 = sbr.rel (%p344) target = $region20
        $region19: #{net_forward.1} parent=11 // pred_region
          _
        $region20: #{net_forward.1} parent=11 // pred_fallthru
          _
        // Predicated region
        $region21: #{net_forward.1} parent=11 // pred_check
          %p347 = pneg %p111
        $region22: #{net_forward.1} parent=11 // pred_check_branch
          %349 = sbr.rel (%p347) target = $region24
        $region23: #{net_forward.1} parent=11 // pred_region
          _
        $region24: #{net_forward.1} parent=11 // pred_fallthru
          _
        // Predicated region
        $region25: #{net_forward.1} parent=11 // pred_check
          %p350 = pneg %p132
        $region26: #{net_forward.1} parent=11 // pred_check_branch
          %352 = sbr.rel (%p350) target = $region28
        $region27: #{net_forward.1} parent=11 // pred_region
          _
        $region28: #{net_forward.1} parent=11 // pred_fallthru
          _
        // Predicated region
        $region29: #{net_forward.1} parent=11 // pred_check
          %p353 = pneg %p153
        $region30: #{net_forward.1} parent=11 // pred_check_branch
          %355 = sbr.rel (%p353) target = $region32
        $region31: #{net_forward.1} parent=11 // pred_region
          _
        $region32: #{net_forward.1} parent=11 // pred_fallthru
          _
        // Predicated region
        $region33: #{net_forward.1} parent=11 // pred_check
          %p356 = pneg %p174
        $region34: #{net_forward.1} parent=11 // pred_check_branch
          %358 = sbr.rel (%p356) target = $region36
        $region35: #{net_forward.1} parent=11 // pred_region
          _
        $region36: #{net_forward.1} parent=11 // pred_fallthru
          _
        // Predicated region
        $region37: #{net_forward.1} parent=11 // pred_check
          %p359 = pneg %p195
        $region38: #{net_forward.1} parent=11 // pred_check_branch
          %361 = sbr.rel (%p359) target = $region40
        $region39: #{net_forward.1} parent=11 // pred_region
          _
        $region40: #{net_forward.1} parent=11 // pred_fallthru
          _
        // Predicated region
        $region41: #{net_forward.1} parent=11 // pred_check
          %p362 = pneg %p216
        $region42: #{net_forward.1} parent=11 // pred_check_branch
          %364 = sbr.rel (%p362) target = $region44
        $region43: #{net_forward.1} parent=11 // pred_region
          _
        $region44: #{net_forward.1} parent=11 // pred_fallthru
          _
        // Predicated region
        $region45: #{net_forward.1} parent=11 // pred_check
          %p365 = pneg %p237
        $region46: #{net_forward.1} parent=11 // pred_check_branch
          %367 = sbr.rel (%p365) target = $region48
        $region47: #{net_forward.1} parent=11 // pred_region
          _
        $region48: #{net_forward.1} parent=11 // pred_fallthru
          _
        // Predicated region
        $region49: #{net_forward.1} parent=11 // pred_check
          %p368 = pneg %p258
        $region50: #{net_forward.1} parent=11 // pred_check_branch
          %370 = sbr.rel (%p368) target = $region52
        $region51: #{net_forward.1} parent=11 // pred_region
          _
        $region52: #{net_forward.1} parent=11 // pred_fallthru
          _
        // Predicated region
        $region53: #{net_forward.1} parent=11 // pred_check
          %p371 = pneg %p279
        $region54: #{net_forward.1} parent=11 // pred_check_branch
          %373 = sbr.rel (%p371) target = $region56
        $region55: #{net_forward.1} parent=11 // pred_region
          _
        $region56: #{net_forward.1} parent=11 // pred_fallthru
          _
        // Predicated region
        $region57: #{net_forward.1} parent=11 // pred_check
          %p374 = pneg %p300
        $region58: #{net_forward.1} parent=11 // pred_check_branch
          %376 = sbr.rel (%p374) target = $region60
        $region59: #{net_forward.1} parent=11 // pred_region
          _
        $region60: #{net_forward.1} parent=11 // pred_fallthru
          _
      $region12: #{net_forward.1} parent=5 // pred_fallthru
        _
      %p377 = scmp.lt.s32.totalorder %s22, 2
      // Predicated region
      $region61: #{net_forward.1} parent=5 // pred_check
        %p378 = pneg %p377
      $region62: #{net_forward.1} parent=5 // pred_check_branch
        %380 = sbr.rel (%p378) target = $region64
      $region63: #{net_forward.1} parent=5 // pred_region
        // Predicated region
        $region65: #{net_forward.1} parent=63 // pred_check
          %p381 = pneg %p42
        $region66: #{net_forward.1} parent=63 // pred_check_branch
          %383 = sbr.rel (%p381) target = $region68
        $region67: #{net_forward.1} parent=63 // pred_region
          %p384 = scmp.lt.s32.totalorder %s22, 1
          %s385 = scalar_select %p384, %s22, 1
          %s386 = smul.addr %s385, 32
          %s387 = smul.addr %s386, 4
          %s388 = scalar_lea.vmem %s0, %s387
        $region68: #{net_forward.1} parent=63 // pred_fallthru
          _
      $region64: #{net_forward.1} parent=5 // pred_fallthru
        _
      %p389 = scmp.le.s32.totalorder 1, %s22
      %p390 = scmp.lt.s32.totalorder %s22, 3
      %p391 = pnand %p389, %p390
      %p392 = pneg %p391
      // Predicated region
      $region69: #{net_forward.1} parent=5 // pred_check
        _
      $region70: #{net_forward.1} parent=5 // pred_check_branch
        %394 = sbr.rel (%p391) target = $region72
      $region71: #{net_forward.1} parent=5 // pred_region
        %s395 = ssub.s32 %s22, 1
        %p396 = scmp.lt.s32.totalorder %s27, 1
        %s397 = scalar_select %p396, %s27, 1
        %s398 = smul.addr %s397, 32
        %s399 = smul.addr %s398, 4
        %s400 = scalar_lea.vmem %s0, %s399
        %p401 = pneg %p48
        %p402 = pneg %p45
        %p403 = pneg %p69
        %p404 = pneg %p66
        %p405 = pneg %p90
        %p406 = pneg %p87
        %p407 = pneg %p111
        %p408 = pneg %p108
        %p409 = pneg %p132
        %p410 = pneg %p129
        %p411 = pneg %p153
        %p412 = pneg %p150
        %p413 = pneg %p174
        %p414 = pneg %p171
        %p415 = pneg %p195
        %p416 = pneg %p192
        %p417 = pneg %p216
        %p418 = pneg %p213
        %p419 = pneg %p237
        %p420 = pneg %p234
        %p421 = pneg %p258
        %p422 = pneg %p255
        %p423 = pneg %p279
        %p424 = pneg %p276
        %p425 = pneg %p300
        %p426 = pneg %p297
        %p427 = pneg %p326
        %p428 = pneg %p323
        %s429 = sand.u32 %s313, 1
        %s430 = scalar_lea.sflag [#allocation11], %s429
        %s431 = sand.u32 %s313, 1
        %s432 = scalar_lea.vmem [#allocation10], %s431
        %p433 = scmp.lt.s32.totalorder %s27, 1
        %s434 = scalar_select %p433, %s27, 1
        %s435 = smul.addr %s434, 32
        %s436 = smul.addr %s435, 4
        %s437 = scalar_lea.vmem %s0, %s436
        %v439 = vld [vmem:[%s437] sm:$0xf]
        %v440 = vld [vmem:[%s437 + $0x4] sm:$0xf]
        %v441 = vld [vmem:[%s437 + $0x8] sm:$0xf]
        %v442 = vld [vmem:[%s437 + $0xc] sm:$0xf]
        %v443 = vld [vmem:[%s437 + $0x10] sm:$0xf]
        %v444 = vld [vmem:[%s437 + $0x14] sm:$0xf]
        %v445 = vld [vmem:[%s437 + $0x18] sm:$0xf]
        %v446 = vld [vmem:[%s437 + $0x1c] sm:$0xf]
        %v447 = vld [vmem:[%s437 + $0x20] sm:$0xf]
        %v448 = vld [vmem:[%s437 + $0x24] sm:$0xf]
        %v449 = vld [vmem:[%s437 + $0x28] sm:$0xf]
        %v450 = vld [vmem:[%s437 + $0x2c] sm:$0xf]
        %v451 = vld [vmem:[%s437 + $0x30] sm:$0xf]
        %v452 = vld [vmem:[%s437 + $0x34] sm:$0xf]
        %v453 = vld [vmem:[%s437 + $0x38] sm:$0xf]
        %v454 = vld [vmem:[%s437 + $0x3c] sm:$0xf]
        %v455 = vld [vmem:[%s437 + $0x40] sm:$0xf]
        %v456 = vld [vmem:[%s437 + $0x44] sm:$0xf]
        %v457 = vld [vmem:[%s437 + $0x48] sm:$0xf]
        %v458 = vld [vmem:[%s437 + $0x4c] sm:$0xf]
        %v459 = vld [vmem:[%s437 + $0x50] sm:$0xf]
        %v460 = vld [vmem:[%s437 + $0x54] sm:$0xf]
        %v461 = vld [vmem:[%s437 + $0x58] sm:$0xf]
        %v462 = vld [vmem:[%s437 + $0x5c] sm:$0xf]
        %v463 = vld [vmem:[%s437 + $0x60] sm:$0xf]
        %v464 = vld [vmem:[%s437 + $0x64] sm:$0xf]
        %v465 = vld [vmem:[%s437 + $0x68] sm:$0xf]
        %v466 = vld [vmem:[%s437 + $0x6c] sm:$0xf]
        %v467 = vld [vmem:[%s437 + $0x70] sm:$0xf]
        %v468 = vld [vmem:[%s437 + $0x74] sm:$0xf]
        %v469 = vld [vmem:[%s437 + $0x78] sm:$0xf]
        %v470 = vld [vmem:[%s437 + $0x7c] sm:$0xf]
        %v471 = vld [vmem:[%s1] sm:$0xf]
        %v472 = vld [vmem:[%s1 + $0x4] sm:$0xf]
        %v473 = vld [vmem:[%s1 + $0x8] sm:$0xf]
        %v474 = vld [vmem:[%s1 + $0xc] sm:$0xf]
        %v475 = vld [vmem:[%s1 + $0x10] sm:$0xf]
        %v476 = vld [vmem:[%s1 + $0x14] sm:$0xf]
        %v477 = vld [vmem:[%s1 + $0x18] sm:$0xf]
        %v478 = vld [vmem:[%s1 + $0x1c] sm:$0xf]
        %v479 = vld [vmem:[%s1 + $0x20] sm:$0xf]
        %v480 = vld [vmem:[%s1 + $0x24] sm:$0xf]
        %v481 = vld [vmem:[%s1 + $0x28] sm:$0xf]
        %v482 = vld [vmem:[%s1 + $0x2c] sm:$0xf]
        %v483 = vld [vmem:[%s1 + $0x30] sm:$0xf]
        %v484 = vld [vmem:[%s1 + $0x34] sm:$0xf]
        %v485 = vld [vmem:[%s1 + $0x38] sm:$0xf]
        %v486 = vld [vmem:[%s1 + $0x3c] sm:$0xf]
        %v487 = vld [vmem:[%s2] sm:$0x1]
        %v489 = vlaneseq
        %v490 = vshrl.u32 %v489, 7
        %v491 = vsub.s32 0, %v490
        %v492 = vrot.slane %v487, %v491
        %v526 = vunpack.c.l.b16 %v439
        %v527 = vunpack.c.l.b16 %v440
        %v528 = vunpack.c.l.b16 %v441
        %v529 = vunpack.c.l.b16 %v442
        %v530 = vunpack.c.l.b16 %v443
        %v531 = vunpack.c.l.b16 %v444
        %v532 = vunpack.c.l.b16 %v445
        %v533 = vunpack.c.l.b16 %v446
        %v534 = vunpack.c.l.b16 %v447
        %v535 = vunpack.c.l.b16 %v448
        %v536 = vunpack.c.l.b16 %v449
        %v537 = vunpack.c.l.b16 %v450
        %v538 = vunpack.c.l.b16 %v451
        %v539 = vunpack.c.l.b16 %v452
        %v540 = vunpack.c.l.b16 %v453
        %v541 = vunpack.c.l.b16 %v454
        %v542 = vunpack.c.l.b16 %v455
        %v543 = vunpack.c.l.b16 %v456
        %v544 = vunpack.c.l.b16 %v457
        %v545 = vunpack.c.l.b16 %v458
        %v546 = vunpack.c.l.b16 %v459
        %v547 = vunpack.c.l.b16 %v460
        %v548 = vunpack.c.l.b16 %v461
        %v549 = vunpack.c.l.b16 %v462
        %v550 = vunpack.c.l.b16 %v463
        %v551 = vunpack.c.l.b16 %v464
        %v552 = vunpack.c.l.b16 %v465
        %v553 = vunpack.c.l.b16 %v466
        %v554 = vunpack.c.l.b16 %v467
        %v555 = vunpack.c.l.b16 %v468
        %v556 = vunpack.c.l.b16 %v469
        %v557 = vunpack.c.l.b16 %v470
        %v558 = vpack.c.b16 %v527, %v526
        %v559 = vpack.c.b16 %v529, %v528
        %v560 = vpack.c.b16 %v531, %v530
        %v561 = vpack.c.b16 %v533, %v532
        %v562 = vpack.c.b16 %v535, %v534
        %v563 = vpack.c.b16 %v537, %v536
        %v564 = vpack.c.b16 %v539, %v538
        %v565 = vpack.c.b16 %v541, %v540
        %v566 = vpack.c.b16 %v543, %v542
        %v567 = vpack.c.b16 %v545, %v544
        %v568 = vpack.c.b16 %v547, %v546
        %v569 = vpack.c.b16 %v549, %v548
        %v570 = vpack.c.b16 %v551, %v550
        %v571 = vpack.c.b16 %v553, %v552
        %v572 = vpack.c.b16 %v555, %v554
        %v573 = vpack.c.b16 %v557, %v556
        %v606 = vunpack.c.l.b16 %v471
        %v607 = vunpack.c.l.b16 %v472
        %v608 = vunpack.c.l.b16 %v473
        %v609 = vunpack.c.l.b16 %v474
        %v610 = vunpack.c.l.b16 %v475
        %v611 = vunpack.c.l.b16 %v476
        %v612 = vunpack.c.l.b16 %v477
        %v613 = vunpack.c.l.b16 %v478
        %v614 = vunpack.c.l.b16 %v479
        %v615 = vunpack.c.l.b16 %v480
        %v616 = vunpack.c.l.b16 %v481
        %v617 = vunpack.c.l.b16 %v482
        %v618 = vunpack.c.l.b16 %v483
        %v619 = vunpack.c.l.b16 %v484
        %v620 = vunpack.c.l.b16 %v485
        %v621 = vunpack.c.l.b16 %v486
        %v622 = vpack.c.b16 %v607, %v606
        %v623 = vpack.c.b16 %v609, %v608
        %v624 = vpack.c.b16 %v611, %v610
        %v625 = vpack.c.b16 %v613, %v612
        %v626 = vpack.c.b16 %v615, %v614
        %v627 = vpack.c.b16 %v617, %v616
        %v628 = vpack.c.b16 %v619, %v618
        %v629 = vpack.c.b16 %v621, %v620
        %638 = vmatprep.subr.bf16.mxu0 0
        %639 = vmatpush1.bf16.msra.mxu0 %v629
        %640 = vmatprep.subr.bf16.mxu0 0
        %641 = vmatpush1.bf16.msra.mxu0 %v628
        %642 = vmatprep.subr.bf16.mxu0 0
        %643 = vmatpush1.bf16.msra.mxu0 %v627
        %644 = vmatprep.subr.bf16.mxu0 0
        %645 = vmatpush1.bf16.msra.mxu0 %v626
        %646 = vmatprep.subr.bf16.mxu0 0
        %647 = vmatpush1.bf16.msra.mxu0 %v625
        %648 = vmatprep.subr.bf16.mxu0 0
        %649 = vmatpush1.bf16.msra.mxu0 %v624
        %650 = vmatprep.subr.bf16.mxu0 0
        %651 = vmatpush1.bf16.msra.mxu0 %v623
        %652 = vmatprep.subr.bf16.mxu0 0
        %653 = vmatpush1.bf16.msra.mxu0 %v622
        %654 = vmatprep.subr.bf16.mxu0 0
        %655 = vmatpush2.bf16.msra.mxu0 0
        %656 = vmatprep.subr.bf16.mxu0 0
        %657 = vmatpush2.bf16.msra.mxu0 0
        %658 = vmatprep.subr.bf16.mxu0 0
        %659 = vmatpush2.bf16.msra.mxu0 0
        %660 = vmatprep.subr.bf16.mxu0 0
        %661 = vmatpush2.bf16.msra.mxu0 0
        %662 = vmatprep.subr.bf16.mxu0 0
        %663 = vmatpush2.bf16.msra.mxu0 0
        %664 = vmatprep.subr.bf16.mxu0 0
        %665 = vmatpush2.bf16.msra.mxu0 0
        %666 = vmatprep.subr.bf16.mxu0 0
        %667 = vmatpush2.bf16.msra.mxu0 0
        %668 = vmatprep.subr.bf16.mxu0 0
        %669 = vmatpush2.bf16.msra.mxu0 0
        %670 = vmatprep.mubr.bf16.mxu0 0
        %671 = vmatmul.mubr.bf16.gmra.mxu0 %v558
        %v672 = vpop.f32.mrf.mxu0
        %v673 = vadd.f32 %v492, %v672
        %v674 = vpop.f32.mrf.mxu0
        %v675 = vpop.f32.mrf.mxu0
        %v676 = vadd.f32 %v492, %v675
        %v677 = vpop.f32.mrf.mxu0
        %678 = vmatprep.mubr.bf16.mxu0 0
        %679 = vmatmul.mubr.bf16.gmra.mxu0 %v559
        %v680 = vpop.f32.mrf.mxu0
        %v681 = vadd.f32 %v492, %v680
        %v682 = vpop.f32.mrf.mxu0
        %v683 = vpop.f32.mrf.mxu0
        %v684 = vadd.f32 %v492, %v683
        %v685 = vpop.f32.mrf.mxu0
        %686 = vmatprep.mubr.bf16.mxu0 0
        %687 = vmatmul.mubr.bf16.gmra.mxu0 %v560
        %v688 = vpop.f32.mrf.mxu0
        %v689 = vadd.f32 %v492, %v688
        %v690 = vpop.f32.mrf.mxu0
        %v691 = vpop.f32.mrf.mxu0
        %v692 = vadd.f32 %v492, %v691
        %v693 = vpop.f32.mrf.mxu0
        %694 = vmatprep.mubr.bf16.mxu0 0
        %695 = vmatmul.mubr.bf16.gmra.mxu0 %v561
        %v696 = vpop.f32.mrf.mxu0
        %v697 = vadd.f32 %v492, %v696
        %v698 = vpop.f32.mrf.mxu0
        %v699 = vpop.f32.mrf.mxu0
        %v700 = vadd.f32 %v492, %v699
        %v701 = vpop.f32.mrf.mxu0
        %702 = vmatprep.mubr.bf16.mxu0 0
        %703 = vmatmul.mubr.bf16.gmra.mxu0 %v562
        %v704 = vpop.f32.mrf.mxu0
        %v705 = vadd.f32 %v492, %v704
        %v706 = vpop.f32.mrf.mxu0
        %v707 = vpop.f32.mrf.mxu0
        %v708 = vadd.f32 %v492, %v707
        %v709 = vpop.f32.mrf.mxu0
        %710 = vmatprep.mubr.bf16.mxu0 0
        %711 = vmatmul.mubr.bf16.gmra.mxu0 %v563
        %v712 = vpop.f32.mrf.mxu0
        %v713 = vadd.f32 %v492, %v712
        %v714 = vpop.f32.mrf.mxu0
        %v715 = vpop.f32.mrf.mxu0
        %v716 = vadd.f32 %v492, %v715
        %v717 = vpop.f32.mrf.mxu0
        %718 = vmatprep.mubr.bf16.mxu0 0
        %719 = vmatmul.mubr.bf16.gmra.mxu0 %v564
        %v720 = vpop.f32.mrf.mxu0
        %v721 = vadd.f32 %v492, %v720
        %v722 = vpop.f32.mrf.mxu0
        %v723 = vpop.f32.mrf.mxu0
        %v724 = vadd.f32 %v492, %v723
        %v725 = vpop.f32.mrf.mxu0
        %726 = vmatprep.mubr.bf16.mxu0 0
        %727 = vmatmul.mubr.bf16.gmra.mxu0 %v565
        %v728 = vpop.f32.mrf.mxu0
        %v729 = vadd.f32 %v492, %v728
        %v730 = vpop.f32.mrf.mxu0
        %v731 = vpop.f32.mrf.mxu0
        %v732 = vadd.f32 %v492, %v731
        %v733 = vpop.f32.mrf.mxu0
        %734 = vmatprep.mubr.bf16.mxu0 0
        %735 = vmatmul.mubr.bf16.gmra.mxu0 %v566
        %v736 = vpop.f32.mrf.mxu0
        %v737 = vadd.f32 %v492, %v736
        %v738 = vpop.f32.mrf.mxu0
        %v739 = vpop.f32.mrf.mxu0
        %v740 = vadd.f32 %v492, %v739
        %v741 = vpop.f32.mrf.mxu0
        %742 = vmatprep.mubr.bf16.mxu0 0
        %743 = vmatmul.mubr.bf16.gmra.mxu0 %v567
        %v744 = vpop.f32.mrf.mxu0
        %v745 = vadd.f32 %v492, %v744
        %v746 = vpop.f32.mrf.mxu0
        %v747 = vpop.f32.mrf.mxu0
        %v748 = vadd.f32 %v492, %v747
        %v749 = vpop.f32.mrf.mxu0
        %750 = vmatprep.mubr.bf16.mxu0 0
        %751 = vmatmul.mubr.bf16.gmra.mxu0 %v568
        %v752 = vpop.f32.mrf.mxu0
        %v753 = vadd.f32 %v492, %v752
        %v754 = vpop.f32.mrf.mxu0
        %v755 = vpop.f32.mrf.mxu0
        %v756 = vadd.f32 %v492, %v755
        %v757 = vpop.f32.mrf.mxu0
        %758 = vmatprep.mubr.bf16.mxu0 0
        %759 = vmatmul.mubr.bf16.gmra.mxu0 %v569
        %v760 = vpop.f32.mrf.mxu0
        %v761 = vadd.f32 %v492, %v760
        %v762 = vpop.f32.mrf.mxu0
        %v763 = vpop.f32.mrf.mxu0
        %v764 = vadd.f32 %v492, %v763
        %v765 = vpop.f32.mrf.mxu0
        %766 = vmatprep.mubr.bf16.mxu0 0
        %767 = vmatmul.mubr.bf16.gmra.mxu0 %v570
        %v768 = vpop.f32.mrf.mxu0
        %v769 = vadd.f32 %v492, %v768
        %v770 = vpop.f32.mrf.mxu0
        %v771 = vpop.f32.mrf.mxu0
        %v772 = vadd.f32 %v492, %v771
        %v773 = vpop.f32.mrf.mxu0
        %774 = vmatprep.mubr.bf16.mxu0 0
        %775 = vmatmul.mubr.bf16.gmra.mxu0 %v571
        %v776 = vpop.f32.mrf.mxu0
        %v777 = vadd.f32 %v492, %v776
        %v778 = vpop.f32.mrf.mxu0
        %v779 = vpop.f32.mrf.mxu0
        %v780 = vadd.f32 %v492, %v779
        %v781 = vpop.f32.mrf.mxu0
        %782 = vmatprep.mubr.bf16.mxu0 0
        %783 = vmatmul.mubr.bf16.gmra.mxu0 %v572
        %v784 = vpop.f32.mrf.mxu0
        %v785 = vadd.f32 %v492, %v784
        %v786 = vpop.f32.mrf.mxu0
        %v787 = vpop.f32.mrf.mxu0
        %v788 = vadd.f32 %v492, %v787
        %v789 = vpop.f32.mrf.mxu0
        %790 = vmatprep.mubr.bf16.mxu0 0
        %791 = vmatmul.mubr.bf16.gmra.mxu0 %v573
        %v792 = vpop.f32.mrf.mxu0
        %v793 = vadd.f32 %v492, %v792
        %v794 = vpop.f32.mrf.mxu0
        %v795 = vpop.f32.mrf.mxu0
        %v796 = vadd.f32 %v492, %v795
        %v797 = vpop.f32.mrf.mxu0
        %798 = vdwg.mxu0
        %v799 = vmax.f32 %v673, 0.0
        %v800 = vmax.f32 %v676, 0.0
        %v801 = vmax.f32 %v681, 0.0
        %v802 = vmax.f32 %v684, 0.0
        %v803 = vmax.f32 %v689, 0.0
        %v804 = vmax.f32 %v692, 0.0
        %v805 = vmax.f32 %v697, 0.0
        %v806 = vmax.f32 %v700, 0.0
        %v807 = vmax.f32 %v705, 0.0
        %v808 = vmax.f32 %v708, 0.0
        %v809 = vmax.f32 %v713, 0.0
        %v810 = vmax.f32 %v716, 0.0
        %v811 = vmax.f32 %v721, 0.0
        %v812 = vmax.f32 %v724, 0.0
        %v813 = vmax.f32 %v729, 0.0
        %v814 = vmax.f32 %v732, 0.0
        %v815 = vmax.f32 %v737, 0.0
        %v816 = vmax.f32 %v740, 0.0
        %v817 = vmax.f32 %v745, 0.0
        %v818 = vmax.f32 %v748, 0.0
        %v819 = vmax.f32 %v753, 0.0
        %v820 = vmax.f32 %v756, 0.0
        %v821 = vmax.f32 %v761, 0.0
        %v822 = vmax.f32 %v764, 0.0
        %v823 = vmax.f32 %v769, 0.0
        %v824 = vmax.f32 %v772, 0.0
        %v825 = vmax.f32 %v777, 0.0
        %v826 = vmax.f32 %v780, 0.0
        %v827 = vmax.f32 %v785, 0.0
        %v828 = vmax.f32 %v788, 0.0
        %v829 = vmax.f32 %v793, 0.0
        %v830 = vmax.f32 %v796, 0.0
        %831 = vst [vmem:[#allocation2] sm:$0xff] %v799
        %832 = vst [vmem:[#allocation2 + $0x8] sm:$0xff] %v800
        %833 = vst [vmem:[#allocation2 + $0x10] sm:$0xff] %v801
        %834 = vst [vmem:[#allocation2 + $0x18] sm:$0xff] %v802
        %835 = vst [vmem:[#allocation2 + $0x20] sm:$0xff] %v803
        %836 = vst [vmem:[#allocation2 + $0x28] sm:$0xff] %v804
        %837 = vst [vmem:[#allocation2 + $0x30] sm:$0xff] %v805
        %838 = vst [vmem:[#allocation2 + $0x38] sm:$0xff] %v806
        %839 = vst [vmem:[#allocation2 + $0x40] sm:$0xff] %v807
        %840 = vst [vmem:[#allocation2 + $0x48] sm:$0xff] %v808
        %841 = vst [vmem:[#allocation2 + $0x50] sm:$0xff] %v809
        %842 = vst [vmem:[#allocation2 + $0x58] sm:$0xff] %v810
        %843 = vst [vmem:[#allocation2 + $0x60] sm:$0xff] %v811
        %844 = vst [vmem:[#allocation2 + $0x68] sm:$0xff] %v812
        %845 = vst [vmem:[#allocation2 + $0x70] sm:$0xff] %v813
        %846 = vst [vmem:[#allocation2 + $0x78] sm:$0xff] %v814
        %847 = vst [vmem:[#allocation2 + $0x80] sm:$0xff] %v815
        %848 = vst [vmem:[#allocation2 + $0x88] sm:$0xff] %v816
        %849 = vst [vmem:[#allocation2 + $0x90] sm:$0xff] %v817
        %850 = vst [vmem:[#allocation2 + $0x98] sm:$0xff] %v818
        %851 = vst [vmem:[#allocation2 + $0xa0] sm:$0xff] %v819
        %852 = vst [vmem:[#allocation2 + $0xa8] sm:$0xff] %v820
        %853 = vst [vmem:[#allocation2 + $0xb0] sm:$0xff] %v821
        %854 = vst [vmem:[#allocation2 + $0xb8] sm:$0xff] %v822
        %855 = vst [vmem:[#allocation2 + $0xc0] sm:$0xff] %v823
        %856 = vst [vmem:[#allocation2 + $0xc8] sm:$0xff] %v824
        %857 = vst [vmem:[#allocation2 + $0xd0] sm:$0xff] %v825
        %858 = vst [vmem:[#allocation2 + $0xd8] sm:$0xff] %v826
        %859 = vst [vmem:[#allocation2 + $0xe0] sm:$0xff] %v827
        %860 = vst [vmem:[#allocation2 + $0xe8] sm:$0xff] %v828
        %861 = vst [vmem:[#allocation2 + $0xf0] sm:$0xff] %v829
        %862 = vst [vmem:[#allocation2 + $0xf8] sm:$0xff] %v830
        %863 = vst [vmem:[#allocation3] sm:$0xf] 0
        %864 = vst [vmem:[#allocation3 + $0x4] sm:$0x3] 0
        %865 = vst [vmem:[#allocation3 + $0x34] sm:$0xc] 0
        %866 = vst [vmem:[#allocation3 + $0x38] sm:$0xf] 0
        %v867 = vld [vmem:[#allocation2] ss:$2 sm:$0xff]
        %s868 = scalar_lea.vmem [#allocation2], 1
        %v869 = vld [vmem:[%s868] ss:$2 sm:$0xff]
        %v870 = vmax.f32 %v867, %v869
        %s871 = scalar_lea.vmem [#allocation2], 16
        %v872 = vld [vmem:[%s871] ss:$2 sm:$0xff]
        %s873 = scalar_lea.vmem [#allocation2], 17
        %v874 = vld [vmem:[%s873] ss:$2 sm:$0xff]
        %v875 = vmax.f32 %v872, %v874
        %v876 = vmax.f32 %v870, %v875
        %877 = vst [vmem:[#allocation3 + $0x4] sm:$0x4] 0
        %v878 = vpack.c.bf16 %v876, %v876
        %v880 = vunpack.c.l.b16 %v878
        %v881 = vpack.c.b16 %v880, %v880
        %v882 = vrot.slane %v881, 5
        %v883 = vrot.slane %v882, 4
        %886 = vst [vmem:[#allocation3 + $0x4] sm:$0x8] %v882
        %887 = vst [vmem:[#allocation3 + $0x8] sm:$0x7] %v883
        %888 = vst [vmem:[#allocation3 + $0x8] sm:$0x8] 0
        %s889 = scalar_lea.vmem [#allocation2], 32
        %v890 = vld [vmem:[%s889] ss:$2 sm:$0xff]
        %s891 = scalar_lea.vmem [#allocation2], 33
        %v892 = vld [vmem:[%s891] ss:$2 sm:$0xff]
        %v893 = vmax.f32 %v890, %v892
        %s894 = scalar_lea.vmem [#allocation2], 48
        %v895 = vld [vmem:[%s894] ss:$2 sm:$0xff]
        %s896 = scalar_lea.vmem [#allocation2], 49
        %v897 = vld [vmem:[%s896] ss:$2 sm:$0xff]
        %v898 = vmax.f32 %v895, %v897
        %v899 = vmax.f32 %v893, %v898
        %900 = vst [vmem:[#allocation3 + $0xc] sm:$0x1] 0
        %v901 = vpack.c.bf16 %v899, %v899
        %v903 = vunpack.c.l.b16 %v901
        %v904 = vpack.c.b16 %v903, %v903
        %v905 = vrot.slane %v904, 7
        %v906 = vrot.slane %v905, 4
        %909 = vst [vmem:[#allocation3 + $0xc] sm:$0xe] %v905
        %910 = vst [vmem:[#allocation3 + $0x10] sm:$0x1] %v906
        %911 = vst [vmem:[#allocation3 + $0x10] sm:$0x2] 0
        %s912 = scalar_lea.vmem [#allocation2], 64
        %v913 = vld [vmem:[%s912] ss:$2 sm:$0xff]
        %s914 = scalar_lea.vmem [#allocation2], 65
        %v915 = vld [vmem:[%s914] ss:$2 sm:$0xff]
        %v916 = vmax.f32 %v913, %v915
        %s917 = scalar_lea.vmem [#allocation2], 80
        %v918 = vld [vmem:[%s917] ss:$2 sm:$0xff]
        %s919 = scalar_lea.vmem [#allocation2], 81
        %v920 = vld [vmem:[%s919] ss:$2 sm:$0xff]
        %v921 = vmax.f32 %v918, %v920
        %v922 = vmax.f32 %v916, %v921
        %923 = vst [vmem:[#allocation3 + $0x10] sm:$0x4] 0
        %v924 = vpack.c.bf16 %v922, %v922
        %v926 = vunpack.c.l.b16 %v924
        %v927 = vpack.c.b16 %v926, %v926
        %v928 = vrot.slane %v927, 5
        %v929 = vrot.slane %v928, 4
        %932 = vst [vmem:[#allocation3 + $0x10] sm:$0x8] %v928
        %933 = vst [vmem:[#allocation3 + $0x14] sm:$0x7] %v929
        %934 = vst [vmem:[#allocation3 + $0x14] sm:$0x8] 0
        %s935 = scalar_lea.vmem [#allocation2], 96
        %v936 = vld [vmem:[%s935] ss:$2 sm:$0xff]
        %s937 = scalar_lea.vmem [#allocation2], 97
        %v938 = vld [vmem:[%s937] ss:$2 sm:$0xff]
        %v939 = vmax.f32 %v936, %v938
        %s940 = scalar_lea.vmem [#allocation2], 112
        %v941 = vld [vmem:[%s940] ss:$2 sm:$0xff]
        %s942 = scalar_lea.vmem [#allocation2], 113
        %v943 = vld [vmem:[%s942] ss:$2 sm:$0xff]
        %v944 = vmax.f32 %v941, %v943
        %v945 = vmax.f32 %v939, %v944
        %946 = vst [vmem:[#allocation3 + $0x18] sm:$0x1] 0
        %v947 = vpack.c.bf16 %v945, %v945
        %v949 = vunpack.c.l.b16 %v947
        %v950 = vpack.c.b16 %v949, %v949
        %v951 = vrot.slane %v950, 7
        %v952 = vrot.slane %v951, 4
        %955 = vst [vmem:[#allocation3 + $0x18] sm:$0xe] %v951
        %956 = vst [vmem:[#allocation3 + $0x1c] sm:$0x1] %v952
        %957 = vst [vmem:[#allocation3 + $0x1c] sm:$0x2] 0
        %s958 = scalar_lea.vmem [#allocation2], 128
        %v959 = vld [vmem:[%s958] ss:$2 sm:$0xff]
        %s960 = scalar_lea.vmem [#allocation2], 129
        %v961 = vld [vmem:[%s960] ss:$2 sm:$0xff]
        %v962 = vmax.f32 %v959, %v961
        %s963 = scalar_lea.vmem [#allocation2], 144
        %v964 = vld [vmem:[%s963] ss:$2 sm:$0xff]
        %s965 = scalar_lea.vmem [#allocation2], 145
        %v966 = vld [vmem:[%s965] ss:$2 sm:$0xff]
        %v967 = vmax.f32 %v964, %v966
        %v968 = vmax.f32 %v962, %v967
        %969 = vst [vmem:[#allocation3 + $0x1c] sm:$0x4] 0
        %v970 = vpack.c.bf16 %v968, %v968
        %v972 = vunpack.c.l.b16 %v970
        %v973 = vpack.c.b16 %v972, %v972
        %v974 = vrot.slane %v973, 5
        %v975 = vrot.slane %v974, 4
        %978 = vst [vmem:[#allocation3 + $0x1c] sm:$0x8] %v974
        %979 = vst [vmem:[#allocation3 + $0x20] sm:$0x7] %v975
        %980 = vst [vmem:[#allocation3 + $0x20] sm:$0x8] 0
        %s981 = scalar_lea.vmem [#allocation2], 160
        %v982 = vld [vmem:[%s981] ss:$2 sm:$0xff]
        %s983 = scalar_lea.vmem [#allocation2], 161
        %v984 = vld [vmem:[%s983] ss:$2 sm:$0xff]
        %v985 = vmax.f32 %v982, %v984
        %s986 = scalar_lea.vmem [#allocation2], 176
        %v987 = vld [vmem:[%s986] ss:$2 sm:$0xff]
        %s988 = scalar_lea.vmem [#allocation2], 177
        %v989 = vld [vmem:[%s988] ss:$2 sm:$0xff]
        %v990 = vmax.f32 %v987, %v989
        %v991 = vmax.f32 %v985, %v990
        %992 = vst [vmem:[#allocation3 + $0x24] sm:$0x1] 0
        %v993 = vpack.c.bf16 %v991, %v991
        %v995 = vunpack.c.l.b16 %v993
        %v996 = vpack.c.b16 %v995, %v995
        %v997 = vrot.slane %v996, 7
        %v998 = vrot.slane %v997, 4
        %1001 = vst [vmem:[#allocation3 + $0x24] sm:$0xe] %v997
        %1002 = vst [vmem:[#allocation3 + $0x28] sm:$0x1] %v998
        %1003 = vst [vmem:[#allocation3 + $0x28] sm:$0x2] 0
        %s1004 = scalar_lea.vmem [#allocation2], 192
        %v1005 = vld [vmem:[%s1004] ss:$2 sm:$0xff]
        %s1006 = scalar_lea.vmem [#allocation2], 193
        %v1007 = vld [vmem:[%s1006] ss:$2 sm:$0xff]
        %v1008 = vmax.f32 %v1005, %v1007
        %s1009 = scalar_lea.vmem [#allocation2], 208
        %v1010 = vld [vmem:[%s1009] ss:$2 sm:$0xff]
        %s1011 = scalar_lea.vmem [#allocation2], 209
        %v1012 = vld [vmem:[%s1011] ss:$2 sm:$0xff]
        %v1013 = vmax.f32 %v1010, %v1012
        %v1014 = vmax.f32 %v1008, %v1013
        %1015 = vst [vmem:[#allocation3 + $0x28] sm:$0x4] 0
        %v1016 = vpack.c.bf16 %v1014, %v1014
        %v1018 = vunpack.c.l.b16 %v1016
        %v1019 = vpack.c.b16 %v1018, %v1018
        %v1020 = vrot.slane %v1019, 5
        %v1021 = vrot.slane %v1020, 4
        %1024 = vst [vmem:[#allocation3 + $0x28] sm:$0x8] %v1020
        %1025 = vst [vmem:[#allocation3 + $0x2c] sm:$0x7] %v1021
        %1026 = vst [vmem:[#allocation3 + $0x2c] sm:$0x8] 0
        %s1027 = scalar_lea.vmem [#allocation2], 224
        %v1028 = vld [vmem:[%s1027] ss:$2 sm:$0xff]
        %s1029 = scalar_lea.vmem [#allocation2], 225
        %v1030 = vld [vmem:[%s1029] ss:$2 sm:$0xff]
        %v1031 = vmax.f32 %v1028, %v1030
        %s1032 = scalar_lea.vmem [#allocation2], 240
        %v1033 = vld [vmem:[%s1032] ss:$2 sm:$0xff]
        %s1034 = scalar_lea.vmem [#allocation2], 241
        %v1035 = vld [vmem:[%s1034] ss:$2 sm:$0xff]
        %v1036 = vmax.f32 %v1033, %v1035
        %v1037 = vmax.f32 %v1031, %v1036
        %1038 = vst [vmem:[#allocation3 + $0x30] sm:$0x1] 0
        %v1039 = vpack.c.bf16 %v1037, %v1037
        %v1041 = vunpack.c.l.b16 %v1039
        %v1042 = vpack.c.b16 %v1041, %v1041
        %v1043 = vrot.slane %v1042, 7
        %v1044 = vrot.slane %v1043, 4
        %1047 = vst [vmem:[#allocation3 + $0x30] sm:$0xe] %v1043
        %1048 = vst [vmem:[#allocation3 + $0x34] sm:$0x1] %v1044
        %1049 = vst [vmem:[#allocation3 + $0x34] sm:$0x2] 0
        %1050 = vst [vmem:[#allocation3 + $0x3c] sm:$0xf] 0
        %1051 = vst [vmem:[#allocation3 + $0x40] sm:$0xf] 0
        %1052 = vst [vmem:[#allocation3 + $0x44] sm:$0xf] 0
        %1053 = vst [vmem:[#allocation3 + $0x48] sm:$0x1] 0
        %v1054 = vld [vmem:[#allocation3] sm:$0xf]
        %v1055 = vld [vmem:[#allocation3 + $0x4] sm:$0xf]
        %v1056 = vld [vmem:[#allocation3 + $0x8] sm:$0xf]
        %v1057 = vld [vmem:[#allocation3 + $0xc] sm:$0xf]
        %v1058 = vld [vmem:[#allocation3 + $0x10] sm:$0xf]
        %v1059 = vld [vmem:[#allocation3 + $0x14] sm:$0xf]
        %v1060 = vld [vmem:[#allocation3 + $0x18] sm:$0xf]
        %v1061 = vld [vmem:[#allocation3 + $0x1c] sm:$0xf]
        %v1062 = vld [vmem:[#allocation3 + $0x20] sm:$0xf]
        %v1063 = vld [vmem:[#allocation3 + $0x24] sm:$0xf]
        %v1064 = vld [vmem:[#allocation3 + $0x28] sm:$0xf]
        %v1065 = vld [vmem:[#allocation3 + $0x2c] sm:$0xf]
        %v1066 = vld [vmem:[#allocation3 + $0x30] sm:$0xf]
        %v1067 = vld [vmem:[#allocation3 + $0x34] sm:$0xf]
        %v1068 = vld [vmem:[#allocation3 + $0x38] sm:$0xf]
        %v1069 = vld [vmem:[%s3] sm:$0xf]
        %v1070 = vld [vmem:[%s3 + $0x4] sm:$0xf]
        %v1071 = vld [vmem:[%s3 + $0x8] sm:$0xf]
        %v1072 = vld [vmem:[%s3 + $0xc] sm:$0xf]
        %v1073 = vld [vmem:[%s3 + $0x10] sm:$0xf]
        %v1074 = vld [vmem:[%s3 + $0x14] sm:$0xf]
        %v1075 = vld [vmem:[%s3 + $0x18] sm:$0xf]
        %v1076 = vld [vmem:[%s3 + $0x1c] sm:$0xf]
        %v1077 = vld [vmem:[%s3 + $0x20] sm:$0xf]
        %v1078 = vld [vmem:[%s3 + $0x24] sm:$0xf]
        %v1079 = vld [vmem:[%s3 + $0x28] sm:$0xf]
        %v1080 = vld [vmem:[%s3 + $0x2c] sm:$0xf]
        %v1081 = vld [vmem:[%s3 + $0x30] sm:$0xf]
        %v1082 = vld [vmem:[%s3 + $0x34] sm:$0xf]
        %v1083 = vld [vmem:[%s3 + $0x38] sm:$0xf]
        %v1084 = vld [vmem:[%s3 + $0x3c] sm:$0xf]
        %v1085 = vld [vmem:[#allocation3 + $0x3c] sm:$0x1]
        %s1086 = scalar_lea.vmem %s3, 64
        %v1087 = vld [vmem:[%s1086] sm:$0xf]
        %v1088 = vld [vmem:[%s1086 + $0x4] sm:$0xf]
        %v1089 = vld [vmem:[%s1086 + $0x8] sm:$0xf]
        %v1090 = vld [vmem:[%s1086 + $0xc] sm:$0xf]
        %v1091 = vld [vmem:[%s1086 + $0x10] sm:$0xf]
        %v1092 = vld [vmem:[%s1086 + $0x14] sm:$0xf]
        %v1093 = vld [vmem:[%s1086 + $0x18] sm:$0xf]
        %v1094 = vld [vmem:[%s1086 + $0x1c] sm:$0xf]
        %v1095 = vld [vmem:[%s1086 + $0x20] sm:$0xf]
        %v1096 = vld [vmem:[%s1086 + $0x24] sm:$0xf]
        %v1097 = vld [vmem:[%s1086 + $0x28] sm:$0xf]
        %v1098 = vld [vmem:[%s1086 + $0x2c] sm:$0xf]
        %v1099 = vld [vmem:[%s1086 + $0x30] sm:$0xf]
        %v1100 = vld [vmem:[%s1086 + $0x34] sm:$0xf]
        %v1101 = vld [vmem:[%s1086 + $0x38] sm:$0xf]
        %v1102 = vld [vmem:[%s1086 + $0x3c] sm:$0xf]
        %v1119 = vunpack.c.l.b16 %v1054
        %v1120 = vunpack.c.l.b16 %v1055
        %v1121 = vunpack.c.l.b16 %v1056
        %v1122 = vunpack.c.l.b16 %v1057
        %v1123 = vunpack.c.l.b16 %v1058
        %v1124 = vunpack.c.l.b16 %v1059
        %v1125 = vunpack.c.l.b16 %v1060
        %v1126 = vunpack.c.l.b16 %v1061
        %v1127 = vunpack.c.l.b16 %v1062
        %v1128 = vunpack.c.l.b16 %v1063
        %v1129 = vunpack.c.l.b16 %v1064
        %v1130 = vunpack.c.l.b16 %v1065
        %v1131 = vunpack.c.l.b16 %v1066
        %v1132 = vunpack.c.l.b16 %v1067
        %v1133 = vunpack.c.l.b16 %v1068
        %v1134 = vunpack.c.l.b16 %v1085
        %v1135 = vpack.c.b16 %v1120, %v1119
        %v1136 = vpack.c.b16 %v1122, %v1121
        %v1137 = vpack.c.b16 %v1124, %v1123
        %v1138 = vpack.c.b16 %v1126, %v1125
        %v1139 = vpack.c.b16 %v1128, %v1127
        %v1140 = vpack.c.b16 %v1130, %v1129
        %v1141 = vpack.c.b16 %v1132, %v1131
        %v1142 = vpack.c.b16 %v1134, %v1133
        %vm1143 = vsmask.f32 7424
        %v1145 = vshrl.u32 %v1135, 16
        %v1147 = vshll.u32 %v1135, 16
        %v1149 = vrot.slane %v1147, 1
        %v1150 = vor.u32 %v1145, %v1149
        %v1152 = vshll.u32 %v1136, 16
        %v1154 = vrot.slane %v1152, 1
        %v1155 = vsel %vm1143, %v1150, %v1154
        %v1156 = vshrl.u32 %v1136, 16
        %v1158 = vor.u32 %v1156, %v1154
        %v1160 = vshll.u32 %v1137, 16
        %v1162 = vrot.slane %v1160, 1
        %v1163 = vsel %vm1143, %v1158, %v1162
        %v1164 = vshrl.u32 %v1137, 16
        %v1166 = vor.u32 %v1164, %v1162
        %v1168 = vshll.u32 %v1138, 16
        %v1170 = vrot.slane %v1168, 1
        %v1171 = vsel %vm1143, %v1166, %v1170
        %v1172 = vshrl.u32 %v1138, 16
        %v1174 = vor.u32 %v1172, %v1170
        %v1176 = vshll.u32 %v1139, 16
        %v1178 = vrot.slane %v1176, 1
        %v1179 = vsel %vm1143, %v1174, %v1178
        %v1180 = vshrl.u32 %v1139, 16
        %v1182 = vor.u32 %v1180, %v1178
        %v1184 = vshll.u32 %v1140, 16
        %v1186 = vrot.slane %v1184, 1
        %v1187 = vsel %vm1143, %v1182, %v1186
        %v1188 = vshrl.u32 %v1140, 16
        %v1190 = vor.u32 %v1188, %v1186
        %v1192 = vshll.u32 %v1141, 16
        %v1194 = vrot.slane %v1192, 1
        %v1195 = vsel %vm1143, %v1190, %v1194
        %v1196 = vshrl.u32 %v1141, 16
        %v1198 = vor.u32 %v1196, %v1194
        %v1200 = vshll.u32 %v1142, 16
        %v1202 = vrot.slane %v1200, 1
        %v1203 = vsel %vm1143, %v1198, %v1202
        %v1204 = vshrl.u32 %v1142, 16
        %v1206 = vor.u32 %v1204, %v1202
        %v1231 = vunpack.c.l.b16 %v1087
        %v1232 = vunpack.c.l.b16 %v1088
        %v1233 = vunpack.c.l.b16 %v1089
        %v1234 = vunpack.c.l.b16 %v1090
        %v1235 = vunpack.c.l.b16 %v1091
        %v1236 = vunpack.c.l.b16 %v1092
        %v1237 = vunpack.c.l.b16 %v1093
        %v1238 = vunpack.c.l.b16 %v1094
        %v1239 = vunpack.c.l.b16 %v1095
        %v1240 = vunpack.c.l.b16 %v1096
        %v1241 = vunpack.c.l.b16 %v1097
        %v1242 = vunpack.c.l.b16 %v1098
        %v1243 = vunpack.c.l.b16 %v1099
        %v1244 = vunpack.c.l.b16 %v1100
        %v1245 = vunpack.c.l.b16 %v1101
        %v1246 = vunpack.c.l.b16 %v1102
        %v1247 = vpack.c.b16 %v1232, %v1231
        %v1248 = vpack.c.b16 %v1234, %v1233
        %v1249 = vpack.c.b16 %v1236, %v1235
        %v1250 = vpack.c.b16 %v1238, %v1237
        %v1251 = vpack.c.b16 %v1240, %v1239
        %v1252 = vpack.c.b16 %v1242, %v1241
        %v1253 = vpack.c.b16 %v1244, %v1243
        %v1254 = vpack.c.b16 %v1246, %v1245
        %1263 = vmatprep.subr.bf16.mxu0 0
        %1264 = vmatpush1.bf16.msra.mxu0 %v1254
        %1265 = vmatprep.subr.bf16.mxu0 0
        %1266 = vmatpush1.bf16.msra.mxu0 %v1253
        %1267 = vmatprep.subr.bf16.mxu0 0
        %1268 = vmatpush1.bf16.msra.mxu0 %v1252
        %1269 = vmatprep.subr.bf16.mxu0 0
        %1270 = vmatpush1.bf16.msra.mxu0 %v1251
        %1271 = vmatprep.subr.bf16.mxu0 0
        %1272 = vmatpush1.bf16.msra.mxu0 %v1250
        %1273 = vmatprep.subr.bf16.mxu0 0
        %1274 = vmatpush1.bf16.msra.mxu0 %v1249
        %1275 = vmatprep.subr.bf16.mxu0 0
        %1276 = vmatpush1.bf16.msra.mxu0 %v1248
        %1277 = vmatprep.subr.bf16.mxu0 0
        %1278 = vmatpush1.bf16.msra.mxu0 %v1247
        %1279 = vmatprep.subr.bf16.mxu0 0
        %1280 = vmatpush2.bf16.msra.mxu0 0
        %1281 = vmatprep.subr.bf16.mxu0 0
        %1282 = vmatpush2.bf16.msra.mxu0 0
        %1283 = vmatprep.subr.bf16.mxu0 0
        %1284 = vmatpush2.bf16.msra.mxu0 0
        %1285 = vmatprep.subr.bf16.mxu0 0
        %1286 = vmatpush2.bf16.msra.mxu0 0
        %1287 = vmatprep.subr.bf16.mxu0 0
        %1288 = vmatpush2.bf16.msra.mxu0 0
        %1289 = vmatprep.subr.bf16.mxu0 0
        %1290 = vmatpush2.bf16.msra.mxu0 0
        %1291 = vmatprep.subr.bf16.mxu0 0
        %1292 = vmatpush2.bf16.msra.mxu0 0
        %1293 = vmatprep.subr.bf16.mxu0 0
        %1294 = vmatpush2.bf16.msra.mxu0 0
        %1295 = vmatprep.mubr.bf16.mxu0 0
        %1296 = vmatmul.mubr.bf16.gmra.mxu0 %v1155
        %v1297 = vpop.f32.mrf.mxu0
        %v1298 = vadd.f32 0.0, %v1297
        %v1299 = vpop.f32.mrf.mxu0
        %v1300 = vpop.f32.mrf.mxu0
        %v1301 = vadd.f32 0.0, %v1300
        %v1302 = vpop.f32.mrf.mxu0
        %1303 = vmatprep.mubr.bf16.mxu0 0
        %1304 = vmatmul.mubr.bf16.gmra.mxu0 %v1163
        %v1305 = vpop.f32.mrf.mxu0
        %v1306 = vadd.f32 0.0, %v1305
        %v1307 = vpop.f32.mrf.mxu0
        %v1308 = vpop.f32.mrf.mxu0
        %v1309 = vadd.f32 0.0, %v1308
        %v1310 = vpop.f32.mrf.mxu0
        %1311 = vmatprep.mubr.bf16.mxu0 0
        %1312 = vmatmul.mubr.bf16.gmra.mxu0 %v1171
        %v1313 = vpop.f32.mrf.mxu0
        %v1314 = vadd.f32 0.0, %v1313
        %v1315 = vpop.f32.mrf.mxu0
        %v1316 = vpop.f32.mrf.mxu0
        %v1317 = vadd.f32 0.0, %v1316
        %v1318 = vpop.f32.mrf.mxu0
        %1319 = vmatprep.mubr.bf16.mxu0 0
        %1320 = vmatmul.mubr.bf16.gmra.mxu0 %v1179
        %v1321 = vpop.f32.mrf.mxu0
        %v1322 = vadd.f32 0.0, %v1321
        %v1323 = vpop.f32.mrf.mxu0
        %v1324 = vpop.f32.mrf.mxu0
        %v1325 = vadd.f32 0.0, %v1324
        %v1326 = vpop.f32.mrf.mxu0
        %1327 = vmatprep.mubr.bf16.mxu0 0
        %1328 = vmatmul.mubr.bf16.gmra.mxu0 %v1187
        %v1329 = vpop.f32.mrf.mxu0
        %v1330 = vadd.f32 0.0, %v1329
        %v1331 = vpop.f32.mrf.mxu0
        %v1332 = vpop.f32.mrf.mxu0
        %v1333 = vadd.f32 0.0, %v1332
        %v1334 = vpop.f32.mrf.mxu0
        %1335 = vmatprep.mubr.bf16.mxu0 0
        %1336 = vmatmul.mubr.bf16.gmra.mxu0 %v1195
        %v1337 = vpop.f32.mrf.mxu0
        %v1338 = vadd.f32 0.0, %v1337
        %v1339 = vpop.f32.mrf.mxu0
        %v1340 = vpop.f32.mrf.mxu0
        %v1341 = vadd.f32 0.0, %v1340
        %v1342 = vpop.f32.mrf.mxu0
        %1343 = vmatprep.mubr.bf16.mxu0 0
        %1344 = vmatmul.mubr.bf16.gmra.mxu0 %v1203
        %v1345 = vpop.f32.mrf.mxu0
        %v1346 = vadd.f32 0.0, %v1345
        %v1347 = vpop.f32.mrf.mxu0
        %v1348 = vpop.f32.mrf.mxu0
        %v1349 = vadd.f32 0.0, %v1348
        %v1350 = vpop.f32.mrf.mxu0
        %1351 = vmatprep.mubr.bf16.mxu0 0
        %1352 = vmatmul.mubr.bf16.gmra.mxu0 %v1206
        %v1353 = vpop.f32.mrf.mxu0
        %v1354 = vadd.f32 0.0, %v1353
        %v1355 = vpop.f32.mrf.mxu0
        %v1356 = vpop.f32.mrf.mxu0
        %v1357 = vpop.f32.mrf.mxu0
        %1358 = vdwg.mxu0
        %v1359 = vpack.c.b16 %v1133, %v1133
        %v1384 = vunpack.c.l.b16 %v1069
        %v1385 = vunpack.c.l.b16 %v1070
        %v1386 = vunpack.c.l.b16 %v1071
        %v1387 = vunpack.c.l.b16 %v1072
        %v1388 = vunpack.c.l.b16 %v1073
        %v1389 = vunpack.c.l.b16 %v1074
        %v1390 = vunpack.c.l.b16 %v1075
        %v1391 = vunpack.c.l.b16 %v1076
        %v1392 = vunpack.c.l.b16 %v1077
        %v1393 = vunpack.c.l.b16 %v1078
        %v1394 = vunpack.c.l.b16 %v1079
        %v1395 = vunpack.c.l.b16 %v1080
        %v1396 = vunpack.c.l.b16 %v1081
        %v1397 = vunpack.c.l.b16 %v1082
        %v1398 = vunpack.c.l.b16 %v1083
        %v1399 = vunpack.c.l.b16 %v1084
        %v1400 = vpack.c.b16 %v1385, %v1384
        %v1401 = vpack.c.b16 %v1387, %v1386
        %v1402 = vpack.c.b16 %v1389, %v1388
        %v1403 = vpack.c.b16 %v1391, %v1390
        %v1404 = vpack.c.b16 %v1393, %v1392
        %v1405 = vpack.c.b16 %v1395, %v1394
        %v1406 = vpack.c.b16 %v1397, %v1396
        %v1407 = vpack.c.b16 %v1399, %v1398
        %1416 = vmatprep.subr.bf16.mxu0 0
        %1417 = vmatpush1.bf16.msra.mxu0 %v1407
        %1418 = vmatprep.subr.bf16.mxu0 0
        %1419 = vmatpush1.bf16.msra.mxu0 %v1406
        %1420 = vmatprep.subr.bf16.mxu0 0
        %1421 = vmatpush1.bf16.msra.mxu0 %v1405
        %1422 = vmatprep.subr.bf16.mxu0 0
        %1423 = vmatpush1.bf16.msra.mxu0 %v1404
        %1424 = vmatprep.subr.bf16.mxu0 0
        %1425 = vmatpush1.bf16.msra.mxu0 %v1403
        %1426 = vmatprep.subr.bf16.mxu0 0
        %1427 = vmatpush1.bf16.msra.mxu0 %v1402
        %1428 = vmatprep.subr.bf16.mxu0 0
        %1429 = vmatpush1.bf16.msra.mxu0 %v1401
        %1430 = vmatprep.subr.bf16.mxu0 0
        %1431 = vmatpush1.bf16.msra.mxu0 %v1400
        %1432 = vmatprep.subr.bf16.mxu0 0
        %1433 = vmatpush2.bf16.msra.mxu0 0
        %1434 = vmatprep.subr.bf16.mxu0 0
        %1435 = vmatpush2.bf16.msra.mxu0 0
        %1436 = vmatprep.subr.bf16.mxu0 0
        %1437 = vmatpush2.bf16.msra.mxu0 0
        %1438 = vmatprep.subr.bf16.mxu0 0
        %1439 = vmatpush2.bf16.msra.mxu0 0
        %1440 = vmatprep.subr.bf16.mxu0 0
        %1441 = vmatpush2.bf16.msra.mxu0 0
        %1442 = vmatprep.subr.bf16.mxu0 0
        %1443 = vmatpush2.bf16.msra.mxu0 0
        %1444 = vmatprep.subr.bf16.mxu0 0
        %1445 = vmatpush2.bf16.msra.mxu0 0
        %1446 = vmatprep.subr.bf16.mxu0 0
        %1447 = vmatpush2.bf16.msra.mxu0 0
        %1448 = vmatprep.mubr.bf16.mxu0 0
        %1449 = vmatmul.mubr.bf16.gmra.mxu0 %v1135
        %v1450 = vpop.f32.mrf.mxu0
        %v1451 = vadd.f32 %v1298, %v1450
        %v1452 = vpop.f32.mrf.mxu0
        %v1453 = vpop.f32.mrf.mxu0
        %v1454 = vadd.f32 %v1301, %v1453
        %v1455 = vpop.f32.mrf.mxu0
        %1456 = vmatprep.mubr.bf16.mxu0 0
        %1457 = vmatmul.mubr.bf16.gmra.mxu0 %v1136
        %v1458 = vpop.f32.mrf.mxu0
        %v1459 = vadd.f32 %v1306, %v1458
        %v1460 = vpop.f32.mrf.mxu0
        %v1461 = vpop.f32.mrf.mxu0
        %v1462 = vadd.f32 %v1309, %v1461
        %v1463 = vpop.f32.mrf.mxu0
        %1464 = vmatprep.mubr.bf16.mxu0 0
        %1465 = vmatmul.mubr.bf16.gmra.mxu0 %v1137
        %v1466 = vpop.f32.mrf.mxu0
        %v1467 = vadd.f32 %v1314, %v1466
        %v1468 = vpop.f32.mrf.mxu0
        %v1469 = vpop.f32.mrf.mxu0
        %v1470 = vadd.f32 %v1317, %v1469
        %v1471 = vpop.f32.mrf.mxu0
        %1472 = vmatprep.mubr.bf16.mxu0 0
        %1473 = vmatmul.mubr.bf16.gmra.mxu0 %v1138
        %v1474 = vpop.f32.mrf.mxu0
        %v1475 = vadd.f32 %v1322, %v1474
        %v1476 = vpop.f32.mrf.mxu0
        %v1477 = vpop.f32.mrf.mxu0
        %v1478 = vadd.f32 %v1325, %v1477
        %v1479 = vpop.f32.mrf.mxu0
        %1480 = vmatprep.mubr.bf16.mxu0 0
        %1481 = vmatmul.mubr.bf16.gmra.mxu0 %v1139
        %v1482 = vpop.f32.mrf.mxu0
        %v1483 = vadd.f32 %v1330, %v1482
        %v1484 = vpop.f32.mrf.mxu0
        %v1485 = vpop.f32.mrf.mxu0
        %v1486 = vadd.f32 %v1333, %v1485
        %v1487 = vpop.f32.mrf.mxu0
        %1488 = vmatprep.mubr.bf16.mxu0 0
        %1489 = vmatmul.mubr.bf16.gmra.mxu0 %v1140
        %v1490 = vpop.f32.mrf.mxu0
        %v1491 = vadd.f32 %v1338, %v1490
        %v1492 = vpop.f32.mrf.mxu0
        %v1493 = vpop.f32.mrf.mxu0
        %v1494 = vadd.f32 %v1341, %v1493
        %v1495 = vpop.f32.mrf.mxu0
        %1496 = vmatprep.mubr.bf16.mxu0 0
        %1497 = vmatmul.mubr.bf16.gmra.mxu0 %v1141
        %v1498 = vpop.f32.mrf.mxu0
        %v1499 = vadd.f32 %v1346, %v1498
        %v1500 = vpop.f32.mrf.mxu0
        %v1501 = vpop.f32.mrf.mxu0
        %v1502 = vadd.f32 %v1349, %v1501
        %v1503 = vpop.f32.mrf.mxu0
        %1504 = vmatprep.mubr.bf16.mxu0 0
        %1505 = vmatmul.mubr.bf16.gmra.mxu0 %v1359
        %v1506 = vpop.f32.mrf.mxu0
        %v1507 = vadd.f32 %v1354, %v1506
        %v1508 = vpop.f32.mrf.mxu0
        %v1509 = vpop.f32.mrf.mxu0
        %v1510 = vpop.f32.mrf.mxu0
        %1511 = vdwg.mxu0
        %v1512 = vld [vmem:[#allocation3] sm:$0xe]
        %s1513 = scalar_lea.vmem %s3, 128
        %v1514 = vld [vmem:[%s1513] sm:$0xf]
        %v1515 = vld [vmem:[%s1513 + $0x4] sm:$0xf]
        %v1516 = vld [vmem:[%s1513 + $0x8] sm:$0xf]
        %v1517 = vld [vmem:[%s1513 + $0xc] sm:$0xf]
        %v1518 = vld [vmem:[%s1513 + $0x10] sm:$0xf]
        %v1519 = vld [vmem:[%s1513 + $0x14] sm:$0xf]
        %v1520 = vld [vmem:[%s1513 + $0x18] sm:$0xf]
        %v1521 = vld [vmem:[%s1513 + $0x1c] sm:$0xf]
        %v1522 = vld [vmem:[%s1513 + $0x20] sm:$0xf]
        %v1523 = vld [vmem:[%s1513 + $0x24] sm:$0xf]
        %v1524 = vld [vmem:[%s1513 + $0x28] sm:$0xf]
        %v1525 = vld [vmem:[%s1513 + $0x2c] sm:$0xf]
        %v1526 = vld [vmem:[%s1513 + $0x30] sm:$0xf]
        %v1527 = vld [vmem:[%s1513 + $0x34] sm:$0xf]
        %v1528 = vld [vmem:[%s1513 + $0x38] sm:$0xf]
        %v1529 = vld [vmem:[%s1513 + $0x3c] sm:$0xf]
        %v1531 = vunpack.c.l.b16 %v1512
        %v1532 = vpack.c.b16 %v1120, %v1531
        %vm1533 = vcmask 1046528
        %v1534 = vrot.slane %v1532, 1
        %v1535 = vrot.slane %v1136, 1
        %v1536 = vsel %vm1533, %v1534, %v1535
        %v1537 = vrot.slane %v1137, 1
        %v1538 = vsel %vm1533, %v1535, %v1537
        %v1539 = vrot.slane %v1138, 1
        %v1540 = vsel %vm1533, %v1537, %v1539
        %v1541 = vrot.slane %v1139, 1
        %v1542 = vsel %vm1533, %v1539, %v1541
        %v1543 = vrot.slane %v1140, 1
        %v1544 = vsel %vm1533, %v1541, %v1543
        %v1545 = vrot.slane %v1141, 1
        %v1546 = vsel %vm1533, %v1543, %v1545
        %v1547 = vrot.slane %v1142, 1
        %v1548 = vsel %vm1533, %v1545, %v1547
        %v1573 = vunpack.c.l.b16 %v1514
        %v1574 = vunpack.c.l.b16 %v1515
        %v1575 = vunpack.c.l.b16 %v1516
        %v1576 = vunpack.c.l.b16 %v1517
        %v1577 = vunpack.c.l.b16 %v1518
        %v1578 = vunpack.c.l.b16 %v1519
        %v1579 = vunpack.c.l.b16 %v1520
        %v1580 = vunpack.c.l.b16 %v1521
        %v1581 = vunpack.c.l.b16 %v1522
        %v1582 = vunpack.c.l.b16 %v1523
        %v1583 = vunpack.c.l.b16 %v1524
        %v1584 = vunpack.c.l.b16 %v1525
        %v1585 = vunpack.c.l.b16 %v1526
        %v1586 = vunpack.c.l.b16 %v1527
        %v1587 = vunpack.c.l.b16 %v1528
        %v1588 = vunpack.c.l.b16 %v1529
        %v1589 = vpack.c.b16 %v1574, %v1573
        %v1590 = vpack.c.b16 %v1576, %v1575
        %v1591 = vpack.c.b16 %v1578, %v1577
        %v1592 = vpack.c.b16 %v1580, %v1579
        %v1593 = vpack.c.b16 %v1582, %v1581
        %v1594 = vpack.c.b16 %v1584, %v1583
        %v1595 = vpack.c.b16 %v1586, %v1585
        %v1596 = vpack.c.b16 %v1588, %v1587
        %1605 = vmatprep.subr.bf16.mxu0 0
        %1606 = vmatpush1.bf16.msra.mxu0 %v1596
        %1607 = vmatprep.subr.bf16.mxu0 0
        %1608 = vmatpush1.bf16.msra.mxu0 %v1595
        %1609 = vmatprep.subr.bf16.mxu0 0
        %1610 = vmatpush1.bf16.msra.mxu0 %v1594
        %1611 = vmatprep.subr.bf16.mxu0 0
        %1612 = vmatpush1.bf16.msra.mxu0 %v1593
        %1613 = vmatprep.subr.bf16.mxu0 0
        %1614 = vmatpush1.bf16.msra.mxu0 %v1592
        %1615 = vmatprep.subr.bf16.mxu0 0
        %1616 = vmatpush1.bf16.msra.mxu0 %v1591
        %1617 = vmatprep.subr.bf16.mxu0 0
        %1618 = vmatpush1.bf16.msra.mxu0 %v1590
        %1619 = vmatprep.subr.bf16.mxu0 0
        %1620 = vmatpush1.bf16.msra.mxu0 %v1589
        %1621 = vmatprep.subr.bf16.mxu0 0
        %1622 = vmatpush2.bf16.msra.mxu0 0
        %1623 = vmatprep.subr.bf16.mxu0 0
        %1624 = vmatpush2.bf16.msra.mxu0 0
        %1625 = vmatprep.subr.bf16.mxu0 0
        %1626 = vmatpush2.bf16.msra.mxu0 0
        %1627 = vmatprep.subr.bf16.mxu0 0
        %1628 = vmatpush2.bf16.msra.mxu0 0
        %1629 = vmatprep.subr.bf16.mxu0 0
        %1630 = vmatpush2.bf16.msra.mxu0 0
        %1631 = vmatprep.subr.bf16.mxu0 0
        %1632 = vmatpush2.bf16.msra.mxu0 0
        %1633 = vmatprep.subr.bf16.mxu0 0
        %1634 = vmatpush2.bf16.msra.mxu0 0
        %1635 = vmatprep.subr.bf16.mxu0 0
        %1636 = vmatpush2.bf16.msra.mxu0 0
        %1637 = vmatprep.mubr.bf16.mxu0 0
        %1638 = vmatmul.mubr.bf16.gmra.mxu0 %v1536
        %v1639 = vpop.f32.mrf.mxu0
        %v1640 = vadd.f32 0.0, %v1639
        %v1641 = vpop.f32.mrf.mxu0
        %v1642 = vpop.f32.mrf.mxu0
        %v1643 = vadd.f32 0.0, %v1642
        %v1644 = vpop.f32.mrf.mxu0
        %1645 = vmatprep.mubr.bf16.mxu0 0
        %1646 = vmatmul.mubr.bf16.gmra.mxu0 %v1538
        %v1647 = vpop.f32.mrf.mxu0
        %v1648 = vadd.f32 0.0, %v1647
        %v1649 = vpop.f32.mrf.mxu0
        %v1650 = vpop.f32.mrf.mxu0
        %v1651 = vadd.f32 0.0, %v1650
        %v1652 = vpop.f32.mrf.mxu0
        %1653 = vmatprep.mubr.bf16.mxu0 0
        %1654 = vmatmul.mubr.bf16.gmra.mxu0 %v1540
        %v1655 = vpop.f32.mrf.mxu0
        %v1656 = vadd.f32 0.0, %v1655
        %v1657 = vpop.f32.mrf.mxu0
        %v1658 = vpop.f32.mrf.mxu0
        %v1659 = vadd.f32 0.0, %v1658
        %v1660 = vpop.f32.mrf.mxu0
        %1661 = vmatprep.mubr.bf16.mxu0 0
        %1662 = vmatmul.mubr.bf16.gmra.mxu0 %v1542
        %v1663 = vpop.f32.mrf.mxu0
        %v1664 = vadd.f32 0.0, %v1663
        %v1665 = vpop.f32.mrf.mxu0
        %v1666 = vpop.f32.mrf.mxu0
        %v1667 = vadd.f32 0.0, %v1666
        %v1668 = vpop.f32.mrf.mxu0
        %1669 = vmatprep.mubr.bf16.mxu0 0
        %1670 = vmatmul.mubr.bf16.gmra.mxu0 %v1544
        %v1671 = vpop.f32.mrf.mxu0
        %v1672 = vadd.f32 0.0, %v1671
        %v1673 = vpop.f32.mrf.mxu0
        %v1674 = vpop.f32.mrf.mxu0
        %v1675 = vadd.f32 0.0, %v1674
        %v1676 = vpop.f32.mrf.mxu0
        %1677 = vmatprep.mubr.bf16.mxu0 0
        %1678 = vmatmul.mubr.bf16.gmra.mxu0 %v1546
        %v1679 = vpop.f32.mrf.mxu0
        %v1680 = vadd.f32 0.0, %v1679
        %v1681 = vpop.f32.mrf.mxu0
        %v1682 = vpop.f32.mrf.mxu0
        %v1683 = vadd.f32 0.0, %v1682
        %v1684 = vpop.f32.mrf.mxu0
        %1685 = vmatprep.mubr.bf16.mxu0 0
        %1686 = vmatmul.mubr.bf16.gmra.mxu0 %v1548
        %v1687 = vpop.f32.mrf.mxu0
        %v1688 = vadd.f32 0.0, %v1687
        %v1689 = vpop.f32.mrf.mxu0
        %v1690 = vpop.f32.mrf.mxu0
        %v1691 = vadd.f32 0.0, %v1690
        %v1692 = vpop.f32.mrf.mxu0
        %1693 = vmatprep.mubr.bf16.mxu0 0
        %1694 = vmatmul.mubr.bf16.gmra.mxu0 %v1547
        %v1695 = vpop.f32.mrf.mxu0
        %v1696 = vadd.f32 0.0, %v1695
        %v1697 = vpop.f32.mrf.mxu0
        %v1698 = vpop.f32.mrf.mxu0
        %v1699 = vpop.f32.mrf.mxu0
        %1700 = vdwg.mxu0
        %v1701 = vadd.f32 %v1451, %v1640
        %v1702 = vadd.f32 %v1454, %v1643
        %v1703 = vadd.f32 %v1459, %v1648
        %v1704 = vadd.f32 %v1462, %v1651
        %v1705 = vadd.f32 %v1467, %v1656
        %v1706 = vadd.f32 %v1470, %v1659
        %v1707 = vadd.f32 %v1475, %v1664
        %v1708 = vadd.f32 %v1478, %v1667
        %v1709 = vadd.f32 %v1483, %v1672
        %v1710 = vadd.f32 %v1486, %v1675
        %v1711 = vadd.f32 %v1491, %v1680
        %v1712 = vadd.f32 %v1494, %v1683
        %v1713 = vadd.f32 %v1499, %v1688
        %v1714 = vadd.f32 %v1502, %v1691
        %v1715 = vadd.f32 %v1507, %v1696
        %v1716 = vld [vmem:[#allocation3 + $0x4] sm:$0xc]
        %v1717 = vld [vmem:[#allocation3 + $0x8] sm:$0xf]
        %v1718 = vld [vmem:[#allocation3 + $0xc] sm:$0xf]
        %v1719 = vld [vmem:[#allocation3 + $0x10] sm:$0xf]
        %v1720 = vld [vmem:[#allocation3 + $0x14] sm:$0xf]
        %v1721 = vld [vmem:[#allocation3 + $0x18] sm:$0xf]
        %v1722 = vld [vmem:[#allocation3 + $0x1c] sm:$0xf]
        %v1723 = vld [vmem:[#allocation3 + $0x20] sm:$0xf]
        %v1724 = vld [vmem:[#allocation3 + $0x24] sm:$0xf]
        %v1725 = vld [vmem:[#allocation3 + $0x28] sm:$0xf]
        %v1726 = vld [vmem:[#allocation3 + $0x2c] sm:$0xf]
        %v1727 = vld [vmem:[#allocation3 + $0x30] sm:$0xf]
        %v1728 = vld [vmem:[#allocation3 + $0x34] sm:$0xf]
        %v1729 = vld [vmem:[#allocation3 + $0x38] sm:$0xf]
        %v1730 = vld [vmem:[#allocation3 + $0x3c] sm:$0xf]
        %v1731 = vld [vmem:[#allocation3 + $0x40] sm:$0x3]
        %s1732 = scalar_lea.vmem %s3, 192
        %v1733 = vld [vmem:[%s1732] sm:$0xf]
        %v1734 = vld [vmem:[%s1732 + $0x4] sm:$0xf]
        %v1735 = vld [vmem:[%s1732 + $0x8] sm:$0xf]
        %v1736 = vld [vmem:[%s1732 + $0xc] sm:$0xf]
        %v1737 = vld [vmem:[%s1732 + $0x10] sm:$0xf]
        %v1738 = vld [vmem:[%s1732 + $0x14] sm:$0xf]
        %v1739 = vld [vmem:[%s1732 + $0x18] sm:$0xf]
        %v1740 = vld [vmem:[%s1732 + $0x1c] sm:$0xf]
        %v1741 = vld [vmem:[%s1732 + $0x20] sm:$0xf]
        %v1742 = vld [vmem:[%s1732 + $0x24] sm:$0xf]
        %v1743 = vld [vmem:[%s1732 + $0x28] sm:$0xf]
        %v1744 = vld [vmem:[%s1732 + $0x2c] sm:$0xf]
        %v1745 = vld [vmem:[%s1732 + $0x30] sm:$0xf]
        %v1746 = vld [vmem:[%s1732 + $0x34] sm:$0xf]
        %v1747 = vld [vmem:[%s1732 + $0x38] sm:$0xf]
        %v1748 = vld [vmem:[%s1732 + $0x3c] sm:$0xf]
        %v1765 = vunpack.c.l.b16 %v1716
        %v1766 = vunpack.c.l.b16 %v1717
        %v1767 = vunpack.c.l.b16 %v1718
        %v1768 = vunpack.c.l.b16 %v1719
        %v1769 = vunpack.c.l.b16 %v1720
        %v1770 = vunpack.c.l.b16 %v1721
        %v1771 = vunpack.c.l.b16 %v1722
        %v1772 = vunpack.c.l.b16 %v1723
        %v1773 = vunpack.c.l.b16 %v1724
        %v1774 = vunpack.c.l.b16 %v1725
        %v1775 = vunpack.c.l.b16 %v1726
        %v1776 = vunpack.c.l.b16 %v1727
        %v1777 = vunpack.c.l.b16 %v1728
        %v1778 = vunpack.c.l.b16 %v1729
        %v1779 = vunpack.c.l.b16 %v1730
        %v1780 = vunpack.c.l.b16 %v1731
        %v1781 = vpack.c.b16 %v1766, %v1765
        %v1782 = vpack.c.b16 %v1768, %v1767
        %v1783 = vpack.c.b16 %v1770, %v1769
        %v1784 = vpack.c.b16 %v1772, %v1771
        %v1785 = vpack.c.b16 %v1774, %v1773
        %v1786 = vpack.c.b16 %v1776, %v1775
        %v1787 = vpack.c.b16 %v1778, %v1777
        %v1788 = vpack.c.b16 %v1780, %v1779
        %vm1789 = vcmask 1045504
        %v1790 = vrot.slane %v1781, 2
        %v1791 = vrot.slane %v1782, 2
        %v1792 = vsel %vm1789, %v1790, %v1791
        %v1793 = vrot.slane %v1783, 2
        %v1794 = vsel %vm1789, %v1791, %v1793
        %v1795 = vrot.slane %v1784, 2
        %v1796 = vsel %vm1789, %v1793, %v1795
        %v1797 = vrot.slane %v1785, 2
        %v1798 = vsel %vm1789, %v1795, %v1797
        %v1799 = vrot.slane %v1786, 2
        %v1800 = vsel %vm1789, %v1797, %v1799
        %v1801 = vrot.slane %v1787, 2
        %v1802 = vsel %vm1789, %v1799, %v1801
        %v1803 = vrot.slane %v1788, 2
        %v1804 = vsel %vm1789, %v1801, %v1803
        %v1829 = vunpack.c.l.b16 %v1733
        %v1830 = vunpack.c.l.b16 %v1734
        %v1831 = vunpack.c.l.b16 %v1735
        %v1832 = vunpack.c.l.b16 %v1736
        %v1833 = vunpack.c.l.b16 %v1737
        %v1834 = vunpack.c.l.b16 %v1738
        %v1835 = vunpack.c.l.b16 %v1739
        %v1836 = vunpack.c.l.b16 %v1740
        %v1837 = vunpack.c.l.b16 %v1741
        %v1838 = vunpack.c.l.b16 %v1742
        %v1839 = vunpack.c.l.b16 %v1743
        %v1840 = vunpack.c.l.b16 %v1744
        %v1841 = vunpack.c.l.b16 %v1745
        %v1842 = vunpack.c.l.b16 %v1746
        %v1843 = vunpack.c.l.b16 %v1747
        %v1844 = vunpack.c.l.b16 %v1748
        %v1845 = vpack.c.b16 %v1830, %v1829
        %v1846 = vpack.c.b16 %v1832, %v1831
        %v1847 = vpack.c.b16 %v1834, %v1833
        %v1848 = vpack.c.b16 %v1836, %v1835
        %v1849 = vpack.c.b16 %v1838, %v1837
        %v1850 = vpack.c.b16 %v1840, %v1839
        %v1851 = vpack.c.b16 %v1842, %v1841
        %v1852 = vpack.c.b16 %v1844, %v1843
        %1861 = vmatprep.subr.bf16.mxu0 0
        %1862 = vmatpush1.bf16.msra.mxu0 %v1852
        %1863 = vmatprep.subr.bf16.mxu0 0
        %1864 = vmatpush1.bf16.msra.mxu0 %v1851
        %1865 = vmatprep.subr.bf16.mxu0 0
        %1866 = vmatpush1.bf16.msra.mxu0 %v1850
        %1867 = vmatprep.subr.bf16.mxu0 0
        %1868 = vmatpush1.bf16.msra.mxu0 %v1849
        %1869 = vmatprep.subr.bf16.mxu0 0
        %1870 = vmatpush1.bf16.msra.mxu0 %v1848
        %1871 = vmatprep.subr.bf16.mxu0 0
        %1872 = vmatpush1.bf16.msra.mxu0 %v1847
        %1873 = vmatprep.subr.bf16.mxu0 0
        %1874 = vmatpush1.bf16.msra.mxu0 %v1846
        %1875 = vmatprep.subr.bf16.mxu0 0
        %1876 = vmatpush1.bf16.msra.mxu0 %v1845
        %1877 = vmatprep.subr.bf16.mxu0 0
        %1878 = vmatpush2.bf16.msra.mxu0 0
        %1879 = vmatprep.subr.bf16.mxu0 0
        %1880 = vmatpush2.bf16.msra.mxu0 0
        %1881 = vmatprep.subr.bf16.mxu0 0
        %1882 = vmatpush2.bf16.msra.mxu0 0
        %1883 = vmatprep.subr.bf16.mxu0 0
        %1884 = vmatpush2.bf16.msra.mxu0 0
        %1885 = vmatprep.subr.bf16.mxu0 0
        %1886 = vmatpush2.bf16.msra.mxu0 0
        %1887 = vmatprep.subr.bf16.mxu0 0
        %1888 = vmatpush2.bf16.msra.mxu0 0
        %1889 = vmatprep.subr.bf16.mxu0 0
        %1890 = vmatpush2.bf16.msra.mxu0 0
        %1891 = vmatprep.subr.bf16.mxu0 0
        %1892 = vmatpush2.bf16.msra.mxu0 0
        %1893 = vmatprep.mubr.bf16.mxu0 0
        %1894 = vmatmul.mubr.bf16.gmra.mxu0 %v1792
        %v1895 = vpop.f32.mrf.mxu0
        %v1896 = vadd.f32 0.0, %v1895
        %v1897 = vpop.f32.mrf.mxu0
        %v1898 = vpop.f32.mrf.mxu0
        %v1899 = vadd.f32 0.0, %v1898
        %v1900 = vpop.f32.mrf.mxu0
        %1901 = vmatprep.mubr.bf16.mxu0 0
        %1902 = vmatmul.mubr.bf16.gmra.mxu0 %v1794
        %v1903 = vpop.f32.mrf.mxu0
        %v1904 = vadd.f32 0.0, %v1903
        %v1905 = vpop.f32.mrf.mxu0
        %v1906 = vpop.f32.mrf.mxu0
        %v1907 = vadd.f32 0.0, %v1906
        %v1908 = vpop.f32.mrf.mxu0
        %1909 = vmatprep.mubr.bf16.mxu0 0
        %1910 = vmatmul.mubr.bf16.gmra.mxu0 %v1796
        %v1911 = vpop.f32.mrf.mxu0
        %v1912 = vadd.f32 0.0, %v1911
        %v1913 = vpop.f32.mrf.mxu0
        %v1914 = vpop.f32.mrf.mxu0
        %v1915 = vadd.f32 0.0, %v1914
        %v1916 = vpop.f32.mrf.mxu0
        %1917 = vmatprep.mubr.bf16.mxu0 0
        %1918 = vmatmul.mubr.bf16.gmra.mxu0 %v1798
        %v1919 = vpop.f32.mrf.mxu0
        %v1920 = vadd.f32 0.0, %v1919
        %v1921 = vpop.f32.mrf.mxu0
        %v1922 = vpop.f32.mrf.mxu0
        %v1923 = vadd.f32 0.0, %v1922
        %v1924 = vpop.f32.mrf.mxu0
        %1925 = vmatprep.mubr.bf16.mxu0 0
        %1926 = vmatmul.mubr.bf16.gmra.mxu0 %v1800
        %v1927 = vpop.f32.mrf.mxu0
        %v1928 = vadd.f32 0.0, %v1927
        %v1929 = vpop.f32.mrf.mxu0
        %v1930 = vpop.f32.mrf.mxu0
        %v1931 = vadd.f32 0.0, %v1930
        %v1932 = vpop.f32.mrf.mxu0
        %1933 = vmatprep.mubr.bf16.mxu0 0
        %1934 = vmatmul.mubr.bf16.gmra.mxu0 %v1802
        %v1935 = vpop.f32.mrf.mxu0
        %v1936 = vadd.f32 0.0, %v1935
        %v1937 = vpop.f32.mrf.mxu0
        %v1938 = vpop.f32.mrf.mxu0
        %v1939 = vadd.f32 0.0, %v1938
        %v1940 = vpop.f32.mrf.mxu0
        %1941 = vmatprep.mubr.bf16.mxu0 0
        %1942 = vmatmul.mubr.bf16.gmra.mxu0 %v1804
        %v1943 = vpop.f32.mrf.mxu0
        %v1944 = vadd.f32 0.0, %v1943
        %v1945 = vpop.f32.mrf.mxu0
        %v1946 = vpop.f32.mrf.mxu0
        %v1947 = vadd.f32 0.0, %v1946
        %v1948 = vpop.f32.mrf.mxu0
        %1949 = vmatprep.mubr.bf16.mxu0 0
        %1950 = vmatmul.mubr.bf16.gmra.mxu0 %v1803
        %v1951 = vpop.f32.mrf.mxu0
        %v1952 = vadd.f32 0.0, %v1951
        %v1953 = vpop.f32.mrf.mxu0
        %v1954 = vpop.f32.mrf.mxu0
        %v1955 = vpop.f32.mrf.mxu0
        %1956 = vdwg.mxu0
        %v1957 = vadd.f32 %v1701, %v1896
        %v1958 = vadd.f32 %v1702, %v1899
        %v1959 = vadd.f32 %v1703, %v1904
        %v1960 = vadd.f32 %v1704, %v1907
        %v1961 = vadd.f32 %v1705, %v1912
        %v1962 = vadd.f32 %v1706, %v1915
        %v1963 = vadd.f32 %v1707, %v1920
        %v1964 = vadd.f32 %v1708, %v1923
        %v1965 = vadd.f32 %v1709, %v1928
        %v1966 = vadd.f32 %v1710, %v1931
        %v1967 = vadd.f32 %v1711, %v1936
        %v1968 = vadd.f32 %v1712, %v1939
        %v1969 = vadd.f32 %v1713, %v1944
        %v1970 = vadd.f32 %v1714, %v1947
        %v1971 = vadd.f32 %v1715, %v1952
        %v1972 = vld [vmem:[#allocation3 + $0x40] sm:$0x7]
        %s1973 = scalar_lea.vmem %s3, 256
        %v1974 = vld [vmem:[%s1973] sm:$0xf]
        %v1975 = vld [vmem:[%s1973 + $0x4] sm:$0xf]
        %v1976 = vld [vmem:[%s1973 + $0x8] sm:$0xf]
        %v1977 = vld [vmem:[%s1973 + $0xc] sm:$0xf]
        %v1978 = vld [vmem:[%s1973 + $0x10] sm:$0xf]
        %v1979 = vld [vmem:[%s1973 + $0x14] sm:$0xf]
        %v1980 = vld [vmem:[%s1973 + $0x18] sm:$0xf]
        %v1981 = vld [vmem:[%s1973 + $0x1c] sm:$0xf]
        %v1982 = vld [vmem:[%s1973 + $0x20] sm:$0xf]
        %v1983 = vld [vmem:[%s1973 + $0x24] sm:$0xf]
        %v1984 = vld [vmem:[%s1973 + $0x28] sm:$0xf]
        %v1985 = vld [vmem:[%s1973 + $0x2c] sm:$0xf]
        %v1986 = vld [vmem:[%s1973 + $0x30] sm:$0xf]
        %v1987 = vld [vmem:[%s1973 + $0x34] sm:$0xf]
        %v1988 = vld [vmem:[%s1973 + $0x38] sm:$0xf]
        %v1989 = vld [vmem:[%s1973 + $0x3c] sm:$0xf]
        %v1991 = vunpack.c.l.b16 %v1972
        %v1992 = vpack.c.b16 %v1991, %v1779
        %vm1993 = vsmask.f32 5376
        %v1995 = vshrl.u32 %v1781, 16
        %v1997 = vrot.slane %v1995, 2
        %v1998 = vshll.u32 %v1781, 16
        %v2000 = vrot.slane %v1998, 3
        %v2001 = vor.u32 %v1997, %v2000
        %v2003 = vshrl.u32 %v1782, 16
        %v2005 = vrot.slane %v2003, 2
        %v2006 = vshll.u32 %v1782, 16
        %v2008 = vrot.slane %v2006, 3
        %v2009 = vor.u32 %v2005, %v2008
        %v2010 = vsel %vm1993, %v2001, %v2009
        %v2012 = vshrl.u32 %v1783, 16
        %v2014 = vrot.slane %v2012, 2
        %v2015 = vshll.u32 %v1783, 16
        %v2017 = vrot.slane %v2015, 3
        %v2018 = vor.u32 %v2014, %v2017
        %v2019 = vsel %vm1993, %v2009, %v2018
        %v2021 = vshrl.u32 %v1784, 16
        %v2023 = vrot.slane %v2021, 2
        %v2024 = vshll.u32 %v1784, 16
        %v2026 = vrot.slane %v2024, 3
        %v2027 = vor.u32 %v2023, %v2026
        %v2028 = vsel %vm1993, %v2018, %v2027
        %v2030 = vshrl.u32 %v1785, 16
        %v2032 = vrot.slane %v2030, 2
        %v2033 = vshll.u32 %v1785, 16
        %v2035 = vrot.slane %v2033, 3
        %v2036 = vor.u32 %v2032, %v2035
        %v2037 = vsel %vm1993, %v2027, %v2036
        %v2039 = vshrl.u32 %v1786, 16
        %v2041 = vrot.slane %v2039, 2
        %v2042 = vshll.u32 %v1786, 16
        %v2044 = vrot.slane %v2042, 3
        %v2045 = vor.u32 %v2041, %v2044
        %v2046 = vsel %vm1993, %v2036, %v2045
        %v2048 = vshrl.u32 %v1787, 16
        %v2050 = vrot.slane %v2048, 2
        %v2051 = vshll.u32 %v1787, 16
        %v2053 = vrot.slane %v2051, 3
        %v2054 = vor.u32 %v2050, %v2053
        %v2055 = vsel %vm1993, %v2045, %v2054
        %v2057 = vshrl.u32 %v1992, 16
        %v2059 = vrot.slane %v2057, 2
        %v2060 = vshll.u32 %v1992, 16
        %v2062 = vrot.slane %v2060, 3
        %v2063 = vor.u32 %v2059, %v2062
        %v2064 = vsel %vm1993, %v2054, %v2063
        %v2089 = vunpack.c.l.b16 %v1974
        %v2090 = vunpack.c.l.b16 %v1975
        %v2091 = vunpack.c.l.b16 %v1976
        %v2092 = vunpack.c.l.b16 %v1977
        %v2093 = vunpack.c.l.b16 %v1978
        %v2094 = vunpack.c.l.b16 %v1979
        %v2095 = vunpack.c.l.b16 %v1980
        %v2096 = vunpack.c.l.b16 %v1981
        %v2097 = vunpack.c.l.b16 %v1982
        %v2098 = vunpack.c.l.b16 %v1983
        %v2099 = vunpack.c.l.b16 %v1984
        %v2100 = vunpack.c.l.b16 %v1985
        %v2101 = vunpack.c.l.b16 %v1986
        %v2102 = vunpack.c.l.b16 %v1987
        %v2103 = vunpack.c.l.b16 %v1988
        %v2104 = vunpack.c.l.b16 %v1989
        %v2105 = vpack.c.b16 %v2090, %v2089
        %v2106 = vpack.c.b16 %v2092, %v2091
        %v2107 = vpack.c.b16 %v2094, %v2093
        %v2108 = vpack.c.b16 %v2096, %v2095
        %v2109 = vpack.c.b16 %v2098, %v2097
        %v2110 = vpack.c.b16 %v2100, %v2099
        %v2111 = vpack.c.b16 %v2102, %v2101
        %v2112 = vpack.c.b16 %v2104, %v2103
        %2121 = vmatprep.subr.bf16.mxu0 0
        %2122 = vmatpush1.bf16.msra.mxu0 %v2112
        %2123 = vmatprep.subr.bf16.mxu0 0
        %2124 = vmatpush1.bf16.msra.mxu0 %v2111
        %2125 = vmatprep.subr.bf16.mxu0 0
        %2126 = vmatpush1.bf16.msra.mxu0 %v2110
        %2127 = vmatprep.subr.bf16.mxu0 0
        %2128 = vmatpush1.bf16.msra.mxu0 %v2109
        %2129 = vmatprep.subr.bf16.mxu0 0
        %2130 = vmatpush1.bf16.msra.mxu0 %v2108
        %2131 = vmatprep.subr.bf16.mxu0 0
        %2132 = vmatpush1.bf16.msra.mxu0 %v2107
        %2133 = vmatprep.subr.bf16.mxu0 0
        %2134 = vmatpush1.bf16.msra.mxu0 %v2106
        %2135 = vmatprep.subr.bf16.mxu0 0
        %2136 = vmatpush1.bf16.msra.mxu0 %v2105
        %2137 = vmatprep.subr.bf16.mxu0 0
        %2138 = vmatpush2.bf16.msra.mxu0 0
        %2139 = vmatprep.subr.bf16.mxu0 0
        %2140 = vmatpush2.bf16.msra.mxu0 0
        %2141 = vmatprep.subr.bf16.mxu0 0
        %2142 = vmatpush2.bf16.msra.mxu0 0
        %2143 = vmatprep.subr.bf16.mxu0 0
        %2144 = vmatpush2.bf16.msra.mxu0 0
        %2145 = vmatprep.subr.bf16.mxu0 0
        %2146 = vmatpush2.bf16.msra.mxu0 0
        %2147 = vmatprep.subr.bf16.mxu0 0
        %2148 = vmatpush2.bf16.msra.mxu0 0
        %2149 = vmatprep.subr.bf16.mxu0 0
        %2150 = vmatpush2.bf16.msra.mxu0 0
        %2151 = vmatprep.subr.bf16.mxu0 0
        %2152 = vmatpush2.bf16.msra.mxu0 0
        %2153 = vmatprep.mubr.bf16.mxu0 0
        %2154 = vmatmul.mubr.bf16.gmra.mxu0 %v2010
        %v2155 = vpop.f32.mrf.mxu0
        %v2156 = vadd.f32 0.0, %v2155
        %v2157 = vpop.f32.mrf.mxu0
        %v2158 = vpop.f32.mrf.mxu0
        %v2159 = vadd.f32 0.0, %v2158
        %v2160 = vpop.f32.mrf.mxu0
        %2161 = vmatprep.mubr.bf16.mxu0 0
        %2162 = vmatmul.mubr.bf16.gmra.mxu0 %v2019
        %v2163 = vpop.f32.mrf.mxu0
        %v2164 = vadd.f32 0.0, %v2163
        %v2165 = vpop.f32.mrf.mxu0
        %v2166 = vpop.f32.mrf.mxu0
        %v2167 = vadd.f32 0.0, %v2166
        %v2168 = vpop.f32.mrf.mxu0
        %2169 = vmatprep.mubr.bf16.mxu0 0
        %2170 = vmatmul.mubr.bf16.gmra.mxu0 %v2028
        %v2171 = vpop.f32.mrf.mxu0
        %v2172 = vadd.f32 0.0, %v2171
        %v2173 = vpop.f32.mrf.mxu0
        %v2174 = vpop.f32.mrf.mxu0
        %v2175 = vadd.f32 0.0, %v2174
        %v2176 = vpop.f32.mrf.mxu0
        %2177 = vmatprep.mubr.bf16.mxu0 0
        %2178 = vmatmul.mubr.bf16.gmra.mxu0 %v2037
        %v2179 = vpop.f32.mrf.mxu0
        %v2180 = vadd.f32 0.0, %v2179
        %v2181 = vpop.f32.mrf.mxu0
        %v2182 = vpop.f32.mrf.mxu0
        %v2183 = vadd.f32 0.0, %v2182
        %v2184 = vpop.f32.mrf.mxu0
        %2185 = vmatprep.mubr.bf16.mxu0 0
        %2186 = vmatmul.mubr.bf16.gmra.mxu0 %v2046
        %v2187 = vpop.f32.mrf.mxu0
        %v2188 = vadd.f32 0.0, %v2187
        %v2189 = vpop.f32.mrf.mxu0
        %v2190 = vpop.f32.mrf.mxu0
        %v2191 = vadd.f32 0.0, %v2190
        %v2192 = vpop.f32.mrf.mxu0
        %2193 = vmatprep.mubr.bf16.mxu0 0
        %2194 = vmatmul.mubr.bf16.gmra.mxu0 %v2055
        %v2195 = vpop.f32.mrf.mxu0
        %v2196 = vadd.f32 0.0, %v2195
        %v2197 = vpop.f32.mrf.mxu0
        %v2198 = vpop.f32.mrf.mxu0
        %v2199 = vadd.f32 0.0, %v2198
        %v2200 = vpop.f32.mrf.mxu0
        %2201 = vmatprep.mubr.bf16.mxu0 0
        %2202 = vmatmul.mubr.bf16.gmra.mxu0 %v2064
        %v2203 = vpop.f32.mrf.mxu0
        %v2204 = vadd.f32 0.0, %v2203
        %v2205 = vpop.f32.mrf.mxu0
        %v2206 = vpop.f32.mrf.mxu0
        %v2207 = vadd.f32 0.0, %v2206
        %v2208 = vpop.f32.mrf.mxu0
        %2209 = vmatprep.mubr.bf16.mxu0 0
        %2210 = vmatmul.mubr.bf16.gmra.mxu0 %v2063
        %v2211 = vpop.f32.mrf.mxu0
        %v2212 = vadd.f32 0.0, %v2211
        %v2213 = vpop.f32.mrf.mxu0
        %v2214 = vpop.f32.mrf.mxu0
        %v2215 = vpop.f32.mrf.mxu0
        %2216 = vdwg.mxu0
        %v2217 = vadd.f32 %v1957, %v2156
        %v2218 = vadd.f32 %v1958, %v2159
        %v2219 = vadd.f32 %v1959, %v2164
        %v2220 = vadd.f32 %v1960, %v2167
        %v2221 = vadd.f32 %v1961, %v2172
        %v2222 = vadd.f32 %v1962, %v2175
        %v2223 = vadd.f32 %v1963, %v2180
        %v2224 = vadd.f32 %v1964, %v2183
        %v2225 = vadd.f32 %v1965, %v2188
        %v2226 = vadd.f32 %v1966, %v2191
        %v2227 = vadd.f32 %v1967, %v2196
        %v2228 = vadd.f32 %v1968, %v2199
        %v2229 = vadd.f32 %v1969, %v2204
        %v2230 = vadd.f32 %v1970, %v2207
        %v2231 = vadd.f32 %v1971, %v2212
        %v2232 = vld [vmem:[#allocation3 + $0x4] sm:$0x8]
        %s2233 = scalar_lea.vmem %s3, 320
        %v2234 = vld [vmem:[%s2233] sm:$0xf]
        %v2235 = vld [vmem:[%s2233 + $0x4] sm:$0xf]
        %v2236 = vld [vmem:[%s2233 + $0x8] sm:$0xf]
        %v2237 = vld [vmem:[%s2233 + $0xc] sm:$0xf]
        %v2238 = vld [vmem:[%s2233 + $0x10] sm:$0xf]
        %v2239 = vld [vmem:[%s2233 + $0x14] sm:$0xf]
        %v2240 = vld [vmem:[%s2233 + $0x18] sm:$0xf]
        %v2241 = vld [vmem:[%s2233 + $0x1c] sm:$0xf]
        %v2242 = vld [vmem:[%s2233 + $0x20] sm:$0xf]
        %v2243 = vld [vmem:[%s2233 + $0x24] sm:$0xf]
        %v2244 = vld [vmem:[%s2233 + $0x28] sm:$0xf]
        %v2245 = vld [vmem:[%s2233 + $0x2c] sm:$0xf]
        %v2246 = vld [vmem:[%s2233 + $0x30] sm:$0xf]
        %v2247 = vld [vmem:[%s2233 + $0x34] sm:$0xf]
        %v2248 = vld [vmem:[%s2233 + $0x38] sm:$0xf]
        %v2249 = vld [vmem:[%s2233 + $0x3c] sm:$0xf]
        %v2251 = vunpack.c.l.b16 %v2232
        %v2252 = vpack.c.b16 %v1766, %v2251
        %vm2253 = vcmask 1044480
        %v2254 = vrot.slane %v2252, 3
        %v2255 = vrot.slane %v1782, 3
        %v2256 = vsel %vm2253, %v2254, %v2255
        %v2257 = vrot.slane %v1783, 3
        %v2258 = vsel %vm2253, %v2255, %v2257
        %v2259 = vrot.slane %v1784, 3
        %v2260 = vsel %vm2253, %v2257, %v2259
        %v2261 = vrot.slane %v1785, 3
        %v2262 = vsel %vm2253, %v2259, %v2261
        %v2263 = vrot.slane %v1786, 3
        %v2264 = vsel %vm2253, %v2261, %v2263
        %v2265 = vrot.slane %v1787, 3
        %v2266 = vsel %vm2253, %v2263, %v2265
        %v2267 = vrot.slane %v1992, 3
        %v2268 = vsel %vm2253, %v2265, %v2267
        %v2293 = vunpack.c.l.b16 %v2234
        %v2294 = vunpack.c.l.b16 %v2235
        %v2295 = vunpack.c.l.b16 %v2236
        %v2296 = vunpack.c.l.b16 %v2237
        %v2297 = vunpack.c.l.b16 %v2238
        %v2298 = vunpack.c.l.b16 %v2239
        %v2299 = vunpack.c.l.b16 %v2240
        %v2300 = vunpack.c.l.b16 %v2241
        %v2301 = vunpack.c.l.b16 %v2242
        %v2302 = vunpack.c.l.b16 %v2243
        %v2303 = vunpack.c.l.b16 %v2244
        %v2304 = vunpack.c.l.b16 %v2245
        %v2305 = vunpack.c.l.b16 %v2246
        %v2306 = vunpack.c.l.b16 %v2247
        %v2307 = vunpack.c.l.b16 %v2248
        %v2308 = vunpack.c.l.b16 %v2249
        %v2309 = vpack.c.b16 %v2294, %v2293
        %v2310 = vpack.c.b16 %v2296, %v2295
        %v2311 = vpack.c.b16 %v2298, %v2297
        %v2312 = vpack.c.b16 %v2300, %v2299
        %v2313 = vpack.c.b16 %v2302, %v2301
        %v2314 = vpack.c.b16 %v2304, %v2303
        %v2315 = vpack.c.b16 %v2306, %v2305
        %v2316 = vpack.c.b16 %v2308, %v2307
        %2325 = vmatprep.subr.bf16.mxu0 0
        %2326 = vmatpush1.bf16.msra.mxu0 %v2316
        %2327 = vmatprep.subr.bf16.mxu0 0
        %2328 = vmatpush1.bf16.msra.mxu0 %v2315
        %2329 = vmatprep.subr.bf16.mxu0 0
        %2330 = vmatpush1.bf16.msra.mxu0 %v2314
        %2331 = vmatprep.subr.bf16.mxu0 0
        %2332 = vmatpush1.bf16.msra.mxu0 %v2313
        %2333 = vmatprep.subr.bf16.mxu0 0
        %2334 = vmatpush1.bf16.msra.mxu0 %v2312
        %2335 = vmatprep.subr.bf16.mxu0 0
        %2336 = vmatpush1.bf16.msra.mxu0 %v2311
        %2337 = vmatprep.subr.bf16.mxu0 0
        %2338 = vmatpush1.bf16.msra.mxu0 %v2310
        %2339 = vmatprep.subr.bf16.mxu0 0
        %2340 = vmatpush1.bf16.msra.mxu0 %v2309
        %2341 = vmatprep.subr.bf16.mxu0 0
        %2342 = vmatpush2.bf16.msra.mxu0 0
        %2343 = vmatprep.subr.bf16.mxu0 0
        %2344 = vmatpush2.bf16.msra.mxu0 0
        %2345 = vmatprep.subr.bf16.mxu0 0
        %2346 = vmatpush2.bf16.msra.mxu0 0
        %2347 = vmatprep.subr.bf16.mxu0 0
        %2348 = vmatpush2.bf16.msra.mxu0 0
        %2349 = vmatprep.subr.bf16.mxu0 0
        %2350 = vmatpush2.bf16.msra.mxu0 0
        %2351 = vmatprep.subr.bf16.mxu0 0
        %2352 = vmatpush2.bf16.msra.mxu0 0
        %2353 = vmatprep.subr.bf16.mxu0 0
        %2354 = vmatpush2.bf16.msra.mxu0 0
        %2355 = vmatprep.subr.bf16.mxu0 0
        %2356 = vmatpush2.bf16.msra.mxu0 0
        %2357 = vmatprep.mubr.bf16.mxu0 0
        %2358 = vmatmul.mubr.bf16.gmra.mxu0 %v2256
        %v2359 = vpop.f32.mrf.mxu0
        %v2360 = vadd.f32 0.0, %v2359
        %v2361 = vpop.f32.mrf.mxu0
        %v2362 = vpop.f32.mrf.mxu0
        %v2363 = vadd.f32 0.0, %v2362
        %v2364 = vpop.f32.mrf.mxu0
        %2365 = vmatprep.mubr.bf16.mxu0 0
        %2366 = vmatmul.mubr.bf16.gmra.mxu0 %v2258
        %v2367 = vpop.f32.mrf.mxu0
        %v2368 = vadd.f32 0.0, %v2367
        %v2369 = vpop.f32.mrf.mxu0
        %v2370 = vpop.f32.mrf.mxu0
        %v2371 = vadd.f32 0.0, %v2370
        %v2372 = vpop.f32.mrf.mxu0
        %2373 = vmatprep.mubr.bf16.mxu0 0
        %2374 = vmatmul.mubr.bf16.gmra.mxu0 %v2260
        %v2375 = vpop.f32.mrf.mxu0
        %v2376 = vadd.f32 0.0, %v2375
        %v2377 = vpop.f32.mrf.mxu0
        %v2378 = vpop.f32.mrf.mxu0
        %v2379 = vadd.f32 0.0, %v2378
        %v2380 = vpop.f32.mrf.mxu0
        %2381 = vmatprep.mubr.bf16.mxu0 0
        %2382 = vmatmul.mubr.bf16.gmra.mxu0 %v2262
        %v2383 = vpop.f32.mrf.mxu0
        %v2384 = vadd.f32 0.0, %v2383
        %v2385 = vpop.f32.mrf.mxu0
        %v2386 = vpop.f32.mrf.mxu0
        %v2387 = vadd.f32 0.0, %v2386
        %v2388 = vpop.f32.mrf.mxu0
        %2389 = vmatprep.mubr.bf16.mxu0 0
        %2390 = vmatmul.mubr.bf16.gmra.mxu0 %v2264
        %v2391 = vpop.f32.mrf.mxu0
        %v2392 = vadd.f32 0.0, %v2391
        %v2393 = vpop.f32.mrf.mxu0
        %v2394 = vpop.f32.mrf.mxu0
        %v2395 = vadd.f32 0.0, %v2394
        %v2396 = vpop.f32.mrf.mxu0
        %2397 = vmatprep.mubr.bf16.mxu0 0
        %2398 = vmatmul.mubr.bf16.gmra.mxu0 %v2266
        %v2399 = vpop.f32.mrf.mxu0
        %v2400 = vadd.f32 0.0, %v2399
        %v2401 = vpop.f32.mrf.mxu0
        %v2402 = vpop.f32.mrf.mxu0
        %v2403 = vadd.f32 0.0, %v2402
        %v2404 = vpop.f32.mrf.mxu0
        %2405 = vmatprep.mubr.bf16.mxu0 0
        %2406 = vmatmul.mubr.bf16.gmra.mxu0 %v2268
        %v2407 = vpop.f32.mrf.mxu0
        %v2408 = vadd.f32 0.0, %v2407
        %v2409 = vpop.f32.mrf.mxu0
        %v2410 = vpop.f32.mrf.mxu0
        %v2411 = vadd.f32 0.0, %v2410
        %v2412 = vpop.f32.mrf.mxu0
        %2413 = vmatprep.mubr.bf16.mxu0 0
        %2414 = vmatmul.mubr.bf16.gmra.mxu0 %v2267
        %v2415 = vpop.f32.mrf.mxu0
        %v2416 = vadd.f32 0.0, %v2415
        %v2417 = vpop.f32.mrf.mxu0
        %v2418 = vpop.f32.mrf.mxu0
        %v2419 = vpop.f32.mrf.mxu0
        %2420 = vdwg.mxu0
        %v2421 = vadd.f32 %v2217, %v2360
        %v2422 = vadd.f32 %v2218, %v2363
        %v2423 = vadd.f32 %v2219, %v2368
        %v2424 = vadd.f32 %v2220, %v2371
        %v2425 = vadd.f32 %v2221, %v2376
        %v2426 = vadd.f32 %v2222, %v2379
        %v2427 = vadd.f32 %v2223, %v2384
        %v2428 = vadd.f32 %v2224, %v2387
        %v2429 = vadd.f32 %v2225, %v2392
        %v2430 = vadd.f32 %v2226, %v2395
        %v2431 = vadd.f32 %v2227, %v2400
        %v2432 = vadd.f32 %v2228, %v2403
        %v2433 = vadd.f32 %v2229, %v2408
        %v2434 = vadd.f32 %v2230, %v2411
        %v2435 = vadd.f32 %v2231, %v2416
        %v2436 = vld [vmem:[#allocation3 + $0xc] sm:$0xf]
        %v2437 = vld [vmem:[#allocation3 + $0x10] sm:$0xf]
        %v2438 = vld [vmem:[#allocation3 + $0x14] sm:$0xf]
        %v2439 = vld [vmem:[#allocation3 + $0x18] sm:$0xf]
        %v2440 = vld [vmem:[#allocation3 + $0x1c] sm:$0xf]
        %v2441 = vld [vmem:[#allocation3 + $0x20] sm:$0xf]
        %v2442 = vld [vmem:[#allocation3 + $0x24] sm:$0xf]
        %v2443 = vld [vmem:[#allocation3 + $0x28] sm:$0xf]
        %v2444 = vld [vmem:[#allocation3 + $0x2c] sm:$0xf]
        %v2445 = vld [vmem:[#allocation3 + $0x30] sm:$0xf]
        %v2446 = vld [vmem:[#allocation3 + $0x34] sm:$0xf]
        %v2447 = vld [vmem:[#allocation3 + $0x38] sm:$0xf]
        %v2448 = vld [vmem:[#allocation3 + $0x3c] sm:$0xf]
        %v2449 = vld [vmem:[#allocation3 + $0x40] sm:$0xf]
        %v2450 = vld [vmem:[#allocation3 + $0x44] sm:$0xf]
        %s2451 = scalar_lea.vmem %s3, 384
        %v2452 = vld [vmem:[%s2451] sm:$0xf]
        %v2453 = vld [vmem:[%s2451 + $0x4] sm:$0xf]
        %v2454 = vld [vmem:[%s2451 + $0x8] sm:$0xf]
        %v2455 = vld [vmem:[%s2451 + $0xc] sm:$0xf]
        %v2456 = vld [vmem:[%s2451 + $0x10] sm:$0xf]
        %v2457 = vld [vmem:[%s2451 + $0x14] sm:$0xf]
        %v2458 = vld [vmem:[%s2451 + $0x18] sm:$0xf]
        %v2459 = vld [vmem:[%s2451 + $0x1c] sm:$0xf]
        %v2460 = vld [vmem:[%s2451 + $0x20] sm:$0xf]
        %v2461 = vld [vmem:[%s2451 + $0x24] sm:$0xf]
        %v2462 = vld [vmem:[%s2451 + $0x28] sm:$0xf]
        %v2463 = vld [vmem:[%s2451 + $0x2c] sm:$0xf]
        %v2464 = vld [vmem:[%s2451 + $0x30] sm:$0xf]
        %v2465 = vld [vmem:[%s2451 + $0x34] sm:$0xf]
        %v2466 = vld [vmem:[%s2451 + $0x38] sm:$0xf]
        %v2467 = vld [vmem:[%s2451 + $0x3c] sm:$0xf]
        %v2483 = vunpack.c.l.b16 %v2436
        %v2484 = vunpack.c.l.b16 %v2437
        %v2485 = vunpack.c.l.b16 %v2438
        %v2486 = vunpack.c.l.b16 %v2439
        %v2487 = vunpack.c.l.b16 %v2440
        %v2488 = vunpack.c.l.b16 %v2441
        %v2489 = vunpack.c.l.b16 %v2442
        %v2490 = vunpack.c.l.b16 %v2443
        %v2491 = vunpack.c.l.b16 %v2444
        %v2492 = vunpack.c.l.b16 %v2445
        %v2493 = vunpack.c.l.b16 %v2446
        %v2494 = vunpack.c.l.b16 %v2447
        %v2495 = vunpack.c.l.b16 %v2448
        %v2496 = vunpack.c.l.b16 %v2449
        %v2497 = vunpack.c.l.b16 %v2450
        %v2498 = vpack.c.b16 %v2484, %v2483
        %v2499 = vpack.c.b16 %v2486, %v2485
        %v2500 = vpack.c.b16 %v2488, %v2487
        %v2501 = vpack.c.b16 %v2490, %v2489
        %v2502 = vpack.c.b16 %v2492, %v2491
        %v2503 = vpack.c.b16 %v2494, %v2493
        %v2504 = vpack.c.b16 %v2496, %v2495
        %v2505 = vpack.c.b16 %v2497, %v2497
        %v2530 = vunpack.c.l.b16 %v2452
        %v2531 = vunpack.c.l.b16 %v2453
        %v2532 = vunpack.c.l.b16 %v2454
        %v2533 = vunpack.c.l.b16 %v2455
        %v2534 = vunpack.c.l.b16 %v2456
        %v2535 = vunpack.c.l.b16 %v2457
        %v2536 = vunpack.c.l.b16 %v2458
        %v2537 = vunpack.c.l.b16 %v2459
        %v2538 = vunpack.c.l.b16 %v2460
        %v2539 = vunpack.c.l.b16 %v2461
        %v2540 = vunpack.c.l.b16 %v2462
        %v2541 = vunpack.c.l.b16 %v2463
        %v2542 = vunpack.c.l.b16 %v2464
        %v2543 = vunpack.c.l.b16 %v2465
        %v2544 = vunpack.c.l.b16 %v2466
        %v2545 = vunpack.c.l.b16 %v2467
        %v2546 = vpack.c.b16 %v2531, %v2530
        %v2547 = vpack.c.b16 %v2533, %v2532
        %v2548 = vpack.c.b16 %v2535, %v2534
        %v2549 = vpack.c.b16 %v2537, %v2536
        %v2550 = vpack.c.b16 %v2539, %v2538
        %v2551 = vpack.c.b16 %v2541, %v2540
        %v2552 = vpack.c.b16 %v2543, %v2542
        %v2553 = vpack.c.b16 %v2545, %v2544
        %2562 = vmatprep.subr.bf16.mxu0 0
        %2563 = vmatpush1.bf16.msra.mxu0 %v2553
        %2564 = vmatprep.subr.bf16.mxu0 0
        %2565 = vmatpush1.bf16.msra.mxu0 %v2552
        %2566 = vmatprep.subr.bf16.mxu0 0
        %2567 = vmatpush1.bf16.msra.mxu0 %v2551
        %2568 = vmatprep.subr.bf16.mxu0 0
        %2569 = vmatpush1.bf16.msra.mxu0 %v2550
        %2570 = vmatprep.subr.bf16.mxu0 0
        %2571 = vmatpush1.bf16.msra.mxu0 %v2549
        %2572 = vmatprep.subr.bf16.mxu0 0
        %2573 = vmatpush1.bf16.msra.mxu0 %v2548
        %2574 = vmatprep.subr.bf16.mxu0 0
        %2575 = vmatpush1.bf16.msra.mxu0 %v2547
        %2576 = vmatprep.subr.bf16.mxu0 0
        %2577 = vmatpush1.bf16.msra.mxu0 %v2546
        %2578 = vmatprep.subr.bf16.mxu0 0
        %2579 = vmatpush2.bf16.msra.mxu0 0
        %2580 = vmatprep.subr.bf16.mxu0 0
        %2581 = vmatpush2.bf16.msra.mxu0 0
        %2582 = vmatprep.subr.bf16.mxu0 0
        %2583 = vmatpush2.bf16.msra.mxu0 0
        %2584 = vmatprep.subr.bf16.mxu0 0
        %2585 = vmatpush2.bf16.msra.mxu0 0
        %2586 = vmatprep.subr.bf16.mxu0 0
        %2587 = vmatpush2.bf16.msra.mxu0 0
        %2588 = vmatprep.subr.bf16.mxu0 0
        %2589 = vmatpush2.bf16.msra.mxu0 0
        %2590 = vmatprep.subr.bf16.mxu0 0
        %2591 = vmatpush2.bf16.msra.mxu0 0
        %2592 = vmatprep.subr.bf16.mxu0 0
        %2593 = vmatpush2.bf16.msra.mxu0 0
        %2594 = vmatprep.mubr.bf16.mxu0 0
        %2595 = vmatmul.mubr.bf16.gmra.mxu0 %v2498
        %v2596 = vpop.f32.mrf.mxu0
        %v2597 = vadd.f32 0.0, %v2596
        %v2598 = vpop.f32.mrf.mxu0
        %v2599 = vpop.f32.mrf.mxu0
        %v2600 = vadd.f32 0.0, %v2599
        %v2601 = vpop.f32.mrf.mxu0
        %2602 = vmatprep.mubr.bf16.mxu0 0
        %2603 = vmatmul.mubr.bf16.gmra.mxu0 %v2499
        %v2604 = vpop.f32.mrf.mxu0
        %v2605 = vadd.f32 0.0, %v2604
        %v2606 = vpop.f32.mrf.mxu0
        %v2607 = vpop.f32.mrf.mxu0
        %v2608 = vadd.f32 0.0, %v2607
        %v2609 = vpop.f32.mrf.mxu0
        %2610 = vmatprep.mubr.bf16.mxu0 0
        %2611 = vmatmul.mubr.bf16.gmra.mxu0 %v2500
        %v2612 = vpop.f32.mrf.mxu0
        %v2613 = vadd.f32 0.0, %v2612
        %v2614 = vpop.f32.mrf.mxu0
        %v2615 = vpop.f32.mrf.mxu0
        %v2616 = vadd.f32 0.0, %v2615
        %v2617 = vpop.f32.mrf.mxu0
        %2618 = vmatprep.mubr.bf16.mxu0 0
        %2619 = vmatmul.mubr.bf16.gmra.mxu0 %v2501
        %v2620 = vpop.f32.mrf.mxu0
        %v2621 = vadd.f32 0.0, %v2620
        %v2622 = vpop.f32.mrf.mxu0
        %v2623 = vpop.f32.mrf.mxu0
        %v2624 = vadd.f32 0.0, %v2623
        %v2625 = vpop.f32.mrf.mxu0
        %2626 = vmatprep.mubr.bf16.mxu0 0
        %2627 = vmatmul.mubr.bf16.gmra.mxu0 %v2502
        %v2628 = vpop.f32.mrf.mxu0
        %v2629 = vadd.f32 0.0, %v2628
        %v2630 = vpop.f32.mrf.mxu0
        %v2631 = vpop.f32.mrf.mxu0
        %v2632 = vadd.f32 0.0, %v2631
        %v2633 = vpop.f32.mrf.mxu0
        %2634 = vmatprep.mubr.bf16.mxu0 0
        %2635 = vmatmul.mubr.bf16.gmra.mxu0 %v2503
        %v2636 = vpop.f32.mrf.mxu0
        %v2637 = vadd.f32 0.0, %v2636
        %v2638 = vpop.f32.mrf.mxu0
        %v2639 = vpop.f32.mrf.mxu0
        %v2640 = vadd.f32 0.0, %v2639
        %v2641 = vpop.f32.mrf.mxu0
        %2642 = vmatprep.mubr.bf16.mxu0 0
        %2643 = vmatmul.mubr.bf16.gmra.mxu0 %v2504
        %v2644 = vpop.f32.mrf.mxu0
        %v2645 = vadd.f32 0.0, %v2644
        %v2646 = vpop.f32.mrf.mxu0
        %v2647 = vpop.f32.mrf.mxu0
        %v2648 = vadd.f32 0.0, %v2647
        %v2649 = vpop.f32.mrf.mxu0
        %2650 = vmatprep.mubr.bf16.mxu0 0
        %2651 = vmatmul.mubr.bf16.gmra.mxu0 %v2505
        %v2652 = vpop.f32.mrf.mxu0
        %v2653 = vadd.f32 0.0, %v2652
        %v2654 = vpop.f32.mrf.mxu0
        %v2655 = vpop.f32.mrf.mxu0
        %v2656 = vpop.f32.mrf.mxu0
        %2657 = vdwg.mxu0
        %v2658 = vadd.f32 %v2421, %v2597
        %v2659 = vadd.f32 %v2422, %v2600
        %v2660 = vadd.f32 %v2423, %v2605
        %v2661 = vadd.f32 %v2424, %v2608
        %v2662 = vadd.f32 %v2425, %v2613
        %v2663 = vadd.f32 %v2426, %v2616
        %v2664 = vadd.f32 %v2427, %v2621
        %v2665 = vadd.f32 %v2428, %v2624
        %v2666 = vadd.f32 %v2429, %v2629
        %v2667 = vadd.f32 %v2430, %v2632
        %v2668 = vadd.f32 %v2431, %v2637
        %v2669 = vadd.f32 %v2432, %v2640
        %v2670 = vadd.f32 %v2433, %v2645
        %v2671 = vadd.f32 %v2434, %v2648
        %v2672 = vadd.f32 %v2435, %v2653
        %v2673 = vld [vmem:[#allocation3 + $0xc] sm:$0xf]
        %v2674 = vld [vmem:[#allocation3 + $0x10] sm:$0xf]
        %v2675 = vld [vmem:[#allocation3 + $0x14] sm:$0xf]
        %v2676 = vld [vmem:[#allocation3 + $0x18] sm:$0xf]
        %v2677 = vld [vmem:[#allocation3 + $0x1c] sm:$0xf]
        %v2678 = vld [vmem:[#allocation3 + $0x20] sm:$0xf]
        %v2679 = vld [vmem:[#allocation3 + $0x24] sm:$0xf]
        %v2680 = vld [vmem:[#allocation3 + $0x28] sm:$0xf]
        %v2681 = vld [vmem:[#allocation3 + $0x2c] sm:$0xf]
        %v2682 = vld [vmem:[#allocation3 + $0x30] sm:$0xf]
        %v2683 = vld [vmem:[#allocation3 + $0x34] sm:$0xf]
        %v2684 = vld [vmem:[#allocation3 + $0x38] sm:$0xf]
        %v2685 = vld [vmem:[#allocation3 + $0x3c] sm:$0xf]
        %v2686 = vld [vmem:[#allocation3 + $0x40] sm:$0xf]
        %v2687 = vld [vmem:[#allocation3 + $0x44] sm:$0xf]
        %v2688 = vld [vmem:[#allocation3 + $0x48] sm:$0x1]
        %s2689 = scalar_lea.vmem %s3, 448
        %v2690 = vld [vmem:[%s2689] sm:$0xf]
        %v2691 = vld [vmem:[%s2689 + $0x4] sm:$0xf]
        %v2692 = vld [vmem:[%s2689 + $0x8] sm:$0xf]
        %v2693 = vld [vmem:[%s2689 + $0xc] sm:$0xf]
        %v2694 = vld [vmem:[%s2689 + $0x10] sm:$0xf]
        %v2695 = vld [vmem:[%s2689 + $0x14] sm:$0xf]
        %v2696 = vld [vmem:[%s2689 + $0x18] sm:$0xf]
        %v2697 = vld [vmem:[%s2689 + $0x1c] sm:$0xf]
        %v2698 = vld [vmem:[%s2689 + $0x20] sm:$0xf]
        %v2699 = vld [vmem:[%s2689 + $0x24] sm:$0xf]
        %v2700 = vld [vmem:[%s2689 + $0x28] sm:$0xf]
        %v2701 = vld [vmem:[%s2689 + $0x2c] sm:$0xf]
        %v2702 = vld [vmem:[%s2689 + $0x30] sm:$0xf]
        %v2703 = vld [vmem:[%s2689 + $0x34] sm:$0xf]
        %v2704 = vld [vmem:[%s2689 + $0x38] sm:$0xf]
        %v2705 = vld [vmem:[%s2689 + $0x3c] sm:$0xf]
        %v2722 = vunpack.c.l.b16 %v2673
        %v2723 = vunpack.c.l.b16 %v2674
        %v2724 = vunpack.c.l.b16 %v2675
        %v2725 = vunpack.c.l.b16 %v2676
        %v2726 = vunpack.c.l.b16 %v2677
        %v2727 = vunpack.c.l.b16 %v2678
        %v2728 = vunpack.c.l.b16 %v2679
        %v2729 = vunpack.c.l.b16 %v2680
        %v2730 = vunpack.c.l.b16 %v2681
        %v2731 = vunpack.c.l.b16 %v2682
        %v2732 = vunpack.c.l.b16 %v2683
        %v2733 = vunpack.c.l.b16 %v2684
        %v2734 = vunpack.c.l.b16 %v2685
        %v2735 = vunpack.c.l.b16 %v2686
        %v2736 = vunpack.c.l.b16 %v2687
        %v2737 = vunpack.c.l.b16 %v2688
        %v2738 = vpack.c.b16 %v2723, %v2722
        %v2739 = vpack.c.b16 %v2725, %v2724
        %v2740 = vpack.c.b16 %v2727, %v2726
        %v2741 = vpack.c.b16 %v2729, %v2728
        %v2742 = vpack.c.b16 %v2731, %v2730
        %v2743 = vpack.c.b16 %v2733, %v2732
        %v2744 = vpack.c.b16 %v2735, %v2734
        %v2745 = vpack.c.b16 %v2737, %v2736
        %v2747 = vshrl.u32 %v2738, 16
        %v2749 = vshll.u32 %v2738, 16
        %v2751 = vrot.slane %v2749, 1
        %v2752 = vor.u32 %v2747, %v2751
        %v2754 = vshll.u32 %v2739, 16
        %v2756 = vrot.slane %v2754, 1
        %v2757 = vsel %vm1143, %v2752, %v2756
        %v2758 = vshrl.u32 %v2739, 16
        %v2760 = vor.u32 %v2758, %v2756
        %v2762 = vshll.u32 %v2740, 16
        %v2764 = vrot.slane %v2762, 1
        %v2765 = vsel %vm1143, %v2760, %v2764
        %v2766 = vshrl.u32 %v2740, 16
        %v2768 = vor.u32 %v2766, %v2764
        %v2770 = vshll.u32 %v2741, 16
        %v2772 = vrot.slane %v2770, 1
        %v2773 = vsel %vm1143, %v2768, %v2772
        %v2774 = vshrl.u32 %v2741, 16
        %v2776 = vor.u32 %v2774, %v2772
        %v2778 = vshll.u32 %v2742, 16
        %v2780 = vrot.slane %v2778, 1
        %v2781 = vsel %vm1143, %v2776, %v2780
        %v2782 = vshrl.u32 %v2742, 16
        %v2784 = vor.u32 %v2782, %v2780
        %v2786 = vshll.u32 %v2743, 16
        %v2788 = vrot.slane %v2786, 1
        %v2789 = vsel %vm1143, %v2784, %v2788
        %v2790 = vshrl.u32 %v2743, 16
        %v2792 = vor.u32 %v2790, %v2788
        %v2794 = vshll.u32 %v2744, 16
        %v2796 = vrot.slane %v2794, 1
        %v2797 = vsel %vm1143, %v2792, %v2796
        %v2798 = vshrl.u32 %v2744, 16
        %v2800 = vor.u32 %v2798, %v2796
        %v2802 = vshll.u32 %v2745, 16
        %v2804 = vrot.slane %v2802, 1
        %v2805 = vsel %vm1143, %v2800, %v2804
        %v2806 = vshrl.u32 %v2745, 16
        %v2808 = vor.u32 %v2806, %v2804
        %v2833 = vunpack.c.l.b16 %v2690
        %v2834 = vunpack.c.l.b16 %v2691
        %v2835 = vunpack.c.l.b16 %v2692
        %v2836 = vunpack.c.l.b16 %v2693
        %v2837 = vunpack.c.l.b16 %v2694
        %v2838 = vunpack.c.l.b16 %v2695
        %v2839 = vunpack.c.l.b16 %v2696
        %v2840 = vunpack.c.l.b16 %v2697
        %v2841 = vunpack.c.l.b16 %v2698
        %v2842 = vunpack.c.l.b16 %v2699
        %v2843 = vunpack.c.l.b16 %v2700
        %v2844 = vunpack.c.l.b16 %v2701
        %v2845 = vunpack.c.l.b16 %v2702
        %v2846 = vunpack.c.l.b16 %v2703
        %v2847 = vunpack.c.l.b16 %v2704
        %v2848 = vunpack.c.l.b16 %v2705
        %v2849 = vpack.c.b16 %v2834, %v2833
        %v2850 = vpack.c.b16 %v2836, %v2835
        %v2851 = vpack.c.b16 %v2838, %v2837
        %v2852 = vpack.c.b16 %v2840, %v2839
        %v2853 = vpack.c.b16 %v2842, %v2841
        %v2854 = vpack.c.b16 %v2844, %v2843
        %v2855 = vpack.c.b16 %v2846, %v2845
        %v2856 = vpack.c.b16 %v2848, %v2847
        %2865 = vmatprep.subr.bf16.mxu0 0
        %2866 = vmatpush1.bf16.msra.mxu0 %v2856
        %2867 = vmatprep.subr.bf16.mxu0 0
        %2868 = vmatpush1.bf16.msra.mxu0 %v2855
        %2869 = vmatprep.subr.bf16.mxu0 0
        %2870 = vmatpush1.bf16.msra.mxu0 %v2854
        %2871 = vmatprep.subr.bf16.mxu0 0
        %2872 = vmatpush1.bf16.msra.mxu0 %v2853
        %2873 = vmatprep.subr.bf16.mxu0 0
        %2874 = vmatpush1.bf16.msra.mxu0 %v2852
        %2875 = vmatprep.subr.bf16.mxu0 0
        %2876 = vmatpush1.bf16.msra.mxu0 %v2851
        %2877 = vmatprep.subr.bf16.mxu0 0
        %2878 = vmatpush1.bf16.msra.mxu0 %v2850
        %2879 = vmatprep.subr.bf16.mxu0 0
        %2880 = vmatpush1.bf16.msra.mxu0 %v2849
        %2881 = vmatprep.subr.bf16.mxu0 0
        %2882 = vmatpush2.bf16.msra.mxu0 0
        %2883 = vmatprep.subr.bf16.mxu0 0
        %2884 = vmatpush2.bf16.msra.mxu0 0
        %2885 = vmatprep.subr.bf16.mxu0 0
        %2886 = vmatpush2.bf16.msra.mxu0 0
        %2887 = vmatprep.subr.bf16.mxu0 0
        %2888 = vmatpush2.bf16.msra.mxu0 0
        %2889 = vmatprep.subr.bf16.mxu0 0
        %2890 = vmatpush2.bf16.msra.mxu0 0
        %2891 = vmatprep.subr.bf16.mxu0 0
        %2892 = vmatpush2.bf16.msra.mxu0 0
        %2893 = vmatprep.subr.bf16.mxu0 0
        %2894 = vmatpush2.bf16.msra.mxu0 0
        %2895 = vmatprep.subr.bf16.mxu0 0
        %2896 = vmatpush2.bf16.msra.mxu0 0
        %2897 = vmatprep.mubr.bf16.mxu0 0
        %2898 = vmatmul.mubr.bf16.gmra.mxu0 %v2757
        %v2899 = vpop.f32.mrf.mxu0
        %v2900 = vadd.f32 0.0, %v2899
        %v2901 = vpop.f32.mrf.mxu0
        %v2902 = vpop.f32.mrf.mxu0
        %v2903 = vadd.f32 0.0, %v2902
        %v2904 = vpop.f32.mrf.mxu0
        %2905 = vmatprep.mubr.bf16.mxu0 0
        %2906 = vmatmul.mubr.bf16.gmra.mxu0 %v2765
        %v2907 = vpop.f32.mrf.mxu0
        %v2908 = vadd.f32 0.0, %v2907
        %v2909 = vpop.f32.mrf.mxu0
        %v2910 = vpop.f32.mrf.mxu0
        %v2911 = vadd.f32 0.0, %v2910
        %v2912 = vpop.f32.mrf.mxu0
        %2913 = vmatprep.mubr.bf16.mxu0 0
        %2914 = vmatmul.mubr.bf16.gmra.mxu0 %v2773
        %v2915 = vpop.f32.mrf.mxu0
        %v2916 = vadd.f32 0.0, %v2915
        %v2917 = vpop.f32.mrf.mxu0
        %v2918 = vpop.f32.mrf.mxu0
        %v2919 = vadd.f32 0.0, %v2918
        %v2920 = vpop.f32.mrf.mxu0
        %2921 = vmatprep.mubr.bf16.mxu0 0
        %2922 = vmatmul.mubr.bf16.gmra.mxu0 %v2781
        %v2923 = vpop.f32.mrf.mxu0
        %v2924 = vadd.f32 0.0, %v2923
        %v2925 = vpop.f32.mrf.mxu0
        %v2926 = vpop.f32.mrf.mxu0
        %v2927 = vadd.f32 0.0, %v2926
        %v2928 = vpop.f32.mrf.mxu0
        %2929 = vmatprep.mubr.bf16.mxu0 0
        %2930 = vmatmul.mubr.bf16.gmra.mxu0 %v2789
        %v2931 = vpop.f32.mrf.mxu0
        %v2932 = vadd.f32 0.0, %v2931
        %v2933 = vpop.f32.mrf.mxu0
        %v2934 = vpop.f32.mrf.mxu0
        %v2935 = vadd.f32 0.0, %v2934
        %v2936 = vpop.f32.mrf.mxu0
        %2937 = vmatprep.mubr.bf16.mxu0 0
        %2938 = vmatmul.mubr.bf16.gmra.mxu0 %v2797
        %v2939 = vpop.f32.mrf.mxu0
        %v2940 = vadd.f32 0.0, %v2939
        %v2941 = vpop.f32.mrf.mxu0
        %v2942 = vpop.f32.mrf.mxu0
        %v2943 = vadd.f32 0.0, %v2942
        %v2944 = vpop.f32.mrf.mxu0
        %2945 = vmatprep.mubr.bf16.mxu0 0
        %2946 = vmatmul.mubr.bf16.gmra.mxu0 %v2805
        %v2947 = vpop.f32.mrf.mxu0
        %v2948 = vadd.f32 0.0, %v2947
        %v2949 = vpop.f32.mrf.mxu0
        %v2950 = vpop.f32.mrf.mxu0
        %v2951 = vadd.f32 0.0, %v2950
        %v2952 = vpop.f32.mrf.mxu0
        %2953 = vmatprep.mubr.bf16.mxu0 0
        %2954 = vmatmul.mubr.bf16.gmra.mxu0 %v2808
        %v2955 = vpop.f32.mrf.mxu0
        %v2956 = vadd.f32 0.0, %v2955
        %v2957 = vpop.f32.mrf.mxu0
        %v2958 = vpop.f32.mrf.mxu0
        %v2959 = vpop.f32.mrf.mxu0
        %2960 = vdwg.mxu0
        %v2961 = vadd.f32 %v2658, %v2900
        %v2962 = vadd.f32 %v2659, %v2903
        %v2963 = vadd.f32 %v2660, %v2908
        %v2964 = vadd.f32 %v2661, %v2911
        %v2965 = vadd.f32 %v2662, %v2916
        %v2966 = vadd.f32 %v2663, %v2919
        %v2967 = vadd.f32 %v2664, %v2924
        %v2968 = vadd.f32 %v2665, %v2927
        %v2969 = vadd.f32 %v2666, %v2932
        %v2970 = vadd.f32 %v2667, %v2935
        %v2971 = vadd.f32 %v2668, %v2940
        %v2972 = vadd.f32 %v2669, %v2943
        %v2973 = vadd.f32 %v2670, %v2948
        %v2974 = vadd.f32 %v2671, %v2951
        %v2975 = vadd.f32 %v2672, %v2956
        %v2976 = vld [vmem:[#allocation3 + $0xc] sm:$0xe]
        %s2977 = scalar_lea.vmem %s3, 512
        %v2978 = vld [vmem:[%s2977] sm:$0xf]
        %v2979 = vld [vmem:[%s2977 + $0x4] sm:$0xf]
        %v2980 = vld [vmem:[%s2977 + $0x8] sm:$0xf]
        %v2981 = vld [vmem:[%s2977 + $0xc] sm:$0xf]
        %v2982 = vld [vmem:[%s2977 + $0x10] sm:$0xf]
        %v2983 = vld [vmem:[%s2977 + $0x14] sm:$0xf]
        %v2984 = vld [vmem:[%s2977 + $0x18] sm:$0xf]
        %v2985 = vld [vmem:[%s2977 + $0x1c] sm:$0xf]
        %v2986 = vld [vmem:[%s2977 + $0x20] sm:$0xf]
        %v2987 = vld [vmem:[%s2977 + $0x24] sm:$0xf]
        %v2988 = vld [vmem:[%s2977 + $0x28] sm:$0xf]
        %v2989 = vld [vmem:[%s2977 + $0x2c] sm:$0xf]
        %v2990 = vld [vmem:[%s2977 + $0x30] sm:$0xf]
        %v2991 = vld [vmem:[%s2977 + $0x34] sm:$0xf]
        %v2992 = vld [vmem:[%s2977 + $0x38] sm:$0xf]
        %v2993 = vld [vmem:[%s2977 + $0x3c] sm:$0xf]
        %v2995 = vunpack.c.l.b16 %v2976
        %v2996 = vpack.c.b16 %v2723, %v2995
        %v2997 = vrot.slane %v2996, 1
        %v2998 = vrot.slane %v2739, 1
        %v2999 = vsel %vm1533, %v2997, %v2998
        %v3000 = vrot.slane %v2740, 1
        %v3001 = vsel %vm1533, %v2998, %v3000
        %v3002 = vrot.slane %v2741, 1
        %v3003 = vsel %vm1533, %v3000, %v3002
        %v3004 = vrot.slane %v2742, 1
        %v3005 = vsel %vm1533, %v3002, %v3004
        %v3006 = vrot.slane %v2743, 1
        %v3007 = vsel %vm1533, %v3004, %v3006
        %v3008 = vrot.slane %v2744, 1
        %v3009 = vsel %vm1533, %v3006, %v3008
        %v3010 = vrot.slane %v2745, 1
        %v3011 = vsel %vm1533, %v3008, %v3010
        %v3036 = vunpack.c.l.b16 %v2978
        %v3037 = vunpack.c.l.b16 %v2979
        %v3038 = vunpack.c.l.b16 %v2980
        %v3039 = vunpack.c.l.b16 %v2981
        %v3040 = vunpack.c.l.b16 %v2982
        %v3041 = vunpack.c.l.b16 %v2983
        %v3042 = vunpack.c.l.b16 %v2984
        %v3043 = vunpack.c.l.b16 %v2985
        %v3044 = vunpack.c.l.b16 %v2986
        %v3045 = vunpack.c.l.b16 %v2987
        %v3046 = vunpack.c.l.b16 %v2988
        %v3047 = vunpack.c.l.b16 %v2989
        %v3048 = vunpack.c.l.b16 %v2990
        %v3049 = vunpack.c.l.b16 %v2991
        %v3050 = vunpack.c.l.b16 %v2992
        %v3051 = vunpack.c.l.b16 %v2993
        %v3052 = vpack.c.b16 %v3037, %v3036
        %v3053 = vpack.c.b16 %v3039, %v3038
        %v3054 = vpack.c.b16 %v3041, %v3040
        %v3055 = vpack.c.b16 %v3043, %v3042
        %v3056 = vpack.c.b16 %v3045, %v3044
        %v3057 = vpack.c.b16 %v3047, %v3046
        %v3058 = vpack.c.b16 %v3049, %v3048
        %v3059 = vpack.c.b16 %v3051, %v3050
        %3068 = vmatprep.subr.bf16.mxu0 0
        %3069 = vmatpush1.bf16.msra.mxu0 %v3059
        %3070 = vmatprep.subr.bf16.mxu0 0
        %3071 = vmatpush1.bf16.msra.mxu0 %v3058
        %3072 = vmatprep.subr.bf16.mxu0 0
        %3073 = vmatpush1.bf16.msra.mxu0 %v3057
        %3074 = vmatprep.subr.bf16.mxu0 0
        %3075 = vmatpush1.bf16.msra.mxu0 %v3056
        %3076 = vmatprep.subr.bf16.mxu0 0
        %3077 = vmatpush1.bf16.msra.mxu0 %v3055
        %3078 = vmatprep.subr.bf16.mxu0 0
        %3079 = vmatpush1.bf16.msra.mxu0 %v3054
        %3080 = vmatprep.subr.bf16.mxu0 0
        %3081 = vmatpush1.bf16.msra.mxu0 %v3053
        %3082 = vmatprep.subr.bf16.mxu0 0
        %3083 = vmatpush1.bf16.msra.mxu0 %v3052
        %3084 = vmatprep.subr.bf16.mxu0 0
        %3085 = vmatpush2.bf16.msra.mxu0 0
        %3086 = vmatprep.subr.bf16.mxu0 0
        %3087 = vmatpush2.bf16.msra.mxu0 0
        %3088 = vmatprep.subr.bf16.mxu0 0
        %3089 = vmatpush2.bf16.msra.mxu0 0
        %3090 = vmatprep.subr.bf16.mxu0 0
        %3091 = vmatpush2.bf16.msra.mxu0 0
        %3092 = vmatprep.subr.bf16.mxu0 0
        %3093 = vmatpush2.bf16.msra.mxu0 0
        %3094 = vmatprep.subr.bf16.mxu0 0
        %3095 = vmatpush2.bf16.msra.mxu0 0
        %3096 = vmatprep.subr.bf16.mxu0 0
        %3097 = vmatpush2.bf16.msra.mxu0 0
        %3098 = vmatprep.subr.bf16.mxu0 0
        %3099 = vmatpush2.bf16.msra.mxu0 0
        %3100 = vmatprep.mubr.bf16.mxu0 0
        %3101 = vmatmul.mubr.bf16.gmra.mxu0 %v2999
        %v3102 = vpop.f32.mrf.mxu0
        %v3103 = vadd.f32 0.0, %v3102
        %v3104 = vpop.f32.mrf.mxu0
        %v3105 = vpop.f32.mrf.mxu0
        %v3106 = vadd.f32 0.0, %v3105
        %v3107 = vpop.f32.mrf.mxu0
        %3108 = vmatprep.mubr.bf16.mxu0 0
        %3109 = vmatmul.mubr.bf16.gmra.mxu0 %v3001
        %v3110 = vpop.f32.mrf.mxu0
        %v3111 = vadd.f32 0.0, %v3110
        %v3112 = vpop.f32.mrf.mxu0
        %v3113 = vpop.f32.mrf.mxu0
        %v3114 = vadd.f32 0.0, %v3113
        %v3115 = vpop.f32.mrf.mxu0
        %3116 = vmatprep.mubr.bf16.mxu0 0
        %3117 = vmatmul.mubr.bf16.gmra.mxu0 %v3003
        %v3118 = vpop.f32.mrf.mxu0
        %v3119 = vadd.f32 0.0, %v3118
        %v3120 = vpop.f32.mrf.mxu0
        %v3121 = vpop.f32.mrf.mxu0
        %v3122 = vadd.f32 0.0, %v3121
        %v3123 = vpop.f32.mrf.mxu0
        %3124 = vmatprep.mubr.bf16.mxu0 0
        %3125 = vmatmul.mubr.bf16.gmra.mxu0 %v3005
        %v3126 = vpop.f32.mrf.mxu0
        %v3127 = vadd.f32 0.0, %v3126
        %v3128 = vpop.f32.mrf.mxu0
        %v3129 = vpop.f32.mrf.mxu0
        %v3130 = vadd.f32 0.0, %v3129
        %v3131 = vpop.f32.mrf.mxu0
        %3132 = vmatprep.mubr.bf16.mxu0 0
        %3133 = vmatmul.mubr.bf16.gmra.mxu0 %v3007
        %v3134 = vpop.f32.mrf.mxu0
        %v3135 = vadd.f32 0.0, %v3134
        %v3136 = vpop.f32.mrf.mxu0
        %v3137 = vpop.f32.mrf.mxu0
        %v3138 = vadd.f32 0.0, %v3137
        %v3139 = vpop.f32.mrf.mxu0
        %3140 = vmatprep.mubr.bf16.mxu0 0
        %3141 = vmatmul.mubr.bf16.gmra.mxu0 %v3009
        %v3142 = vpop.f32.mrf.mxu0
        %v3143 = vadd.f32 0.0, %v3142
        %v3144 = vpop.f32.mrf.mxu0
        %v3145 = vpop.f32.mrf.mxu0
        %v3146 = vadd.f32 0.0, %v3145
        %v3147 = vpop.f32.mrf.mxu0
        %3148 = vmatprep.mubr.bf16.mxu0 0
        %3149 = vmatmul.mubr.bf16.gmra.mxu0 %v3011
        %v3150 = vpop.f32.mrf.mxu0
        %v3151 = vadd.f32 0.0, %v3150
        %v3152 = vpop.f32.mrf.mxu0
        %v3153 = vpop.f32.mrf.mxu0
        %v3154 = vadd.f32 0.0, %v3153
        %v3155 = vpop.f32.mrf.mxu0
        %3156 = vmatprep.mubr.bf16.mxu0 0
        %3157 = vmatmul.mubr.bf16.gmra.mxu0 %v3010
        %v3158 = vpop.f32.mrf.mxu0
        %v3159 = vadd.f32 0.0, %v3158
        %v3160 = vpop.f32.mrf.mxu0
        %v3161 = vpop.f32.mrf.mxu0
        %v3162 = vpop.f32.mrf.mxu0
        %3163 = vdwg.mxu0
        %v3164 = vadd.f32 %v2961, %v3103
        %v3165 = vadd.f32 %v2962, %v3106
        %v3166 = vadd.f32 %v2963, %v3111
        %v3167 = vadd.f32 %v2964, %v3114
        %v3168 = vadd.f32 %v2965, %v3119
        %v3169 = vadd.f32 %v2966, %v3122
        %v3170 = vadd.f32 %v2967, %v3127
        %v3171 = vadd.f32 %v2968, %v3130
        %v3172 = vadd.f32 %v2969, %v3135
        %v3173 = vadd.f32 %v2970, %v3138
        %v3174 = vadd.f32 %v2971, %v3143
        %v3175 = vadd.f32 %v2972, %v3146
        %v3176 = vadd.f32 %v2973, %v3151
        %v3177 = vadd.f32 %v2974, %v3154
        %v3178 = vadd.f32 %v2975, %v3159
        %v3179 = vld [vmem:[%s4] sm:$0x1]
        %v3181 = vlaneseq
        %v3182 = vshrl.u32 %v3181, 7
        %v3183 = vsub.s32 0, %v3182
        %v3184 = vrot.slane %v3179, %v3183
        %v3186 = vadd.f32 %v3164, %v3184
        %v3187 = vadd.f32 %v3165, %v3184
        %v3188 = vadd.f32 %v3166, %v3184
        %v3189 = vadd.f32 %v3167, %v3184
        %v3190 = vadd.f32 %v3168, %v3184
        %v3191 = vadd.f32 %v3169, %v3184
        %v3192 = vadd.f32 %v3170, %v3184
        %v3193 = vadd.f32 %v3171, %v3184
        %v3194 = vadd.f32 %v3172, %v3184
        %v3195 = vadd.f32 %v3173, %v3184
        %v3196 = vadd.f32 %v3174, %v3184
        %v3197 = vadd.f32 %v3175, %v3184
        %v3198 = vadd.f32 %v3176, %v3184
        %v3199 = vadd.f32 %v3177, %v3184
        %v3200 = vadd.f32 %v3178, %v3184
        %v3201 = vmax.f32 %v3186, 0.0
        %v3202 = vmax.f32 %v3187, 0.0
        %v3203 = vmax.f32 %v3188, 0.0
        %v3204 = vmax.f32 %v3189, 0.0
        %v3205 = vmax.f32 %v3190, 0.0
        %v3206 = vmax.f32 %v3191, 0.0
        %v3207 = vmax.f32 %v3192, 0.0
        %v3208 = vmax.f32 %v3193, 0.0
        %v3209 = vmax.f32 %v3194, 0.0
        %v3210 = vmax.f32 %v3195, 0.0
        %v3211 = vmax.f32 %v3196, 0.0
        %v3212 = vmax.f32 %v3197, 0.0
        %v3213 = vmax.f32 %v3198, 0.0
        %v3214 = vmax.f32 %v3199, 0.0
        %v3215 = vmax.f32 %v3200, 0.0
        %3216 = vst [vmem:[#allocation4] sm:$0xff] %v3201
        %3217 = vst [vmem:[#allocation4 + $0x8] sm:$0xff] %v3202
        %3218 = vst [vmem:[#allocation4 + $0x10] sm:$0xff] %v3203
        %3219 = vst [vmem:[#allocation4 + $0x18] sm:$0xff] %v3204
        %3220 = vst [vmem:[#allocation4 + $0x20] sm:$0xff] %v3205
        %3221 = vst [vmem:[#allocation4 + $0x28] sm:$0xff] %v3206
        %3222 = vst [vmem:[#allocation4 + $0x30] sm:$0xff] %v3207
        %3223 = vst [vmem:[#allocation4 + $0x38] sm:$0xff] %v3208
        %3224 = vst [vmem:[#allocation4 + $0x40] sm:$0xff] %v3209
        %3225 = vst [vmem:[#allocation4 + $0x48] sm:$0xff] %v3210
        %3226 = vst [vmem:[#allocation4 + $0x50] sm:$0xff] %v3211
        %3227 = vst [vmem:[#allocation4 + $0x58] sm:$0xff] %v3212
        %3228 = vst [vmem:[#allocation4 + $0x60] sm:$0xff] %v3213
        %3229 = vst [vmem:[#allocation4 + $0x68] sm:$0xff] %v3214
        %3230 = vst [vmem:[#allocation4 + $0x70] sm:$0xff] %v3215
        %3231 = vst [vmem:[#allocation5] sm:$0xf] 0
        %3232 = vst [vmem:[#allocation5 + $0x14] sm:$0xf] 0
        %s3233 = scalar_lea.vmem [#allocation4], 1
        %v3234 = vld [vmem:[%s3233] ss:$2 sm:$0xf]
        %s3235 = scalar_lea.vmem [#allocation4], 2
        %v3236 = vld [vmem:[%s3235] ss:$2 sm:$0xf]
        %v3237 = vmax.f32 %v3234, %v3236
        %s3238 = scalar_lea.vmem [#allocation4], 13
        %v3239 = vld [vmem:[%s3238] ss:$2 sm:$0xf]
        %s3240 = scalar_lea.vmem [#allocation4], 14
        %v3241 = vld [vmem:[%s3240] ss:$2 sm:$0xf]
        %v3242 = vmax.f32 %v3239, %v3241
        %v3243 = vmax.f32 %v3237, %v3242
        %3244 = vst [vmem:[#allocation5 + $0x4] sm:$0x1] 0
        %v3245 = vpack.c.bf16 %v3243, %v3243
        %v3247 = vunpack.c.l.b16 %v3245
        %v3248 = vpack.c.b16 %v3247, %v3247
        %v3249 = vrot.slane %v3248, 7
        %3251 = vst [vmem:[#allocation5 + $0x4] sm:$0x6] %v3249
        %3252 = vst [vmem:[#allocation5 + $0x4] sm:$0x8] 0
        %s3253 = scalar_lea.vmem [#allocation4], 25
        %v3254 = vld [vmem:[%s3253] ss:$2 sm:$0xf]
        %s3255 = scalar_lea.vmem [#allocation4], 26
        %v3256 = vld [vmem:[%s3255] ss:$2 sm:$0xf]
        %v3257 = vmax.f32 %v3254, %v3256
        %s3258 = scalar_lea.vmem [#allocation4], 37
        %v3259 = vld [vmem:[%s3258] ss:$2 sm:$0xf]
        %s3260 = scalar_lea.vmem [#allocation4], 38
        %v3261 = vld [vmem:[%s3260] ss:$2 sm:$0xf]
        %v3262 = vmax.f32 %v3259, %v3261
        %v3263 = vmax.f32 %v3257, %v3262
        %3264 = vst [vmem:[#allocation5 + $0x8] sm:$0x1] 0
        %v3265 = vpack.c.bf16 %v3263, %v3263
        %v3267 = vunpack.c.l.b16 %v3265
        %v3268 = vpack.c.b16 %v3267, %v3267
        %v3269 = vrot.slane %v3268, 7
        %3271 = vst [vmem:[#allocation5 + $0x8] sm:$0x6] %v3269
        %3272 = vst [vmem:[#allocation5 + $0x8] sm:$0x8] 0
        %s3273 = scalar_lea.vmem [#allocation4], 49
        %v3274 = vld [vmem:[%s3273] ss:$2 sm:$0xf]
        %s3275 = scalar_lea.vmem [#allocation4], 50
        %v3276 = vld [vmem:[%s3275] ss:$2 sm:$0xf]
        %v3277 = vmax.f32 %v3274, %v3276
        %s3278 = scalar_lea.vmem [#allocation4], 61
        %v3279 = vld [vmem:[%s3278] ss:$2 sm:$0xf]
        %s3280 = scalar_lea.vmem [#allocation4], 62
        %v3281 = vld [vmem:[%s3280] ss:$2 sm:$0xf]
        %v3282 = vmax.f32 %v3279, %v3281
        %v3283 = vmax.f32 %v3277, %v3282
        %3284 = vst [vmem:[#allocation5 + $0xc] sm:$0x1] 0
        %v3285 = vpack.c.bf16 %v3283, %v3283
        %v3287 = vunpack.c.l.b16 %v3285
        %v3288 = vpack.c.b16 %v3287, %v3287
        %v3289 = vrot.slane %v3288, 7
        %3291 = vst [vmem:[#allocation5 + $0xc] sm:$0x6] %v3289
        %3292 = vst [vmem:[#allocation5 + $0xc] sm:$0x8] 0
        %s3293 = scalar_lea.vmem [#allocation4], 73
        %v3294 = vld [vmem:[%s3293] ss:$2 sm:$0xf]
        %s3295 = scalar_lea.vmem [#allocation4], 74
        %v3296 = vld [vmem:[%s3295] ss:$2 sm:$0xf]
        %v3297 = vmax.f32 %v3294, %v3296
        %s3298 = scalar_lea.vmem [#allocation4], 85
        %v3299 = vld [vmem:[%s3298] ss:$2 sm:$0xf]
        %s3300 = scalar_lea.vmem [#allocation4], 86
        %v3301 = vld [vmem:[%s3300] ss:$2 sm:$0xf]
        %v3302 = vmax.f32 %v3299, %v3301
        %v3303 = vmax.f32 %v3297, %v3302
        %3304 = vst [vmem:[#allocation5 + $0x10] sm:$0x1] 0
        %v3305 = vpack.c.bf16 %v3303, %v3303
        %v3307 = vunpack.c.l.b16 %v3305
        %v3308 = vpack.c.b16 %v3307, %v3307
        %v3309 = vrot.slane %v3308, 7
        %3311 = vst [vmem:[#allocation5 + $0x10] sm:$0x6] %v3309
        %3312 = vst [vmem:[#allocation5 + $0x10] sm:$0x8] 0
        %3313 = vst [vmem:[#allocation5 + $0x18] sm:$0xf] 0
        %3314 = vst [vmem:[#allocation5 + $0x1c] sm:$0xf] 0
        %3315 = vst [vmem:[#allocation5 + $0x20] sm:$0x1] 0
        %v3316 = vld [vmem:[#allocation5] sm:$0xf]
        %v3317 = vld [vmem:[#allocation5 + $0x4] sm:$0xf]
        %v3318 = vld [vmem:[#allocation5 + $0x8] sm:$0xf]
        %v3319 = vld [vmem:[#allocation5 + $0xc] sm:$0xf]
        %v3320 = vld [vmem:[#allocation5 + $0x10] sm:$0xf]
        %v3321 = vld [vmem:[#allocation5 + $0x14] sm:$0xf]
        %v3322 = vld [vmem:[%s5] sm:$0xf]
        %v3323 = vld [vmem:[%s5 + $0x4] sm:$0xf]
        %v3324 = vld [vmem:[%s5 + $0x8] sm:$0xf]
        %v3325 = vld [vmem:[%s5 + $0xc] sm:$0xf]
        %v3326 = vld [vmem:[%s5 + $0x10] sm:$0xf]
        %v3327 = vld [vmem:[%s5 + $0x14] sm:$0xf]
        %v3328 = vld [vmem:[%s5 + $0x18] sm:$0xf]
        %v3329 = vld [vmem:[%s5 + $0x1c] sm:$0xf]
        %v3330 = vld [vmem:[%s5 + $0x20] sm:$0xf]
        %v3331 = vld [vmem:[%s5 + $0x24] sm:$0xf]
        %v3332 = vld [vmem:[%s5 + $0x28] sm:$0xf]
        %v3333 = vld [vmem:[%s5 + $0x2c] sm:$0xf]
        %v3334 = vld [vmem:[%s5 + $0x30] sm:$0xf]
        %v3335 = vld [vmem:[%s5 + $0x34] sm:$0xf]
        %v3336 = vld [vmem:[%s5 + $0x38] sm:$0xf]
        %v3337 = vld [vmem:[%s5 + $0x3c] sm:$0xf]
        %v3338 = vld [vmem:[#allocation5 + $0x18] sm:$0x1]
        %s3339 = scalar_lea.vmem %s5, 64
        %v3340 = vld [vmem:[%s3339] sm:$0xf]
        %v3341 = vld [vmem:[%s3339 + $0x4] sm:$0xf]
        %v3342 = vld [vmem:[%s3339 + $0x8] sm:$0xf]
        %v3343 = vld [vmem:[%s3339 + $0xc] sm:$0xf]
        %v3344 = vld [vmem:[%s3339 + $0x10] sm:$0xf]
        %v3345 = vld [vmem:[%s3339 + $0x14] sm:$0xf]
        %v3346 = vld [vmem:[%s3339 + $0x18] sm:$0xf]
        %v3347 = vld [vmem:[%s3339 + $0x1c] sm:$0xf]
        %v3348 = vld [vmem:[%s3339 + $0x20] sm:$0xf]
        %v3349 = vld [vmem:[%s3339 + $0x24] sm:$0xf]
        %v3350 = vld [vmem:[%s3339 + $0x28] sm:$0xf]
        %v3351 = vld [vmem:[%s3339 + $0x2c] sm:$0xf]
        %v3352 = vld [vmem:[%s3339 + $0x30] sm:$0xf]
        %v3353 = vld [vmem:[%s3339 + $0x34] sm:$0xf]
        %v3354 = vld [vmem:[%s3339 + $0x38] sm:$0xf]
        %v3355 = vld [vmem:[%s3339 + $0x3c] sm:$0xf]
        %v3363 = vunpack.c.l.b16 %v3316
        %v3364 = vunpack.c.l.b16 %v3317
        %v3365 = vunpack.c.l.b16 %v3318
        %v3366 = vunpack.c.l.b16 %v3319
        %v3367 = vunpack.c.l.b16 %v3320
        %v3368 = vunpack.c.l.b16 %v3321
        %v3369 = vunpack.c.l.b16 %v3338
        %v3370 = vpack.c.b16 %v3364, %v3363
        %v3371 = vpack.c.b16 %v3366, %v3365
        %v3372 = vpack.c.b16 %v3368, %v3367
        %v3373 = vpack.c.b16 %v3369, %v3369
        %v3375 = vshrl.u32 %v3370, 16
        %v3377 = vshll.u32 %v3370, 16
        %v3379 = vrot.slane %v3377, 1
        %v3380 = vor.u32 %v3375, %v3379
        %v3382 = vshll.u32 %v3371, 16
        %v3384 = vrot.slane %v3382, 1
        %v3385 = vsel %vm1143, %v3380, %v3384
        %v3386 = vshrl.u32 %v3371, 16
        %v3388 = vor.u32 %v3386, %v3384
        %v3390 = vshll.u32 %v3372, 16
        %v3392 = vrot.slane %v3390, 1
        %v3393 = vsel %vm1143, %v3388, %v3392
        %v3394 = vshrl.u32 %v3372, 16
        %v3396 = vor.u32 %v3394, %v3392
        %v3398 = vshll.u32 %v3373, 16
        %v3400 = vrot.slane %v3398, 1
        %v3401 = vsel %vm1143, %v3396, %v3400
        %v3421 = vunpack.c.l.b16 %v3340
        %v3422 = vunpack.c.l.b16 %v3341
        %v3423 = vunpack.c.l.b16 %v3342
        %v3424 = vunpack.c.l.b16 %v3343
        %v3425 = vunpack.c.l.b16 %v3344
        %v3426 = vunpack.c.l.b16 %v3345
        %v3427 = vunpack.c.l.b16 %v3346
        %v3428 = vunpack.c.l.b16 %v3347
        %v3429 = vunpack.c.l.b16 %v3348
        %v3430 = vunpack.c.l.b16 %v3349
        %v3431 = vunpack.c.l.b16 %v3350
        %v3432 = vunpack.c.l.b16 %v3351
        %v3433 = vunpack.c.l.b16 %v3352
        %v3434 = vunpack.c.l.b16 %v3353
        %v3435 = vunpack.c.l.b16 %v3354
        %v3436 = vunpack.c.l.b16 %v3355
        %v3437 = vpack.c.b16 %v3422, %v3421
        %v3438 = vpack.c.b16 %v3424, %v3423
        %v3439 = vpack.c.b16 %v3426, %v3425
        %v3440 = vpack.c.b16 %v3428, %v3427
        %v3441 = vpack.c.b16 %v3430, %v3429
        %v3442 = vpack.c.b16 %v3432, %v3431
        %v3443 = vpack.c.b16 %v3434, %v3433
        %v3444 = vpack.c.b16 %v3436, %v3435
        %3453 = vmatprep.subr.bf16.mxu0 0
        %3454 = vmatpush1.bf16.msra.mxu0 %v3444
        %3455 = vmatprep.subr.bf16.mxu0 0
        %3456 = vmatpush1.bf16.msra.mxu0 %v3443
        %3457 = vmatprep.subr.bf16.mxu0 0
        %3458 = vmatpush1.bf16.msra.mxu0 %v3442
        %3459 = vmatprep.subr.bf16.mxu0 0
        %3460 = vmatpush1.bf16.msra.mxu0 %v3441
        %3461 = vmatprep.subr.bf16.mxu0 0
        %3462 = vmatpush1.bf16.msra.mxu0 %v3440
        %3463 = vmatprep.subr.bf16.mxu0 0
        %3464 = vmatpush1.bf16.msra.mxu0 %v3439
        %3465 = vmatprep.subr.bf16.mxu0 0
        %3466 = vmatpush1.bf16.msra.mxu0 %v3438
        %3467 = vmatprep.subr.bf16.mxu0 0
        %3468 = vmatpush1.bf16.msra.mxu0 %v3437
        %3469 = vmatprep.subr.bf16.mxu0 0
        %3470 = vmatpush2.bf16.msra.mxu0 0
        %3471 = vmatprep.subr.bf16.mxu0 0
        %3472 = vmatpush2.bf16.msra.mxu0 0
        %3473 = vmatprep.subr.bf16.mxu0 0
        %3474 = vmatpush2.bf16.msra.mxu0 0
        %3475 = vmatprep.subr.bf16.mxu0 0
        %3476 = vmatpush2.bf16.msra.mxu0 0
        %3477 = vmatprep.subr.bf16.mxu0 0
        %3478 = vmatpush2.bf16.msra.mxu0 0
        %3479 = vmatprep.subr.bf16.mxu0 0
        %3480 = vmatpush2.bf16.msra.mxu0 0
        %3481 = vmatprep.subr.bf16.mxu0 0
        %3482 = vmatpush2.bf16.msra.mxu0 0
        %3483 = vmatprep.subr.bf16.mxu0 0
        %3484 = vmatpush2.bf16.msra.mxu0 0
        %3485 = vmatprep.mubr.bf16.mxu0 0
        %3486 = vmatmul.mubr.bf16.gmra.mxu0 %v3385
        %v3487 = vpop.f32.mrf.mxu0
        %v3488 = vadd.f32 0.0, %v3487
        %v3489 = vpop.f32.mrf.mxu0
        %v3490 = vpop.f32.mrf.mxu0
        %v3491 = vadd.f32 0.0, %v3490
        %v3492 = vpop.f32.mrf.mxu0
        %3493 = vmatprep.mubr.bf16.mxu0 0
        %3494 = vmatmul.mubr.bf16.gmra.mxu0 %v3393
        %v3495 = vpop.f32.mrf.mxu0
        %v3496 = vadd.f32 0.0, %v3495
        %v3497 = vpop.f32.mrf.mxu0
        %v3498 = vpop.f32.mrf.mxu0
        %v3499 = vadd.f32 0.0, %v3498
        %v3500 = vpop.f32.mrf.mxu0
        %3501 = vmatprep.mubr.bf16.mxu0 0
        %3502 = vmatmul.mubr.bf16.gmra.mxu0 %v3401
        %v3503 = vpop.f32.mrf.mxu0
        %v3504 = vadd.f32 0.0, %v3503
        %v3505 = vpop.f32.mrf.mxu0
        %v3506 = vpop.f32.mrf.mxu0
        %v3507 = vadd.f32 0.0, %v3506
        %v3508 = vpop.f32.mrf.mxu0
        %3509 = vdwg.mxu0
        %v3529 = vunpack.c.l.b16 %v3322
        %v3530 = vunpack.c.l.b16 %v3323
        %v3531 = vunpack.c.l.b16 %v3324
        %v3532 = vunpack.c.l.b16 %v3325
        %v3533 = vunpack.c.l.b16 %v3326
        %v3534 = vunpack.c.l.b16 %v3327
        %v3535 = vunpack.c.l.b16 %v3328
        %v3536 = vunpack.c.l.b16 %v3329
        %v3537 = vunpack.c.l.b16 %v3330
        %v3538 = vunpack.c.l.b16 %v3331
        %v3539 = vunpack.c.l.b16 %v3332
        %v3540 = vunpack.c.l.b16 %v3333
        %v3541 = vunpack.c.l.b16 %v3334
        %v3542 = vunpack.c.l.b16 %v3335
        %v3543 = vunpack.c.l.b16 %v3336
        %v3544 = vunpack.c.l.b16 %v3337
        %v3545 = vpack.c.b16 %v3530, %v3529
        %v3546 = vpack.c.b16 %v3532, %v3531
        %v3547 = vpack.c.b16 %v3534, %v3533
        %v3548 = vpack.c.b16 %v3536, %v3535
        %v3549 = vpack.c.b16 %v3538, %v3537
        %v3550 = vpack.c.b16 %v3540, %v3539
        %v3551 = vpack.c.b16 %v3542, %v3541
        %v3552 = vpack.c.b16 %v3544, %v3543
        %3561 = vmatprep.subr.bf16.mxu0 0
        %3562 = vmatpush1.bf16.msra.mxu0 %v3552
        %3563 = vmatprep.subr.bf16.mxu0 0
        %3564 = vmatpush1.bf16.msra.mxu0 %v3551
        %3565 = vmatprep.subr.bf16.mxu0 0
        %3566 = vmatpush1.bf16.msra.mxu0 %v3550
        %3567 = vmatprep.subr.bf16.mxu0 0
        %3568 = vmatpush1.bf16.msra.mxu0 %v3549
        %3569 = vmatprep.subr.bf16.mxu0 0
        %3570 = vmatpush1.bf16.msra.mxu0 %v3548
        %3571 = vmatprep.subr.bf16.mxu0 0
        %3572 = vmatpush1.bf16.msra.mxu0 %v3547
        %3573 = vmatprep.subr.bf16.mxu0 0
        %3574 = vmatpush1.bf16.msra.mxu0 %v3546
        %3575 = vmatprep.subr.bf16.mxu0 0
        %3576 = vmatpush1.bf16.msra.mxu0 %v3545
        %3577 = vmatprep.subr.bf16.mxu0 0
        %3578 = vmatpush2.bf16.msra.mxu0 0
        %3579 = vmatprep.subr.bf16.mxu0 0
        %3580 = vmatpush2.bf16.msra.mxu0 0
        %3581 = vmatprep.subr.bf16.mxu0 0
        %3582 = vmatpush2.bf16.msra.mxu0 0
        %3583 = vmatprep.subr.bf16.mxu0 0
        %3584 = vmatpush2.bf16.msra.mxu0 0
        %3585 = vmatprep.subr.bf16.mxu0 0
        %3586 = vmatpush2.bf16.msra.mxu0 0
        %3587 = vmatprep.subr.bf16.mxu0 0
        %3588 = vmatpush2.bf16.msra.mxu0 0
        %3589 = vmatprep.subr.bf16.mxu0 0
        %3590 = vmatpush2.bf16.msra.mxu0 0
        %3591 = vmatprep.subr.bf16.mxu0 0
        %3592 = vmatpush2.bf16.msra.mxu0 0
        %3593 = vmatprep.mubr.bf16.mxu0 0
        %3594 = vmatmul.mubr.bf16.gmra.mxu0 %v3370
        %v3595 = vpop.f32.mrf.mxu0
        %v3596 = vadd.f32 %v3488, %v3595
        %v3597 = vpop.f32.mrf.mxu0
        %v3598 = vpop.f32.mrf.mxu0
        %v3599 = vadd.f32 %v3491, %v3598
        %v3600 = vpop.f32.mrf.mxu0
        %3601 = vmatprep.mubr.bf16.mxu0 0
        %3602 = vmatmul.mubr.bf16.gmra.mxu0 %v3371
        %v3603 = vpop.f32.mrf.mxu0
        %v3604 = vadd.f32 %v3496, %v3603
        %v3605 = vpop.f32.mrf.mxu0
        %v3606 = vpop.f32.mrf.mxu0
        %v3607 = vadd.f32 %v3499, %v3606
        %v3608 = vpop.f32.mrf.mxu0
        %3609 = vmatprep.mubr.bf16.mxu0 0
        %3610 = vmatmul.mubr.bf16.gmra.mxu0 %v3372
        %v3611 = vpop.f32.mrf.mxu0
        %v3612 = vadd.f32 %v3504, %v3611
        %v3613 = vpop.f32.mrf.mxu0
        %v3614 = vpop.f32.mrf.mxu0
        %v3615 = vadd.f32 %v3507, %v3614
        %v3616 = vpop.f32.mrf.mxu0
        %3617 = vdwg.mxu0
        %v3618 = vld [vmem:[#allocation5] sm:$0xe]
        %s3619 = scalar_lea.vmem %s5, 128
        %v3620 = vld [vmem:[%s3619] sm:$0xf]
        %v3621 = vld [vmem:[%s3619 + $0x4] sm:$0xf]
        %v3622 = vld [vmem:[%s3619 + $0x8] sm:$0xf]
        %v3623 = vld [vmem:[%s3619 + $0xc] sm:$0xf]
        %v3624 = vld [vmem:[%s3619 + $0x10] sm:$0xf]
        %v3625 = vld [vmem:[%s3619 + $0x14] sm:$0xf]
        %v3626 = vld [vmem:[%s3619 + $0x18] sm:$0xf]
        %v3627 = vld [vmem:[%s3619 + $0x1c] sm:$0xf]
        %v3628 = vld [vmem:[%s3619 + $0x20] sm:$0xf]
        %v3629 = vld [vmem:[%s3619 + $0x24] sm:$0xf]
        %v3630 = vld [vmem:[%s3619 + $0x28] sm:$0xf]
        %v3631 = vld [vmem:[%s3619 + $0x2c] sm:$0xf]
        %v3632 = vld [vmem:[%s3619 + $0x30] sm:$0xf]
        %v3633 = vld [vmem:[%s3619 + $0x34] sm:$0xf]
        %v3634 = vld [vmem:[%s3619 + $0x38] sm:$0xf]
        %v3635 = vld [vmem:[%s3619 + $0x3c] sm:$0xf]
        %v3637 = vunpack.c.l.b16 %v3618
        %v3638 = vpack.c.b16 %v3364, %v3637
        %v3639 = vrot.slane %v3638, 1
        %v3640 = vrot.slane %v3371, 1
        %v3641 = vsel %vm1533, %v3639, %v3640
        %v3642 = vrot.slane %v3372, 1
        %v3643 = vsel %vm1533, %v3640, %v3642
        %v3644 = vrot.slane %v3373, 1
        %v3645 = vsel %vm1533, %v3642, %v3644
        %v3665 = vunpack.c.l.b16 %v3620
        %v3666 = vunpack.c.l.b16 %v3621
        %v3667 = vunpack.c.l.b16 %v3622
        %v3668 = vunpack.c.l.b16 %v3623
        %v3669 = vunpack.c.l.b16 %v3624
        %v3670 = vunpack.c.l.b16 %v3625
        %v3671 = vunpack.c.l.b16 %v3626
        %v3672 = vunpack.c.l.b16 %v3627
        %v3673 = vunpack.c.l.b16 %v3628
        %v3674 = vunpack.c.l.b16 %v3629
        %v3675 = vunpack.c.l.b16 %v3630
        %v3676 = vunpack.c.l.b16 %v3631
        %v3677 = vunpack.c.l.b16 %v3632
        %v3678 = vunpack.c.l.b16 %v3633
        %v3679 = vunpack.c.l.b16 %v3634
        %v3680 = vunpack.c.l.b16 %v3635
        %v3681 = vpack.c.b16 %v3666, %v3665
        %v3682 = vpack.c.b16 %v3668, %v3667
        %v3683 = vpack.c.b16 %v3670, %v3669
        %v3684 = vpack.c.b16 %v3672, %v3671
        %v3685 = vpack.c.b16 %v3674, %v3673
        %v3686 = vpack.c.b16 %v3676, %v3675
        %v3687 = vpack.c.b16 %v3678, %v3677
        %v3688 = vpack.c.b16 %v3680, %v3679
        %3697 = vmatprep.subr.bf16.mxu0 0
        %3698 = vmatpush1.bf16.msra.mxu0 %v3688
        %3699 = vmatprep.subr.bf16.mxu0 0
        %3700 = vmatpush1.bf16.msra.mxu0 %v3687
        %3701 = vmatprep.subr.bf16.mxu0 0
        %3702 = vmatpush1.bf16.msra.mxu0 %v3686
        %3703 = vmatprep.subr.bf16.mxu0 0
        %3704 = vmatpush1.bf16.msra.mxu0 %v3685
        %3705 = vmatprep.subr.bf16.mxu0 0
        %3706 = vmatpush1.bf16.msra.mxu0 %v3684
        %3707 = vmatprep.subr.bf16.mxu0 0
        %3708 = vmatpush1.bf16.msra.mxu0 %v3683
        %3709 = vmatprep.subr.bf16.mxu0 0
        %3710 = vmatpush1.bf16.msra.mxu0 %v3682
        %3711 = vmatprep.subr.bf16.mxu0 0
        %3712 = vmatpush1.bf16.msra.mxu0 %v3681
        %3713 = vmatprep.subr.bf16.mxu0 0
        %3714 = vmatpush2.bf16.msra.mxu0 0
        %3715 = vmatprep.subr.bf16.mxu0 0
        %3716 = vmatpush2.bf16.msra.mxu0 0
        %3717 = vmatprep.subr.bf16.mxu0 0
        %3718 = vmatpush2.bf16.msra.mxu0 0
        %3719 = vmatprep.subr.bf16.mxu0 0
        %3720 = vmatpush2.bf16.msra.mxu0 0
        %3721 = vmatprep.subr.bf16.mxu0 0
        %3722 = vmatpush2.bf16.msra.mxu0 0
        %3723 = vmatprep.subr.bf16.mxu0 0
        %3724 = vmatpush2.bf16.msra.mxu0 0
        %3725 = vmatprep.subr.bf16.mxu0 0
        %3726 = vmatpush2.bf16.msra.mxu0 0
        %3727 = vmatprep.subr.bf16.mxu0 0
        %3728 = vmatpush2.bf16.msra.mxu0 0
        %3729 = vmatprep.mubr.bf16.mxu0 0
        %3730 = vmatmul.mubr.bf16.gmra.mxu0 %v3641
        %v3731 = vpop.f32.mrf.mxu0
        %v3732 = vadd.f32 0.0, %v3731
        %v3733 = vpop.f32.mrf.mxu0
        %v3734 = vpop.f32.mrf.mxu0
        %v3735 = vadd.f32 0.0, %v3734
        %v3736 = vpop.f32.mrf.mxu0
        %3737 = vmatprep.mubr.bf16.mxu0 0
        %3738 = vmatmul.mubr.bf16.gmra.mxu0 %v3643
        %v3739 = vpop.f32.mrf.mxu0
        %v3740 = vadd.f32 0.0, %v3739
        %v3741 = vpop.f32.mrf.mxu0
        %v3742 = vpop.f32.mrf.mxu0
        %v3743 = vadd.f32 0.0, %v3742
        %v3744 = vpop.f32.mrf.mxu0
        %3745 = vmatprep.mubr.bf16.mxu0 0
        %3746 = vmatmul.mubr.bf16.gmra.mxu0 %v3645
        %v3747 = vpop.f32.mrf.mxu0
        %v3748 = vadd.f32 0.0, %v3747
        %v3749 = vpop.f32.mrf.mxu0
        %v3750 = vpop.f32.mrf.mxu0
        %v3751 = vadd.f32 0.0, %v3750
        %v3752 = vpop.f32.mrf.mxu0
        %3753 = vdwg.mxu0
        %v3754 = vadd.f32 %v3596, %v3732
        %v3755 = vadd.f32 %v3599, %v3735
        %v3756 = vadd.f32 %v3604, %v3740
        %v3757 = vadd.f32 %v3607, %v3743
        %v3758 = vadd.f32 %v3612, %v3748
        %v3759 = vadd.f32 %v3615, %v3751
        %v3760 = vld [vmem:[#allocation5 + $0x18] sm:$0xf]
        %s3761 = scalar_lea.vmem %s5, 192
        %v3762 = vld [vmem:[%s3761] sm:$0xf]
        %v3763 = vld [vmem:[%s3761 + $0x4] sm:$0xf]
        %v3764 = vld [vmem:[%s3761 + $0x8] sm:$0xf]
        %v3765 = vld [vmem:[%s3761 + $0xc] sm:$0xf]
        %v3766 = vld [vmem:[%s3761 + $0x10] sm:$0xf]
        %v3767 = vld [vmem:[%s3761 + $0x14] sm:$0xf]
        %v3768 = vld [vmem:[%s3761 + $0x18] sm:$0xf]
        %v3769 = vld [vmem:[%s3761 + $0x1c] sm:$0xf]
        %v3770 = vld [vmem:[%s3761 + $0x20] sm:$0xf]
        %v3771 = vld [vmem:[%s3761 + $0x24] sm:$0xf]
        %v3772 = vld [vmem:[%s3761 + $0x28] sm:$0xf]
        %v3773 = vld [vmem:[%s3761 + $0x2c] sm:$0xf]
        %v3774 = vld [vmem:[%s3761 + $0x30] sm:$0xf]
        %v3775 = vld [vmem:[%s3761 + $0x34] sm:$0xf]
        %v3776 = vld [vmem:[%s3761 + $0x38] sm:$0xf]
        %v3777 = vld [vmem:[%s3761 + $0x3c] sm:$0xf]
        %v3779 = vunpack.c.l.b16 %v3760
        %v3780 = vpack.c.b16 %v3365, %v3364
        %v3781 = vpack.c.b16 %v3367, %v3366
        %v3782 = vpack.c.b16 %v3779, %v3368
        %v3802 = vunpack.c.l.b16 %v3762
        %v3803 = vunpack.c.l.b16 %v3763
        %v3804 = vunpack.c.l.b16 %v3764
        %v3805 = vunpack.c.l.b16 %v3765
        %v3806 = vunpack.c.l.b16 %v3766
        %v3807 = vunpack.c.l.b16 %v3767
        %v3808 = vunpack.c.l.b16 %v3768
        %v3809 = vunpack.c.l.b16 %v3769
        %v3810 = vunpack.c.l.b16 %v3770
        %v3811 = vunpack.c.l.b16 %v3771
        %v3812 = vunpack.c.l.b16 %v3772
        %v3813 = vunpack.c.l.b16 %v3773
        %v3814 = vunpack.c.l.b16 %v3774
        %v3815 = vunpack.c.l.b16 %v3775
        %v3816 = vunpack.c.l.b16 %v3776
        %v3817 = vunpack.c.l.b16 %v3777
        %v3818 = vpack.c.b16 %v3803, %v3802
        %v3819 = vpack.c.b16 %v3805, %v3804
        %v3820 = vpack.c.b16 %v3807, %v3806
        %v3821 = vpack.c.b16 %v3809, %v3808
        %v3822 = vpack.c.b16 %v3811, %v3810
        %v3823 = vpack.c.b16 %v3813, %v3812
        %v3824 = vpack.c.b16 %v3815, %v3814
        %v3825 = vpack.c.b16 %v3817, %v3816
        %3834 = vmatprep.subr.bf16.mxu0 0
        %3835 = vmatpush1.bf16.msra.mxu0 %v3825
        %3836 = vmatprep.subr.bf16.mxu0 0
        %3837 = vmatpush1.bf16.msra.mxu0 %v3824
        %3838 = vmatprep.subr.bf16.mxu0 0
        %3839 = vmatpush1.bf16.msra.mxu0 %v3823
        %3840 = vmatprep.subr.bf16.mxu0 0
        %3841 = vmatpush1.bf16.msra.mxu0 %v3822
        %3842 = vmatprep.subr.bf16.mxu0 0
        %3843 = vmatpush1.bf16.msra.mxu0 %v3821
        %3844 = vmatprep.subr.bf16.mxu0 0
        %3845 = vmatpush1.bf16.msra.mxu0 %v3820
        %3846 = vmatprep.subr.bf16.mxu0 0
        %3847 = vmatpush1.bf16.msra.mxu0 %v3819
        %3848 = vmatprep.subr.bf16.mxu0 0
        %3849 = vmatpush1.bf16.msra.mxu0 %v3818
        %3850 = vmatprep.subr.bf16.mxu0 0
        %3851 = vmatpush2.bf16.msra.mxu0 0
        %3852 = vmatprep.subr.bf16.mxu0 0
        %3853 = vmatpush2.bf16.msra.mxu0 0
        %3854 = vmatprep.subr.bf16.mxu0 0
        %3855 = vmatpush2.bf16.msra.mxu0 0
        %3856 = vmatprep.subr.bf16.mxu0 0
        %3857 = vmatpush2.bf16.msra.mxu0 0
        %3858 = vmatprep.subr.bf16.mxu0 0
        %3859 = vmatpush2.bf16.msra.mxu0 0
        %3860 = vmatprep.subr.bf16.mxu0 0
        %3861 = vmatpush2.bf16.msra.mxu0 0
        %3862 = vmatprep.subr.bf16.mxu0 0
        %3863 = vmatpush2.bf16.msra.mxu0 0
        %3864 = vmatprep.subr.bf16.mxu0 0
        %3865 = vmatpush2.bf16.msra.mxu0 0
        %3866 = vmatprep.mubr.bf16.mxu0 0
        %3867 = vmatmul.mubr.bf16.gmra.mxu0 %v3780
        %v3868 = vpop.f32.mrf.mxu0
        %v3869 = vadd.f32 0.0, %v3868
        %v3870 = vpop.f32.mrf.mxu0
        %v3871 = vpop.f32.mrf.mxu0
        %v3872 = vadd.f32 0.0, %v3871
        %v3873 = vpop.f32.mrf.mxu0
        %3874 = vmatprep.mubr.bf16.mxu0 0
        %3875 = vmatmul.mubr.bf16.gmra.mxu0 %v3781
        %v3876 = vpop.f32.mrf.mxu0
        %v3877 = vadd.f32 0.0, %v3876
        %v3878 = vpop.f32.mrf.mxu0
        %v3879 = vpop.f32.mrf.mxu0
        %v3880 = vadd.f32 0.0, %v3879
        %v3881 = vpop.f32.mrf.mxu0
        %3882 = vmatprep.mubr.bf16.mxu0 0
        %3883 = vmatmul.mubr.bf16.gmra.mxu0 %v3782
        %v3884 = vpop.f32.mrf.mxu0
        %v3885 = vadd.f32 0.0, %v3884
        %v3886 = vpop.f32.mrf.mxu0
        %v3887 = vpop.f32.mrf.mxu0
        %v3888 = vadd.f32 0.0, %v3887
        %v3889 = vpop.f32.mrf.mxu0
        %3890 = vdwg.mxu0
        %v3891 = vadd.f32 %v3754, %v3869
        %v3892 = vadd.f32 %v3755, %v3872
        %v3893 = vadd.f32 %v3756, %v3877
        %v3894 = vadd.f32 %v3757, %v3880
        %v3895 = vadd.f32 %v3758, %v3885
        %v3896 = vadd.f32 %v3759, %v3888
        %v3897 = vld [vmem:[#allocation5 + $0x4] sm:$0xf]
        %v3898 = vld [vmem:[#allocation5 + $0x8] sm:$0xf]
        %v3899 = vld [vmem:[#allocation5 + $0xc] sm:$0xf]
        %v3900 = vld [vmem:[#allocation5 + $0x10] sm:$0xf]
        %v3901 = vld [vmem:[#allocation5 + $0x14] sm:$0xf]
        %v3902 = vld [vmem:[#allocation5 + $0x18] sm:$0xf]
        %v3903 = vld [vmem:[#allocation5 + $0x1c] sm:$0x1]
        %s3904 = scalar_lea.vmem %s5, 256
        %v3905 = vld [vmem:[%s3904] sm:$0xf]
        %v3906 = vld [vmem:[%s3904 + $0x4] sm:$0xf]
        %v3907 = vld [vmem:[%s3904 + $0x8] sm:$0xf]
        %v3908 = vld [vmem:[%s3904 + $0xc] sm:$0xf]
        %v3909 = vld [vmem:[%s3904 + $0x10] sm:$0xf]
        %v3910 = vld [vmem:[%s3904 + $0x14] sm:$0xf]
        %v3911 = vld [vmem:[%s3904 + $0x18] sm:$0xf]
        %v3912 = vld [vmem:[%s3904 + $0x1c] sm:$0xf]
        %v3913 = vld [vmem:[%s3904 + $0x20] sm:$0xf]
        %v3914 = vld [vmem:[%s3904 + $0x24] sm:$0xf]
        %v3915 = vld [vmem:[%s3904 + $0x28] sm:$0xf]
        %v3916 = vld [vmem:[%s3904 + $0x2c] sm:$0xf]
        %v3917 = vld [vmem:[%s3904 + $0x30] sm:$0xf]
        %v3918 = vld [vmem:[%s3904 + $0x34] sm:$0xf]
        %v3919 = vld [vmem:[%s3904 + $0x38] sm:$0xf]
        %v3920 = vld [vmem:[%s3904 + $0x3c] sm:$0xf]
        %v3928 = vunpack.c.l.b16 %v3897
        %v3929 = vunpack.c.l.b16 %v3898
        %v3930 = vunpack.c.l.b16 %v3899
        %v3931 = vunpack.c.l.b16 %v3900
        %v3932 = vunpack.c.l.b16 %v3901
        %v3933 = vunpack.c.l.b16 %v3902
        %v3934 = vunpack.c.l.b16 %v3903
        %v3935 = vpack.c.b16 %v3929, %v3928
        %v3936 = vpack.c.b16 %v3931, %v3930
        %v3937 = vpack.c.b16 %v3933, %v3932
        %v3938 = vpack.c.b16 %v3934, %v3934
        %v3940 = vshrl.u32 %v3935, 16
        %v3942 = vshll.u32 %v3935, 16
        %v3944 = vrot.slane %v3942, 1
        %v3945 = vor.u32 %v3940, %v3944
        %v3947 = vshll.u32 %v3936, 16
        %v3949 = vrot.slane %v3947, 1
        %v3950 = vsel %vm1143, %v3945, %v3949
        %v3951 = vshrl.u32 %v3936, 16
        %v3953 = vor.u32 %v3951, %v3949
        %v3955 = vshll.u32 %v3937, 16
        %v3957 = vrot.slane %v3955, 1
        %v3958 = vsel %vm1143, %v3953, %v3957
        %v3959 = vshrl.u32 %v3937, 16
        %v3961 = vor.u32 %v3959, %v3957
        %v3963 = vshll.u32 %v3938, 16
        %v3965 = vrot.slane %v3963, 1
        %v3966 = vsel %vm1143, %v3961, %v3965
        %v3986 = vunpack.c.l.b16 %v3905
        %v3987 = vunpack.c.l.b16 %v3906
        %v3988 = vunpack.c.l.b16 %v3907
        %v3989 = vunpack.c.l.b16 %v3908
        %v3990 = vunpack.c.l.b16 %v3909
        %v3991 = vunpack.c.l.b16 %v3910
        %v3992 = vunpack.c.l.b16 %v3911
        %v3993 = vunpack.c.l.b16 %v3912
        %v3994 = vunpack.c.l.b16 %v3913
        %v3995 = vunpack.c.l.b16 %v3914
        %v3996 = vunpack.c.l.b16 %v3915
        %v3997 = vunpack.c.l.b16 %v3916
        %v3998 = vunpack.c.l.b16 %v3917
        %v3999 = vunpack.c.l.b16 %v3918
        %v4000 = vunpack.c.l.b16 %v3919
        %v4001 = vunpack.c.l.b16 %v3920
        %v4002 = vpack.c.b16 %v3987, %v3986
        %v4003 = vpack.c.b16 %v3989, %v3988
        %v4004 = vpack.c.b16 %v3991, %v3990
        %v4005 = vpack.c.b16 %v3993, %v3992
        %v4006 = vpack.c.b16 %v3995, %v3994
        %v4007 = vpack.c.b16 %v3997, %v3996
        %v4008 = vpack.c.b16 %v3999, %v3998
        %v4009 = vpack.c.b16 %v4001, %v4000
        %4018 = vmatprep.subr.bf16.mxu0 0
        %4019 = vmatpush1.bf16.msra.mxu0 %v4009
        %4020 = vmatprep.subr.bf16.mxu0 0
        %4021 = vmatpush1.bf16.msra.mxu0 %v4008
        %4022 = vmatprep.subr.bf16.mxu0 0
        %4023 = vmatpush1.bf16.msra.mxu0 %v4007
        %4024 = vmatprep.subr.bf16.mxu0 0
        %4025 = vmatpush1.bf16.msra.mxu0 %v4006
        %4026 = vmatprep.subr.bf16.mxu0 0
        %4027 = vmatpush1.bf16.msra.mxu0 %v4005
        %4028 = vmatprep.subr.bf16.mxu0 0
        %4029 = vmatpush1.bf16.msra.mxu0 %v4004
        %4030 = vmatprep.subr.bf16.mxu0 0
        %4031 = vmatpush1.bf16.msra.mxu0 %v4003
        %4032 = vmatprep.subr.bf16.mxu0 0
        %4033 = vmatpush1.bf16.msra.mxu0 %v4002
        %4034 = vmatprep.subr.bf16.mxu0 0
        %4035 = vmatpush2.bf16.msra.mxu0 0
        %4036 = vmatprep.subr.bf16.mxu0 0
        %4037 = vmatpush2.bf16.msra.mxu0 0
        %4038 = vmatprep.subr.bf16.mxu0 0
        %4039 = vmatpush2.bf16.msra.mxu0 0
        %4040 = vmatprep.subr.bf16.mxu0 0
        %4041 = vmatpush2.bf16.msra.mxu0 0
        %4042 = vmatprep.subr.bf16.mxu0 0
        %4043 = vmatpush2.bf16.msra.mxu0 0
        %4044 = vmatprep.subr.bf16.mxu0 0
        %4045 = vmatpush2.bf16.msra.mxu0 0
        %4046 = vmatprep.subr.bf16.mxu0 0
        %4047 = vmatpush2.bf16.msra.mxu0 0
        %4048 = vmatprep.subr.bf16.mxu0 0
        %4049 = vmatpush2.bf16.msra.mxu0 0
        %4050 = vmatprep.mubr.bf16.mxu0 0
        %4051 = vmatmul.mubr.bf16.gmra.mxu0 %v3950
        %v4052 = vpop.f32.mrf.mxu0
        %v4053 = vadd.f32 0.0, %v4052
        %v4054 = vpop.f32.mrf.mxu0
        %v4055 = vpop.f32.mrf.mxu0
        %v4056 = vadd.f32 0.0, %v4055
        %v4057 = vpop.f32.mrf.mxu0
        %4058 = vmatprep.mubr.bf16.mxu0 0
        %4059 = vmatmul.mubr.bf16.gmra.mxu0 %v3958
        %v4060 = vpop.f32.mrf.mxu0
        %v4061 = vadd.f32 0.0, %v4060
        %v4062 = vpop.f32.mrf.mxu0
        %v4063 = vpop.f32.mrf.mxu0
        %v4064 = vadd.f32 0.0, %v4063
        %v4065 = vpop.f32.mrf.mxu0
        %4066 = vmatprep.mubr.bf16.mxu0 0
        %4067 = vmatmul.mubr.bf16.gmra.mxu0 %v3966
        %v4068 = vpop.f32.mrf.mxu0
        %v4069 = vadd.f32 0.0, %v4068
        %v4070 = vpop.f32.mrf.mxu0
        %v4071 = vpop.f32.mrf.mxu0
        %v4072 = vadd.f32 0.0, %v4071
        %v4073 = vpop.f32.mrf.mxu0
        %4074 = vdwg.mxu0
        %v4075 = vadd.f32 %v3891, %v4053
        %v4076 = vadd.f32 %v3892, %v4056
        %v4077 = vadd.f32 %v3893, %v4061
        %v4078 = vadd.f32 %v3894, %v4064
        %v4079 = vadd.f32 %v3895, %v4069
        %v4080 = vadd.f32 %v3896, %v4072
        %v4081 = vld [vmem:[#allocation5 + $0x4] sm:$0xe]
        %s4082 = scalar_lea.vmem %s5, 320
        %v4083 = vld [vmem:[%s4082] sm:$0xf]
        %v4084 = vld [vmem:[%s4082 + $0x4] sm:$0xf]
        %v4085 = vld [vmem:[%s4082 + $0x8] sm:$0xf]
        %v4086 = vld [vmem:[%s4082 + $0xc] sm:$0xf]
        %v4087 = vld [vmem:[%s4082 + $0x10] sm:$0xf]
        %v4088 = vld [vmem:[%s4082 + $0x14] sm:$0xf]
        %v4089 = vld [vmem:[%s4082 + $0x18] sm:$0xf]
        %v4090 = vld [vmem:[%s4082 + $0x1c] sm:$0xf]
        %v4091 = vld [vmem:[%s4082 + $0x20] sm:$0xf]
        %v4092 = vld [vmem:[%s4082 + $0x24] sm:$0xf]
        %v4093 = vld [vmem:[%s4082 + $0x28] sm:$0xf]
        %v4094 = vld [vmem:[%s4082 + $0x2c] sm:$0xf]
        %v4095 = vld [vmem:[%s4082 + $0x30] sm:$0xf]
        %v4096 = vld [vmem:[%s4082 + $0x34] sm:$0xf]
        %v4097 = vld [vmem:[%s4082 + $0x38] sm:$0xf]
        %v4098 = vld [vmem:[%s4082 + $0x3c] sm:$0xf]
        %v4100 = vunpack.c.l.b16 %v4081
        %v4101 = vpack.c.b16 %v3929, %v4100
        %v4102 = vrot.slane %v4101, 1
        %v4103 = vrot.slane %v3936, 1
        %v4104 = vsel %vm1533, %v4102, %v4103
        %v4105 = vrot.slane %v3937, 1
        %v4106 = vsel %vm1533, %v4103, %v4105
        %v4107 = vrot.slane %v3938, 1
        %v4108 = vsel %vm1533, %v4105, %v4107
        %v4128 = vunpack.c.l.b16 %v4083
        %v4129 = vunpack.c.l.b16 %v4084
        %v4130 = vunpack.c.l.b16 %v4085
        %v4131 = vunpack.c.l.b16 %v4086
        %v4132 = vunpack.c.l.b16 %v4087
        %v4133 = vunpack.c.l.b16 %v4088
        %v4134 = vunpack.c.l.b16 %v4089
        %v4135 = vunpack.c.l.b16 %v4090
        %v4136 = vunpack.c.l.b16 %v4091
        %v4137 = vunpack.c.l.b16 %v4092
        %v4138 = vunpack.c.l.b16 %v4093
        %v4139 = vunpack.c.l.b16 %v4094
        %v4140 = vunpack.c.l.b16 %v4095
        %v4141 = vunpack.c.l.b16 %v4096
        %v4142 = vunpack.c.l.b16 %v4097
        %v4143 = vunpack.c.l.b16 %v4098
        %v4144 = vpack.c.b16 %v4129, %v4128
        %v4145 = vpack.c.b16 %v4131, %v4130
        %v4146 = vpack.c.b16 %v4133, %v4132
        %v4147 = vpack.c.b16 %v4135, %v4134
        %v4148 = vpack.c.b16 %v4137, %v4136
        %v4149 = vpack.c.b16 %v4139, %v4138
        %v4150 = vpack.c.b16 %v4141, %v4140
        %v4151 = vpack.c.b16 %v4143, %v4142
        %4160 = vmatprep.subr.bf16.mxu0 0
        %4161 = vmatpush1.bf16.msra.mxu0 %v4151
        %4162 = vmatprep.subr.bf16.mxu0 0
        %4163 = vmatpush1.bf16.msra.mxu0 %v4150
        %4164 = vmatprep.subr.bf16.mxu0 0
        %4165 = vmatpush1.bf16.msra.mxu0 %v4149
        %4166 = vmatprep.subr.bf16.mxu0 0
        %4167 = vmatpush1.bf16.msra.mxu0 %v4148
        %4168 = vmatprep.subr.bf16.mxu0 0
        %4169 = vmatpush1.bf16.msra.mxu0 %v4147
        %4170 = vmatprep.subr.bf16.mxu0 0
        %4171 = vmatpush1.bf16.msra.mxu0 %v4146
        %4172 = vmatprep.subr.bf16.mxu0 0
        %4173 = vmatpush1.bf16.msra.mxu0 %v4145
        %4174 = vmatprep.subr.bf16.mxu0 0
        %4175 = vmatpush1.bf16.msra.mxu0 %v4144
        %4176 = vmatprep.subr.bf16.mxu0 0
        %4177 = vmatpush2.bf16.msra.mxu0 0
        %4178 = vmatprep.subr.bf16.mxu0 0
        %4179 = vmatpush2.bf16.msra.mxu0 0
        %4180 = vmatprep.subr.bf16.mxu0 0
        %4181 = vmatpush2.bf16.msra.mxu0 0
        %4182 = vmatprep.subr.bf16.mxu0 0
        %4183 = vmatpush2.bf16.msra.mxu0 0
        %4184 = vmatprep.subr.bf16.mxu0 0
        %4185 = vmatpush2.bf16.msra.mxu0 0
        %4186 = vmatprep.subr.bf16.mxu0 0
        %4187 = vmatpush2.bf16.msra.mxu0 0
        %4188 = vmatprep.subr.bf16.mxu0 0
        %4189 = vmatpush2.bf16.msra.mxu0 0
        %4190 = vmatprep.subr.bf16.mxu0 0
        %4191 = vmatpush2.bf16.msra.mxu0 0
        %4192 = vmatprep.mubr.bf16.mxu0 0
        %4193 = vmatmul.mubr.bf16.gmra.mxu0 %v4104
        %v4194 = vpop.f32.mrf.mxu0
        %v4195 = vadd.f32 0.0, %v4194
        %v4196 = vpop.f32.mrf.mxu0
        %v4197 = vpop.f32.mrf.mxu0
        %v4198 = vadd.f32 0.0, %v4197
        %v4199 = vpop.f32.mrf.mxu0
        %4200 = vmatprep.mubr.bf16.mxu0 0
        %4201 = vmatmul.mubr.bf16.gmra.mxu0 %v4106
        %v4202 = vpop.f32.mrf.mxu0
        %v4203 = vadd.f32 0.0, %v4202
        %v4204 = vpop.f32.mrf.mxu0
        %v4205 = vpop.f32.mrf.mxu0
        %v4206 = vadd.f32 0.0, %v4205
        %v4207 = vpop.f32.mrf.mxu0
        %4208 = vmatprep.mubr.bf16.mxu0 0
        %4209 = vmatmul.mubr.bf16.gmra.mxu0 %v4108
        %v4210 = vpop.f32.mrf.mxu0
        %v4211 = vadd.f32 0.0, %v4210
        %v4212 = vpop.f32.mrf.mxu0
        %v4213 = vpop.f32.mrf.mxu0
        %v4214 = vadd.f32 0.0, %v4213
        %v4215 = vpop.f32.mrf.mxu0
        %4216 = vdwg.mxu0
        %v4217 = vadd.f32 %v4075, %v4195
        %v4218 = vadd.f32 %v4076, %v4198
        %v4219 = vadd.f32 %v4077, %v4203
        %v4220 = vadd.f32 %v4078, %v4206
        %v4221 = vadd.f32 %v4079, %v4211
        %v4222 = vadd.f32 %v4080, %v4214
        %v4223 = vld [vmem:[#allocation5 + $0x1c] sm:$0xf]
        %s4224 = scalar_lea.vmem %s5, 384
        %v4225 = vld [vmem:[%s4224] sm:$0xf]
        %v4226 = vld [vmem:[%s4224 + $0x4] sm:$0xf]
        %v4227 = vld [vmem:[%s4224 + $0x8] sm:$0xf]
        %v4228 = vld [vmem:[%s4224 + $0xc] sm:$0xf]
        %v4229 = vld [vmem:[%s4224 + $0x10] sm:$0xf]
        %v4230 = vld [vmem:[%s4224 + $0x14] sm:$0xf]
        %v4231 = vld [vmem:[%s4224 + $0x18] sm:$0xf]
        %v4232 = vld [vmem:[%s4224 + $0x1c] sm:$0xf]
        %v4233 = vld [vmem:[%s4224 + $0x20] sm:$0xf]
        %v4234 = vld [vmem:[%s4224 + $0x24] sm:$0xf]
        %v4235 = vld [vmem:[%s4224 + $0x28] sm:$0xf]
        %v4236 = vld [vmem:[%s4224 + $0x2c] sm:$0xf]
        %v4237 = vld [vmem:[%s4224 + $0x30] sm:$0xf]
        %v4238 = vld [vmem:[%s4224 + $0x34] sm:$0xf]
        %v4239 = vld [vmem:[%s4224 + $0x38] sm:$0xf]
        %v4240 = vld [vmem:[%s4224 + $0x3c] sm:$0xf]
        %v4242 = vunpack.c.l.b16 %v4223
        %v4243 = vpack.c.b16 %v3930, %v3929
        %v4244 = vpack.c.b16 %v3932, %v3931
        %v4245 = vpack.c.b16 %v4242, %v3933
        %v4265 = vunpack.c.l.b16 %v4225
        %v4266 = vunpack.c.l.b16 %v4226
        %v4267 = vunpack.c.l.b16 %v4227
        %v4268 = vunpack.c.l.b16 %v4228
        %v4269 = vunpack.c.l.b16 %v4229
        %v4270 = vunpack.c.l.b16 %v4230
        %v4271 = vunpack.c.l.b16 %v4231
        %v4272 = vunpack.c.l.b16 %v4232
        %v4273 = vunpack.c.l.b16 %v4233
        %v4274 = vunpack.c.l.b16 %v4234
        %v4275 = vunpack.c.l.b16 %v4235
        %v4276 = vunpack.c.l.b16 %v4236
        %v4277 = vunpack.c.l.b16 %v4237
        %v4278 = vunpack.c.l.b16 %v4238
        %v4279 = vunpack.c.l.b16 %v4239
        %v4280 = vunpack.c.l.b16 %v4240
        %v4281 = vpack.c.b16 %v4266, %v4265
        %v4282 = vpack.c.b16 %v4268, %v4267
        %v4283 = vpack.c.b16 %v4270, %v4269
        %v4284 = vpack.c.b16 %v4272, %v4271
        %v4285 = vpack.c.b16 %v4274, %v4273
        %v4286 = vpack.c.b16 %v4276, %v4275
        %v4287 = vpack.c.b16 %v4278, %v4277
        %v4288 = vpack.c.b16 %v4280, %v4279
        %4297 = vmatprep.subr.bf16.mxu0 0
        %4298 = vmatpush1.bf16.msra.mxu0 %v4288
        %4299 = vmatprep.subr.bf16.mxu0 0
        %4300 = vmatpush1.bf16.msra.mxu0 %v4287
        %4301 = vmatprep.subr.bf16.mxu0 0
        %4302 = vmatpush1.bf16.msra.mxu0 %v4286
        %4303 = vmatprep.subr.bf16.mxu0 0
        %4304 = vmatpush1.bf16.msra.mxu0 %v4285
        %4305 = vmatprep.subr.bf16.mxu0 0
        %4306 = vmatpush1.bf16.msra.mxu0 %v4284
        %4307 = vmatprep.subr.bf16.mxu0 0
        %4308 = vmatpush1.bf16.msra.mxu0 %v4283
        %4309 = vmatprep.subr.bf16.mxu0 0
        %4310 = vmatpush1.bf16.msra.mxu0 %v4282
        %4311 = vmatprep.subr.bf16.mxu0 0
        %4312 = vmatpush1.bf16.msra.mxu0 %v4281
        %4313 = vmatprep.subr.bf16.mxu0 0
        %4314 = vmatpush2.bf16.msra.mxu0 0
        %4315 = vmatprep.subr.bf16.mxu0 0
        %4316 = vmatpush2.bf16.msra.mxu0 0
        %4317 = vmatprep.subr.bf16.mxu0 0
        %4318 = vmatpush2.bf16.msra.mxu0 0
        %4319 = vmatprep.subr.bf16.mxu0 0
        %4320 = vmatpush2.bf16.msra.mxu0 0
        %4321 = vmatprep.subr.bf16.mxu0 0
        %4322 = vmatpush2.bf16.msra.mxu0 0
        %4323 = vmatprep.subr.bf16.mxu0 0
        %4324 = vmatpush2.bf16.msra.mxu0 0
        %4325 = vmatprep.subr.bf16.mxu0 0
        %4326 = vmatpush2.bf16.msra.mxu0 0
        %4327 = vmatprep.subr.bf16.mxu0 0
        %4328 = vmatpush2.bf16.msra.mxu0 0
        %4329 = vmatprep.mubr.bf16.mxu0 0
        %4330 = vmatmul.mubr.bf16.gmra.mxu0 %v4243
        %v4331 = vpop.f32.mrf.mxu0
        %v4332 = vadd.f32 0.0, %v4331
        %v4333 = vpop.f32.mrf.mxu0
        %v4334 = vpop.f32.mrf.mxu0
        %v4335 = vadd.f32 0.0, %v4334
        %v4336 = vpop.f32.mrf.mxu0
        %4337 = vmatprep.mubr.bf16.mxu0 0
        %4338 = vmatmul.mubr.bf16.gmra.mxu0 %v4244
        %v4339 = vpop.f32.mrf.mxu0
        %v4340 = vadd.f32 0.0, %v4339
        %v4341 = vpop.f32.mrf.mxu0
        %v4342 = vpop.f32.mrf.mxu0
        %v4343 = vadd.f32 0.0, %v4342
        %v4344 = vpop.f32.mrf.mxu0
        %4345 = vmatprep.mubr.bf16.mxu0 0
        %4346 = vmatmul.mubr.bf16.gmra.mxu0 %v4245
        %v4347 = vpop.f32.mrf.mxu0
        %v4348 = vadd.f32 0.0, %v4347
        %v4349 = vpop.f32.mrf.mxu0
        %v4350 = vpop.f32.mrf.mxu0
        %v4351 = vadd.f32 0.0, %v4350
        %v4352 = vpop.f32.mrf.mxu0
        %4353 = vdwg.mxu0
        %v4354 = vadd.f32 %v4217, %v4332
        %v4355 = vadd.f32 %v4218, %v4335
        %v4356 = vadd.f32 %v4219, %v4340
        %v4357 = vadd.f32 %v4220, %v4343
        %v4358 = vadd.f32 %v4221, %v4348
        %v4359 = vadd.f32 %v4222, %v4351
        %v4360 = vld [vmem:[#allocation5 + $0x8] sm:$0xf]
        %v4361 = vld [vmem:[#allocation5 + $0xc] sm:$0xf]
        %v4362 = vld [vmem:[#allocation5 + $0x10] sm:$0xf]
        %v4363 = vld [vmem:[#allocation5 + $0x14] sm:$0xf]
        %v4364 = vld [vmem:[#allocation5 + $0x18] sm:$0xf]
        %v4365 = vld [vmem:[#allocation5 + $0x1c] sm:$0xf]
        %v4366 = vld [vmem:[#allocation5 + $0x20] sm:$0x1]
        %s4367 = scalar_lea.vmem %s5, 448
        %v4368 = vld [vmem:[%s4367] sm:$0xf]
        %v4369 = vld [vmem:[%s4367 + $0x4] sm:$0xf]
        %v4370 = vld [vmem:[%s4367 + $0x8] sm:$0xf]
        %v4371 = vld [vmem:[%s4367 + $0xc] sm:$0xf]
        %v4372 = vld [vmem:[%s4367 + $0x10] sm:$0xf]
        %v4373 = vld [vmem:[%s4367 + $0x14] sm:$0xf]
        %v4374 = vld [vmem:[%s4367 + $0x18] sm:$0xf]
        %v4375 = vld [vmem:[%s4367 + $0x1c] sm:$0xf]
        %v4376 = vld [vmem:[%s4367 + $0x20] sm:$0xf]
        %v4377 = vld [vmem:[%s4367 + $0x24] sm:$0xf]
        %v4378 = vld [vmem:[%s4367 + $0x28] sm:$0xf]
        %v4379 = vld [vmem:[%s4367 + $0x2c] sm:$0xf]
        %v4380 = vld [vmem:[%s4367 + $0x30] sm:$0xf]
        %v4381 = vld [vmem:[%s4367 + $0x34] sm:$0xf]
        %v4382 = vld [vmem:[%s4367 + $0x38] sm:$0xf]
        %v4383 = vld [vmem:[%s4367 + $0x3c] sm:$0xf]
        %v4391 = vunpack.c.l.b16 %v4360
        %v4392 = vunpack.c.l.b16 %v4361
        %v4393 = vunpack.c.l.b16 %v4362
        %v4394 = vunpack.c.l.b16 %v4363
        %v4395 = vunpack.c.l.b16 %v4364
        %v4396 = vunpack.c.l.b16 %v4365
        %v4397 = vunpack.c.l.b16 %v4366
        %v4398 = vpack.c.b16 %v4392, %v4391
        %v4399 = vpack.c.b16 %v4394, %v4393
        %v4400 = vpack.c.b16 %v4396, %v4395
        %v4401 = vpack.c.b16 %v4397, %v4397
        %v4403 = vshrl.u32 %v4398, 16
        %v4405 = vshll.u32 %v4398, 16
        %v4407 = vrot.slane %v4405, 1
        %v4408 = vor.u32 %v4403, %v4407
        %v4410 = vshll.u32 %v4399, 16
        %v4412 = vrot.slane %v4410, 1
        %v4413 = vsel %vm1143, %v4408, %v4412
        %v4414 = vshrl.u32 %v4399, 16
        %v4416 = vor.u32 %v4414, %v4412
        %v4418 = vshll.u32 %v4400, 16
        %v4420 = vrot.slane %v4418, 1
        %v4421 = vsel %vm1143, %v4416, %v4420
        %v4422 = vshrl.u32 %v4400, 16
        %v4424 = vor.u32 %v4422, %v4420
        %v4426 = vshll.u32 %v4401, 16
        %v4428 = vrot.slane %v4426, 1
        %v4429 = vsel %vm1143, %v4424, %v4428
        %v4449 = vunpack.c.l.b16 %v4368
        %v4450 = vunpack.c.l.b16 %v4369
        %v4451 = vunpack.c.l.b16 %v4370
        %v4452 = vunpack.c.l.b16 %v4371
        %v4453 = vunpack.c.l.b16 %v4372
        %v4454 = vunpack.c.l.b16 %v4373
        %v4455 = vunpack.c.l.b16 %v4374
        %v4456 = vunpack.c.l.b16 %v4375
        %v4457 = vunpack.c.l.b16 %v4376
        %v4458 = vunpack.c.l.b16 %v4377
        %v4459 = vunpack.c.l.b16 %v4378
        %v4460 = vunpack.c.l.b16 %v4379
        %v4461 = vunpack.c.l.b16 %v4380
        %v4462 = vunpack.c.l.b16 %v4381
        %v4463 = vunpack.c.l.b16 %v4382
        %v4464 = vunpack.c.l.b16 %v4383
        %v4465 = vpack.c.b16 %v4450, %v4449
        %v4466 = vpack.c.b16 %v4452, %v4451
        %v4467 = vpack.c.b16 %v4454, %v4453
        %v4468 = vpack.c.b16 %v4456, %v4455
        %v4469 = vpack.c.b16 %v4458, %v4457
        %v4470 = vpack.c.b16 %v4460, %v4459
        %v4471 = vpack.c.b16 %v4462, %v4461
        %v4472 = vpack.c.b16 %v4464, %v4463
        %4481 = vmatprep.subr.bf16.mxu0 0
        %4482 = vmatpush1.bf16.msra.mxu0 %v4472
        %4483 = vmatprep.subr.bf16.mxu0 0
        %4484 = vmatpush1.bf16.msra.mxu0 %v4471
        %4485 = vmatprep.subr.bf16.mxu0 0
        %4486 = vmatpush1.bf16.msra.mxu0 %v4470
        %4487 = vmatprep.subr.bf16.mxu0 0
        %4488 = vmatpush1.bf16.msra.mxu0 %v4469
        %4489 = vmatprep.subr.bf16.mxu0 0
        %4490 = vmatpush1.bf16.msra.mxu0 %v4468
        %4491 = vmatprep.subr.bf16.mxu0 0
        %4492 = vmatpush1.bf16.msra.mxu0 %v4467
        %4493 = vmatprep.subr.bf16.mxu0 0
        %4494 = vmatpush1.bf16.msra.mxu0 %v4466
        %4495 = vmatprep.subr.bf16.mxu0 0
        %4496 = vmatpush1.bf16.msra.mxu0 %v4465
        %4497 = vmatprep.subr.bf16.mxu0 0
        %4498 = vmatpush2.bf16.msra.mxu0 0
        %4499 = vmatprep.subr.bf16.mxu0 0
        %4500 = vmatpush2.bf16.msra.mxu0 0
        %4501 = vmatprep.subr.bf16.mxu0 0
        %4502 = vmatpush2.bf16.msra.mxu0 0
        %4503 = vmatprep.subr.bf16.mxu0 0
        %4504 = vmatpush2.bf16.msra.mxu0 0
        %4505 = vmatprep.subr.bf16.mxu0 0
        %4506 = vmatpush2.bf16.msra.mxu0 0
        %4507 = vmatprep.subr.bf16.mxu0 0
        %4508 = vmatpush2.bf16.msra.mxu0 0
        %4509 = vmatprep.subr.bf16.mxu0 0
        %4510 = vmatpush2.bf16.msra.mxu0 0
        %4511 = vmatprep.subr.bf16.mxu0 0
        %4512 = vmatpush2.bf16.msra.mxu0 0
        %4513 = vmatprep.mubr.bf16.mxu0 0
        %4514 = vmatmul.mubr.bf16.gmra.mxu0 %v4413
        %v4515 = vpop.f32.mrf.mxu0
        %v4516 = vadd.f32 0.0, %v4515
        %v4517 = vpop.f32.mrf.mxu0
        %v4518 = vpop.f32.mrf.mxu0
        %v4519 = vadd.f32 0.0, %v4518
        %v4520 = vpop.f32.mrf.mxu0
        %4521 = vmatprep.mubr.bf16.mxu0 0
        %4522 = vmatmul.mubr.bf16.gmra.mxu0 %v4421
        %v4523 = vpop.f32.mrf.mxu0
        %v4524 = vadd.f32 0.0, %v4523
        %v4525 = vpop.f32.mrf.mxu0
        %v4526 = vpop.f32.mrf.mxu0
        %v4527 = vadd.f32 0.0, %v4526
        %v4528 = vpop.f32.mrf.mxu0
        %4529 = vmatprep.mubr.bf16.mxu0 0
        %4530 = vmatmul.mubr.bf16.gmra.mxu0 %v4429
        %v4531 = vpop.f32.mrf.mxu0
        %v4532 = vadd.f32 0.0, %v4531
        %v4533 = vpop.f32.mrf.mxu0
        %v4534 = vpop.f32.mrf.mxu0
        %v4535 = vadd.f32 0.0, %v4534
        %v4536 = vpop.f32.mrf.mxu0
        %4537 = vdwg.mxu0
        %v4538 = vadd.f32 %v4354, %v4516
        %v4539 = vadd.f32 %v4355, %v4519
        %v4540 = vadd.f32 %v4356, %v4524
        %v4541 = vadd.f32 %v4357, %v4527
        %v4542 = vadd.f32 %v4358, %v4532
        %v4543 = vadd.f32 %v4359, %v4535
        %v4544 = vld [vmem:[#allocation5 + $0x8] sm:$0xe]
        %s4545 = scalar_lea.vmem %s5, 512
        %v4546 = vld [vmem:[%s4545] sm:$0xf]
        %v4547 = vld [vmem:[%s4545 + $0x4] sm:$0xf]
        %v4548 = vld [vmem:[%s4545 + $0x8] sm:$0xf]
        %v4549 = vld [vmem:[%s4545 + $0xc] sm:$0xf]
        %v4550 = vld [vmem:[%s4545 + $0x10] sm:$0xf]
        %v4551 = vld [vmem:[%s4545 + $0x14] sm:$0xf]
        %v4552 = vld [vmem:[%s4545 + $0x18] sm:$0xf]
        %v4553 = vld [vmem:[%s4545 + $0x1c] sm:$0xf]
        %v4554 = vld [vmem:[%s4545 + $0x20] sm:$0xf]
        %v4555 = vld [vmem:[%s4545 + $0x24] sm:$0xf]
        %v4556 = vld [vmem:[%s4545 + $0x28] sm:$0xf]
        %v4557 = vld [vmem:[%s4545 + $0x2c] sm:$0xf]
        %v4558 = vld [vmem:[%s4545 + $0x30] sm:$0xf]
        %v4559 = vld [vmem:[%s4545 + $0x34] sm:$0xf]
        %v4560 = vld [vmem:[%s4545 + $0x38] sm:$0xf]
        %v4561 = vld [vmem:[%s4545 + $0x3c] sm:$0xf]
        %v4563 = vunpack.c.l.b16 %v4544
        %v4564 = vpack.c.b16 %v4392, %v4563
        %v4565 = vrot.slane %v4564, 1
        %v4566 = vrot.slane %v4399, 1
        %v4567 = vsel %vm1533, %v4565, %v4566
        %v4568 = vrot.slane %v4400, 1
        %v4569 = vsel %vm1533, %v4566, %v4568
        %v4570 = vrot.slane %v4401, 1
        %v4571 = vsel %vm1533, %v4568, %v4570
        %v4591 = vunpack.c.l.b16 %v4546
        %v4592 = vunpack.c.l.b16 %v4547
        %v4593 = vunpack.c.l.b16 %v4548
        %v4594 = vunpack.c.l.b16 %v4549
        %v4595 = vunpack.c.l.b16 %v4550
        %v4596 = vunpack.c.l.b16 %v4551
        %v4597 = vunpack.c.l.b16 %v4552
        %v4598 = vunpack.c.l.b16 %v4553
        %v4599 = vunpack.c.l.b16 %v4554
        %v4600 = vunpack.c.l.b16 %v4555
        %v4601 = vunpack.c.l.b16 %v4556
        %v4602 = vunpack.c.l.b16 %v4557
        %v4603 = vunpack.c.l.b16 %v4558
        %v4604 = vunpack.c.l.b16 %v4559
        %v4605 = vunpack.c.l.b16 %v4560
        %v4606 = vunpack.c.l.b16 %v4561
        %v4607 = vpack.c.b16 %v4592, %v4591
        %v4608 = vpack.c.b16 %v4594, %v4593
        %v4609 = vpack.c.b16 %v4596, %v4595
        %v4610 = vpack.c.b16 %v4598, %v4597
        %v4611 = vpack.c.b16 %v4600, %v4599
        %v4612 = vpack.c.b16 %v4602, %v4601
        %v4613 = vpack.c.b16 %v4604, %v4603
        %v4614 = vpack.c.b16 %v4606, %v4605
        %4623 = vmatprep.subr.bf16.mxu0 0
        %4624 = vmatpush1.bf16.msra.mxu0 %v4614
        %4625 = vmatprep.subr.bf16.mxu0 0
        %4626 = vmatpush1.bf16.msra.mxu0 %v4613
        %4627 = vmatprep.subr.bf16.mxu0 0
        %4628 = vmatpush1.bf16.msra.mxu0 %v4612
        %4629 = vmatprep.subr.bf16.mxu0 0
        %4630 = vmatpush1.bf16.msra.mxu0 %v4611
        %4631 = vmatprep.subr.bf16.mxu0 0
        %4632 = vmatpush1.bf16.msra.mxu0 %v4610
        %4633 = vmatprep.subr.bf16.mxu0 0
        %4634 = vmatpush1.bf16.msra.mxu0 %v4609
        %4635 = vmatprep.subr.bf16.mxu0 0
        %4636 = vmatpush1.bf16.msra.mxu0 %v4608
        %4637 = vmatprep.subr.bf16.mxu0 0
        %4638 = vmatpush1.bf16.msra.mxu0 %v4607
        %4639 = vmatprep.subr.bf16.mxu0 0
        %4640 = vmatpush2.bf16.msra.mxu0 0
        %4641 = vmatprep.subr.bf16.mxu0 0
        %4642 = vmatpush2.bf16.msra.mxu0 0
        %4643 = vmatprep.subr.bf16.mxu0 0
        %4644 = vmatpush2.bf16.msra.mxu0 0
        %4645 = vmatprep.subr.bf16.mxu0 0
        %4646 = vmatpush2.bf16.msra.mxu0 0
        %4647 = vmatprep.subr.bf16.mxu0 0
        %4648 = vmatpush2.bf16.msra.mxu0 0
        %4649 = vmatprep.subr.bf16.mxu0 0
        %4650 = vmatpush2.bf16.msra.mxu0 0
        %4651 = vmatprep.subr.bf16.mxu0 0
        %4652 = vmatpush2.bf16.msra.mxu0 0
        %4653 = vmatprep.subr.bf16.mxu0 0
        %4654 = vmatpush2.bf16.msra.mxu0 0
        %4655 = vmatprep.mubr.bf16.mxu0 0
        %4656 = vmatmul.mubr.bf16.gmra.mxu0 %v4567
        %v4657 = vpop.f32.mrf.mxu0
        %v4658 = vadd.f32 0.0, %v4657
        %v4659 = vpop.f32.mrf.mxu0
        %v4660 = vpop.f32.mrf.mxu0
        %v4661 = vadd.f32 0.0, %v4660
        %v4662 = vpop.f32.mrf.mxu0
        %4663 = vmatprep.mubr.bf16.mxu0 0
        %4664 = vmatmul.mubr.bf16.gmra.mxu0 %v4569
        %v4665 = vpop.f32.mrf.mxu0
        %v4666 = vadd.f32 0.0, %v4665
        %v4667 = vpop.f32.mrf.mxu0
        %v4668 = vpop.f32.mrf.mxu0
        %v4669 = vadd.f32 0.0, %v4668
        %v4670 = vpop.f32.mrf.mxu0
        %4671 = vmatprep.mubr.bf16.mxu0 0
        %4672 = vmatmul.mubr.bf16.gmra.mxu0 %v4571
        %v4673 = vpop.f32.mrf.mxu0
        %v4674 = vadd.f32 0.0, %v4673
        %v4675 = vpop.f32.mrf.mxu0
        %v4676 = vpop.f32.mrf.mxu0
        %v4677 = vadd.f32 0.0, %v4676
        %v4678 = vpop.f32.mrf.mxu0
        %4679 = vdwg.mxu0
        %v4680 = vadd.f32 %v4538, %v4658
        %v4681 = vadd.f32 %v4539, %v4661
        %v4682 = vadd.f32 %v4540, %v4666
        %v4683 = vadd.f32 %v4541, %v4669
        %v4684 = vadd.f32 %v4542, %v4674
        %v4685 = vadd.f32 %v4543, %v4677
        %v4686 = vld [vmem:[%s6] sm:$0x1]
        %v4688 = vlaneseq
        %v4689 = vshrl.u32 %v4688, 7
        %v4690 = vsub.s32 0, %v4689
        %v4691 = vrot.slane %v4686, %v4690
        %v4693 = vadd.f32 %v4680, %v4691
        %v4694 = vadd.f32 %v4681, %v4691
        %v4695 = vadd.f32 %v4682, %v4691
        %v4696 = vadd.f32 %v4683, %v4691
        %v4697 = vadd.f32 %v4684, %v4691
        %v4698 = vadd.f32 %v4685, %v4691
        %v4699 = vmax.f32 %v4693, 0.0
        %v4700 = vmax.f32 %v4694, 0.0
        %v4701 = vmax.f32 %v4695, 0.0
        %v4702 = vmax.f32 %v4696, 0.0
        %v4703 = vmax.f32 %v4697, 0.0
        %v4704 = vmax.f32 %v4698, 0.0
        %4705 = vst [vmem:[#allocation6] sm:$0xff] %v4699
        %4706 = vst [vmem:[#allocation6 + $0x8] sm:$0xff] %v4700
        %4707 = vst [vmem:[#allocation6 + $0x10] sm:$0xff] %v4701
        %4708 = vst [vmem:[#allocation6 + $0x18] sm:$0xff] %v4702
        %4709 = vst [vmem:[#allocation6 + $0x20] sm:$0xff] %v4703
        %4710 = vst [vmem:[#allocation6 + $0x28] sm:$0xff] %v4704
        %4711 = vst [vmem:[#allocation7] sm:$0x7] 0
        %4712 = vst [vmem:[#allocation7 + $0x8] sm:$0xe] 0
        %s4713 = scalar_lea.vmem [#allocation6], 1
        %v4714 = vld [vmem:[%s4713] ss:$2 sm:$0x3]
        %s4715 = scalar_lea.vmem [#allocation6], 2
        %v4716 = vld [vmem:[%s4715] ss:$2 sm:$0x3]
        %v4717 = vmax.f32 %v4714, %v4716
        %s4718 = scalar_lea.vmem [#allocation6], 9
        %v4719 = vld [vmem:[%s4718] ss:$2 sm:$0x3]
        %s4720 = scalar_lea.vmem [#allocation6], 10
        %v4721 = vld [vmem:[%s4720] ss:$2 sm:$0x3]
        %v4722 = vmax.f32 %v4719, %v4721
        %v4723 = vmax.f32 %v4717, %v4722
        %4724 = vst [vmem:[#allocation7] sm:$0x8] 0
        %v4725 = vpack.c.bf16 %v4723, %v4723
        %4726 = vst [vmem:[#allocation7 + $0x4] sm:$0x1] %v4725
        %4727 = vst [vmem:[#allocation7 + $0x4] sm:$0x2] 0
        %s4728 = scalar_lea.vmem [#allocation6], 17
        %v4729 = vld [vmem:[%s4728] ss:$2 sm:$0x3]
        %s4730 = scalar_lea.vmem [#allocation6], 18
        %v4731 = vld [vmem:[%s4730] ss:$2 sm:$0x3]
        %v4732 = vmax.f32 %v4729, %v4731
        %s4733 = scalar_lea.vmem [#allocation6], 25
        %v4734 = vld [vmem:[%s4733] ss:$2 sm:$0x3]
        %s4735 = scalar_lea.vmem [#allocation6], 26
        %v4736 = vld [vmem:[%s4735] ss:$2 sm:$0x3]
        %v4737 = vmax.f32 %v4734, %v4736
        %v4738 = vmax.f32 %v4732, %v4737
        %4739 = vst [vmem:[#allocation7 + $0x4] sm:$0x4] 0
        %v4740 = vpack.c.bf16 %v4738, %v4738
        %v4742 = vunpack.c.l.b16 %v4740
        %v4743 = vpack.c.b16 %v4742, %v4742
        %v4744 = vrot.slane %v4743, 5
        %4746 = vst [vmem:[#allocation7 + $0x4] sm:$0x8] %v4744
        %4747 = vst [vmem:[#allocation7 + $0x8] sm:$0x1] 0
        %4748 = vst [vmem:[#allocation7 + $0xc] sm:$0xf] 0
        %4749 = vst [vmem:[#allocation7 + $0x10] sm:$0x7] 0
        %v4750 = vld [vmem:[#allocation7] sm:$0xf]
        %v4751 = vld [vmem:[#allocation7 + $0x4] sm:$0xf]
        %v4752 = vld [vmem:[#allocation7 + $0x8] sm:$0xf]
        %v4753 = vld [vmem:[%s7] sm:$0xf]
        %v4754 = vld [vmem:[%s7 + $0x4] sm:$0xf]
        %v4755 = vld [vmem:[%s7 + $0x8] sm:$0xf]
        %v4756 = vld [vmem:[%s7 + $0xc] sm:$0xf]
        %v4757 = vld [vmem:[%s7 + $0x10] sm:$0xf]
        %v4758 = vld [vmem:[%s7 + $0x14] sm:$0xf]
        %v4759 = vld [vmem:[%s7 + $0x18] sm:$0xf]
        %v4760 = vld [vmem:[%s7 + $0x1c] sm:$0xf]
        %v4761 = vld [vmem:[%s7 + $0x20] sm:$0xf]
        %v4762 = vld [vmem:[%s7 + $0x24] sm:$0xf]
        %v4763 = vld [vmem:[%s7 + $0x28] sm:$0xf]
        %v4764 = vld [vmem:[%s7 + $0x2c] sm:$0xf]
        %v4765 = vld [vmem:[%s7 + $0x30] sm:$0xf]
        %v4766 = vld [vmem:[%s7 + $0x34] sm:$0xf]
        %v4767 = vld [vmem:[%s7 + $0x38] sm:$0xf]
        %v4768 = vld [vmem:[%s7 + $0x3c] sm:$0xf]
        %v4769 = vld [vmem:[#allocation7 + $0xc] sm:$0x1]
        %s4770 = scalar_lea.vmem %s7, 64
        %v4771 = vld [vmem:[%s4770] sm:$0xf]
        %v4772 = vld [vmem:[%s4770 + $0x4] sm:$0xf]
        %v4773 = vld [vmem:[%s4770 + $0x8] sm:$0xf]
        %v4774 = vld [vmem:[%s4770 + $0xc] sm:$0xf]
        %v4775 = vld [vmem:[%s4770 + $0x10] sm:$0xf]
        %v4776 = vld [vmem:[%s4770 + $0x14] sm:$0xf]
        %v4777 = vld [vmem:[%s4770 + $0x18] sm:$0xf]
        %v4778 = vld [vmem:[%s4770 + $0x1c] sm:$0xf]
        %v4779 = vld [vmem:[%s4770 + $0x20] sm:$0xf]
        %v4780 = vld [vmem:[%s4770 + $0x24] sm:$0xf]
        %v4781 = vld [vmem:[%s4770 + $0x28] sm:$0xf]
        %v4782 = vld [vmem:[%s4770 + $0x2c] sm:$0xf]
        %v4783 = vld [vmem:[%s4770 + $0x30] sm:$0xf]
        %v4784 = vld [vmem:[%s4770 + $0x34] sm:$0xf]
        %v4785 = vld [vmem:[%s4770 + $0x38] sm:$0xf]
        %v4786 = vld [vmem:[%s4770 + $0x3c] sm:$0xf]
        %v4791 = vunpack.c.l.b16 %v4750
        %v4792 = vunpack.c.l.b16 %v4751
        %v4793 = vunpack.c.l.b16 %v4752
        %v4794 = vunpack.c.l.b16 %v4769
        %v4795 = vpack.c.b16 %v4792, %v4791
        %v4796 = vpack.c.b16 %v4794, %v4793
        %v4798 = vshrl.u32 %v4795, 16
        %v4800 = vshll.u32 %v4795, 16
        %v4802 = vrot.slane %v4800, 1
        %v4803 = vor.u32 %v4798, %v4802
        %v4805 = vshll.u32 %v4796, 16
        %v4807 = vrot.slane %v4805, 1
        %v4808 = vsel %vm1143, %v4803, %v4807
        %v4809 = vshrl.u32 %v4796, 16
        %v4811 = vor.u32 %v4809, %v4807
        %v4830 = vunpack.c.l.b16 %v4771
        %v4831 = vunpack.c.l.b16 %v4772
        %v4832 = vunpack.c.l.b16 %v4773
        %v4833 = vunpack.c.l.b16 %v4774
        %v4834 = vunpack.c.l.b16 %v4775
        %v4835 = vunpack.c.l.b16 %v4776
        %v4836 = vunpack.c.l.b16 %v4777
        %v4837 = vunpack.c.l.b16 %v4778
        %v4838 = vunpack.c.l.b16 %v4779
        %v4839 = vunpack.c.l.b16 %v4780
        %v4840 = vunpack.c.l.b16 %v4781
        %v4841 = vunpack.c.l.b16 %v4782
        %v4842 = vunpack.c.l.b16 %v4783
        %v4843 = vunpack.c.l.b16 %v4784
        %v4844 = vunpack.c.l.b16 %v4785
        %v4845 = vunpack.c.l.b16 %v4786
        %v4846 = vpack.c.b16 %v4831, %v4830
        %v4847 = vpack.c.b16 %v4833, %v4832
        %v4848 = vpack.c.b16 %v4835, %v4834
        %v4849 = vpack.c.b16 %v4837, %v4836
        %v4850 = vpack.c.b16 %v4839, %v4838
        %v4851 = vpack.c.b16 %v4841, %v4840
        %v4852 = vpack.c.b16 %v4843, %v4842
        %v4853 = vpack.c.b16 %v4845, %v4844
        %4862 = vmatprep.subr.bf16.mxu0 0
        %4863 = vmatpush1.bf16.msra.mxu0 %v4853
        %4864 = vmatprep.subr.bf16.mxu0 0
        %4865 = vmatpush1.bf16.msra.mxu0 %v4852
        %4866 = vmatprep.subr.bf16.mxu0 0
        %4867 = vmatpush1.bf16.msra.mxu0 %v4851
        %4868 = vmatprep.subr.bf16.mxu0 0
        %4869 = vmatpush1.bf16.msra.mxu0 %v4850
        %4870 = vmatprep.subr.bf16.mxu0 0
        %4871 = vmatpush1.bf16.msra.mxu0 %v4849
        %4872 = vmatprep.subr.bf16.mxu0 0
        %4873 = vmatpush1.bf16.msra.mxu0 %v4848
        %4874 = vmatprep.subr.bf16.mxu0 0
        %4875 = vmatpush1.bf16.msra.mxu0 %v4847
        %4876 = vmatprep.subr.bf16.mxu0 0
        %4877 = vmatpush1.bf16.msra.mxu0 %v4846
        %4878 = vmatprep.subr.bf16.mxu0 0
        %4879 = vmatpush2.bf16.msra.mxu0 0
        %4880 = vmatprep.subr.bf16.mxu0 0
        %4881 = vmatpush2.bf16.msra.mxu0 0
        %4882 = vmatprep.subr.bf16.mxu0 0
        %4883 = vmatpush2.bf16.msra.mxu0 0
        %4884 = vmatprep.subr.bf16.mxu0 0
        %4885 = vmatpush2.bf16.msra.mxu0 0
        %4886 = vmatprep.subr.bf16.mxu0 0
        %4887 = vmatpush2.bf16.msra.mxu0 0
        %4888 = vmatprep.subr.bf16.mxu0 0
        %4889 = vmatpush2.bf16.msra.mxu0 0
        %4890 = vmatprep.subr.bf16.mxu0 0
        %4891 = vmatpush2.bf16.msra.mxu0 0
        %4892 = vmatprep.subr.bf16.mxu0 0
        %4893 = vmatpush2.bf16.msra.mxu0 0
        %4894 = vmatprep.mubr.bf16.mxu0 0
        %4895 = vmatmul.mubr.bf16.gmra.mxu0 %v4808
        %v4896 = vpop.f32.mrf.mxu0
        %v4897 = vadd.f32 0.0, %v4896
        %v4898 = vpop.f32.mrf.mxu0
        %v4899 = vpop.f32.mrf.mxu0
        %v4900 = vadd.f32 0.0, %v4899
        %v4901 = vpop.f32.mrf.mxu0
        %4902 = vmatprep.mubr.bf16.mxu0 0
        %4903 = vmatmul.mubr.bf16.gmra.mxu0 %v4811
        %v4904 = vpop.f32.mrf.mxu0
        %v4905 = vadd.f32 0.0, %v4904
        %v4906 = vpop.f32.mrf.mxu0
        %v4907 = vpop.f32.mrf.mxu0
        %v4908 = vpop.f32.mrf.mxu0
        %4909 = vdwg.mxu0
        %v4910 = vpack.c.b16 %v4793, %v4793
        %v4929 = vunpack.c.l.b16 %v4753
        %v4930 = vunpack.c.l.b16 %v4754
        %v4931 = vunpack.c.l.b16 %v4755
        %v4932 = vunpack.c.l.b16 %v4756
        %v4933 = vunpack.c.l.b16 %v4757
        %v4934 = vunpack.c.l.b16 %v4758
        %v4935 = vunpack.c.l.b16 %v4759
        %v4936 = vunpack.c.l.b16 %v4760
        %v4937 = vunpack.c.l.b16 %v4761
        %v4938 = vunpack.c.l.b16 %v4762
        %v4939 = vunpack.c.l.b16 %v4763
        %v4940 = vunpack.c.l.b16 %v4764
        %v4941 = vunpack.c.l.b16 %v4765
        %v4942 = vunpack.c.l.b16 %v4766
        %v4943 = vunpack.c.l.b16 %v4767
        %v4944 = vunpack.c.l.b16 %v4768
        %v4945 = vpack.c.b16 %v4930, %v4929
        %v4946 = vpack.c.b16 %v4932, %v4931
        %v4947 = vpack.c.b16 %v4934, %v4933
        %v4948 = vpack.c.b16 %v4936, %v4935
        %v4949 = vpack.c.b16 %v4938, %v4937
        %v4950 = vpack.c.b16 %v4940, %v4939
        %v4951 = vpack.c.b16 %v4942, %v4941
        %v4952 = vpack.c.b16 %v4944, %v4943
        %4961 = vmatprep.subr.bf16.mxu0 0
        %4962 = vmatpush1.bf16.msra.mxu0 %v4952
        %4963 = vmatprep.subr.bf16.mxu0 0
        %4964 = vmatpush1.bf16.msra.mxu0 %v4951
        %4965 = vmatprep.subr.bf16.mxu0 0
        %4966 = vmatpush1.bf16.msra.mxu0 %v4950
        %4967 = vmatprep.subr.bf16.mxu0 0
        %4968 = vmatpush1.bf16.msra.mxu0 %v4949
        %4969 = vmatprep.subr.bf16.mxu0 0
        %4970 = vmatpush1.bf16.msra.mxu0 %v4948
        %4971 = vmatprep.subr.bf16.mxu0 0
        %4972 = vmatpush1.bf16.msra.mxu0 %v4947
        %4973 = vmatprep.subr.bf16.mxu0 0
        %4974 = vmatpush1.bf16.msra.mxu0 %v4946
        %4975 = vmatprep.subr.bf16.mxu0 0
        %4976 = vmatpush1.bf16.msra.mxu0 %v4945
        %4977 = vmatprep.subr.bf16.mxu0 0
        %4978 = vmatpush2.bf16.msra.mxu0 0
        %4979 = vmatprep.subr.bf16.mxu0 0
        %4980 = vmatpush2.bf16.msra.mxu0 0
        %4981 = vmatprep.subr.bf16.mxu0 0
        %4982 = vmatpush2.bf16.msra.mxu0 0
        %4983 = vmatprep.subr.bf16.mxu0 0
        %4984 = vmatpush2.bf16.msra.mxu0 0
        %4985 = vmatprep.subr.bf16.mxu0 0
        %4986 = vmatpush2.bf16.msra.mxu0 0
        %4987 = vmatprep.subr.bf16.mxu0 0
        %4988 = vmatpush2.bf16.msra.mxu0 0
        %4989 = vmatprep.subr.bf16.mxu0 0
        %4990 = vmatpush2.bf16.msra.mxu0 0
        %4991 = vmatprep.subr.bf16.mxu0 0
        %4992 = vmatpush2.bf16.msra.mxu0 0
        %4993 = vmatprep.mubr.bf16.mxu0 0
        %4994 = vmatmul.mubr.bf16.gmra.mxu0 %v4795
        %v4995 = vpop.f32.mrf.mxu0
        %v4996 = vadd.f32 %v4897, %v4995
        %v4997 = vpop.f32.mrf.mxu0
        %v4998 = vpop.f32.mrf.mxu0
        %v4999 = vadd.f32 %v4900, %v4998
        %v5000 = vpop.f32.mrf.mxu0
        %5001 = vmatprep.mubr.bf16.mxu0 0
        %5002 = vmatmul.mubr.bf16.gmra.mxu0 %v4910
        %v5003 = vpop.f32.mrf.mxu0
        %v5004 = vadd.f32 %v4905, %v5003
        %v5005 = vpop.f32.mrf.mxu0
        %v5006 = vpop.f32.mrf.mxu0
        %v5007 = vpop.f32.mrf.mxu0
        %5008 = vdwg.mxu0
        %v5009 = vld [vmem:[#allocation7] sm:$0xe]
        %s5010 = scalar_lea.vmem %s7, 128
        %v5011 = vld [vmem:[%s5010] sm:$0xf]
        %v5012 = vld [vmem:[%s5010 + $0x4] sm:$0xf]
        %v5013 = vld [vmem:[%s5010 + $0x8] sm:$0xf]
        %v5014 = vld [vmem:[%s5010 + $0xc] sm:$0xf]
        %v5015 = vld [vmem:[%s5010 + $0x10] sm:$0xf]
        %v5016 = vld [vmem:[%s5010 + $0x14] sm:$0xf]
        %v5017 = vld [vmem:[%s5010 + $0x18] sm:$0xf]
        %v5018 = vld [vmem:[%s5010 + $0x1c] sm:$0xf]
        %v5019 = vld [vmem:[%s5010 + $0x20] sm:$0xf]
        %v5020 = vld [vmem:[%s5010 + $0x24] sm:$0xf]
        %v5021 = vld [vmem:[%s5010 + $0x28] sm:$0xf]
        %v5022 = vld [vmem:[%s5010 + $0x2c] sm:$0xf]
        %v5023 = vld [vmem:[%s5010 + $0x30] sm:$0xf]
        %v5024 = vld [vmem:[%s5010 + $0x34] sm:$0xf]
        %v5025 = vld [vmem:[%s5010 + $0x38] sm:$0xf]
        %v5026 = vld [vmem:[%s5010 + $0x3c] sm:$0xf]
        %v5028 = vunpack.c.l.b16 %v5009
        %v5029 = vpack.c.b16 %v4792, %v5028
        %v5030 = vrot.slane %v5029, 1
        %v5031 = vrot.slane %v4796, 1
        %v5032 = vsel %vm1533, %v5030, %v5031
        %v5051 = vunpack.c.l.b16 %v5011
        %v5052 = vunpack.c.l.b16 %v5012
        %v5053 = vunpack.c.l.b16 %v5013
        %v5054 = vunpack.c.l.b16 %v5014
        %v5055 = vunpack.c.l.b16 %v5015
        %v5056 = vunpack.c.l.b16 %v5016
        %v5057 = vunpack.c.l.b16 %v5017
        %v5058 = vunpack.c.l.b16 %v5018
        %v5059 = vunpack.c.l.b16 %v5019
        %v5060 = vunpack.c.l.b16 %v5020
        %v5061 = vunpack.c.l.b16 %v5021
        %v5062 = vunpack.c.l.b16 %v5022
        %v5063 = vunpack.c.l.b16 %v5023
        %v5064 = vunpack.c.l.b16 %v5024
        %v5065 = vunpack.c.l.b16 %v5025
        %v5066 = vunpack.c.l.b16 %v5026
        %v5067 = vpack.c.b16 %v5052, %v5051
        %v5068 = vpack.c.b16 %v5054, %v5053
        %v5069 = vpack.c.b16 %v5056, %v5055
        %v5070 = vpack.c.b16 %v5058, %v5057
        %v5071 = vpack.c.b16 %v5060, %v5059
        %v5072 = vpack.c.b16 %v5062, %v5061
        %v5073 = vpack.c.b16 %v5064, %v5063
        %v5074 = vpack.c.b16 %v5066, %v5065
        %5083 = vmatprep.subr.bf16.mxu0 0
        %5084 = vmatpush1.bf16.msra.mxu0 %v5074
        %5085 = vmatprep.subr.bf16.mxu0 0
        %5086 = vmatpush1.bf16.msra.mxu0 %v5073
        %5087 = vmatprep.subr.bf16.mxu0 0
        %5088 = vmatpush1.bf16.msra.mxu0 %v5072
        %5089 = vmatprep.subr.bf16.mxu0 0
        %5090 = vmatpush1.bf16.msra.mxu0 %v5071
        %5091 = vmatprep.subr.bf16.mxu0 0
        %5092 = vmatpush1.bf16.msra.mxu0 %v5070
        %5093 = vmatprep.subr.bf16.mxu0 0
        %5094 = vmatpush1.bf16.msra.mxu0 %v5069
        %5095 = vmatprep.subr.bf16.mxu0 0
        %5096 = vmatpush1.bf16.msra.mxu0 %v5068
        %5097 = vmatprep.subr.bf16.mxu0 0
        %5098 = vmatpush1.bf16.msra.mxu0 %v5067
        %5099 = vmatprep.subr.bf16.mxu0 0
        %5100 = vmatpush2.bf16.msra.mxu0 0
        %5101 = vmatprep.subr.bf16.mxu0 0
        %5102 = vmatpush2.bf16.msra.mxu0 0
        %5103 = vmatprep.subr.bf16.mxu0 0
        %5104 = vmatpush2.bf16.msra.mxu0 0
        %5105 = vmatprep.subr.bf16.mxu0 0
        %5106 = vmatpush2.bf16.msra.mxu0 0
        %5107 = vmatprep.subr.bf16.mxu0 0
        %5108 = vmatpush2.bf16.msra.mxu0 0
        %5109 = vmatprep.subr.bf16.mxu0 0
        %5110 = vmatpush2.bf16.msra.mxu0 0
        %5111 = vmatprep.subr.bf16.mxu0 0
        %5112 = vmatpush2.bf16.msra.mxu0 0
        %5113 = vmatprep.subr.bf16.mxu0 0
        %5114 = vmatpush2.bf16.msra.mxu0 0
        %5115 = vmatprep.mubr.bf16.mxu0 0
        %5116 = vmatmul.mubr.bf16.gmra.mxu0 %v5032
        %v5117 = vpop.f32.mrf.mxu0
        %v5118 = vadd.f32 0.0, %v5117
        %v5119 = vpop.f32.mrf.mxu0
        %v5120 = vpop.f32.mrf.mxu0
        %v5121 = vadd.f32 0.0, %v5120
        %v5122 = vpop.f32.mrf.mxu0
        %5123 = vmatprep.mubr.bf16.mxu0 0
        %5124 = vmatmul.mubr.bf16.gmra.mxu0 %v5031
        %v5125 = vpop.f32.mrf.mxu0
        %v5126 = vadd.f32 0.0, %v5125
        %v5127 = vpop.f32.mrf.mxu0
        %v5128 = vpop.f32.mrf.mxu0
        %v5129 = vpop.f32.mrf.mxu0
        %5130 = vdwg.mxu0
        %v5131 = vadd.f32 %v4996, %v5118
        %v5132 = vadd.f32 %v4999, %v5121
        %v5133 = vadd.f32 %v5004, %v5126
        %v5134 = vld [vmem:[#allocation7] sm:$0x8]
        %v5135 = vld [vmem:[#allocation7 + $0xc] sm:$0x7]
        %s5136 = scalar_lea.vmem %s7, 192
        %v5137 = vld [vmem:[%s5136] sm:$0xf]
        %v5138 = vld [vmem:[%s5136 + $0x4] sm:$0xf]
        %v5139 = vld [vmem:[%s5136 + $0x8] sm:$0xf]
        %v5140 = vld [vmem:[%s5136 + $0xc] sm:$0xf]
        %v5141 = vld [vmem:[%s5136 + $0x10] sm:$0xf]
        %v5142 = vld [vmem:[%s5136 + $0x14] sm:$0xf]
        %v5143 = vld [vmem:[%s5136 + $0x18] sm:$0xf]
        %v5144 = vld [vmem:[%s5136 + $0x1c] sm:$0xf]
        %v5145 = vld [vmem:[%s5136 + $0x20] sm:$0xf]
        %v5146 = vld [vmem:[%s5136 + $0x24] sm:$0xf]
        %v5147 = vld [vmem:[%s5136 + $0x28] sm:$0xf]
        %v5148 = vld [vmem:[%s5136 + $0x2c] sm:$0xf]
        %v5149 = vld [vmem:[%s5136 + $0x30] sm:$0xf]
        %v5150 = vld [vmem:[%s5136 + $0x34] sm:$0xf]
        %v5151 = vld [vmem:[%s5136 + $0x38] sm:$0xf]
        %v5152 = vld [vmem:[%s5136 + $0x3c] sm:$0xf]
        %v5155 = vunpack.c.l.b16 %v5134
        %v5156 = vunpack.c.l.b16 %v5135
        %v5157 = vpack.c.b16 %v4792, %v5155
        %v5158 = vpack.c.b16 %v5156, %v4793
        %v5159 = vrot.slane %v5157, 3
        %v5160 = vrot.slane %v5158, 3
        %v5161 = vsel %vm2253, %v5159, %v5160
        %v5180 = vunpack.c.l.b16 %v5137
        %v5181 = vunpack.c.l.b16 %v5138
        %v5182 = vunpack.c.l.b16 %v5139
        %v5183 = vunpack.c.l.b16 %v5140
        %v5184 = vunpack.c.l.b16 %v5141
        %v5185 = vunpack.c.l.b16 %v5142
        %v5186 = vunpack.c.l.b16 %v5143
        %v5187 = vunpack.c.l.b16 %v5144
        %v5188 = vunpack.c.l.b16 %v5145
        %v5189 = vunpack.c.l.b16 %v5146
        %v5190 = vunpack.c.l.b16 %v5147
        %v5191 = vunpack.c.l.b16 %v5148
        %v5192 = vunpack.c.l.b16 %v5149
        %v5193 = vunpack.c.l.b16 %v5150
        %v5194 = vunpack.c.l.b16 %v5151
        %v5195 = vunpack.c.l.b16 %v5152
        %v5196 = vpack.c.b16 %v5181, %v5180
        %v5197 = vpack.c.b16 %v5183, %v5182
        %v5198 = vpack.c.b16 %v5185, %v5184
        %v5199 = vpack.c.b16 %v5187, %v5186
        %v5200 = vpack.c.b16 %v5189, %v5188
        %v5201 = vpack.c.b16 %v5191, %v5190
        %v5202 = vpack.c.b16 %v5193, %v5192
        %v5203 = vpack.c.b16 %v5195, %v5194
        %5212 = vmatprep.subr.bf16.mxu0 0
        %5213 = vmatpush1.bf16.msra.mxu0 %v5203
        %5214 = vmatprep.subr.bf16.mxu0 0
        %5215 = vmatpush1.bf16.msra.mxu0 %v5202
        %5216 = vmatprep.subr.bf16.mxu0 0
        %5217 = vmatpush1.bf16.msra.mxu0 %v5201
        %5218 = vmatprep.subr.bf16.mxu0 0
        %5219 = vmatpush1.bf16.msra.mxu0 %v5200
        %5220 = vmatprep.subr.bf16.mxu0 0
        %5221 = vmatpush1.bf16.msra.mxu0 %v5199
        %5222 = vmatprep.subr.bf16.mxu0 0
        %5223 = vmatpush1.bf16.msra.mxu0 %v5198
        %5224 = vmatprep.subr.bf16.mxu0 0
        %5225 = vmatpush1.bf16.msra.mxu0 %v5197
        %5226 = vmatprep.subr.bf16.mxu0 0
        %5227 = vmatpush1.bf16.msra.mxu0 %v5196
        %5228 = vmatprep.subr.bf16.mxu0 0
        %5229 = vmatpush2.bf16.msra.mxu0 0
        %5230 = vmatprep.subr.bf16.mxu0 0
        %5231 = vmatpush2.bf16.msra.mxu0 0
        %5232 = vmatprep.subr.bf16.mxu0 0
        %5233 = vmatpush2.bf16.msra.mxu0 0
        %5234 = vmatprep.subr.bf16.mxu0 0
        %5235 = vmatpush2.bf16.msra.mxu0 0
        %5236 = vmatprep.subr.bf16.mxu0 0
        %5237 = vmatpush2.bf16.msra.mxu0 0
        %5238 = vmatprep.subr.bf16.mxu0 0
        %5239 = vmatpush2.bf16.msra.mxu0 0
        %5240 = vmatprep.subr.bf16.mxu0 0
        %5241 = vmatpush2.bf16.msra.mxu0 0
        %5242 = vmatprep.subr.bf16.mxu0 0
        %5243 = vmatpush2.bf16.msra.mxu0 0
        %5244 = vmatprep.mubr.bf16.mxu0 0
        %5245 = vmatmul.mubr.bf16.gmra.mxu0 %v5161
        %v5246 = vpop.f32.mrf.mxu0
        %v5247 = vadd.f32 0.0, %v5246
        %v5248 = vpop.f32.mrf.mxu0
        %v5249 = vpop.f32.mrf.mxu0
        %v5250 = vadd.f32 0.0, %v5249
        %v5251 = vpop.f32.mrf.mxu0
        %5252 = vmatprep.mubr.bf16.mxu0 0
        %5253 = vmatmul.mubr.bf16.gmra.mxu0 %v5160
        %v5254 = vpop.f32.mrf.mxu0
        %v5255 = vadd.f32 0.0, %v5254
        %v5256 = vpop.f32.mrf.mxu0
        %v5257 = vpop.f32.mrf.mxu0
        %v5258 = vpop.f32.mrf.mxu0
        %5259 = vdwg.mxu0
        %v5260 = vadd.f32 %v5131, %v5247
        %v5261 = vadd.f32 %v5132, %v5250
        %v5262 = vadd.f32 %v5133, %v5255
        %v5263 = vld [vmem:[#allocation7 + $0xc] sm:$0xf]
        %s5264 = scalar_lea.vmem %s7, 256
        %v5265 = vld [vmem:[%s5264] sm:$0xf]
        %v5266 = vld [vmem:[%s5264 + $0x4] sm:$0xf]
        %v5267 = vld [vmem:[%s5264 + $0x8] sm:$0xf]
        %v5268 = vld [vmem:[%s5264 + $0xc] sm:$0xf]
        %v5269 = vld [vmem:[%s5264 + $0x10] sm:$0xf]
        %v5270 = vld [vmem:[%s5264 + $0x14] sm:$0xf]
        %v5271 = vld [vmem:[%s5264 + $0x18] sm:$0xf]
        %v5272 = vld [vmem:[%s5264 + $0x1c] sm:$0xf]
        %v5273 = vld [vmem:[%s5264 + $0x20] sm:$0xf]
        %v5274 = vld [vmem:[%s5264 + $0x24] sm:$0xf]
        %v5275 = vld [vmem:[%s5264 + $0x28] sm:$0xf]
        %v5276 = vld [vmem:[%s5264 + $0x2c] sm:$0xf]
        %v5277 = vld [vmem:[%s5264 + $0x30] sm:$0xf]
        %v5278 = vld [vmem:[%s5264 + $0x34] sm:$0xf]
        %v5279 = vld [vmem:[%s5264 + $0x38] sm:$0xf]
        %v5280 = vld [vmem:[%s5264 + $0x3c] sm:$0xf]
        %v5282 = vunpack.c.l.b16 %v5263
        %v5283 = vpack.c.b16 %v5282, %v4793
        %vm5284 = vsmask.f32 4352
        %v5286 = vshrl.u32 %v5157, 16
        %v5288 = vrot.slane %v5286, 3
        %v5289 = vshll.u32 %v5157, 16
        %v5291 = vrot.slane %v5289, 4
        %v5292 = vor.u32 %v5288, %v5291
        %v5294 = vshrl.u32 %v5283, 16
        %v5296 = vrot.slane %v5294, 3
        %v5297 = vshll.u32 %v5283, 16
        %v5299 = vrot.slane %v5297, 4
        %v5300 = vor.u32 %v5296, %v5299
        %v5301 = vsel %vm5284, %v5292, %v5300
        %v5320 = vunpack.c.l.b16 %v5265
        %v5321 = vunpack.c.l.b16 %v5266
        %v5322 = vunpack.c.l.b16 %v5267
        %v5323 = vunpack.c.l.b16 %v5268
        %v5324 = vunpack.c.l.b16 %v5269
        %v5325 = vunpack.c.l.b16 %v5270
        %v5326 = vunpack.c.l.b16 %v5271
        %v5327 = vunpack.c.l.b16 %v5272
        %v5328 = vunpack.c.l.b16 %v5273
        %v5329 = vunpack.c.l.b16 %v5274
        %v5330 = vunpack.c.l.b16 %v5275
        %v5331 = vunpack.c.l.b16 %v5276
        %v5332 = vunpack.c.l.b16 %v5277
        %v5333 = vunpack.c.l.b16 %v5278
        %v5334 = vunpack.c.l.b16 %v5279
        %v5335 = vunpack.c.l.b16 %v5280
        %v5336 = vpack.c.b16 %v5321, %v5320
        %v5337 = vpack.c.b16 %v5323, %v5322
        %v5338 = vpack.c.b16 %v5325, %v5324
        %v5339 = vpack.c.b16 %v5327, %v5326
        %v5340 = vpack.c.b16 %v5329, %v5328
        %v5341 = vpack.c.b16 %v5331, %v5330
        %v5342 = vpack.c.b16 %v5333, %v5332
        %v5343 = vpack.c.b16 %v5335, %v5334
        %5352 = vmatprep.subr.bf16.mxu0 0
        %5353 = vmatpush1.bf16.msra.mxu0 %v5343
        %5354 = vmatprep.subr.bf16.mxu0 0
        %5355 = vmatpush1.bf16.msra.mxu0 %v5342
        %5356 = vmatprep.subr.bf16.mxu0 0
        %5357 = vmatpush1.bf16.msra.mxu0 %v5341
        %5358 = vmatprep.subr.bf16.mxu0 0
        %5359 = vmatpush1.bf16.msra.mxu0 %v5340
        %5360 = vmatprep.subr.bf16.mxu0 0
        %5361 = vmatpush1.bf16.msra.mxu0 %v5339
        %5362 = vmatprep.subr.bf16.mxu0 0
        %5363 = vmatpush1.bf16.msra.mxu0 %v5338
        %5364 = vmatprep.subr.bf16.mxu0 0
        %5365 = vmatpush1.bf16.msra.mxu0 %v5337
        %5366 = vmatprep.subr.bf16.mxu0 0
        %5367 = vmatpush1.bf16.msra.mxu0 %v5336
        %5368 = vmatprep.subr.bf16.mxu0 0
        %5369 = vmatpush2.bf16.msra.mxu0 0
        %5370 = vmatprep.subr.bf16.mxu0 0
        %5371 = vmatpush2.bf16.msra.mxu0 0
        %5372 = vmatprep.subr.bf16.mxu0 0
        %5373 = vmatpush2.bf16.msra.mxu0 0
        %5374 = vmatprep.subr.bf16.mxu0 0
        %5375 = vmatpush2.bf16.msra.mxu0 0
        %5376 = vmatprep.subr.bf16.mxu0 0
        %5377 = vmatpush2.bf16.msra.mxu0 0
        %5378 = vmatprep.subr.bf16.mxu0 0
        %5379 = vmatpush2.bf16.msra.mxu0 0
        %5380 = vmatprep.subr.bf16.mxu0 0
        %5381 = vmatpush2.bf16.msra.mxu0 0
        %5382 = vmatprep.subr.bf16.mxu0 0
        %5383 = vmatpush2.bf16.msra.mxu0 0
        %5384 = vmatprep.mubr.bf16.mxu0 0
        %5385 = vmatmul.mubr.bf16.gmra.mxu0 %v5301
        %v5386 = vpop.f32.mrf.mxu0
        %v5387 = vadd.f32 0.0, %v5386
        %v5388 = vpop.f32.mrf.mxu0
        %v5389 = vpop.f32.mrf.mxu0
        %v5390 = vadd.f32 0.0, %v5389
        %v5391 = vpop.f32.mrf.mxu0
        %5392 = vmatprep.mubr.bf16.mxu0 0
        %5393 = vmatmul.mubr.bf16.gmra.mxu0 %v5300
        %v5394 = vpop.f32.mrf.mxu0
        %v5395 = vadd.f32 0.0, %v5394
        %v5396 = vpop.f32.mrf.mxu0
        %v5397 = vpop.f32.mrf.mxu0
        %v5398 = vpop.f32.mrf.mxu0
        %5399 = vdwg.mxu0
        %v5400 = vadd.f32 %v5260, %v5387
        %v5401 = vadd.f32 %v5261, %v5390
        %v5402 = vadd.f32 %v5262, %v5395
        %s5403 = scalar_lea.vmem %s7, 320
        %v5404 = vld [vmem:[%s5403] sm:$0xf]
        %v5405 = vld [vmem:[%s5403 + $0x4] sm:$0xf]
        %v5406 = vld [vmem:[%s5403 + $0x8] sm:$0xf]
        %v5407 = vld [vmem:[%s5403 + $0xc] sm:$0xf]
        %v5408 = vld [vmem:[%s5403 + $0x10] sm:$0xf]
        %v5409 = vld [vmem:[%s5403 + $0x14] sm:$0xf]
        %v5410 = vld [vmem:[%s5403 + $0x18] sm:$0xf]
        %v5411 = vld [vmem:[%s5403 + $0x1c] sm:$0xf]
        %v5412 = vld [vmem:[%s5403 + $0x20] sm:$0xf]
        %v5413 = vld [vmem:[%s5403 + $0x24] sm:$0xf]
        %v5414 = vld [vmem:[%s5403 + $0x28] sm:$0xf]
        %v5415 = vld [vmem:[%s5403 + $0x2c] sm:$0xf]
        %v5416 = vld [vmem:[%s5403 + $0x30] sm:$0xf]
        %v5417 = vld [vmem:[%s5403 + $0x34] sm:$0xf]
        %v5418 = vld [vmem:[%s5403 + $0x38] sm:$0xf]
        %v5419 = vld [vmem:[%s5403 + $0x3c] sm:$0xf]
        %v5420 = vpack.c.b16 %v4793, %v4792
        %v5421 = vpack.c.b16 %v5282, %v5282
        %v5440 = vunpack.c.l.b16 %v5404
        %v5441 = vunpack.c.l.b16 %v5405
        %v5442 = vunpack.c.l.b16 %v5406
        %v5443 = vunpack.c.l.b16 %v5407
        %v5444 = vunpack.c.l.b16 %v5408
        %v5445 = vunpack.c.l.b16 %v5409
        %v5446 = vunpack.c.l.b16 %v5410
        %v5447 = vunpack.c.l.b16 %v5411
        %v5448 = vunpack.c.l.b16 %v5412
        %v5449 = vunpack.c.l.b16 %v5413
        %v5450 = vunpack.c.l.b16 %v5414
        %v5451 = vunpack.c.l.b16 %v5415
        %v5452 = vunpack.c.l.b16 %v5416
        %v5453 = vunpack.c.l.b16 %v5417
        %v5454 = vunpack.c.l.b16 %v5418
        %v5455 = vunpack.c.l.b16 %v5419
        %v5456 = vpack.c.b16 %v5441, %v5440
        %v5457 = vpack.c.b16 %v5443, %v5442
        %v5458 = vpack.c.b16 %v5445, %v5444
        %v5459 = vpack.c.b16 %v5447, %v5446
        %v5460 = vpack.c.b16 %v5449, %v5448
        %v5461 = vpack.c.b16 %v5451, %v5450
        %v5462 = vpack.c.b16 %v5453, %v5452
        %v5463 = vpack.c.b16 %v5455, %v5454
        %5472 = vmatprep.subr.bf16.mxu0 0
        %5473 = vmatpush1.bf16.msra.mxu0 %v5463
        %5474 = vmatprep.subr.bf16.mxu0 0
        %5475 = vmatpush1.bf16.msra.mxu0 %v5462
        %5476 = vmatprep.subr.bf16.mxu0 0
        %5477 = vmatpush1.bf16.msra.mxu0 %v5461
        %5478 = vmatprep.subr.bf16.mxu0 0
        %5479 = vmatpush1.bf16.msra.mxu0 %v5460
        %5480 = vmatprep.subr.bf16.mxu0 0
        %5481 = vmatpush1.bf16.msra.mxu0 %v5459
        %5482 = vmatprep.subr.bf16.mxu0 0
        %5483 = vmatpush1.bf16.msra.mxu0 %v5458
        %5484 = vmatprep.subr.bf16.mxu0 0
        %5485 = vmatpush1.bf16.msra.mxu0 %v5457
        %5486 = vmatprep.subr.bf16.mxu0 0
        %5487 = vmatpush1.bf16.msra.mxu0 %v5456
        %5488 = vmatprep.subr.bf16.mxu0 0
        %5489 = vmatpush2.bf16.msra.mxu0 0
        %5490 = vmatprep.subr.bf16.mxu0 0
        %5491 = vmatpush2.bf16.msra.mxu0 0
        %5492 = vmatprep.subr.bf16.mxu0 0
        %5493 = vmatpush2.bf16.msra.mxu0 0
        %5494 = vmatprep.subr.bf16.mxu0 0
        %5495 = vmatpush2.bf16.msra.mxu0 0
        %5496 = vmatprep.subr.bf16.mxu0 0
        %5497 = vmatpush2.bf16.msra.mxu0 0
        %5498 = vmatprep.subr.bf16.mxu0 0
        %5499 = vmatpush2.bf16.msra.mxu0 0
        %5500 = vmatprep.subr.bf16.mxu0 0
        %5501 = vmatpush2.bf16.msra.mxu0 0
        %5502 = vmatprep.subr.bf16.mxu0 0
        %5503 = vmatpush2.bf16.msra.mxu0 0
        %5504 = vmatprep.mubr.bf16.mxu0 0
        %5505 = vmatmul.mubr.bf16.gmra.mxu0 %v5420
        %v5506 = vpop.f32.mrf.mxu0
        %v5507 = vadd.f32 0.0, %v5506
        %v5508 = vpop.f32.mrf.mxu0
        %v5509 = vpop.f32.mrf.mxu0
        %v5510 = vadd.f32 0.0, %v5509
        %v5511 = vpop.f32.mrf.mxu0
        %5512 = vmatprep.mubr.bf16.mxu0 0
        %5513 = vmatmul.mubr.bf16.gmra.mxu0 %v5421
        %v5514 = vpop.f32.mrf.mxu0
        %v5515 = vadd.f32 0.0, %v5514
        %v5516 = vpop.f32.mrf.mxu0
        %v5517 = vpop.f32.mrf.mxu0
        %v5518 = vpop.f32.mrf.mxu0
        %5519 = vdwg.mxu0
        %v5520 = vadd.f32 %v5400, %v5507
        %v5521 = vadd.f32 %v5401, %v5510
        %v5522 = vadd.f32 %v5402, %v5515
        %v5523 = vld [vmem:[#allocation7 + $0x4] sm:$0xc]
        %v5524 = vld [vmem:[#allocation7 + $0x8] sm:$0xf]
        %v5525 = vld [vmem:[#allocation7 + $0xc] sm:$0xf]
        %v5526 = vld [vmem:[#allocation7 + $0x10] sm:$0x3]
        %s5527 = scalar_lea.vmem %s7, 384
        %v5528 = vld [vmem:[%s5527] sm:$0xf]
        %v5529 = vld [vmem:[%s5527 + $0x4] sm:$0xf]
        %v5530 = vld [vmem:[%s5527 + $0x8] sm:$0xf]
        %v5531 = vld [vmem:[%s5527 + $0xc] sm:$0xf]
        %v5532 = vld [vmem:[%s5527 + $0x10] sm:$0xf]
        %v5533 = vld [vmem:[%s5527 + $0x14] sm:$0xf]
        %v5534 = vld [vmem:[%s5527 + $0x18] sm:$0xf]
        %v5535 = vld [vmem:[%s5527 + $0x1c] sm:$0xf]
        %v5536 = vld [vmem:[%s5527 + $0x20] sm:$0xf]
        %v5537 = vld [vmem:[%s5527 + $0x24] sm:$0xf]
        %v5538 = vld [vmem:[%s5527 + $0x28] sm:$0xf]
        %v5539 = vld [vmem:[%s5527 + $0x2c] sm:$0xf]
        %v5540 = vld [vmem:[%s5527 + $0x30] sm:$0xf]
        %v5541 = vld [vmem:[%s5527 + $0x34] sm:$0xf]
        %v5542 = vld [vmem:[%s5527 + $0x38] sm:$0xf]
        %v5543 = vld [vmem:[%s5527 + $0x3c] sm:$0xf]
        %v5548 = vunpack.c.l.b16 %v5523
        %v5549 = vunpack.c.l.b16 %v5524
        %v5550 = vunpack.c.l.b16 %v5525
        %v5551 = vunpack.c.l.b16 %v5526
        %v5552 = vpack.c.b16 %v5549, %v5548
        %v5553 = vpack.c.b16 %v5551, %v5550
        %v5554 = vrot.slane %v5552, 2
        %v5555 = vrot.slane %v5553, 2
        %v5556 = vsel %vm1789, %v5554, %v5555
        %v5575 = vunpack.c.l.b16 %v5528
        %v5576 = vunpack.c.l.b16 %v5529
        %v5577 = vunpack.c.l.b16 %v5530
        %v5578 = vunpack.c.l.b16 %v5531
        %v5579 = vunpack.c.l.b16 %v5532
        %v5580 = vunpack.c.l.b16 %v5533
        %v5581 = vunpack.c.l.b16 %v5534
        %v5582 = vunpack.c.l.b16 %v5535
        %v5583 = vunpack.c.l.b16 %v5536
        %v5584 = vunpack.c.l.b16 %v5537
        %v5585 = vunpack.c.l.b16 %v5538
        %v5586 = vunpack.c.l.b16 %v5539
        %v5587 = vunpack.c.l.b16 %v5540
        %v5588 = vunpack.c.l.b16 %v5541
        %v5589 = vunpack.c.l.b16 %v5542
        %v5590 = vunpack.c.l.b16 %v5543
        %v5591 = vpack.c.b16 %v5576, %v5575
        %v5592 = vpack.c.b16 %v5578, %v5577
        %v5593 = vpack.c.b16 %v5580, %v5579
        %v5594 = vpack.c.b16 %v5582, %v5581
        %v5595 = vpack.c.b16 %v5584, %v5583
        %v5596 = vpack.c.b16 %v5586, %v5585
        %v5597 = vpack.c.b16 %v5588, %v5587
        %v5598 = vpack.c.b16 %v5590, %v5589
        %5607 = vmatprep.subr.bf16.mxu0 0
        %5608 = vmatpush1.bf16.msra.mxu0 %v5598
        %5609 = vmatprep.subr.bf16.mxu0 0
        %5610 = vmatpush1.bf16.msra.mxu0 %v5597
        %5611 = vmatprep.subr.bf16.mxu0 0
        %5612 = vmatpush1.bf16.msra.mxu0 %v5596
        %5613 = vmatprep.subr.bf16.mxu0 0
        %5614 = vmatpush1.bf16.msra.mxu0 %v5595
        %5615 = vmatprep.subr.bf16.mxu0 0
        %5616 = vmatpush1.bf16.msra.mxu0 %v5594
        %5617 = vmatprep.subr.bf16.mxu0 0
        %5618 = vmatpush1.bf16.msra.mxu0 %v5593
        %5619 = vmatprep.subr.bf16.mxu0 0
        %5620 = vmatpush1.bf16.msra.mxu0 %v5592
        %5621 = vmatprep.subr.bf16.mxu0 0
        %5622 = vmatpush1.bf16.msra.mxu0 %v5591
        %5623 = vmatprep.subr.bf16.mxu0 0
        %5624 = vmatpush2.bf16.msra.mxu0 0
        %5625 = vmatprep.subr.bf16.mxu0 0
        %5626 = vmatpush2.bf16.msra.mxu0 0
        %5627 = vmatprep.subr.bf16.mxu0 0
        %5628 = vmatpush2.bf16.msra.mxu0 0
        %5629 = vmatprep.subr.bf16.mxu0 0
        %5630 = vmatpush2.bf16.msra.mxu0 0
        %5631 = vmatprep.subr.bf16.mxu0 0
        %5632 = vmatpush2.bf16.msra.mxu0 0
        %5633 = vmatprep.subr.bf16.mxu0 0
        %5634 = vmatpush2.bf16.msra.mxu0 0
        %5635 = vmatprep.subr.bf16.mxu0 0
        %5636 = vmatpush2.bf16.msra.mxu0 0
        %5637 = vmatprep.subr.bf16.mxu0 0
        %5638 = vmatpush2.bf16.msra.mxu0 0
        %5639 = vmatprep.mubr.bf16.mxu0 0
        %5640 = vmatmul.mubr.bf16.gmra.mxu0 %v5556
        %v5641 = vpop.f32.mrf.mxu0
        %v5642 = vadd.f32 0.0, %v5641
        %v5643 = vpop.f32.mrf.mxu0
        %v5644 = vpop.f32.mrf.mxu0
        %v5645 = vadd.f32 0.0, %v5644
        %v5646 = vpop.f32.mrf.mxu0
        %5647 = vmatprep.mubr.bf16.mxu0 0
        %5648 = vmatmul.mubr.bf16.gmra.mxu0 %v5555
        %v5649 = vpop.f32.mrf.mxu0
        %v5650 = vadd.f32 0.0, %v5649
        %v5651 = vpop.f32.mrf.mxu0
        %v5652 = vpop.f32.mrf.mxu0
        %v5653 = vpop.f32.mrf.mxu0
        %5654 = vdwg.mxu0
        %v5655 = vadd.f32 %v5520, %v5642
        %v5656 = vadd.f32 %v5521, %v5645
        %v5657 = vadd.f32 %v5522, %v5650
        %v5658 = vld [vmem:[#allocation7 + $0x10] sm:$0x7]
        %s5659 = scalar_lea.vmem %s7, 448
        %v5660 = vld [vmem:[%s5659] sm:$0xf]
        %v5661 = vld [vmem:[%s5659 + $0x4] sm:$0xf]
        %v5662 = vld [vmem:[%s5659 + $0x8] sm:$0xf]
        %v5663 = vld [vmem:[%s5659 + $0xc] sm:$0xf]
        %v5664 = vld [vmem:[%s5659 + $0x10] sm:$0xf]
        %v5665 = vld [vmem:[%s5659 + $0x14] sm:$0xf]
        %v5666 = vld [vmem:[%s5659 + $0x18] sm:$0xf]
        %v5667 = vld [vmem:[%s5659 + $0x1c] sm:$0xf]
        %v5668 = vld [vmem:[%s5659 + $0x20] sm:$0xf]
        %v5669 = vld [vmem:[%s5659 + $0x24] sm:$0xf]
        %v5670 = vld [vmem:[%s5659 + $0x28] sm:$0xf]
        %v5671 = vld [vmem:[%s5659 + $0x2c] sm:$0xf]
        %v5672 = vld [vmem:[%s5659 + $0x30] sm:$0xf]
        %v5673 = vld [vmem:[%s5659 + $0x34] sm:$0xf]
        %v5674 = vld [vmem:[%s5659 + $0x38] sm:$0xf]
        %v5675 = vld [vmem:[%s5659 + $0x3c] sm:$0xf]
        %v5677 = vunpack.c.l.b16 %v5658
        %v5678 = vpack.c.b16 %v5677, %v5550
        %v5680 = vshrl.u32 %v5552, 16
        %v5682 = vrot.slane %v5680, 2
        %v5683 = vshll.u32 %v5552, 16
        %v5685 = vrot.slane %v5683, 3
        %v5686 = vor.u32 %v5682, %v5685
        %v5688 = vshrl.u32 %v5678, 16
        %v5690 = vrot.slane %v5688, 2
        %v5691 = vshll.u32 %v5678, 16
        %v5693 = vrot.slane %v5691, 3
        %v5694 = vor.u32 %v5690, %v5693
        %v5695 = vsel %vm1993, %v5686, %v5694
        %v5714 = vunpack.c.l.b16 %v5660
        %v5715 = vunpack.c.l.b16 %v5661
        %v5716 = vunpack.c.l.b16 %v5662
        %v5717 = vunpack.c.l.b16 %v5663
        %v5718 = vunpack.c.l.b16 %v5664
        %v5719 = vunpack.c.l.b16 %v5665
        %v5720 = vunpack.c.l.b16 %v5666
        %v5721 = vunpack.c.l.b16 %v5667
        %v5722 = vunpack.c.l.b16 %v5668
        %v5723 = vunpack.c.l.b16 %v5669
        %v5724 = vunpack.c.l.b16 %v5670
        %v5725 = vunpack.c.l.b16 %v5671
        %v5726 = vunpack.c.l.b16 %v5672
        %v5727 = vunpack.c.l.b16 %v5673
        %v5728 = vunpack.c.l.b16 %v5674
        %v5729 = vunpack.c.l.b16 %v5675
        %v5730 = vpack.c.b16 %v5715, %v5714
        %v5731 = vpack.c.b16 %v5717, %v5716
        %v5732 = vpack.c.b16 %v5719, %v5718
        %v5733 = vpack.c.b16 %v5721, %v5720
        %v5734 = vpack.c.b16 %v5723, %v5722
        %v5735 = vpack.c.b16 %v5725, %v5724
        %v5736 = vpack.c.b16 %v5727, %v5726
        %v5737 = vpack.c.b16 %v5729, %v5728
        %5746 = vmatprep.subr.bf16.mxu0 0
        %5747 = vmatpush1.bf16.msra.mxu0 %v5737
        %5748 = vmatprep.subr.bf16.mxu0 0
        %5749 = vmatpush1.bf16.msra.mxu0 %v5736
        %5750 = vmatprep.subr.bf16.mxu0 0
        %5751 = vmatpush1.bf16.msra.mxu0 %v5735
        %5752 = vmatprep.subr.bf16.mxu0 0
        %5753 = vmatpush1.bf16.msra.mxu0 %v5734
        %5754 = vmatprep.subr.bf16.mxu0 0
        %5755 = vmatpush1.bf16.msra.mxu0 %v5733
        %5756 = vmatprep.subr.bf16.mxu0 0
        %5757 = vmatpush1.bf16.msra.mxu0 %v5732
        %5758 = vmatprep.subr.bf16.mxu0 0
        %5759 = vmatpush1.bf16.msra.mxu0 %v5731
        %5760 = vmatprep.subr.bf16.mxu0 0
        %5761 = vmatpush1.bf16.msra.mxu0 %v5730
        %5762 = vmatprep.subr.bf16.mxu0 0
        %5763 = vmatpush2.bf16.msra.mxu0 0
        %5764 = vmatprep.subr.bf16.mxu0 0
        %5765 = vmatpush2.bf16.msra.mxu0 0
        %5766 = vmatprep.subr.bf16.mxu0 0
        %5767 = vmatpush2.bf16.msra.mxu0 0
        %5768 = vmatprep.subr.bf16.mxu0 0
        %5769 = vmatpush2.bf16.msra.mxu0 0
        %5770 = vmatprep.subr.bf16.mxu0 0
        %5771 = vmatpush2.bf16.msra.mxu0 0
        %5772 = vmatprep.subr.bf16.mxu0 0
        %5773 = vmatpush2.bf16.msra.mxu0 0
        %5774 = vmatprep.subr.bf16.mxu0 0
        %5775 = vmatpush2.bf16.msra.mxu0 0
        %5776 = vmatprep.subr.bf16.mxu0 0
        %5777 = vmatpush2.bf16.msra.mxu0 0
        %5778 = vmatprep.mubr.bf16.mxu0 0
        %5779 = vmatmul.mubr.bf16.gmra.mxu0 %v5695
        %v5780 = vpop.f32.mrf.mxu0
        %v5781 = vadd.f32 0.0, %v5780
        %v5782 = vpop.f32.mrf.mxu0
        %v5783 = vpop.f32.mrf.mxu0
        %v5784 = vadd.f32 0.0, %v5783
        %v5785 = vpop.f32.mrf.mxu0
        %5786 = vmatprep.mubr.bf16.mxu0 0
        %5787 = vmatmul.mubr.bf16.gmra.mxu0 %v5694
        %v5788 = vpop.f32.mrf.mxu0
        %v5789 = vadd.f32 0.0, %v5788
        %v5790 = vpop.f32.mrf.mxu0
        %v5791 = vpop.f32.mrf.mxu0
        %v5792 = vpop.f32.mrf.mxu0
        %5793 = vdwg.mxu0
        %v5794 = vadd.f32 %v5655, %v5781
        %v5795 = vadd.f32 %v5656, %v5784
        %v5796 = vadd.f32 %v5657, %v5789
        %v5797 = vld [vmem:[#allocation7 + $0x4] sm:$0x8]
        %s5798 = scalar_lea.vmem %s7, 512
        %v5799 = vld [vmem:[%s5798] sm:$0xf]
        %v5800 = vld [vmem:[%s5798 + $0x4] sm:$0xf]
        %v5801 = vld [vmem:[%s5798 + $0x8] sm:$0xf]
        %v5802 = vld [vmem:[%s5798 + $0xc] sm:$0xf]
        %v5803 = vld [vmem:[%s5798 + $0x10] sm:$0xf]
        %v5804 = vld [vmem:[%s5798 + $0x14] sm:$0xf]
        %v5805 = vld [vmem:[%s5798 + $0x18] sm:$0xf]
        %v5806 = vld [vmem:[%s5798 + $0x1c] sm:$0xf]
        %v5807 = vld [vmem:[%s5798 + $0x20] sm:$0xf]
        %v5808 = vld [vmem:[%s5798 + $0x24] sm:$0xf]
        %v5809 = vld [vmem:[%s5798 + $0x28] sm:$0xf]
        %v5810 = vld [vmem:[%s5798 + $0x2c] sm:$0xf]
        %v5811 = vld [vmem:[%s5798 + $0x30] sm:$0xf]
        %v5812 = vld [vmem:[%s5798 + $0x34] sm:$0xf]
        %v5813 = vld [vmem:[%s5798 + $0x38] sm:$0xf]
        %v5814 = vld [vmem:[%s5798 + $0x3c] sm:$0xf]
        %v5816 = vunpack.c.l.b16 %v5797
        %v5817 = vpack.c.b16 %v5549, %v5816
        %v5818 = vrot.slane %v5817, 3
        %v5819 = vrot.slane %v5678, 3
        %v5820 = vsel %vm2253, %v5818, %v5819
        %v5839 = vunpack.c.l.b16 %v5799
        %v5840 = vunpack.c.l.b16 %v5800
        %v5841 = vunpack.c.l.b16 %v5801
        %v5842 = vunpack.c.l.b16 %v5802
        %v5843 = vunpack.c.l.b16 %v5803
        %v5844 = vunpack.c.l.b16 %v5804
        %v5845 = vunpack.c.l.b16 %v5805
        %v5846 = vunpack.c.l.b16 %v5806
        %v5847 = vunpack.c.l.b16 %v5807
        %v5848 = vunpack.c.l.b16 %v5808
        %v5849 = vunpack.c.l.b16 %v5809
        %v5850 = vunpack.c.l.b16 %v5810
        %v5851 = vunpack.c.l.b16 %v5811
        %v5852 = vunpack.c.l.b16 %v5812
        %v5853 = vunpack.c.l.b16 %v5813
        %v5854 = vunpack.c.l.b16 %v5814
        %v5855 = vpack.c.b16 %v5840, %v5839
        %v5856 = vpack.c.b16 %v5842, %v5841
        %v5857 = vpack.c.b16 %v5844, %v5843
        %v5858 = vpack.c.b16 %v5846, %v5845
        %v5859 = vpack.c.b16 %v5848, %v5847
        %v5860 = vpack.c.b16 %v5850, %v5849
        %v5861 = vpack.c.b16 %v5852, %v5851
        %v5862 = vpack.c.b16 %v5854, %v5853
        %5871 = vmatprep.subr.bf16.mxu0 0
        %5872 = vmatpush1.bf16.msra.mxu0 %v5862
        %5873 = vmatprep.subr.bf16.mxu0 0
        %5874 = vmatpush1.bf16.msra.mxu0 %v5861
        %5875 = vmatprep.subr.bf16.mxu0 0
        %5876 = vmatpush1.bf16.msra.mxu0 %v5860
        %5877 = vmatprep.subr.bf16.mxu0 0
        %5878 = vmatpush1.bf16.msra.mxu0 %v5859
        %5879 = vmatprep.subr.bf16.mxu0 0
        %5880 = vmatpush1.bf16.msra.mxu0 %v5858
        %5881 = vmatprep.subr.bf16.mxu0 0
        %5882 = vmatpush1.bf16.msra.mxu0 %v5857
        %5883 = vmatprep.subr.bf16.mxu0 0
        %5884 = vmatpush1.bf16.msra.mxu0 %v5856
        %5885 = vmatprep.subr.bf16.mxu0 0
        %5886 = vmatpush1.bf16.msra.mxu0 %v5855
        %5887 = vmatprep.subr.bf16.mxu0 0
        %5888 = vmatpush2.bf16.msra.mxu0 0
        %5889 = vmatprep.subr.bf16.mxu0 0
        %5890 = vmatpush2.bf16.msra.mxu0 0
        %5891 = vmatprep.subr.bf16.mxu0 0
        %5892 = vmatpush2.bf16.msra.mxu0 0
        %5893 = vmatprep.subr.bf16.mxu0 0
        %5894 = vmatpush2.bf16.msra.mxu0 0
        %5895 = vmatprep.subr.bf16.mxu0 0
        %5896 = vmatpush2.bf16.msra.mxu0 0
        %5897 = vmatprep.subr.bf16.mxu0 0
        %5898 = vmatpush2.bf16.msra.mxu0 0
        %5899 = vmatprep.subr.bf16.mxu0 0
        %5900 = vmatpush2.bf16.msra.mxu0 0
        %5901 = vmatprep.subr.bf16.mxu0 0
        %5902 = vmatpush2.bf16.msra.mxu0 0
        %5903 = vmatprep.mubr.bf16.mxu0 0
        %5904 = vmatmul.mubr.bf16.gmra.mxu0 %v5820
        %v5905 = vpop.f32.mrf.mxu0
        %v5906 = vadd.f32 0.0, %v5905
        %v5907 = vpop.f32.mrf.mxu0
        %v5908 = vpop.f32.mrf.mxu0
        %v5909 = vadd.f32 0.0, %v5908
        %v5910 = vpop.f32.mrf.mxu0
        %5911 = vmatprep.mubr.bf16.mxu0 0
        %5912 = vmatmul.mubr.bf16.gmra.mxu0 %v5819
        %v5913 = vpop.f32.mrf.mxu0
        %v5914 = vadd.f32 0.0, %v5913
        %v5915 = vpop.f32.mrf.mxu0
        %v5916 = vpop.f32.mrf.mxu0
        %v5917 = vpop.f32.mrf.mxu0
        %5918 = vdwg.mxu0
        %v5919 = vadd.f32 %v5794, %v5906
        %v5920 = vadd.f32 %v5795, %v5909
        %v5921 = vadd.f32 %v5796, %v5914
        %v5922 = vld [vmem:[%s8] sm:$0x1]
        %v5924 = vlaneseq
        %v5925 = vshrl.u32 %v5924, 7
        %v5926 = vsub.s32 0, %v5925
        %v5927 = vrot.slane %v5922, %v5926
        %v5929 = vadd.f32 %v5919, %v5927
        %v5930 = vadd.f32 %v5920, %v5927
        %v5931 = vadd.f32 %v5921, %v5927
        %v5932 = vmax.f32 %v5929, 0.0
        %v5933 = vmax.f32 %v5930, 0.0
        %v5934 = vmax.f32 %v5931, 0.0
        %5935 = vst [vmem:[#allocation8] sm:$0xff] %v5932
        %5936 = vst [vmem:[#allocation8 + $0x8] sm:$0xff] %v5933
        %5937 = vst [vmem:[#allocation8 + $0x10] sm:$0xff] %v5934
        %v5938 = vld [vmem:[#allocation8 + $0x1] sm:$0x1]
        %v5939 = vld [vmem:[#allocation8 + $0x2] sm:$0x1]
        %v5940 = vmax.f32 %v5938, %v5939
        %v5941 = vld [vmem:[#allocation8 + $0x7] sm:$0x1]
        %v5942 = vld [vmem:[#allocation8 + $0x8] sm:$0x1]
        %v5943 = vmax.f32 %v5941, %v5942
        %v5944 = vmax.f32 %v5940, %v5943
        %5945 = vst [vmem:[#allocation9] sm:$0x1] %v5944
        %v5946 = vld [vmem:[#allocation9] sm:$0x1]
        %v5947 = vpack.c.bf16 %v5946, %v5946
        %v5948 = vld [vmem:[%s9] sm:$0xff]
        %v5949 = vld [vmem:[%s9 + $0x8] sm:$0xff]
        %v5950 = vld [vmem:[%s9 + $0x10] sm:$0xff]
        %v5951 = vld [vmem:[%s9 + $0x18] sm:$0xff]
        %v5952 = vld [vmem:[%s9 + $0x20] sm:$0xff]
        %v5953 = vld [vmem:[%s9 + $0x28] sm:$0xff]
        %v5954 = vld [vmem:[%s9 + $0x30] sm:$0xff]
        %v5955 = vld [vmem:[%s9 + $0x38] sm:$0xff]
        %v5956 = vld [vmem:[%s9 + $0x40] sm:$0xff]
        %v5957 = vld [vmem:[%s9 + $0x48] sm:$0xff]
        %v5958 = vld [vmem:[%s9 + $0x50] sm:$0xff]
        %v5959 = vld [vmem:[%s9 + $0x58] sm:$0xff]
        %v5960 = vld [vmem:[%s9 + $0x60] sm:$0xff]
        %v5961 = vld [vmem:[%s9 + $0x68] sm:$0xff]
        %v5962 = vld [vmem:[%s9 + $0x70] sm:$0xff]
        %v5963 = vld [vmem:[%s9 + $0x78] sm:$0xff]
        %v5964 = vld [vmem:[%s9 + $0x80] sm:$0xff]
        %v5965 = vld [vmem:[%s9 + $0x88] sm:$0xff]
        %v5966 = vld [vmem:[%s9 + $0x90] sm:$0xff]
        %v5967 = vld [vmem:[%s9 + $0x98] sm:$0xff]
        %v5968 = vld [vmem:[%s9 + $0xa0] sm:$0xff]
        %v5969 = vld [vmem:[%s9 + $0xa8] sm:$0xff]
        %v5970 = vld [vmem:[%s9 + $0xb0] sm:$0xff]
        %v5971 = vld [vmem:[%s9 + $0xb8] sm:$0xff]
        %v5972 = vld [vmem:[%s9 + $0xc0] sm:$0xff]
        %v5973 = vld [vmem:[%s9 + $0xc8] sm:$0xff]
        %v5974 = vld [vmem:[%s9 + $0xd0] sm:$0xff]
        %v5975 = vld [vmem:[%s9 + $0xd8] sm:$0xff]
        %v5976 = vld [vmem:[%s9 + $0xe0] sm:$0xff]
        %v5977 = vld [vmem:[%s9 + $0xe8] sm:$0xff]
        %v5978 = vld [vmem:[%s9 + $0xf0] sm:$0xff]
        %v5979 = vld [vmem:[%s9 + $0xf8] sm:$0xff]
        %v5980 = vld [vmem:[%s10] sm:$0xf]
        %v6013 = vunpack.c.l.b16 %v5948
        %v6014 = vunpack.c.h.b16 %v5948
        %v6015 = vunpack.c.l.b16 %v5949
        %v6016 = vunpack.c.h.b16 %v5949
        %v6017 = vunpack.c.l.b16 %v5950
        %v6018 = vunpack.c.h.b16 %v5950
        %v6019 = vunpack.c.l.b16 %v5951
        %v6020 = vunpack.c.h.b16 %v5951
        %v6021 = vunpack.c.l.b16 %v5952
        %v6022 = vunpack.c.h.b16 %v5952
        %v6023 = vunpack.c.l.b16 %v5953
        %v6024 = vunpack.c.h.b16 %v5953
        %v6025 = vunpack.c.l.b16 %v5954
        %v6026 = vunpack.c.h.b16 %v5954
        %v6027 = vunpack.c.l.b16 %v5955
        %v6028 = vunpack.c.h.b16 %v5955
        %v6029 = vunpack.c.l.b16 %v5956
        %v6030 = vunpack.c.h.b16 %v5956
        %v6031 = vunpack.c.l.b16 %v5957
        %v6032 = vunpack.c.h.b16 %v5957
        %v6033 = vunpack.c.l.b16 %v5958
        %v6034 = vunpack.c.h.b16 %v5958
        %v6035 = vunpack.c.l.b16 %v5959
        %v6036 = vunpack.c.h.b16 %v5959
        %v6037 = vunpack.c.l.b16 %v5960
        %v6038 = vunpack.c.h.b16 %v5960
        %v6039 = vunpack.c.l.b16 %v5961
        %v6040 = vunpack.c.h.b16 %v5961
        %v6041 = vunpack.c.l.b16 %v5962
        %v6042 = vunpack.c.h.b16 %v5962
        %v6043 = vunpack.c.l.b16 %v5963
        %v6044 = vunpack.c.h.b16 %v5963
        %v6045 = vunpack.c.l.b16 %v5964
        %v6046 = vunpack.c.h.b16 %v5964
        %v6047 = vunpack.c.l.b16 %v5965
        %v6048 = vunpack.c.h.b16 %v5965
        %v6049 = vunpack.c.l.b16 %v5966
        %v6050 = vunpack.c.h.b16 %v5966
        %v6051 = vunpack.c.l.b16 %v5967
        %v6052 = vunpack.c.h.b16 %v5967
        %v6053 = vunpack.c.l.b16 %v5968
        %v6054 = vunpack.c.h.b16 %v5968
        %v6055 = vunpack.c.l.b16 %v5969
        %v6056 = vunpack.c.h.b16 %v5969
        %v6057 = vunpack.c.l.b16 %v5970
        %v6058 = vunpack.c.h.b16 %v5970
        %v6059 = vunpack.c.l.b16 %v5971
        %v6060 = vunpack.c.h.b16 %v5971
        %v6061 = vunpack.c.l.b16 %v5972
        %v6062 = vunpack.c.h.b16 %v5972
        %v6063 = vunpack.c.l.b16 %v5973
        %v6064 = vunpack.c.h.b16 %v5973
        %v6065 = vunpack.c.l.b16 %v5974
        %v6066 = vunpack.c.h.b16 %v5974
        %v6067 = vunpack.c.l.b16 %v5975
        %v6068 = vunpack.c.h.b16 %v5975
        %v6069 = vunpack.c.l.b16 %v5976
        %v6070 = vunpack.c.h.b16 %v5976
        %v6071 = vunpack.c.l.b16 %v5977
        %v6072 = vunpack.c.h.b16 %v5977
        %v6073 = vunpack.c.l.b16 %v5978
        %v6074 = vunpack.c.h.b16 %v5978
        %v6075 = vunpack.c.l.b16 %v5979
        %v6076 = vunpack.c.h.b16 %v5979
        %v6077 = vpack.c.b16 %v6017, %v6013
        %v6078 = vpack.c.b16 %v6018, %v6014
        %v6079 = vpack.c.b16 %v6019, %v6015
        %v6080 = vpack.c.b16 %v6020, %v6016
        %v6081 = vpack.c.b16 %v6025, %v6021
        %v6082 = vpack.c.b16 %v6026, %v6022
        %v6083 = vpack.c.b16 %v6027, %v6023
        %v6084 = vpack.c.b16 %v6028, %v6024
        %v6085 = vpack.c.b16 %v6033, %v6029
        %v6086 = vpack.c.b16 %v6034, %v6030
        %v6087 = vpack.c.b16 %v6035, %v6031
        %v6088 = vpack.c.b16 %v6036, %v6032
        %v6089 = vpack.c.b16 %v6041, %v6037
        %v6090 = vpack.c.b16 %v6042, %v6038
        %v6091 = vpack.c.b16 %v6043, %v6039
        %v6092 = vpack.c.b16 %v6044, %v6040
        %v6093 = vpack.c.b16 %v6049, %v6045
        %v6094 = vpack.c.b16 %v6050, %v6046
        %v6095 = vpack.c.b16 %v6051, %v6047
        %v6096 = vpack.c.b16 %v6052, %v6048
        %v6097 = vpack.c.b16 %v6057, %v6053
        %v6098 = vpack.c.b16 %v6058, %v6054
        %v6099 = vpack.c.b16 %v6059, %v6055
        %v6100 = vpack.c.b16 %v6060, %v6056
        %v6101 = vpack.c.b16 %v6065, %v6061
        %v6102 = vpack.c.b16 %v6066, %v6062
        %v6103 = vpack.c.b16 %v6067, %v6063
        %v6104 = vpack.c.b16 %v6068, %v6064
        %v6105 = vpack.c.b16 %v6073, %v6069
        %v6106 = vpack.c.b16 %v6074, %v6070
        %v6107 = vpack.c.b16 %v6075, %v6071
        %v6108 = vpack.c.b16 %v6076, %v6072
        %v6142 = vlaneseq
        %v6143 = vshrl.u32 %v6142, 7
        %v6144 = vsub.s32 0, %v6143
        %v6145 = vrot.slane %v5980, %v6144
        %v6146 = vlaneseq
        %v6147 = vshrl.u32 %v6146, 7
        %v6148 = vsub.s32 1, %v6147
        %v6149 = vrot.slane %v5980, %v6148
        %v6150 = vlaneseq
        %v6151 = vshrl.u32 %v6150, 7
        %v6152 = vsub.s32 2, %v6151
        %v6153 = vrot.slane %v5980, %v6152
        %v6154 = vlaneseq
        %v6155 = vshrl.u32 %v6154, 7
        %v6156 = vsub.s32 3, %v6155
        %v6157 = vrot.slane %v5980, %v6156
        %6162 = vmatprep.subr.bf16.mxu0 %v6106
        %6163 = vmatpush1.bf16.msra.mxu0 %v6105
        %6164 = vmatprep.subr.bf16.mxu0 %v6102
        %6165 = vmatpush1.bf16.msra.mxu0 %v6101
        %6166 = vmatprep.subr.bf16.mxu0 %v6098
        %6167 = vmatpush1.bf16.msra.mxu0 %v6097
        %6168 = vmatprep.subr.bf16.mxu0 %v6094
        %6169 = vmatpush1.bf16.msra.mxu0 %v6093
        %6170 = vmatprep.subr.bf16.mxu0 %v6090
        %6171 = vmatpush1.bf16.msra.mxu0 %v6089
        %6172 = vmatprep.subr.bf16.mxu0 %v6086
        %6173 = vmatpush1.bf16.msra.mxu0 %v6085
        %6174 = vmatprep.subr.bf16.mxu0 %v6082
        %6175 = vmatpush1.bf16.msra.mxu0 %v6081
        %6176 = vmatprep.subr.bf16.mxu0 %v6078
        %6177 = vmatpush1.bf16.msra.mxu0 %v6077
        %6178 = vmatprep.subr.bf16.mxu0 0
        %6179 = vmatpush2.bf16.msra.mxu0 0
        %6180 = vmatprep.subr.bf16.mxu0 0
        %6181 = vmatpush2.bf16.msra.mxu0 0
        %6182 = vmatprep.subr.bf16.mxu0 0
        %6183 = vmatpush2.bf16.msra.mxu0 0
        %6184 = vmatprep.subr.bf16.mxu0 0
        %6185 = vmatpush2.bf16.msra.mxu0 0
        %6186 = vmatprep.subr.bf16.mxu0 0
        %6187 = vmatpush2.bf16.msra.mxu0 0
        %6188 = vmatprep.subr.bf16.mxu0 0
        %6189 = vmatpush2.bf16.msra.mxu0 0
        %6190 = vmatprep.subr.bf16.mxu0 0
        %6191 = vmatpush2.bf16.msra.mxu0 0
        %6192 = vmatprep.subr.bf16.mxu0 0
        %6193 = vmatpush2.bf16.msra.mxu0 0
        %6194 = vmatprep.mubr.bf16.mxu0 0
        %6195 = vmatmul.mubr.bf16.gmra.mxu0 %v5947
        %v6196 = vpop.f32.mrf.mxu0
        %v6197 = vadd.f32 %v6145, %v6196
        %v6198 = vpop.f32.mrf.mxu0
        %v6199 = vadd.f32 %v6149, %v6198
        %v6200 = vpop.f32.mrf.mxu0
        %v6201 = vpop.f32.mrf.mxu0
        %6202 = vdwg.mxu0
        %6203 = vmatprep.subr.bf16.mxu0 %v6108
        %6204 = vmatpush1.bf16.msra.mxu0 %v6107
        %6205 = vmatprep.subr.bf16.mxu0 %v6104
        %6206 = vmatpush1.bf16.msra.mxu0 %v6103
        %6207 = vmatprep.subr.bf16.mxu0 %v6100
        %6208 = vmatpush1.bf16.msra.mxu0 %v6099
        %6209 = vmatprep.subr.bf16.mxu0 %v6096
        %6210 = vmatpush1.bf16.msra.mxu0 %v6095
        %6211 = vmatprep.subr.bf16.mxu0 %v6092
        %6212 = vmatpush1.bf16.msra.mxu0 %v6091
        %6213 = vmatprep.subr.bf16.mxu0 %v6088
        %6214 = vmatpush1.bf16.msra.mxu0 %v6087
        %6215 = vmatprep.subr.bf16.mxu0 %v6084
        %6216 = vmatpush1.bf16.msra.mxu0 %v6083
        %6217 = vmatprep.subr.bf16.mxu0 %v6080
        %6218 = vmatpush1.bf16.msra.mxu0 %v6079
        %6219 = vmatprep.subr.bf16.mxu0 0
        %6220 = vmatpush2.bf16.msra.mxu0 0
        %6221 = vmatprep.subr.bf16.mxu0 0
        %6222 = vmatpush2.bf16.msra.mxu0 0
        %6223 = vmatprep.subr.bf16.mxu0 0
        %6224 = vmatpush2.bf16.msra.mxu0 0
        %6225 = vmatprep.subr.bf16.mxu0 0
        %6226 = vmatpush2.bf16.msra.mxu0 0
        %6227 = vmatprep.subr.bf16.mxu0 0
        %6228 = vmatpush2.bf16.msra.mxu0 0
        %6229 = vmatprep.subr.bf16.mxu0 0
        %6230 = vmatpush2.bf16.msra.mxu0 0
        %6231 = vmatprep.subr.bf16.mxu0 0
        %6232 = vmatpush2.bf16.msra.mxu0 0
        %6233 = vmatprep.subr.bf16.mxu0 0
        %6234 = vmatpush2.bf16.msra.mxu0 0
        %6235 = vmatprep.mubr.bf16.mxu0 0
        %6236 = vmatmul.mubr.bf16.gmra.mxu0 %v5947
        %v6237 = vpop.f32.mrf.mxu0
        %v6238 = vadd.f32 %v6153, %v6237
        %v6239 = vpop.f32.mrf.mxu0
        %v6240 = vadd.f32 %v6157, %v6239
        %v6241 = vpop.f32.mrf.mxu0
        %v6242 = vpop.f32.mrf.mxu0
        %6243 = vdwg.mxu0
        %v6244 = vmax.f32 %v6197, 0.0
        %v6245 = vmax.f32 %v6199, 0.0
        %v6246 = vmax.f32 %v6238, 0.0
        %v6247 = vmax.f32 %v6240, 0.0
        %v6248 = vpack.c.bf16 %v6244, %v6244
        %v6249 = vpack.c.bf16 %v6245, %v6245
        %v6250 = vpack.c.bf16 %v6246, %v6246
        %v6251 = vpack.c.bf16 %v6247, %v6247
        %v6252 = vld [vmem:[%s11] sm:$0xf]
        %v6253 = vld [vmem:[%s11 + $0x4] sm:$0xf]
        %v6254 = vld [vmem:[%s11 + $0x8] sm:$0xf]
        %v6255 = vld [vmem:[%s11 + $0xc] sm:$0xf]
        %v6256 = vld [vmem:[%s11 + $0x10] sm:$0xf]
        %v6257 = vld [vmem:[%s11 + $0x14] sm:$0xf]
        %v6258 = vld [vmem:[%s11 + $0x18] sm:$0xf]
        %v6259 = vld [vmem:[%s11 + $0x1c] sm:$0xf]
        %v6260 = vld [vmem:[%s11 + $0x20] sm:$0xf]
        %v6261 = vld [vmem:[%s11 + $0x24] sm:$0xf]
        %v6262 = vld [vmem:[%s11 + $0x28] sm:$0xf]
        %v6263 = vld [vmem:[%s11 + $0x2c] sm:$0xf]
        %v6264 = vld [vmem:[%s11 + $0x30] sm:$0xf]
        %v6265 = vld [vmem:[%s11 + $0x34] sm:$0xf]
        %v6266 = vld [vmem:[%s11 + $0x38] sm:$0xf]
        %v6267 = vld [vmem:[%s11 + $0x3c] sm:$0xf]
        %v6268 = vld [vmem:[%s11 + $0x40] sm:$0xf]
        %v6269 = vld [vmem:[%s11 + $0x44] sm:$0xf]
        %v6270 = vld [vmem:[%s11 + $0x48] sm:$0xf]
        %v6271 = vld [vmem:[%s11 + $0x4c] sm:$0xf]
        %v6272 = vld [vmem:[%s11 + $0x50] sm:$0xf]
        %v6273 = vld [vmem:[%s11 + $0x54] sm:$0xf]
        %v6274 = vld [vmem:[%s11 + $0x58] sm:$0xf]
        %v6275 = vld [vmem:[%s11 + $0x5c] sm:$0xf]
        %v6276 = vld [vmem:[%s11 + $0x60] sm:$0xf]
        %v6277 = vld [vmem:[%s11 + $0x64] sm:$0xf]
        %v6278 = vld [vmem:[%s11 + $0x68] sm:$0xf]
        %v6279 = vld [vmem:[%s11 + $0x6c] sm:$0xf]
        %v6280 = vld [vmem:[%s11 + $0x70] sm:$0xf]
        %v6281 = vld [vmem:[%s11 + $0x74] sm:$0xf]
        %v6282 = vld [vmem:[%s11 + $0x78] sm:$0xf]
        %v6283 = vld [vmem:[%s11 + $0x7c] sm:$0xf]
        %v6284 = vld [vmem:[%s11 + $0x80] sm:$0xf]
        %v6285 = vld [vmem:[%s11 + $0x84] sm:$0xf]
        %v6286 = vld [vmem:[%s11 + $0x88] sm:$0xf]
        %v6287 = vld [vmem:[%s11 + $0x8c] sm:$0xf]
        %v6288 = vld [vmem:[%s11 + $0x90] sm:$0xf]
        %v6289 = vld [vmem:[%s11 + $0x94] sm:$0xf]
        %v6290 = vld [vmem:[%s11 + $0x98] sm:$0xf]
        %v6291 = vld [vmem:[%s11 + $0x9c] sm:$0xf]
        %v6292 = vld [vmem:[%s11 + $0xa0] sm:$0xf]
        %v6293 = vld [vmem:[%s11 + $0xa4] sm:$0xf]
        %v6294 = vld [vmem:[%s11 + $0xa8] sm:$0xf]
        %v6295 = vld [vmem:[%s11 + $0xac] sm:$0xf]
        %v6296 = vld [vmem:[%s11 + $0xb0] sm:$0xf]
        %v6297 = vld [vmem:[%s11 + $0xb4] sm:$0xf]
        %v6298 = vld [vmem:[%s11 + $0xb8] sm:$0xf]
        %v6299 = vld [vmem:[%s11 + $0xbc] sm:$0xf]
        %v6300 = vld [vmem:[%s11 + $0xc0] sm:$0xf]
        %v6301 = vld [vmem:[%s11 + $0xc4] sm:$0xf]
        %v6302 = vld [vmem:[%s11 + $0xc8] sm:$0xf]
        %v6303 = vld [vmem:[%s11 + $0xcc] sm:$0xf]
        %v6304 = vld [vmem:[%s11 + $0xd0] sm:$0xf]
        %v6305 = vld [vmem:[%s11 + $0xd4] sm:$0xf]
        %v6306 = vld [vmem:[%s11 + $0xd8] sm:$0xf]
        %v6307 = vld [vmem:[%s11 + $0xdc] sm:$0xf]
        %v6308 = vld [vmem:[%s11 + $0xe0] sm:$0xf]
        %v6309 = vld [vmem:[%s11 + $0xe4] sm:$0xf]
        %v6310 = vld [vmem:[%s11 + $0xe8] sm:$0xf]
        %v6311 = vld [vmem:[%s11 + $0xec] sm:$0xf]
        %v6312 = vld [vmem:[%s11 + $0xf0] sm:$0xf]
        %v6313 = vld [vmem:[%s11 + $0xf4] sm:$0xf]
        %v6314 = vld [vmem:[%s11 + $0xf8] sm:$0xf]
        %v6315 = vld [vmem:[%s11 + $0xfc] sm:$0xf]
        %v6316 = vld [vmem:[%s12] sm:$0x1]
        %v6381 = vunpack.c.l.b16 %v6252
        %v6382 = vunpack.c.l.b16 %v6253
        %v6383 = vunpack.c.l.b16 %v6254
        %v6384 = vunpack.c.l.b16 %v6255
        %v6385 = vunpack.c.l.b16 %v6256
        %v6386 = vunpack.c.l.b16 %v6257
        %v6387 = vunpack.c.l.b16 %v6258
        %v6388 = vunpack.c.l.b16 %v6259
        %v6389 = vunpack.c.l.b16 %v6260
        %v6390 = vunpack.c.l.b16 %v6261
        %v6391 = vunpack.c.l.b16 %v6262
        %v6392 = vunpack.c.l.b16 %v6263
        %v6393 = vunpack.c.l.b16 %v6264
        %v6394 = vunpack.c.l.b16 %v6265
        %v6395 = vunpack.c.l.b16 %v6266
        %v6396 = vunpack.c.l.b16 %v6267
        %v6397 = vunpack.c.l.b16 %v6268
        %v6398 = vunpack.c.l.b16 %v6269
        %v6399 = vunpack.c.l.b16 %v6270
        %v6400 = vunpack.c.l.b16 %v6271
        %v6401 = vunpack.c.l.b16 %v6272
        %v6402 = vunpack.c.l.b16 %v6273
        %v6403 = vunpack.c.l.b16 %v6274
        %v6404 = vunpack.c.l.b16 %v6275
        %v6405 = vunpack.c.l.b16 %v6276
        %v6406 = vunpack.c.l.b16 %v6277
        %v6407 = vunpack.c.l.b16 %v6278
        %v6408 = vunpack.c.l.b16 %v6279
        %v6409 = vunpack.c.l.b16 %v6280
        %v6410 = vunpack.c.l.b16 %v6281
        %v6411 = vunpack.c.l.b16 %v6282
        %v6412 = vunpack.c.l.b16 %v6283
        %v6413 = vunpack.c.l.b16 %v6284
        %v6414 = vunpack.c.l.b16 %v6285
        %v6415 = vunpack.c.l.b16 %v6286
        %v6416 = vunpack.c.l.b16 %v6287
        %v6417 = vunpack.c.l.b16 %v6288
        %v6418 = vunpack.c.l.b16 %v6289
        %v6419 = vunpack.c.l.b16 %v6290
        %v6420 = vunpack.c.l.b16 %v6291
        %v6421 = vunpack.c.l.b16 %v6292
        %v6422 = vunpack.c.l.b16 %v6293
        %v6423 = vunpack.c.l.b16 %v6294
        %v6424 = vunpack.c.l.b16 %v6295
        %v6425 = vunpack.c.l.b16 %v6296
        %v6426 = vunpack.c.l.b16 %v6297
        %v6427 = vunpack.c.l.b16 %v6298
        %v6428 = vunpack.c.l.b16 %v6299
        %v6429 = vunpack.c.l.b16 %v6300
        %v6430 = vunpack.c.l.b16 %v6301
        %v6431 = vunpack.c.l.b16 %v6302
        %v6432 = vunpack.c.l.b16 %v6303
        %v6433 = vunpack.c.l.b16 %v6304
        %v6434 = vunpack.c.l.b16 %v6305
        %v6435 = vunpack.c.l.b16 %v6306
        %v6436 = vunpack.c.l.b16 %v6307
        %v6437 = vunpack.c.l.b16 %v6308
        %v6438 = vunpack.c.l.b16 %v6309
        %v6439 = vunpack.c.l.b16 %v6310
        %v6440 = vunpack.c.l.b16 %v6311
        %v6441 = vunpack.c.l.b16 %v6312
        %v6442 = vunpack.c.l.b16 %v6313
        %v6443 = vunpack.c.l.b16 %v6314
        %v6444 = vunpack.c.l.b16 %v6315
        %v6445 = vpack.c.b16 %v6382, %v6381
        %v6446 = vpack.c.b16 %v6384, %v6383
        %v6447 = vpack.c.b16 %v6386, %v6385
        %v6448 = vpack.c.b16 %v6388, %v6387
        %v6449 = vpack.c.b16 %v6390, %v6389
        %v6450 = vpack.c.b16 %v6392, %v6391
        %v6451 = vpack.c.b16 %v6394, %v6393
        %v6452 = vpack.c.b16 %v6396, %v6395
        %v6453 = vpack.c.b16 %v6398, %v6397
        %v6454 = vpack.c.b16 %v6400, %v6399
        %v6455 = vpack.c.b16 %v6402, %v6401
        %v6456 = vpack.c.b16 %v6404, %v6403
        %v6457 = vpack.c.b16 %v6406, %v6405
        %v6458 = vpack.c.b16 %v6408, %v6407
        %v6459 = vpack.c.b16 %v6410, %v6409
        %v6460 = vpack.c.b16 %v6412, %v6411
        %v6461 = vpack.c.b16 %v6414, %v6413
        %v6462 = vpack.c.b16 %v6416, %v6415
        %v6463 = vpack.c.b16 %v6418, %v6417
        %v6464 = vpack.c.b16 %v6420, %v6419
        %v6465 = vpack.c.b16 %v6422, %v6421
        %v6466 = vpack.c.b16 %v6424, %v6423
        %v6467 = vpack.c.b16 %v6426, %v6425
        %v6468 = vpack.c.b16 %v6428, %v6427
        %v6469 = vpack.c.b16 %v6430, %v6429
        %v6470 = vpack.c.b16 %v6432, %v6431
        %v6471 = vpack.c.b16 %v6434, %v6433
        %v6472 = vpack.c.b16 %v6436, %v6435
        %v6473 = vpack.c.b16 %v6438, %v6437
        %v6474 = vpack.c.b16 %v6440, %v6439
        %v6475 = vpack.c.b16 %v6442, %v6441
        %v6476 = vpack.c.b16 %v6444, %v6443
        %6509 = vmatprep.subr.bf16.mxu0 0
        %6510 = vmatpush1.bf16.msra.mxu0 %v6452
        %6511 = vmatprep.subr.bf16.mxu0 0
        %6512 = vmatpush1.bf16.msra.mxu0 %v6451
        %6513 = vmatprep.subr.bf16.mxu0 0
        %6514 = vmatpush1.bf16.msra.mxu0 %v6450
        %6515 = vmatprep.subr.bf16.mxu0 0
        %6516 = vmatpush1.bf16.msra.mxu0 %v6449
        %6517 = vmatprep.subr.bf16.mxu0 0
        %6518 = vmatpush1.bf16.msra.mxu0 %v6448
        %6519 = vmatprep.subr.bf16.mxu0 0
        %6520 = vmatpush1.bf16.msra.mxu0 %v6447
        %6521 = vmatprep.subr.bf16.mxu0 0
        %6522 = vmatpush1.bf16.msra.mxu0 %v6446
        %6523 = vmatprep.subr.bf16.mxu0 0
        %6524 = vmatpush1.bf16.msra.mxu0 %v6445
        %6525 = vmatprep.subr.bf16.mxu0 0
        %6526 = vmatpush2.bf16.msra.mxu0 %v6460
        %6527 = vmatprep.subr.bf16.mxu0 0
        %6528 = vmatpush2.bf16.msra.mxu0 %v6459
        %6529 = vmatprep.subr.bf16.mxu0 0
        %6530 = vmatpush2.bf16.msra.mxu0 %v6458
        %6531 = vmatprep.subr.bf16.mxu0 0
        %6532 = vmatpush2.bf16.msra.mxu0 %v6457
        %6533 = vmatprep.subr.bf16.mxu0 0
        %6534 = vmatpush2.bf16.msra.mxu0 %v6456
        %6535 = vmatprep.subr.bf16.mxu0 0
        %6536 = vmatpush2.bf16.msra.mxu0 %v6455
        %6537 = vmatprep.subr.bf16.mxu0 0
        %6538 = vmatpush2.bf16.msra.mxu0 %v6454
        %6539 = vmatprep.subr.bf16.mxu0 0
        %6540 = vmatpush2.bf16.msra.mxu0 %v6453
        %6541 = vmatprep.mubr.bf16.mxu0 %v6249
        %6542 = vmatmul.mubr.bf16.gmra.mxu0 %v6248
        %v6543 = vpop.f32.mrf.mxu0
        %v6544 = vadd.f32 %v6316, %v6543
        %v6545 = vpop.f32.mrf.mxu0
        %v6546 = vpop.f32.mrf.mxu0
        %v6547 = vpop.f32.mrf.mxu0
        %6548 = vdwg.mxu0
        %6549 = vmatprep.subr.bf16.mxu0 0
        %6550 = vmatpush1.bf16.msra.mxu0 %v6468
        %6551 = vmatprep.subr.bf16.mxu0 0
        %6552 = vmatpush1.bf16.msra.mxu0 %v6467
        %6553 = vmatprep.subr.bf16.mxu0 0
        %6554 = vmatpush1.bf16.msra.mxu0 %v6466
        %6555 = vmatprep.subr.bf16.mxu0 0
        %6556 = vmatpush1.bf16.msra.mxu0 %v6465
        %6557 = vmatprep.subr.bf16.mxu0 0
        %6558 = vmatpush1.bf16.msra.mxu0 %v6464
        %6559 = vmatprep.subr.bf16.mxu0 0
        %6560 = vmatpush1.bf16.msra.mxu0 %v6463
        %6561 = vmatprep.subr.bf16.mxu0 0
        %6562 = vmatpush1.bf16.msra.mxu0 %v6462
        %6563 = vmatprep.subr.bf16.mxu0 0
        %6564 = vmatpush1.bf16.msra.mxu0 %v6461
        %6565 = vmatprep.subr.bf16.mxu0 0
        %6566 = vmatpush2.bf16.msra.mxu0 %v6476
        %6567 = vmatprep.subr.bf16.mxu0 0
        %6568 = vmatpush2.bf16.msra.mxu0 %v6475
        %6569 = vmatprep.subr.bf16.mxu0 0
        %6570 = vmatpush2.bf16.msra.mxu0 %v6474
        %6571 = vmatprep.subr.bf16.mxu0 0
        %6572 = vmatpush2.bf16.msra.mxu0 %v6473
        %6573 = vmatprep.subr.bf16.mxu0 0
        %6574 = vmatpush2.bf16.msra.mxu0 %v6472
        %6575 = vmatprep.subr.bf16.mxu0 0
        %6576 = vmatpush2.bf16.msra.mxu0 %v6471
        %6577 = vmatprep.subr.bf16.mxu0 0
        %6578 = vmatpush2.bf16.msra.mxu0 %v6470
        %6579 = vmatprep.subr.bf16.mxu0 0
        %6580 = vmatpush2.bf16.msra.mxu0 %v6469
        %6581 = vmatprep.mubr.bf16.mxu0 %v6251
        %6582 = vmatmul.mubr.bf16.gmra.mxu0 %v6250
        %v6583 = vpop.f32.mrf.mxu0
        %v6584 = vadd.f32 %v6544, %v6583
        %v6585 = vpop.f32.mrf.mxu0
        %v6586 = vpop.f32.mrf.mxu0
        %v6587 = vpop.f32.mrf.mxu0
        %6588 = vdwg.mxu0
        %6589 = vst [vmem:[%s432] sm:$0x1] %v6584
        %s6590 = sand.u32 %s313, 1
        %s6591 = scalar_lea.sflag [#allocation11], %s6590
        %s6592 = sand.u32 %s313, 1
        %s6593 = scalar_lea.vmem [#allocation10], %s6592
        // Predicated region
        $region73: #{net_forward.1} parent=71 // pred_check
          %p6594 = pneg %p323
        $region74: #{net_forward.1} parent=71 // pred_check_branch
          %6596 = sbr.rel (%p6594) target = $region76
        $region75: #{net_forward.1} parent=71 // pred_region
          %s6598 = ssub.s32 16, 16
          %6599 = vsyncadd %s6591, %s6598
          %s6600 = smul.addr %s27, 16
          %s6601 = scalar_lea.hbm %s13, %s6600
          %s6603 = sshll.u32 %s6593, 4
          %s6604 = int_to_ptr.vmem [resolvable:$true] %s6603
          %6606 = dma.vmem_to_hbm [thread:$0]  %s6604, 16, %s6601, %s6591
        $region76: #{net_forward.1} parent=71 // pred_fallthru
          _
      $region72: #{net_forward.1} parent=5 // pred_fallthru
        _
      %p6607 = scmp.le.s32.totalorder 2, %s22
      // Predicated region
      $region77: #{net_forward.1} parent=5 // pred_check
        %p6608 = pneg %p6607
      $region78: #{net_forward.1} parent=5 // pred_check_branch
        %6610 = sbr.rel (%p6608) target = $region80
      $region79: #{net_forward.1} parent=5 // pred_region
        %s6611 = ssub.s32 %s22, 2
        // Predicated region
        $region81: #{net_forward.1} parent=79 // pred_check
          %p6612 = pneg %p329
        $region82: #{net_forward.1} parent=79 // pred_check_branch
          %6614 = sbr.rel (%p6612) target = $region84
        $region83: #{net_forward.1} parent=79 // pred_region
          %s6615 = sand.u32 %s314, 1
          %s6616 = scalar_lea.sflag [#allocation11], %s6615
          %s6617 = sand.u32 %s314, 1
          %s6618 = scalar_lea.vmem [#allocation10], %s6617
          %6619 = dma.done %s6616, 16
        $region84: #{net_forward.1} parent=79 // pred_fallthru
          _
      $region80: #{net_forward.1} parent=5 // pred_fallthru
        _
    $region6: #{net_forward.1} parent=1 // loop_footer
      %s26 = sadd.s32 1, %s22
    $region7: #{net_forward.1} parent=1 // loop_footer_branch
      %21 = sbr.rel target = $region3
    $region8: #{net_forward.1} parent=1 // loop_exit
      _
    %6620 = vsyncpa [#allocation11], 1
    %s6621 = scalar_lea.sflag [#allocation11], 1
    %6622 = vsyncpa %s6621, 1

</llo_original>
